<compile_context>
chip_gen: v7x
topology: tpu7x:2x2x1
jax: 0.10.0
libtpu: 0.0.40
codegen_flags: <defaults>
</compile_context>

<pallas_src>
import functools

import jax
import jax.numpy as jnp
from jax.experimental import pallas as pl
from jax.experimental.pallas import tpu as pltpu

EPS = 1e-5
F32 = jnp.float32
BF16 = jnp.bfloat16


# ---------------------------------------------------------------------------
# In-kernel helpers (traced inside the Pallas kernel)
# ---------------------------------------------------------------------------
def _maxpool3_s2_p1(x, axis, size):
    """1-D maxpool (k=3, s=2, p=1) along `axis` built only from contiguous slices.

    Clipped edge windows are equivalent to nn.MaxPool2d's implicit -inf padding.
    """
    pieces = []
    for o in range(size // 2):
        lo = max(0, 2 * o - 1)
        hi = min(size, 2 * o + 2)
        idx = [slice(None)] * x.ndim
        idx[axis] = slice(lo, hi)
        pieces.append(jnp.max(x[tuple(idx)], axis=axis, keepdims=True))
    return jnp.concatenate(pieces, axis=axis)


def _serial_conv_block_kernel(xph_ref, w_ref, g_ref, b_ref, o_ref, *, N, S, Cpad, Cout):
    """One HFTA stream, fully fused.

    xph_ref: (1, 4*N, S+3, S+3, Cpad) f32  stride-2 phases of the (pad=3) padded NHWC input
    w_ref:   (1, 49, Cpad, Cout)      bf16 per-tap (Cin, Cout) weight slices
    g_ref/b_ref: (1, 1, Cout)         f32  BN affine parameters
    o_ref:   (1, N*(S//2)*(S//2), Cout) f32 pooled output, row-major (n, h, w)
    """
    M = N * S * S
    # --- conv 7x7 / stride 2 / pad 3: 49 accumulated tap matmuls (in-kernel im2col) ---
    acc = jnp.zeros((M, Cout), F32)
    for ki in range(7):
        for kj in range(7):
            ph = (ki % 2) * 2 + (kj % 2)
            xs = xph_ref[0, ph * N:(ph + 1) * N,
                         ki // 2:ki // 2 + S, kj // 2:kj // 2 + S, :]
            xs = xs.reshape(M, Cpad).astype(BF16)
            acc = acc + jnp.dot(xs, w_ref[0, ki * 7 + kj],
                                preferred_element_type=F32)
    # --- BatchNorm2d, training mode (biased variance), folded into scale + shift ---
    mean = jnp.mean(acc, axis=0, keepdims=True)
    var = jnp.mean(acc * acc, axis=0, keepdims=True) - mean * mean
    scale = g_ref[0] * jax.lax.rsqrt(var + EPS)
    shift = b_ref[0] - mean * scale
    y = jnp.maximum(acc * scale + shift, 0.0)                      # ReLU
    # --- MaxPool2d(k=3, s=2, p=1) on the VMEM-resident activations ---
    y = y.reshape(N, S, S, Cout)
    y = _maxpool3_s2_p1(y, axis=1, size=S)
    y = _maxpool3_s2_p1(y, axis=2, size=S)
    o_ref[0] = y.reshape(N * (S // 2) * (S // 2), Cout)


# ---------------------------------------------------------------------------
# Wrapper (host side does only cheap layout prep: pad / transpose / cast)
# ---------------------------------------------------------------------------
def serial_conv_block(x, conv_w, gamma, beta, *, hfta):
    """Forward pass of SerialConvBlock.

    hfta=False (single model): x (N, Cin, H, W), conv_w (Cout, Cin, 7, 7),
        gamma/beta (Cout,)            -> (N, Cout, H//4, W//4)
    hfta=True  (B fused models): x (N, B, Cin, H, W), conv_w (B, Cout, Cin, 7, 7),
        gamma/beta (B, Cout)          -> (N, B, Cout, H//4, W//4)
    """
    if not hfta:
        x, conv_w = x[:, None], conv_w[None]
        gamma, beta = gamma[None], beta[None]
    N, B, Cin, H, W = x.shape
    Cout = conv_w.shape[1]
    assert H == W and H % 4 == 0, "SerialConvBlock kernel needs square input, H % 4 == 0"
    S = H // 2                        # conv output spatial size
    Sp = S // 2                       # pooled output spatial size
    Hp = S + 3                        # per-phase extent of the padded input
    Cpad = max(8, ((Cin + 7) // 8) * 8)

    # NHWC per stream, pad channels + spatial(3), split into the 2x2 stride-2 phases so
    # the kernel only needs contiguous slices (no HBM im2col / patch blow-up).
    xs = jnp.transpose(x, (1, 0, 3, 4, 2)).astype(F32)             # (B, N, H, W, Cin)
    xs = jnp.pad(xs, ((0, 0), (0, 0), (3, 3), (3, 3), (0, Cpad - Cin)))
    xph = xs.reshape(B, N, Hp, 2, Hp, 2, Cpad).transpose(0, 3, 5, 1, 2, 4, 6)
    xph = xph.reshape(B, 4 * N, Hp, Hp, Cpad)                      # phase ph = 2*(ki%2)+(kj%2)

    w = jnp.transpose(conv_w, (0, 3, 4, 2, 1))                     # (B, 7, 7, Cin, Cout)
    w = jnp.pad(w, ((0, 0), (0, 0), (0, 0), (0, Cpad - Cin), (0, 0)))
    w = w.reshape(B, 49, Cpad, Cout).astype(BF16)
    g = gamma.reshape(B, 1, Cout).astype(F32)
    b = beta.reshape(B, 1, Cout).astype(F32)

    out = pl.pallas_call(
        functools.partial(_serial_conv_block_kernel, N=N, S=S, Cpad=Cpad, Cout=Cout),
        grid=(B,),
        in_specs=[
            pl.BlockSpec((1, 4 * N, Hp, Hp, Cpad), lambda i: (i, 0, 0, 0, 0)),
            pl.BlockSpec((1, 49, Cpad, Cout), lambda i: (i, 0, 0, 0)),
            pl.BlockSpec((1, 1, Cout), lambda i: (i, 0, 0)),
            pl.BlockSpec((1, 1, Cout), lambda i: (i, 0, 0)),
        ],
        out_specs=pl.BlockSpec((1, N * Sp * Sp, Cout), lambda i: (i, 0, 0)),
        out_shape=jax.ShapeDtypeStruct((B, N * Sp * Sp, Cout), F32),
        compiler_params=pltpu.CompilerParams(dimension_semantics=("parallel",)),
    )(xph, w, g, b)

    out = out.reshape(B, N, Sp, Sp, Cout).transpose(1, 0, 4, 2, 3)  # (N, B, Cout, Sp, Sp)
    return out if hfta else out[:, 0]


# ---------------------------------------------------------------------------
# Pure-JAX reference (single stream) for correctness checking
# ---------------------------------------------------------------------------
def _reference_single(x, w, gamma, beta):
    y = jax.lax.conv_general_dilated(
        x, w, window_strides=(2, 2), padding=((3, 3), (3, 3)),
        dimension_numbers=("NCHW", "OIHW", "NCHW"),
        precision=jax.lax.Precision.HIGHEST)
    mean = jnp.mean(y, axis=(0, 2, 3), keepdims=True)
    var = jnp.mean((y - mean) ** 2, axis=(0, 2, 3), keepdims=True)
    y = (y - mean) * jax.lax.rsqrt(var + EPS)
    y = y * gamma.reshape(1, -1, 1, 1) + beta.reshape(1, -1, 1, 1)
    y = jnp.maximum(y, 0.0)
    return jax.lax.reduce_window(
        y, -jnp.inf, jax.lax.max, window_dimensions=(1, 1, 3, 3),
        window_strides=(1, 1, 2, 2), padding=((0, 0), (0, 0), (1, 1), (1, 1)))


if __name__ == "__main__":
    key = jax.random.PRNGKey(0)
    kx, kw, kg, kb = jax.random.split(key, 4)
    N, B, Cin, Cout, H = 2, 2, 3, 64, 16

    # HFTA path (B fused model replicas): input (N, B, Cin, H, W), per-stream params.
    x = jax.random.normal(kx, (N, B, Cin, H, H), F32)
    std = (2.0 / (Cout * 7 * 7)) ** 0.5        # kaiming_normal_(fan_out) like resnet
    w = std * jax.random.normal(kw, (B, Cout, Cin, 7, 7), F32)
    gamma = 1.0 + 0.1 * jax.random.normal(kg, (B, Cout), F32)
    beta = 0.1 * jax.random.normal(kb, (B, Cout), F32)

    fwd_hfta = jax.jit(functools.partial(serial_conv_block, hfta=True))
    out = fwd_hfta(x, w, gamma, beta)
    jax.block_until_ready(out)
    assert out.shape == (N, B, Cout, H // 4, H // 4), out.shape
    assert bool(jnp.all(jnp.isfinite(out)))

    ref = jnp.stack([_reference_single(x[:, i], w[i], gamma[i], beta[i])
                     for i in range(B)], axis=1)
    err = float(jnp.max(jnp.abs(out - ref)))
    assert err < 8e-2, f"HFTA path max abs err vs reference: {err}"

    # Single-model path (the module's non-HFTA usage): input (N, Cin, H, W).
    fwd_single = jax.jit(functools.partial(serial_conv_block, hfta=False))
    out0 = fwd_single(x[:, 0], w[0], gamma[0], beta[0])
    jax.block_until_ready(out0)
    assert out0.shape == (N, Cout, H // 4, H // 4), out0.shape
    err0 = float(jnp.max(jnp.abs(out0 - ref[:, 0])))
    assert err0 < 8e-2, f"single-model path max abs err vs reference: {err0}"

    print("KERNEL_OK")
</pallas_src>

<mosaic_0001>
module attributes {stable_mosaic.version = 11 : i64} {
  func.func @_serial_conv_block_kernel(%arg0: i32, %arg1: memref<1x8x11x11x8xf32, #tpu.memory_space<vmem>>, %arg2: memref<1x49x8x64xbf16, #tpu.memory_space<vmem>>, %arg3: memref<1x1x64xf32, #tpu.memory_space<vmem>>, %arg4: memref<1x1x64xf32, #tpu.memory_space<vmem>>, %arg5: memref<1x32x64xf32, #tpu.memory_space<vmem>>) attributes {dimension_semantics = [#tpu.dimension_semantics<parallel>], iteration_bounds = array<i64: 2>, scalar_prefetch = 0 : i64, scratch_operands = 0 : i64, tpu.core_type = #tpu.core_type<tc>, window_params = [{transform_indices = @transform_0, window_bounds = array<i64: 1, 8, 11, 11, 8>}, {transform_indices = @transform_1, window_bounds = array<i64: 1, 49, 8, 64>}, {transform_indices = @transform_2, window_bounds = array<i64: 1, 1, 64>}, {transform_indices = @transform_3, window_bounds = array<i64: 1, 1, 64>}, {transform_indices = @transform_4, window_bounds = array<i64: 1, 32, 64>}]} {
    %cst = arith.constant 0.000000e+00 : f32
    %0 = vector.broadcast %cst : f32 to vector<128x64xf32>
    %c0 = arith.constant 0 : index
    %c0_0 = arith.constant 0 : index
    %c0_1 = arith.constant 0 : index
    %c0_2 = arith.constant 0 : index
    %c0_3 = arith.constant 0 : index
    %1 = vector.load %arg1[%c0, %c0_0, %c0_1, %c0_2, %c0_3] : memref<1x8x11x11x8xf32, #tpu.memory_space<vmem>>, vector<1x2x8x8x8xf32>
    %2 = vector.shape_cast %1 : vector<1x2x8x8x8xf32> to vector<2x8x8x8xf32>
    %3 = vector.shape_cast %2 : vector<2x8x8x8xf32> to vector<128x8xf32>
    %4 = arith.truncf %3 : vector<128x8xf32> to vector<128x8xbf16>
    %c0_4 = arith.constant 0 : index
    %c0_5 = arith.constant 0 : index
    %c0_6 = arith.constant 0 : index
    %c0_7 = arith.constant 0 : index
    %5 = vector.load %arg2[%c0_4, %c0_5, %c0_6, %c0_7] : memref<1x49x8x64xbf16, #tpu.memory_space<vmem>>, vector<1x1x8x64xbf16>
    %6 = vector.shape_cast %5 : vector<1x1x8x64xbf16> to vector<8x64xbf16>
    %cst_8 = arith.constant dense<0.000000e+00> : vector<128x64xf32>
    %7 = tpu.matmul %4, %6, %cst_8 {dimension_numbers = #tpu.dot_dimension_numbers<[1], [0], [0], [1], [0, 0, 1, 1], [], []>} : vector<128x8xbf16>, vector<8x64xbf16>, vector<128x64xf32> -> vector<128x64xf32>
    %8 = arith.addf %0, %7 : vector<128x64xf32>
    %c0_9 = arith.constant 0 : index
    %c2 = arith.constant 2 : index
    %c0_10 = arith.constant 0 : index
    %c0_11 = arith.constant 0 : index
    %c0_12 = arith.constant 0 : index
    %9 = vector.load %arg1[%c0_9, %c2, %c0_10, %c0_11, %c0_12] : memref<1x8x11x11x8xf32, #tpu.memory_space<vmem>>, vector<1x2x8x8x8xf32>
    %10 = vector.shape_cast %9 : vector<1x2x8x8x8xf32> to vector<2x8x8x8xf32>
    %11 = vector.shape_cast %10 : vector<2x8x8x8xf32> to vector<128x8xf32>
    %12 = arith.truncf %11 : vector<128x8xf32> to vector<128x8xbf16>
    %c0_13 = arith.constant 0 : index
    %c1 = arith.constant 1 : index
    %c0_14 = arith.constant 0 : index
    %c0_15 = arith.constant 0 : index
    %13 = vector.load %arg2[%c0_13, %c1, %c0_14, %c0_15] : memref<1x49x8x64xbf16, #tpu.memory_space<vmem>>, vector<1x1x8x64xbf16>
    %14 = vector.shape_cast %13 : vector<1x1x8x64xbf16> to vector<8x64xbf16>
    %cst_16 = arith.constant dense<0.000000e+00> : vector<128x64xf32>
    %15 = tpu.matmul %12, %14, %cst_16 {dimension_numbers = #tpu.dot_dimension_numbers<[1], [0], [0], [1], [0, 0, 1, 1], [], []>} : vector<128x8xbf16>, vector<8x64xbf16>, vector<128x64xf32> -> vector<128x64xf32>
    %16 = arith.addf %8, %15 : vector<128x64xf32>
    %c0_17 = arith.constant 0 : index
    %c0_18 = arith.constant 0 : index
    %c0_19 = arith.constant 0 : index
    %c1_20 = arith.constant 1 : index
    %c0_21 = arith.constant 0 : index
    %17 = vector.load %arg1[%c0_17, %c0_18, %c0_19, %c1_20, %c0_21] : memref<1x8x11x11x8xf32, #tpu.memory_space<vmem>>, vector<1x2x8x8x8xf32>
    %18 = vector.shape_cast %17 : vector<1x2x8x8x8xf32> to vector<2x8x8x8xf32>
    %19 = vector.shape_cast %18 : vector<2x8x8x8xf32> to vector<128x8xf32>
    %20 = arith.truncf %19 : vector<128x8xf32> to vector<128x8xbf16>
    %c0_22 = arith.constant 0 : index
    %c2_23 = arith.constant 2 : index
    %c0_24 = arith.constant 0 : index
    %c0_25 = arith.constant 0 : index
    %21 = vector.load %arg2[%c0_22, %c2_23, %c0_24, %c0_25] : memref<1x49x8x64xbf16, #tpu.memory_space<vmem>>, vector<1x1x8x64xbf16>
    %22 = vector.shape_cast %21 : vector<1x1x8x64xbf16> to vector<8x64xbf16>
    %cst_26 = arith.constant dense<0.000000e+00> : vector<128x64xf32>
    %23 = tpu.matmul %20, %22, %cst_26 {dimension_numbers = #tpu.dot_dimension_numbers<[1], [0], [0], [1], [0, 0, 1, 1], [], []>} : vector<128x8xbf16>, vector<8x64xbf16>, vector<128x64xf32> -> vector<128x64xf32>
    %24 = arith.addf %16, %23 : vector<128x64xf32>
    %c0_27 = arith.constant 0 : index
    %c2_28 = arith.constant 2 : index
    %c0_29 = arith.constant 0 : index
    %c1_30 = arith.constant 1 : index
    %c0_31 = arith.constant 0 : index
    %25 = vector.load %arg1[%c0_27, %c2_28, %c0_29, %c1_30, %c0_31] : memref<1x8x11x11x8xf32, #tpu.memory_space<vmem>>, vector<1x2x8x8x8xf32>
    %26 = vector.shape_cast %25 : vector<1x2x8x8x8xf32> to vector<2x8x8x8xf32>
    %27 = vector.shape_cast %26 : vector<2x8x8x8xf32> to vector<128x8xf32>
    %28 = arith.truncf %27 : vector<128x8xf32> to vector<128x8xbf16>
    %c0_32 = arith.constant 0 : index
    %c3 = arith.constant 3 : index
    %c0_33 = arith.constant 0 : index
    %c0_34 = arith.constant 0 : index
    %29 = vector.load %arg2[%c0_32, %c3, %c0_33, %c0_34] : memref<1x49x8x64xbf16, #tpu.memory_space<vmem>>, vector<1x1x8x64xbf16>
    %30 = vector.shape_cast %29 : vector<1x1x8x64xbf16> to vector<8x64xbf16>
    %cst_35 = arith.constant dense<0.000000e+00> : vector<128x64xf32>
    %31 = tpu.matmul %28, %30, %cst_35 {dimension_numbers = #tpu.dot_dimension_numbers<[1], [0], [0], [1], [0, 0, 1, 1], [], []>} : vector<128x8xbf16>, vector<8x64xbf16>, vector<128x64xf32> -> vector<128x64xf32>
    %32 = arith.addf %24, %31 : vector<128x64xf32>
    %c0_36 = arith.constant 0 : index
    %c0_37 = arith.constant 0 : index
    %c0_38 = arith.constant 0 : index
    %c2_39 = arith.constant 2 : index
    %c0_40 = arith.constant 0 : index
    %33 = vector.load %arg1[%c0_36, %c0_37, %c0_38, %c2_39, %c0_40] : memref<1x8x11x11x8xf32, #tpu.memory_space<vmem>>, vector<1x2x8x8x8xf32>
    %34 = vector.shape_cast %33 : vector<1x2x8x8x8xf32> to vector<2x8x8x8xf32>
    %35 = vector.shape_cast %34 : vector<2x8x8x8xf32> to vector<128x8xf32>
    %36 = arith.truncf %35 : vector<128x8xf32> to vector<128x8xbf16>
    %c0_41 = arith.constant 0 : index
    %c4 = arith.constant 4 : index
    %c0_42 = arith.constant 0 : index
    %c0_43 = arith.constant 0 : index
    %37 = vector.load %arg2[%c0_41, %c4, %c0_42, %c0_43] : memref<1x49x8x64xbf16, #tpu.memory_space<vmem>>, vector<1x1x8x64xbf16>
    %38 = vector.shape_cast %37 : vector<1x1x8x64xbf16> to vector<8x64xbf16>
    %cst_44 = arith.constant dense<0.000000e+00> : vector<128x64xf32>
    %39 = tpu.matmul %36, %38, %cst_44 {dimension_numbers = #tpu.dot_dimension_numbers<[1], [0], [0], [1], [0, 0, 1, 1], [], []>} : vector<128x8xbf16>, vector<8x64xbf16>, vector<128x64xf32> -> vector<128x64xf32>
    %40 = arith.addf %32, %39 : vector<128x64xf32>
    %c0_45 = arith.constant 0 : index
    %c2_46 = arith.constant 2 : index
    %c0_47 = arith.constant 0 : index
    %c2_48 = arith.constant 2 : index
    %c0_49 = arith.constant 0 : index
    %41 = vector.load %arg1[%c0_45, %c2_46, %c0_47, %c2_48, %c0_49] : memref<1x8x11x11x8xf32, #tpu.memory_space<vmem>>, vector<1x2x8x8x8xf32>
    %42 = vector.shape_cast %41 : vector<1x2x8x8x8xf32> to vector<2x8x8x8xf32>
    %43 = vector.shape_cast %42 : vector<2x8x8x8xf32> to vector<128x8xf32>
    %44 = arith.truncf %43 : vector<128x8xf32> to vector<128x8xbf16>
    %c0_50 = arith.constant 0 : index
    %c5 = arith.constant 5 : index
    %c0_51 = arith.constant 0 : index
    %c0_52 = arith.constant 0 : index
    %45 = vector.load %arg2[%c0_50, %c5, %c0_51, %c0_52] : memref<1x49x8x64xbf16, #tpu.memory_space<vmem>>, vector<1x1x8x64xbf16>
    %46 = vector.shape_cast %45 : vector<1x1x8x64xbf16> to vector<8x64xbf16>
    %cst_53 = arith.constant dense<0.000000e+00> : vector<128x64xf32>
    %47 = tpu.matmul %44, %46, %cst_53 {dimension_numbers = #tpu.dot_dimension_numbers<[1], [0], [0], [1], [0, 0, 1, 1], [], []>} : vector<128x8xbf16>, vector<8x64xbf16>, vector<128x64xf32> -> vector<128x64xf32>
    %48 = arith.addf %40, %47 : vector<128x64xf32>
    %c0_54 = arith.constant 0 : index
    %c0_55 = arith.constant 0 : index
    %c0_56 = arith.constant 0 : index
    %c3_57 = arith.constant 3 : index
    %c0_58 = arith.constant 0 : index
    %49 = vector.load %arg1[%c0_54, %c0_55, %c0_56, %c3_57, %c0_58] : memref<1x8x11x11x8xf32, #tpu.memory_space<vmem>>, vector<1x2x8x8x8xf32>
    %50 = vector.shape_cast %49 : vector<1x2x8x8x8xf32> to vector<2x8x8x8xf32>
    %51 = vector.shape_cast %50 : vector<2x8x8x8xf32> to vector<128x8xf32>
    %52 = arith.truncf %51 : vector<128x8xf32> to vector<128x8xbf16>
    %c0_59 = arith.constant 0 : index
    %c6 = arith.constant 6 : index
    %c0_60 = arith.constant 0 : index
    %c0_61 = arith.constant 0 : index
    %53 = vector.load %arg2[%c0_59, %c6, %c0_60, %c0_61] : memref<1x49x8x64xbf16, #tpu.memory_space<vmem>>, vector<1x1x8x64xbf16>
    %54 = vector.shape_cast %53 : vector<1x1x8x64xbf16> to vector<8x64xbf16>
    %cst_62 = arith.constant dense<0.000000e+00> : vector<128x64xf32>
    %55 = tpu.matmul %52, %54, %cst_62 {dimension_numbers = #tpu.dot_dimension_numbers<[1], [0], [0], [1], [0, 0, 1, 1], [], []>} : vector<128x8xbf16>, vector<8x64xbf16>, vector<128x64xf32> -> vector<128x64xf32>
    %56 = arith.addf %48, %55 : vector<128x64xf32>
    %c0_63 = arith.constant 0 : index
    %c4_64 = arith.constant 4 : index
    %c0_65 = arith.constant 0 : index
    %c0_66 = arith.constant 0 : index
    %c0_67 = arith.constant 0 : index
    %57 = vector.load %arg1[%c0_63, %c4_64, %c0_65, %c0_66, %c0_67] : memref<1x8x11x11x8xf32, #tpu.memory_space<vmem>>, vector<1x2x8x8x8xf32>
    %58 = vector.shape_cast %57 : vector<1x2x8x8x8xf32> to vector<2x8x8x8xf32>
    %59 = vector.shape_cast %58 : vector<2x8x8x8xf32> to vector<128x8xf32>
    %60 = arith.truncf %59 : vector<128x8xf32> to vector<128x8xbf16>
    %c0_68 = arith.constant 0 : index
    %c7 = arith.constant 7 : index
    %c0_69 = arith.constant 0 : index
    %c0_70 = arith.constant 0 : index
    %61 = vector.load %arg2[%c0_68, %c7, %c0_69, %c0_70] : memref<1x49x8x64xbf16, #tpu.memory_space<vmem>>, vector<1x1x8x64xbf16>
    %62 = vector.shape_cast %61 : vector<1x1x8x64xbf16> to vector<8x64xbf16>
    %cst_71 = arith.constant dense<0.000000e+00> : vector<128x64xf32>
    %63 = tpu.matmul %60, %62, %cst_71 {dimension_numbers = #tpu.dot_dimension_numbers<[1], [0], [0], [1], [0, 0, 1, 1], [], []>} : vector<128x8xbf16>, vector<8x64xbf16>, vector<128x64xf32> -> vector<128x64xf32>
    %64 = arith.addf %56, %63 : vector<128x64xf32>
    %c0_72 = arith.constant 0 : index
    %c6_73 = arith.constant 6 : index
    %c0_74 = arith.constant 0 : index
    %c0_75 = arith.constant 0 : index
    %c0_76 = arith.constant 0 : index
    %65 = vector.load %arg1[%c0_72, %c6_73, %c0_74, %c0_75, %c0_76] : memref<1x8x11x11x8xf32, #tpu.memory_space<vmem>>, vector<1x2x8x8x8xf32>
    %66 = vector.shape_cast %65 : vector<1x2x8x8x8xf32> to vector<2x8x8x8xf32>
    %67 = vector.shape_cast %66 : vector<2x8x8x8xf32> to vector<128x8xf32>
    %68 = arith.truncf %67 : vector<128x8xf32> to vector<128x8xbf16>
    %c0_77 = arith.constant 0 : index
    %c8 = arith.constant 8 : index
    %c0_78 = arith.constant 0 : index
    %c0_79 = arith.constant 0 : index
    %69 = vector.load %arg2[%c0_77, %c8, %c0_78, %c0_79] : memref<1x49x8x64xbf16, #tpu.memory_space<vmem>>, vector<1x1x8x64xbf16>
    %70 = vector.shape_cast %69 : vector<1x1x8x64xbf16> to vector<8x64xbf16>
    %cst_80 = arith.constant dense<0.000000e+00> : vector<128x64xf32>
    %71 = tpu.matmul %68, %70, %cst_80 {dimension_numbers = #tpu.dot_dimension_numbers<[1], [0], [0], [1], [0, 0, 1, 1], [], []>} : vector<128x8xbf16>, vector<8x64xbf16>, vector<128x64xf32> -> vector<128x64xf32>
    %72 = arith.addf %64, %71 : vector<128x64xf32>
    %c0_81 = arith.constant 0 : index
    %c4_82 = arith.constant 4 : index
    %c0_83 = arith.constant 0 : index
    %c1_84 = arith.constant 1 : index
    %c0_85 = arith.constant 0 : index
    %73 = vector.load %arg1[%c0_81, %c4_82, %c0_83, %c1_84, %c0_85] : memref<1x8x11x11x8xf32, #tpu.memory_space<vmem>>, vector<1x2x8x8x8xf32>
    %74 = vector.shape_cast %73 : vector<1x2x8x8x8xf32> to vector<2x8x8x8xf32>
    %75 = vector.shape_cast %74 : vector<2x8x8x8xf32> to vector<128x8xf32>
    %76 = arith.truncf %75 : vector<128x8xf32> to vector<128x8xbf16>
    %c0_86 = arith.constant 0 : index
    %c9 = arith.constant 9 : index
    %c0_87 = arith.constant 0 : index
    %c0_88 = arith.constant 0 : index
    %77 = vector.load %arg2[%c0_86, %c9, %c0_87, %c0_88] : memref<1x49x8x64xbf16, #tpu.memory_space<vmem>>, vector<1x1x8x64xbf16>
    %78 = vector.shape_cast %77 : vector<1x1x8x64xbf16> to vector<8x64xbf16>
    %cst_89 = arith.constant dense<0.000000e+00> : vector<128x64xf32>
    %79 = tpu.matmul %76, %78, %cst_89 {dimension_numbers = #tpu.dot_dimension_numbers<[1], [0], [0], [1], [0, 0, 1, 1], [], []>} : vector<128x8xbf16>, vector<8x64xbf16>, vector<128x64xf32> -> vector<128x64xf32>
    %80 = arith.addf %72, %79 : vector<128x64xf32>
    %c0_90 = arith.constant 0 : index
    %c6_91 = arith.constant 6 : index
    %c0_92 = arith.constant 0 : index
    %c1_93 = arith.constant 1 : index
    %c0_94 = arith.constant 0 : index
    %81 = vector.load %arg1[%c0_90, %c6_91, %c0_92, %c1_93, %c0_94] : memref<1x8x11x11x8xf32, #tpu.memory_space<vmem>>, vector<1x2x8x8x8xf32>
    %82 = vector.shape_cast %81 : vector<1x2x8x8x8xf32> to vector<2x8x8x8xf32>
    %83 = vector.shape_cast %82 : vector<2x8x8x8xf32> to vector<128x8xf32>
    %84 = arith.truncf %83 : vector<128x8xf32> to vector<128x8xbf16>
    %c0_95 = arith.constant 0 : index
    %c10 = arith.constant 10 : index
    %c0_96 = arith.constant 0 : index
    %c0_97 = arith.constant 0 : index
    %85 = vector.load %arg2[%c0_95, %c10, %c0_96, %c0_97] : memref<1x49x8x64xbf16, #tpu.memory_space<vmem>>, vector<1x1x8x64xbf16>
    %86 = vector.shape_cast %85 : vector<1x1x8x64xbf16> to vector<8x64xbf16>
    %cst_98 = arith.constant dense<0.000000e+00> : vector<128x64xf32>
    %87 = tpu.matmul %84, %86, %cst_98 {dimension_numbers = #tpu.dot_dimension_numbers<[1], [0], [0], [1], [0, 0, 1, 1], [], []>} : vector<128x8xbf16>, vector<8x64xbf16>, vector<128x64xf32> -> vector<128x64xf32>
    %88 = arith.addf %80, %87 : vector<128x64xf32>
    %c0_99 = arith.constant 0 : index
    %c4_100 = arith.constant 4 : index
    %c0_101 = arith.constant 0 : index
    %c2_102 = arith.constant 2 : index
    %c0_103 = arith.constant 0 : index
    %89 = vector.load %arg1[%c0_99, %c4_100, %c0_101, %c2_102, %c0_103] : memref<1x8x11x11x8xf32, #tpu.memory_space<vmem>>, vector<1x2x8x8x8xf32>
    %90 = vector.shape_cast %89 : vector<1x2x8x8x8xf32> to vector<2x8x8x8xf32>
    %91 = vector.shape_cast %90 : vector<2x8x8x8xf32> to vector<128x8xf32>
    %92 = arith.truncf %91 : vector<128x8xf32> to vector<128x8xbf16>
    %c0_104 = arith.constant 0 : index
    %c11 = arith.constant 11 : index
    %c0_105 = arith.constant 0 : index
    %c0_106 = arith.constant 0 : index
    %93 = vector.load %arg2[%c0_104, %c11, %c0_105, %c0_106] : memref<1x49x8x64xbf16, #tpu.memory_space<vmem>>, vector<1x1x8x64xbf16>
    %94 = vector.shape_cast %93 : vector<1x1x8x64xbf16> to vector<8x64xbf16>
    %cst_107 = arith.constant dense<0.000000e+00> : vector<128x64xf32>
    %95 = tpu.matmul %92, %94, %cst_107 {dimension_numbers = #tpu.dot_dimension_numbers<[1], [0], [0], [1], [0, 0, 1, 1], [], []>} : vector<128x8xbf16>, vector<8x64xbf16>, vector<128x64xf32> -> vector<128x64xf32>
    %96 = arith.addf %88, %95 : vector<128x64xf32>
    %c0_108 = arith.constant 0 : index
    %c6_109 = arith.constant 6 : index
    %c0_110 = arith.constant 0 : index
    %c2_111 = arith.constant 2 : index
    %c0_112 = arith.constant 0 : index
    %97 = vector.load %arg1[%c0_108, %c6_109, %c0_110, %c2_111, %c0_112] : memref<1x8x11x11x8xf32, #tpu.memory_space<vmem>>, vector<1x2x8x8x8xf32>
    %98 = vector.shape_cast %97 : vector<1x2x8x8x8xf32> to vector<2x8x8x8xf32>
    %99 = vector.shape_cast %98 : vector<2x8x8x8xf32> to vector<128x8xf32>
    %100 = arith.truncf %99 : vector<128x8xf32> to vector<128x8xbf16>
    %c0_113 = arith.constant 0 : index
    %c12 = arith.constant 12 : index
    %c0_114 = arith.constant 0 : index
    %c0_115 = arith.constant 0 : index
    %101 = vector.load %arg2[%c0_113, %c12, %c0_114, %c0_115] : memref<1x49x8x64xbf16, #tpu.memory_space<vmem>>, vector<1x1x8x64xbf16>
    %102 = vector.shape_cast %101 : vector<1x1x8x64xbf16> to vector<8x64xbf16>
    %cst_116 = arith.constant dense<0.000000e+00> : vector<128x64xf32>
    %103 = tpu.matmul %100, %102, %cst_116 {dimension_numbers = #tpu.dot_dimension_numbers<[1], [0], [0], [1], [0, 0, 1, 1], [], []>} : vector<128x8xbf16>, vector<8x64xbf16>, vector<128x64xf32> -> vector<128x64xf32>
    %104 = arith.addf %96, %103 : vector<128x64xf32>
    %c0_117 = arith.constant 0 : index
    %c4_118 = arith.constant 4 : index
    %c0_119 = arith.constant 0 : index
    %c3_120 = arith.constant 3 : index
    %c0_121 = arith.constant 0 : index
    %105 = vector.load %arg1[%c0_117, %c4_118, %c0_119, %c3_120, %c0_121] : memref<1x8x11x11x8xf32, #tpu.memory_space<vmem>>, vector<1x2x8x8x8xf32>
    %106 = vector.shape_cast %105 : vector<1x2x8x8x8xf32> to vector<2x8x8x8xf32>
    %107 = vector.shape_cast %106 : vector<2x8x8x8xf32> to vector<128x8xf32>
    %108 = arith.truncf %107 : vector<128x8xf32> to vector<128x8xbf16>
    %c0_122 = arith.constant 0 : index
    %c13 = arith.constant 13 : index
    %c0_123 = arith.constant 0 : index
    %c0_124 = arith.constant 0 : index
    %109 = vector.load %arg2[%c0_122, %c13, %c0_123, %c0_124] : memref<1x49x8x64xbf16, #tpu.memory_space<vmem>>, vector<1x1x8x64xbf16>
    %110 = vector.shape_cast %109 : vector<1x1x8x64xbf16> to vector<8x64xbf16>
    %cst_125 = arith.constant dense<0.000000e+00> : vector<128x64xf32>
    %111 = tpu.matmul %108, %110, %cst_125 {dimension_numbers = #tpu.dot_dimension_numbers<[1], [0], [0], [1], [0, 0, 1, 1], [], []>} : vector<128x8xbf16>, vector<8x64xbf16>, vector<128x64xf32> -> vector<128x64xf32>
    %112 = arith.addf %104, %111 : vector<128x64xf32>
    %c0_126 = arith.constant 0 : index
    %c0_127 = arith.constant 0 : index
    %c1_128 = arith.constant 1 : index
    %c0_129 = arith.constant 0 : index
    %c0_130 = arith.constant 0 : index
    %113 = vector.load %arg1[%c0_126, %c0_127, %c1_128, %c0_129, %c0_130] : memref<1x8x11x11x8xf32, #tpu.memory_space<vmem>>, vector<1x2x8x8x8xf32>
    %114 = vector.shape_cast %113 : vector<1x2x8x8x8xf32> to vector<2x8x8x8xf32>
    %115 = vector.shape_cast %114 : vector<2x8x8x8xf32> to vector<128x8xf32>
    %116 = arith.truncf %115 : vector<128x8xf32> to vector<128x8xbf16>
    %c0_131 = arith.constant 0 : index
    %c14 = arith.constant 14 : index
    %c0_132 = arith.constant 0 : index
    %c0_133 = arith.constant 0 : index
    %117 = vector.load %arg2[%c0_131, %c14, %c0_132, %c0_133] : memref<1x49x8x64xbf16, #tpu.memory_space<vmem>>, vector<1x1x8x64xbf16>
    %118 = vector.shape_cast %117 : vector<1x1x8x64xbf16> to vector<8x64xbf16>
    %cst_134 = arith.constant dense<0.000000e+00> : vector<128x64xf32>
    %119 = tpu.matmul %116, %118, %cst_134 {dimension_numbers = #tpu.dot_dimension_numbers<[1], [0], [0], [1], [0, 0, 1, 1], [], []>} : vector<128x8xbf16>, vector<8x64xbf16>, vector<128x64xf32> -> vector<128x64xf32>
    %120 = arith.addf %112, %119 : vector<128x64xf32>
    %c0_135 = arith.constant 0 : index
    %c2_136 = arith.constant 2 : index
    %c1_137 = arith.constant 1 : index
    %c0_138 = arith.constant 0 : index
    %c0_139 = arith.constant 0 : index
    %121 = vector.load %arg1[%c0_135, %c2_136, %c1_137, %c0_138, %c0_139] : memref<1x8x11x11x8xf32, #tpu.memory_space<vmem>>, vector<1x2x8x8x8xf32>
    %122 = vector.shape_cast %121 : vector<1x2x8x8x8xf32> to vector<2x8x8x8xf32>
    %123 = vector.shape_cast %122 : vector<2x8x8x8xf32> to vector<128x8xf32>
    %124 = arith.truncf %123 : vector<128x8xf32> to vector<128x8xbf16>
    %c0_140 = arith.constant 0 : index
    %c15 = arith.constant 15 : index
    %c0_141 = arith.constant 0 : index
    %c0_142 = arith.constant 0 : index
    %125 = vector.load %arg2[%c0_140, %c15, %c0_141, %c0_142] : memref<1x49x8x64xbf16, #tpu.memory_space<vmem>>, vector<1x1x8x64xbf16>
    %126 = vector.shape_cast %125 : vector<1x1x8x64xbf16> to vector<8x64xbf16>
    %cst_143 = arith.constant dense<0.000000e+00> : vector<128x64xf32>
    %127 = tpu.matmul %124, %126, %cst_143 {dimension_numbers = #tpu.dot_dimension_numbers<[1], [0], [0], [1], [0, 0, 1, 1], [], []>} : vector<128x8xbf16>, vector<8x64xbf16>, vector<128x64xf32> -> vector<128x64xf32>
    %128 = arith.addf %120, %127 : vector<128x64xf32>
    %c0_144 = arith.constant 0 : index
    %c0_145 = arith.constant 0 : index
    %c1_146 = arith.constant 1 : index
    %c1_147 = arith.constant 1 : index
    %c0_148 = arith.constant 0 : index
    %129 = vector.load %arg1[%c0_144, %c0_145, %c1_146, %c1_147, %c0_148] : memref<1x8x11x11x8xf32, #tpu.memory_space<vmem>>, vector<1x2x8x8x8xf32>
    %130 = vector.shape_cast %129 : vector<1x2x8x8x8xf32> to vector<2x8x8x8xf32>
    %131 = vector.shape_cast %130 : vector<2x8x8x8xf32> to vector<128x8xf32>
    %132 = arith.truncf %131 : vector<128x8xf32> to vector<128x8xbf16>
    %c0_149 = arith.constant 0 : index
    %c16 = arith.constant 16 : index
    %c0_150 = arith.constant 0 : index
    %c0_151 = arith.constant 0 : index
    %133 = vector.load %arg2[%c0_149, %c16, %c0_150, %c0_151] : memref<1x49x8x64xbf16, #tpu.memory_space<vmem>>, vector<1x1x8x64xbf16>
    %134 = vector.shape_cast %133 : vector<1x1x8x64xbf16> to vector<8x64xbf16>
    %cst_152 = arith.constant dense<0.000000e+00> : vector<128x64xf32>
    %135 = tpu.matmul %132, %134, %cst_152 {dimension_numbers = #tpu.dot_dimension_numbers<[1], [0], [0], [1], [0, 0, 1, 1], [], []>} : vector<128x8xbf16>, vector<8x64xbf16>, vector<128x64xf32> -> vector<128x64xf32>
    %136 = arith.addf %128, %135 : vector<128x64xf32>
    %c0_153 = arith.constant 0 : index
    %c2_154 = arith.constant 2 : index
    %c1_155 = arith.constant 1 : index
    %c1_156 = arith.constant 1 : index
    %c0_157 = arith.constant 0 : index
    %137 = vector.load %arg1[%c0_153, %c2_154, %c1_155, %c1_156, %c0_157] : memref<1x8x11x11x8xf32, #tpu.memory_space<vmem>>, vector<1x2x8x8x8xf32>
    %138 = vector.shape_cast %137 : vector<1x2x8x8x8xf32> to vector<2x8x8x8xf32>
    %139 = vector.shape_cast %138 : vector<2x8x8x8xf32> to vector<128x8xf32>
    %140 = arith.truncf %139 : vector<128x8xf32> to vector<128x8xbf16>
    %c0_158 = arith.constant 0 : index
    %c17 = arith.constant 17 : index
    %c0_159 = arith.constant 0 : index
    %c0_160 = arith.constant 0 : index
    %141 = vector.load %arg2[%c0_158, %c17, %c0_159, %c0_160] : memref<1x49x8x64xbf16, #tpu.memory_space<vmem>>, vector<1x1x8x64xbf16>
    %142 = vector.shape_cast %141 : vector<1x1x8x64xbf16> to vector<8x64xbf16>
    %cst_161 = arith.constant dense<0.000000e+00> : vector<128x64xf32>
    %143 = tpu.matmul %140, %142, %cst_161 {dimension_numbers = #tpu.dot_dimension_numbers<[1], [0], [0], [1], [0, 0, 1, 1], [], []>} : vector<128x8xbf16>, vector<8x64xbf16>, vector<128x64xf32> -> vector<128x64xf32>
    %144 = arith.addf %136, %143 : vector<128x64xf32>
    %c0_162 = arith.constant 0 : index
    %c0_163 = arith.constant 0 : index
    %c1_164 = arith.constant 1 : index
    %c2_165 = arith.constant 2 : index
    %c0_166 = arith.constant 0 : index
    %145 = vector.load %arg1[%c0_162, %c0_163, %c1_164, %c2_165, %c0_166] : memref<1x8x11x11x8xf32, #tpu.memory_space<vmem>>, vector<1x2x8x8x8xf32>
    %146 = vector.shape_cast %145 : vector<1x2x8x8x8xf32> to vector<2x8x8x8xf32>
    %147 = vector.shape_cast %146 : vector<2x8x8x8xf32> to vector<128x8xf32>
    %148 = arith.truncf %147 : vector<128x8xf32> to vector<128x8xbf16>
    %c0_167 = arith.constant 0 : index
    %c18 = arith.constant 18 : index
    %c0_168 = arith.constant 0 : index
    %c0_169 = arith.constant 0 : index
    %149 = vector.load %arg2[%c0_167, %c18, %c0_168, %c0_169] : memref<1x49x8x64xbf16, #tpu.memory_space<vmem>>, vector<1x1x8x64xbf16>
    %150 = vector.shape_cast %149 : vector<1x1x8x64xbf16> to vector<8x64xbf16>
    %cst_170 = arith.constant dense<0.000000e+00> : vector<128x64xf32>
    %151 = tpu.matmul %148, %150, %cst_170 {dimension_numbers = #tpu.dot_dimension_numbers<[1], [0], [0], [1], [0, 0, 1, 1], [], []>} : vector<128x8xbf16>, vector<8x64xbf16>, vector<128x64xf32> -> vector<128x64xf32>
    %152 = arith.addf %144, %151 : vector<128x64xf32>
    %c0_171 = arith.constant 0 : index
    %c2_172 = arith.constant 2 : index
    %c1_173 = arith.constant 1 : index
    %c2_174 = arith.constant 2 : index
    %c0_175 = arith.constant 0 : index
    %153 = vector.load %arg1[%c0_171, %c2_172, %c1_173, %c2_174, %c0_175] : memref<1x8x11x11x8xf32, #tpu.memory_space<vmem>>, vector<1x2x8x8x8xf32>
    %154 = vector.shape_cast %153 : vector<1x2x8x8x8xf32> to vector<2x8x8x8xf32>
    %155 = vector.shape_cast %154 : vector<2x8x8x8xf32> to vector<128x8xf32>
    %156 = arith.truncf %155 : vector<128x8xf32> to vector<128x8xbf16>
    %c0_176 = arith.constant 0 : index
    %c19 = arith.constant 19 : index
    %c0_177 = arith.constant 0 : index
    %c0_178 = arith.constant 0 : index
    %157 = vector.load %arg2[%c0_176, %c19, %c0_177, %c0_178] : memref<1x49x8x64xbf16, #tpu.memory_space<vmem>>, vector<1x1x8x64xbf16>
    %158 = vector.shape_cast %157 : vector<1x1x8x64xbf16> to vector<8x64xbf16>
    %cst_179 = arith.constant dense<0.000000e+00> : vector<128x64xf32>
    %159 = tpu.matmul %156, %158, %cst_179 {dimension_numbers = #tpu.dot_dimension_numbers<[1], [0], [0], [1], [0, 0, 1, 1], [], []>} : vector<128x8xbf16>, vector<8x64xbf16>, vector<128x64xf32> -> vector<128x64xf32>
    %160 = arith.addf %152, %159 : vector<128x64xf32>
    %c0_180 = arith.constant 0 : index
    %c0_181 = arith.constant 0 : index
    %c1_182 = arith.constant 1 : index
    %c3_183 = arith.constant 3 : index
    %c0_184 = arith.constant 0 : index
    %161 = vector.load %arg1[%c0_180, %c0_181, %c1_182, %c3_183, %c0_184] : memref<1x8x11x11x8xf32, #tpu.memory_space<vmem>>, vector<1x2x8x8x8xf32>
    %162 = vector.shape_cast %161 : vector<1x2x8x8x8xf32> to vector<2x8x8x8xf32>
    %163 = vector.shape_cast %162 : vector<2x8x8x8xf32> to vector<128x8xf32>
    %164 = arith.truncf %163 : vector<128x8xf32> to vector<128x8xbf16>
    %c0_185 = arith.constant 0 : index
    %c20 = arith.constant 20 : index
    %c0_186 = arith.constant 0 : index
    %c0_187 = arith.constant 0 : index
    %165 = vector.load %arg2[%c0_185, %c20, %c0_186, %c0_187] : memref<1x49x8x64xbf16, #tpu.memory_space<vmem>>, vector<1x1x8x64xbf16>
    %166 = vector.shape_cast %165 : vector<1x1x8x64xbf16> to vector<8x64xbf16>
    %cst_188 = arith.constant dense<0.000000e+00> : vector<128x64xf32>
    %167 = tpu.matmul %164, %166, %cst_188 {dimension_numbers = #tpu.dot_dimension_numbers<[1], [0], [0], [1], [0, 0, 1, 1], [], []>} : vector<128x8xbf16>, vector<8x64xbf16>, vector<128x64xf32> -> vector<128x64xf32>
    %168 = arith.addf %160, %167 : vector<128x64xf32>
    %c0_189 = arith.constant 0 : index
    %c4_190 = arith.constant 4 : index
    %c1_191 = arith.constant 1 : index
    %c0_192 = arith.constant 0 : index
    %c0_193 = arith.constant 0 : index
    %169 = vector.load %arg1[%c0_189, %c4_190, %c1_191, %c0_192, %c0_193] : memref<1x8x11x11x8xf32, #tpu.memory_space<vmem>>, vector<1x2x8x8x8xf32>
    %170 = vector.shape_cast %169 : vector<1x2x8x8x8xf32> to vector<2x8x8x8xf32>
    %171 = vector.shape_cast %170 : vector<2x8x8x8xf32> to vector<128x8xf32>
    %172 = arith.truncf %171 : vector<128x8xf32> to vector<128x8xbf16>
    %c0_194 = arith.constant 0 : index
    %c21 = arith.constant 21 : index
    %c0_195 = arith.constant 0 : index
    %c0_196 = arith.constant 0 : index
    %173 = vector.load %arg2[%c0_194, %c21, %c0_195, %c0_196] : memref<1x49x8x64xbf16, #tpu.memory_space<vmem>>, vector<1x1x8x64xbf16>
    %174 = vector.shape_cast %173 : vector<1x1x8x64xbf16> to vector<8x64xbf16>
    %cst_197 = arith.constant dense<0.000000e+00> : vector<128x64xf32>
    %175 = tpu.matmul %172, %174, %cst_197 {dimension_numbers = #tpu.dot_dimension_numbers<[1], [0], [0], [1], [0, 0, 1, 1], [], []>} : vector<128x8xbf16>, vector<8x64xbf16>, vector<128x64xf32> -> vector<128x64xf32>
    %176 = arith.addf %168, %175 : vector<128x64xf32>
    %c0_198 = arith.constant 0 : index
    %c6_199 = arith.constant 6 : index
    %c1_200 = arith.constant 1 : index
    %c0_201 = arith.constant 0 : index
    %c0_202 = arith.constant 0 : index
    %177 = vector.load %arg1[%c0_198, %c6_199, %c1_200, %c0_201, %c0_202] : memref<1x8x11x11x8xf32, #tpu.memory_space<vmem>>, vector<1x2x8x8x8xf32>
    %178 = vector.shape_cast %177 : vector<1x2x8x8x8xf32> to vector<2x8x8x8xf32>
    %179 = vector.shape_cast %178 : vector<2x8x8x8xf32> to vector<128x8xf32>
    %180 = arith.truncf %179 : vector<128x8xf32> to vector<128x8xbf16>
    %c0_203 = arith.constant 0 : index
    %c22 = arith.constant 22 : index
    %c0_204 = arith.constant 0 : index
    %c0_205 = arith.constant 0 : index
    %181 = vector.load %arg2[%c0_203, %c22, %c0_204, %c0_205] : memref<1x49x8x64xbf16, #tpu.memory_space<vmem>>, vector<1x1x8x64xbf16>
    %182 = vector.shape_cast %181 : vector<1x1x8x64xbf16> to vector<8x64xbf16>
    %cst_206 = arith.constant dense<0.000000e+00> : vector<128x64xf32>
    %183 = tpu.matmul %180, %182, %cst_206 {dimension_numbers = #tpu.dot_dimension_numbers<[1], [0], [0], [1], [0, 0, 1, 1], [], []>} : vector<128x8xbf16>, vector<8x64xbf16>, vector<128x64xf32> -> vector<128x64xf32>
    %184 = arith.addf %176, %183 : vector<128x64xf32>
    %c0_207 = arith.constant 0 : index
    %c4_208 = arith.constant 4 : index
    %c1_209 = arith.constant 1 : index
    %c1_210 = arith.constant 1 : index
    %c0_211 = arith.constant 0 : index
    %185 = vector.load %arg1[%c0_207, %c4_208, %c1_209, %c1_210, %c0_211] : memref<1x8x11x11x8xf32, #tpu.memory_space<vmem>>, vector<1x2x8x8x8xf32>
    %186 = vector.shape_cast %185 : vector<1x2x8x8x8xf32> to vector<2x8x8x8xf32>
    %187 = vector.shape_cast %186 : vector<2x8x8x8xf32> to vector<128x8xf32>
    %188 = arith.truncf %187 : vector<128x8xf32> to vector<128x8xbf16>
    %c0_212 = arith.constant 0 : index
    %c23 = arith.constant 23 : index
    %c0_213 = arith.constant 0 : index
    %c0_214 = arith.constant 0 : index
    %189 = vector.load %arg2[%c0_212, %c23, %c0_213, %c0_214] : memref<1x49x8x64xbf16, #tpu.memory_space<vmem>>, vector<1x1x8x64xbf16>
    %190 = vector.shape_cast %189 : vector<1x1x8x64xbf16> to vector<8x64xbf16>
    %cst_215 = arith.constant dense<0.000000e+00> : vector<128x64xf32>
    %191 = tpu.matmul %188, %190, %cst_215 {dimension_numbers = #tpu.dot_dimension_numbers<[1], [0], [0], [1], [0, 0, 1, 1], [], []>} : vector<128x8xbf16>, vector<8x64xbf16>, vector<128x64xf32> -> vector<128x64xf32>
    %192 = arith.addf %184, %191 : vector<128x64xf32>
    %c0_216 = arith.constant 0 : index
    %c6_217 = arith.constant 6 : index
    %c1_218 = arith.constant 1 : index
    %c1_219 = arith.constant 1 : index
    %c0_220 = arith.constant 0 : index
    %193 = vector.load %arg1[%c0_216, %c6_217, %c1_218, %c1_219, %c0_220] : memref<1x8x11x11x8xf32, #tpu.memory_space<vmem>>, vector<1x2x8x8x8xf32>
    %194 = vector.shape_cast %193 : vector<1x2x8x8x8xf32> to vector<2x8x8x8xf32>
    %195 = vector.shape_cast %194 : vector<2x8x8x8xf32> to vector<128x8xf32>
    %196 = arith.truncf %195 : vector<128x8xf32> to vector<128x8xbf16>
    %c0_221 = arith.constant 0 : index
    %c24 = arith.constant 24 : index
    %c0_222 = arith.constant 0 : index
    %c0_223 = arith.constant 0 : index
    %197 = vector.load %arg2[%c0_221, %c24, %c0_222, %c0_223] : memref<1x49x8x64xbf16, #tpu.memory_space<vmem>>, vector<1x1x8x64xbf16>
    %198 = vector.shape_cast %197 : vector<1x1x8x64xbf16> to vector<8x64xbf16>
    %cst_224 = arith.constant dense<0.000000e+00> : vector<128x64xf32>
    %199 = tpu.matmul %196, %198, %cst_224 {dimension_numbers = #tpu.dot_dimension_numbers<[1], [0], [0], [1], [0, 0, 1, 1], [], []>} : vector<128x8xbf16>, vector<8x64xbf16>, vector<128x64xf32> -> vector<128x64xf32>
    %200 = arith.addf %192, %199 : vector<128x64xf32>
    %c0_225 = arith.constant 0 : index
    %c4_226 = arith.constant 4 : index
    %c1_227 = arith.constant 1 : index
    %c2_228 = arith.constant 2 : index
    %c0_229 = arith.constant 0 : index
    %201 = vector.load %arg1[%c0_225, %c4_226, %c1_227, %c2_228, %c0_229] : memref<1x8x11x11x8xf32, #tpu.memory_space<vmem>>, vector<1x2x8x8x8xf32>
    %202 = vector.shape_cast %201 : vector<1x2x8x8x8xf32> to vector<2x8x8x8xf32>
    %203 = vector.shape_cast %202 : vector<2x8x8x8xf32> to vector<128x8xf32>
    %204 = arith.truncf %203 : vector<128x8xf32> to vector<128x8xbf16>
    %c0_230 = arith.constant 0 : index
    %c25 = arith.constant 25 : index
    %c0_231 = arith.constant 0 : index
    %c0_232 = arith.constant 0 : index
    %205 = vector.load %arg2[%c0_230, %c25, %c0_231, %c0_232] : memref<1x49x8x64xbf16, #tpu.memory_space<vmem>>, vector<1x1x8x64xbf16>
    %206 = vector.shape_cast %205 : vector<1x1x8x64xbf16> to vector<8x64xbf16>
    %cst_233 = arith.constant dense<0.000000e+00> : vector<128x64xf32>
    %207 = tpu.matmul %204, %206, %cst_233 {dimension_numbers = #tpu.dot_dimension_numbers<[1], [0], [0], [1], [0, 0, 1, 1], [], []>} : vector<128x8xbf16>, vector<8x64xbf16>, vector<128x64xf32> -> vector<128x64xf32>
    %208 = arith.addf %200, %207 : vector<128x64xf32>
    %c0_234 = arith.constant 0 : index
    %c6_235 = arith.constant 6 : index
    %c1_236 = arith.constant 1 : index
    %c2_237 = arith.constant 2 : index
    %c0_238 = arith.constant 0 : index
    %209 = vector.load %arg1[%c0_234, %c6_235, %c1_236, %c2_237, %c0_238] : memref<1x8x11x11x8xf32, #tpu.memory_space<vmem>>, vector<1x2x8x8x8xf32>
    %210 = vector.shape_cast %209 : vector<1x2x8x8x8xf32> to vector<2x8x8x8xf32>
    %211 = vector.shape_cast %210 : vector<2x8x8x8xf32> to vector<128x8xf32>
    %212 = arith.truncf %211 : vector<128x8xf32> to vector<128x8xbf16>
    %c0_239 = arith.constant 0 : index
    %c26 = arith.constant 26 : index
    %c0_240 = arith.constant 0 : index
    %c0_241 = arith.constant 0 : index
    %213 = vector.load %arg2[%c0_239, %c26, %c0_240, %c0_241] : memref<1x49x8x64xbf16, #tpu.memory_space<vmem>>, vector<1x1x8x64xbf16>
    %214 = vector.shape_cast %213 : vector<1x1x8x64xbf16> to vector<8x64xbf16>
    %cst_242 = arith.constant dense<0.000000e+00> : vector<128x64xf32>
    %215 = tpu.matmul %212, %214, %cst_242 {dimension_numbers = #tpu.dot_dimension_numbers<[1], [0], [0], [1], [0, 0, 1, 1], [], []>} : vector<128x8xbf16>, vector<8x64xbf16>, vector<128x64xf32> -> vector<128x64xf32>
    %216 = arith.addf %208, %215 : vector<128x64xf32>
    %c0_243 = arith.constant 0 : index
    %c4_244 = arith.constant 4 : index
    %c1_245 = arith.constant 1 : index
    %c3_246 = arith.constant 3 : index
    %c0_247 = arith.constant 0 : index
    %217 = vector.load %arg1[%c0_243, %c4_244, %c1_245, %c3_246, %c0_247] : memref<1x8x11x11x8xf32, #tpu.memory_space<vmem>>, vector<1x2x8x8x8xf32>
    %218 = vector.shape_cast %217 : vector<1x2x8x8x8xf32> to vector<2x8x8x8xf32>
    %219 = vector.shape_cast %218 : vector<2x8x8x8xf32> to vector<128x8xf32>
    %220 = arith.truncf %219 : vector<128x8xf32> to vector<128x8xbf16>
    %c0_248 = arith.constant 0 : index
    %c27 = arith.constant 27 : index
    %c0_249 = arith.constant 0 : index
    %c0_250 = arith.constant 0 : index
    %221 = vector.load %arg2[%c0_248, %c27, %c0_249, %c0_250] : memref<1x49x8x64xbf16, #tpu.memory_space<vmem>>, vector<1x1x8x64xbf16>
    %222 = vector.shape_cast %221 : vector<1x1x8x64xbf16> to vector<8x64xbf16>
    %cst_251 = arith.constant dense<0.000000e+00> : vector<128x64xf32>
    %223 = tpu.matmul %220, %222, %cst_251 {dimension_numbers = #tpu.dot_dimension_numbers<[1], [0], [0], [1], [0, 0, 1, 1], [], []>} : vector<128x8xbf16>, vector<8x64xbf16>, vector<128x64xf32> -> vector<128x64xf32>
    %224 = arith.addf %216, %223 : vector<128x64xf32>
    %c0_252 = arith.constant 0 : index
    %c0_253 = arith.constant 0 : index
    %c2_254 = arith.constant 2 : index
    %c0_255 = arith.constant 0 : index
    %c0_256 = arith.constant 0 : index
    %225 = vector.load %arg1[%c0_252, %c0_253, %c2_254, %c0_255, %c0_256] : memref<1x8x11x11x8xf32, #tpu.memory_space<vmem>>, vector<1x2x8x8x8xf32>
    %226 = vector.shape_cast %225 : vector<1x2x8x8x8xf32> to vector<2x8x8x8xf32>
    %227 = vector.shape_cast %226 : vector<2x8x8x8xf32> to vector<128x8xf32>
    %228 = arith.truncf %227 : vector<128x8xf32> to vector<128x8xbf16>
    %c0_257 = arith.constant 0 : index
    %c28 = arith.constant 28 : index
    %c0_258 = arith.constant 0 : index
    %c0_259 = arith.constant 0 : index
    %229 = vector.load %arg2[%c0_257, %c28, %c0_258, %c0_259] : memref<1x49x8x64xbf16, #tpu.memory_space<vmem>>, vector<1x1x8x64xbf16>
    %230 = vector.shape_cast %229 : vector<1x1x8x64xbf16> to vector<8x64xbf16>
    %cst_260 = arith.constant dense<0.000000e+00> : vector<128x64xf32>
    %231 = tpu.matmul %228, %230, %cst_260 {dimension_numbers = #tpu.dot_dimension_numbers<[1], [0], [0], [1], [0, 0, 1, 1], [], []>} : vector<128x8xbf16>, vector<8x64xbf16>, vector<128x64xf32> -> vector<128x64xf32>
    %232 = arith.addf %224, %231 : vector<128x64xf32>
    %c0_261 = arith.constant 0 : index
    %c2_262 = arith.constant 2 : index
    %c2_263 = arith.constant 2 : index
    %c0_264 = arith.constant 0 : index
    %c0_265 = arith.constant 0 : index
    %233 = vector.load %arg1[%c0_261, %c2_262, %c2_263, %c0_264, %c0_265] : memref<1x8x11x11x8xf32, #tpu.memory_space<vmem>>, vector<1x2x8x8x8xf32>
    %234 = vector.shape_cast %233 : vector<1x2x8x8x8xf32> to vector<2x8x8x8xf32>
    %235 = vector.shape_cast %234 : vector<2x8x8x8xf32> to vector<128x8xf32>
    %236 = arith.truncf %235 : vector<128x8xf32> to vector<128x8xbf16>
    %c0_266 = arith.constant 0 : index
    %c29 = arith.constant 29 : index
    %c0_267 = arith.constant 0 : index
    %c0_268 = arith.constant 0 : index
    %237 = vector.load %arg2[%c0_266, %c29, %c0_267, %c0_268] : memref<1x49x8x64xbf16, #tpu.memory_space<vmem>>, vector<1x1x8x64xbf16>
    %238 = vector.shape_cast %237 : vector<1x1x8x64xbf16> to vector<8x64xbf16>
    %cst_269 = arith.constant dense<0.000000e+00> : vector<128x64xf32>
    %239 = tpu.matmul %236, %238, %cst_269 {dimension_numbers = #tpu.dot_dimension_numbers<[1], [0], [0], [1], [0, 0, 1, 1], [], []>} : vector<128x8xbf16>, vector<8x64xbf16>, vector<128x64xf32> -> vector<128x64xf32>
    %240 = arith.addf %232, %239 : vector<128x64xf32>
    %c0_270 = arith.constant 0 : index
    %c0_271 = arith.constant 0 : index
    %c2_272 = arith.constant 2 : index
    %c1_273 = arith.constant 1 : index
    %c0_274 = arith.constant 0 : index
    %241 = vector.load %arg1[%c0_270, %c0_271, %c2_272, %c1_273, %c0_274] : memref<1x8x11x11x8xf32, #tpu.memory_space<vmem>>, vector<1x2x8x8x8xf32>
    %242 = vector.shape_cast %241 : vector<1x2x8x8x8xf32> to vector<2x8x8x8xf32>
    %243 = vector.shape_cast %242 : vector<2x8x8x8xf32> to vector<128x8xf32>
    %244 = arith.truncf %243 : vector<128x8xf32> to vector<128x8xbf16>
    %c0_275 = arith.constant 0 : index
    %c30 = arith.constant 30 : index
    %c0_276 = arith.constant 0 : index
    %c0_277 = arith.constant 0 : index
    %245 = vector.load %arg2[%c0_275, %c30, %c0_276, %c0_277] : memref<1x49x8x64xbf16, #tpu.memory_space<vmem>>, vector<1x1x8x64xbf16>
    %246 = vector.shape_cast %245 : vector<1x1x8x64xbf16> to vector<8x64xbf16>
    %cst_278 = arith.constant dense<0.000000e+00> : vector<128x64xf32>
    %247 = tpu.matmul %244, %246, %cst_278 {dimension_numbers = #tpu.dot_dimension_numbers<[1], [0], [0], [1], [0, 0, 1, 1], [], []>} : vector<128x8xbf16>, vector<8x64xbf16>, vector<128x64xf32> -> vector<128x64xf32>
    %248 = arith.addf %240, %247 : vector<128x64xf32>
    %c0_279 = arith.constant 0 : index
    %c2_280 = arith.constant 2 : index
    %c2_281 = arith.constant 2 : index
    %c1_282 = arith.constant 1 : index
    %c0_283 = arith.constant 0 : index
    %249 = vector.load %arg1[%c0_279, %c2_280, %c2_281, %c1_282, %c0_283] : memref<1x8x11x11x8xf32, #tpu.memory_space<vmem>>, vector<1x2x8x8x8xf32>
    %250 = vector.shape_cast %249 : vector<1x2x8x8x8xf32> to vector<2x8x8x8xf32>
    %251 = vector.shape_cast %250 : vector<2x8x8x8xf32> to vector<128x8xf32>
    %252 = arith.truncf %251 : vector<128x8xf32> to vector<128x8xbf16>
    %c0_284 = arith.constant 0 : index
    %c31 = arith.constant 31 : index
    %c0_285 = arith.constant 0 : index
    %c0_286 = arith.constant 0 : index
    %253 = vector.load %arg2[%c0_284, %c31, %c0_285, %c0_286] : memref<1x49x8x64xbf16, #tpu.memory_space<vmem>>, vector<1x1x8x64xbf16>
    %254 = vector.shape_cast %253 : vector<1x1x8x64xbf16> to vector<8x64xbf16>
    %cst_287 = arith.constant dense<0.000000e+00> : vector<128x64xf32>
    %255 = tpu.matmul %252, %254, %cst_287 {dimension_numbers = #tpu.dot_dimension_numbers<[1], [0], [0], [1], [0, 0, 1, 1], [], []>} : vector<128x8xbf16>, vector<8x64xbf16>, vector<128x64xf32> -> vector<128x64xf32>
    %256 = arith.addf %248, %255 : vector<128x64xf32>
    %c0_288 = arith.constant 0 : index
    %c0_289 = arith.constant 0 : index
    %c2_290 = arith.constant 2 : index
    %c2_291 = arith.constant 2 : index
    %c0_292 = arith.constant 0 : index
    %257 = vector.load %arg1[%c0_288, %c0_289, %c2_290, %c2_291, %c0_292] : memref<1x8x11x11x8xf32, #tpu.memory_space<vmem>>, vector<1x2x8x8x8xf32>
    %258 = vector.shape_cast %257 : vector<1x2x8x8x8xf32> to vector<2x8x8x8xf32>
    %259 = vector.shape_cast %258 : vector<2x8x8x8xf32> to vector<128x8xf32>
    %260 = arith.truncf %259 : vector<128x8xf32> to vector<128x8xbf16>
    %c0_293 = arith.constant 0 : index
    %c32 = arith.constant 32 : index
    %c0_294 = arith.constant 0 : index
    %c0_295 = arith.constant 0 : index
    %261 = vector.load %arg2[%c0_293, %c32, %c0_294, %c0_295] : memref<1x49x8x64xbf16, #tpu.memory_space<vmem>>, vector<1x1x8x64xbf16>
    %262 = vector.shape_cast %261 : vector<1x1x8x64xbf16> to vector<8x64xbf16>
    %cst_296 = arith.constant dense<0.000000e+00> : vector<128x64xf32>
    %263 = tpu.matmul %260, %262, %cst_296 {dimension_numbers = #tpu.dot_dimension_numbers<[1], [0], [0], [1], [0, 0, 1, 1], [], []>} : vector<128x8xbf16>, vector<8x64xbf16>, vector<128x64xf32> -> vector<128x64xf32>
    %264 = arith.addf %256, %263 : vector<128x64xf32>
    %c0_297 = arith.constant 0 : index
    %c2_298 = arith.constant 2 : index
    %c2_299 = arith.constant 2 : index
    %c2_300 = arith.constant 2 : index
    %c0_301 = arith.constant 0 : index
    %265 = vector.load %arg1[%c0_297, %c2_298, %c2_299, %c2_300, %c0_301] : memref<1x8x11x11x8xf32, #tpu.memory_space<vmem>>, vector<1x2x8x8x8xf32>
    %266 = vector.shape_cast %265 : vector<1x2x8x8x8xf32> to vector<2x8x8x8xf32>
    %267 = vector.shape_cast %266 : vector<2x8x8x8xf32> to vector<128x8xf32>
    %268 = arith.truncf %267 : vector<128x8xf32> to vector<128x8xbf16>
    %c0_302 = arith.constant 0 : index
    %c33 = arith.constant 33 : index
    %c0_303 = arith.constant 0 : index
    %c0_304 = arith.constant 0 : index
    %269 = vector.load %arg2[%c0_302, %c33, %c0_303, %c0_304] : memref<1x49x8x64xbf16, #tpu.memory_space<vmem>>, vector<1x1x8x64xbf16>
    %270 = vector.shape_cast %269 : vector<1x1x8x64xbf16> to vector<8x64xbf16>
    %cst_305 = arith.constant dense<0.000000e+00> : vector<128x64xf32>
    %271 = tpu.matmul %268, %270, %cst_305 {dimension_numbers = #tpu.dot_dimension_numbers<[1], [0], [0], [1], [0, 0, 1, 1], [], []>} : vector<128x8xbf16>, vector<8x64xbf16>, vector<128x64xf32> -> vector<128x64xf32>
    %272 = arith.addf %264, %271 : vector<128x64xf32>
    %c0_306 = arith.constant 0 : index
    %c0_307 = arith.constant 0 : index
    %c2_308 = arith.constant 2 : index
    %c3_309 = arith.constant 3 : index
    %c0_310 = arith.constant 0 : index
    %273 = vector.load %arg1[%c0_306, %c0_307, %c2_308, %c3_309, %c0_310] : memref<1x8x11x11x8xf32, #tpu.memory_space<vmem>>, vector<1x2x8x8x8xf32>
    %274 = vector.shape_cast %273 : vector<1x2x8x8x8xf32> to vector<2x8x8x8xf32>
    %275 = vector.shape_cast %274 : vector<2x8x8x8xf32> to vector<128x8xf32>
    %276 = arith.truncf %275 : vector<128x8xf32> to vector<128x8xbf16>
    %c0_311 = arith.constant 0 : index
    %c34 = arith.constant 34 : index
    %c0_312 = arith.constant 0 : index
    %c0_313 = arith.constant 0 : index
    %277 = vector.load %arg2[%c0_311, %c34, %c0_312, %c0_313] : memref<1x49x8x64xbf16, #tpu.memory_space<vmem>>, vector<1x1x8x64xbf16>
    %278 = vector.shape_cast %277 : vector<1x1x8x64xbf16> to vector<8x64xbf16>
    %cst_314 = arith.constant dense<0.000000e+00> : vector<128x64xf32>
    %279 = tpu.matmul %276, %278, %cst_314 {dimension_numbers = #tpu.dot_dimension_numbers<[1], [0], [0], [1], [0, 0, 1, 1], [], []>} : vector<128x8xbf16>, vector<8x64xbf16>, vector<128x64xf32> -> vector<128x64xf32>
    %280 = arith.addf %272, %279 : vector<128x64xf32>
    %c0_315 = arith.constant 0 : index
    %c4_316 = arith.constant 4 : index
    %c2_317 = arith.constant 2 : index
    %c0_318 = arith.constant 0 : index
    %c0_319 = arith.constant 0 : index
    %281 = vector.load %arg1[%c0_315, %c4_316, %c2_317, %c0_318, %c0_319] : memref<1x8x11x11x8xf32, #tpu.memory_space<vmem>>, vector<1x2x8x8x8xf32>
    %282 = vector.shape_cast %281 : vector<1x2x8x8x8xf32> to vector<2x8x8x8xf32>
    %283 = vector.shape_cast %282 : vector<2x8x8x8xf32> to vector<128x8xf32>
    %284 = arith.truncf %283 : vector<128x8xf32> to vector<128x8xbf16>
    %c0_320 = arith.constant 0 : index
    %c35 = arith.constant 35 : index
    %c0_321 = arith.constant 0 : index
    %c0_322 = arith.constant 0 : index
    %285 = vector.load %arg2[%c0_320, %c35, %c0_321, %c0_322] : memref<1x49x8x64xbf16, #tpu.memory_space<vmem>>, vector<1x1x8x64xbf16>
    %286 = vector.shape_cast %285 : vector<1x1x8x64xbf16> to vector<8x64xbf16>
    %cst_323 = arith.constant dense<0.000000e+00> : vector<128x64xf32>
    %287 = tpu.matmul %284, %286, %cst_323 {dimension_numbers = #tpu.dot_dimension_numbers<[1], [0], [0], [1], [0, 0, 1, 1], [], []>} : vector<128x8xbf16>, vector<8x64xbf16>, vector<128x64xf32> -> vector<128x64xf32>
    %288 = arith.addf %280, %287 : vector<128x64xf32>
    %c0_324 = arith.constant 0 : index
    %c6_325 = arith.constant 6 : index
    %c2_326 = arith.constant 2 : index
    %c0_327 = arith.constant 0 : index
    %c0_328 = arith.constant 0 : index
    %289 = vector.load %arg1[%c0_324, %c6_325, %c2_326, %c0_327, %c0_328] : memref<1x8x11x11x8xf32, #tpu.memory_space<vmem>>, vector<1x2x8x8x8xf32>
    %290 = vector.shape_cast %289 : vector<1x2x8x8x8xf32> to vector<2x8x8x8xf32>
    %291 = vector.shape_cast %290 : vector<2x8x8x8xf32> to vector<128x8xf32>
    %292 = arith.truncf %291 : vector<128x8xf32> to vector<128x8xbf16>
    %c0_329 = arith.constant 0 : index
    %c36 = arith.constant 36 : index
    %c0_330 = arith.constant 0 : index
    %c0_331 = arith.constant 0 : index
    %293 = vector.load %arg2[%c0_329, %c36, %c0_330, %c0_331] : memref<1x49x8x64xbf16, #tpu.memory_space<vmem>>, vector<1x1x8x64xbf16>
    %294 = vector.shape_cast %293 : vector<1x1x8x64xbf16> to vector<8x64xbf16>
    %cst_332 = arith.constant dense<0.000000e+00> : vector<128x64xf32>
    %295 = tpu.matmul %292, %294, %cst_332 {dimension_numbers = #tpu.dot_dimension_numbers<[1], [0], [0], [1], [0, 0, 1, 1], [], []>} : vector<128x8xbf16>, vector<8x64xbf16>, vector<128x64xf32> -> vector<128x64xf32>
    %296 = arith.addf %288, %295 : vector<128x64xf32>
    %c0_333 = arith.constant 0 : index
    %c4_334 = arith.constant 4 : index
    %c2_335 = arith.constant 2 : index
    %c1_336 = arith.constant 1 : index
    %c0_337 = arith.constant 0 : index
    %297 = vector.load %arg1[%c0_333, %c4_334, %c2_335, %c1_336, %c0_337] : memref<1x8x11x11x8xf32, #tpu.memory_space<vmem>>, vector<1x2x8x8x8xf32>
    %298 = vector.shape_cast %297 : vector<1x2x8x8x8xf32> to vector<2x8x8x8xf32>
    %299 = vector.shape_cast %298 : vector<2x8x8x8xf32> to vector<128x8xf32>
    %300 = arith.truncf %299 : vector<128x8xf32> to vector<128x8xbf16>
    %c0_338 = arith.constant 0 : index
    %c37 = arith.constant 37 : index
    %c0_339 = arith.constant 0 : index
    %c0_340 = arith.constant 0 : index
    %301 = vector.load %arg2[%c0_338, %c37, %c0_339, %c0_340] : memref<1x49x8x64xbf16, #tpu.memory_space<vmem>>, vector<1x1x8x64xbf16>
    %302 = vector.shape_cast %301 : vector<1x1x8x64xbf16> to vector<8x64xbf16>
    %cst_341 = arith.constant dense<0.000000e+00> : vector<128x64xf32>
    %303 = tpu.matmul %300, %302, %cst_341 {dimension_numbers = #tpu.dot_dimension_numbers<[1], [0], [0], [1], [0, 0, 1, 1], [], []>} : vector<128x8xbf16>, vector<8x64xbf16>, vector<128x64xf32> -> vector<128x64xf32>
    %304 = arith.addf %296, %303 : vector<128x64xf32>
    %c0_342 = arith.constant 0 : index
    %c6_343 = arith.constant 6 : index
    %c2_344 = arith.constant 2 : index
    %c1_345 = arith.constant 1 : index
    %c0_346 = arith.constant 0 : index
    %305 = vector.load %arg1[%c0_342, %c6_343, %c2_344, %c1_345, %c0_346] : memref<1x8x11x11x8xf32, #tpu.memory_space<vmem>>, vector<1x2x8x8x8xf32>
    %306 = vector.shape_cast %305 : vector<1x2x8x8x8xf32> to vector<2x8x8x8xf32>
    %307 = vector.shape_cast %306 : vector<2x8x8x8xf32> to vector<128x8xf32>
    %308 = arith.truncf %307 : vector<128x8xf32> to vector<128x8xbf16>
    %c0_347 = arith.constant 0 : index
    %c38 = arith.constant 38 : index
    %c0_348 = arith.constant 0 : index
    %c0_349 = arith.constant 0 : index
    %309 = vector.load %arg2[%c0_347, %c38, %c0_348, %c0_349] : memref<1x49x8x64xbf16, #tpu.memory_space<vmem>>, vector<1x1x8x64xbf16>
    %310 = vector.shape_cast %309 : vector<1x1x8x64xbf16> to vector<8x64xbf16>
    %cst_350 = arith.constant dense<0.000000e+00> : vector<128x64xf32>
    %311 = tpu.matmul %308, %310, %cst_350 {dimension_numbers = #tpu.dot_dimension_numbers<[1], [0], [0], [1], [0, 0, 1, 1], [], []>} : vector<128x8xbf16>, vector<8x64xbf16>, vector<128x64xf32> -> vector<128x64xf32>
    %312 = arith.addf %304, %311 : vector<128x64xf32>
    %c0_351 = arith.constant 0 : index
    %c4_352 = arith.constant 4 : index
    %c2_353 = arith.constant 2 : index
    %c2_354 = arith.constant 2 : index
    %c0_355 = arith.constant 0 : index
    %313 = vector.load %arg1[%c0_351, %c4_352, %c2_353, %c2_354, %c0_355] : memref<1x8x11x11x8xf32, #tpu.memory_space<vmem>>, vector<1x2x8x8x8xf32>
    %314 = vector.shape_cast %313 : vector<1x2x8x8x8xf32> to vector<2x8x8x8xf32>
    %315 = vector.shape_cast %314 : vector<2x8x8x8xf32> to vector<128x8xf32>
    %316 = arith.truncf %315 : vector<128x8xf32> to vector<128x8xbf16>
    %c0_356 = arith.constant 0 : index
    %c39 = arith.constant 39 : index
    %c0_357 = arith.constant 0 : index
    %c0_358 = arith.constant 0 : index
    %317 = vector.load %arg2[%c0_356, %c39, %c0_357, %c0_358] : memref<1x49x8x64xbf16, #tpu.memory_space<vmem>>, vector<1x1x8x64xbf16>
    %318 = vector.shape_cast %317 : vector<1x1x8x64xbf16> to vector<8x64xbf16>
    %cst_359 = arith.constant dense<0.000000e+00> : vector<128x64xf32>
    %319 = tpu.matmul %316, %318, %cst_359 {dimension_numbers = #tpu.dot_dimension_numbers<[1], [0], [0], [1], [0, 0, 1, 1], [], []>} : vector<128x8xbf16>, vector<8x64xbf16>, vector<128x64xf32> -> vector<128x64xf32>
    %320 = arith.addf %312, %319 : vector<128x64xf32>
    %c0_360 = arith.constant 0 : index
    %c6_361 = arith.constant 6 : index
    %c2_362 = arith.constant 2 : index
    %c2_363 = arith.constant 2 : index
    %c0_364 = arith.constant 0 : index
    %321 = vector.load %arg1[%c0_360, %c6_361, %c2_362, %c2_363, %c0_364] : memref<1x8x11x11x8xf32, #tpu.memory_space<vmem>>, vector<1x2x8x8x8xf32>
    %322 = vector.shape_cast %321 : vector<1x2x8x8x8xf32> to vector<2x8x8x8xf32>
    %323 = vector.shape_cast %322 : vector<2x8x8x8xf32> to vector<128x8xf32>
    %324 = arith.truncf %323 : vector<128x8xf32> to vector<128x8xbf16>
    %c0_365 = arith.constant 0 : index
    %c40 = arith.constant 40 : index
    %c0_366 = arith.constant 0 : index
    %c0_367 = arith.constant 0 : index
    %325 = vector.load %arg2[%c0_365, %c40, %c0_366, %c0_367] : memref<1x49x8x64xbf16, #tpu.memory_space<vmem>>, vector<1x1x8x64xbf16>
    %326 = vector.shape_cast %325 : vector<1x1x8x64xbf16> to vector<8x64xbf16>
    %cst_368 = arith.constant dense<0.000000e+00> : vector<128x64xf32>
    %327 = tpu.matmul %324, %326, %cst_368 {dimension_numbers = #tpu.dot_dimension_numbers<[1], [0], [0], [1], [0, 0, 1, 1], [], []>} : vector<128x8xbf16>, vector<8x64xbf16>, vector<128x64xf32> -> vector<128x64xf32>
    %328 = arith.addf %320, %327 : vector<128x64xf32>
    %c0_369 = arith.constant 0 : index
    %c4_370 = arith.constant 4 : index
    %c2_371 = arith.constant 2 : index
    %c3_372 = arith.constant 3 : index
    %c0_373 = arith.constant 0 : index
    %329 = vector.load %arg1[%c0_369, %c4_370, %c2_371, %c3_372, %c0_373] : memref<1x8x11x11x8xf32, #tpu.memory_space<vmem>>, vector<1x2x8x8x8xf32>
    %330 = vector.shape_cast %329 : vector<1x2x8x8x8xf32> to vector<2x8x8x8xf32>
    %331 = vector.shape_cast %330 : vector<2x8x8x8xf32> to vector<128x8xf32>
    %332 = arith.truncf %331 : vector<128x8xf32> to vector<128x8xbf16>
    %c0_374 = arith.constant 0 : index
    %c41 = arith.constant 41 : index
    %c0_375 = arith.constant 0 : index
    %c0_376 = arith.constant 0 : index
    %333 = vector.load %arg2[%c0_374, %c41, %c0_375, %c0_376] : memref<1x49x8x64xbf16, #tpu.memory_space<vmem>>, vector<1x1x8x64xbf16>
    %334 = vector.shape_cast %333 : vector<1x1x8x64xbf16> to vector<8x64xbf16>
    %cst_377 = arith.constant dense<0.000000e+00> : vector<128x64xf32>
    %335 = tpu.matmul %332, %334, %cst_377 {dimension_numbers = #tpu.dot_dimension_numbers<[1], [0], [0], [1], [0, 0, 1, 1], [], []>} : vector<128x8xbf16>, vector<8x64xbf16>, vector<128x64xf32> -> vector<128x64xf32>
    %336 = arith.addf %328, %335 : vector<128x64xf32>
    %c0_378 = arith.constant 0 : index
    %c0_379 = arith.constant 0 : index
    %c3_380 = arith.constant 3 : index
    %c0_381 = arith.constant 0 : index
    %c0_382 = arith.constant 0 : index
    %337 = vector.load %arg1[%c0_378, %c0_379, %c3_380, %c0_381, %c0_382] : memref<1x8x11x11x8xf32, #tpu.memory_space<vmem>>, vector<1x2x8x8x8xf32>
    %338 = vector.shape_cast %337 : vector<1x2x8x8x8xf32> to vector<2x8x8x8xf32>
    %339 = vector.shape_cast %338 : vector<2x8x8x8xf32> to vector<128x8xf32>
    %340 = arith.truncf %339 : vector<128x8xf32> to vector<128x8xbf16>
    %c0_383 = arith.constant 0 : index
    %c42 = arith.constant 42 : index
    %c0_384 = arith.constant 0 : index
    %c0_385 = arith.constant 0 : index
    %341 = vector.load %arg2[%c0_383, %c42, %c0_384, %c0_385] : memref<1x49x8x64xbf16, #tpu.memory_space<vmem>>, vector<1x1x8x64xbf16>
    %342 = vector.shape_cast %341 : vector<1x1x8x64xbf16> to vector<8x64xbf16>
    %cst_386 = arith.constant dense<0.000000e+00> : vector<128x64xf32>
    %343 = tpu.matmul %340, %342, %cst_386 {dimension_numbers = #tpu.dot_dimension_numbers<[1], [0], [0], [1], [0, 0, 1, 1], [], []>} : vector<128x8xbf16>, vector<8x64xbf16>, vector<128x64xf32> -> vector<128x64xf32>
    %344 = arith.addf %336, %343 : vector<128x64xf32>
    %c0_387 = arith.constant 0 : index
    %c2_388 = arith.constant 2 : index
    %c3_389 = arith.constant 3 : index
    %c0_390 = arith.constant 0 : index
    %c0_391 = arith.constant 0 : index
    %345 = vector.load %arg1[%c0_387, %c2_388, %c3_389, %c0_390, %c0_391] : memref<1x8x11x11x8xf32, #tpu.memory_space<vmem>>, vector<1x2x8x8x8xf32>
    %346 = vector.shape_cast %345 : vector<1x2x8x8x8xf32> to vector<2x8x8x8xf32>
    %347 = vector.shape_cast %346 : vector<2x8x8x8xf32> to vector<128x8xf32>
    %348 = arith.truncf %347 : vector<128x8xf32> to vector<128x8xbf16>
    %c0_392 = arith.constant 0 : index
    %c43 = arith.constant 43 : index
    %c0_393 = arith.constant 0 : index
    %c0_394 = arith.constant 0 : index
    %349 = vector.load %arg2[%c0_392, %c43, %c0_393, %c0_394] : memref<1x49x8x64xbf16, #tpu.memory_space<vmem>>, vector<1x1x8x64xbf16>
    %350 = vector.shape_cast %349 : vector<1x1x8x64xbf16> to vector<8x64xbf16>
    %cst_395 = arith.constant dense<0.000000e+00> : vector<128x64xf32>
    %351 = tpu.matmul %348, %350, %cst_395 {dimension_numbers = #tpu.dot_dimension_numbers<[1], [0], [0], [1], [0, 0, 1, 1], [], []>} : vector<128x8xbf16>, vector<8x64xbf16>, vector<128x64xf32> -> vector<128x64xf32>
    %352 = arith.addf %344, %351 : vector<128x64xf32>
    %c0_396 = arith.constant 0 : index
    %c0_397 = arith.constant 0 : index
    %c3_398 = arith.constant 3 : index
    %c1_399 = arith.constant 1 : index
    %c0_400 = arith.constant 0 : index
    %353 = vector.load %arg1[%c0_396, %c0_397, %c3_398, %c1_399, %c0_400] : memref<1x8x11x11x8xf32, #tpu.memory_space<vmem>>, vector<1x2x8x8x8xf32>
    %354 = vector.shape_cast %353 : vector<1x2x8x8x8xf32> to vector<2x8x8x8xf32>
    %355 = vector.shape_cast %354 : vector<2x8x8x8xf32> to vector<128x8xf32>
    %356 = arith.truncf %355 : vector<128x8xf32> to vector<128x8xbf16>
    %c0_401 = arith.constant 0 : index
    %c44 = arith.constant 44 : index
    %c0_402 = arith.constant 0 : index
    %c0_403 = arith.constant 0 : index
    %357 = vector.load %arg2[%c0_401, %c44, %c0_402, %c0_403] : memref<1x49x8x64xbf16, #tpu.memory_space<vmem>>, vector<1x1x8x64xbf16>
    %358 = vector.shape_cast %357 : vector<1x1x8x64xbf16> to vector<8x64xbf16>
    %cst_404 = arith.constant dense<0.000000e+00> : vector<128x64xf32>
    %359 = tpu.matmul %356, %358, %cst_404 {dimension_numbers = #tpu.dot_dimension_numbers<[1], [0], [0], [1], [0, 0, 1, 1], [], []>} : vector<128x8xbf16>, vector<8x64xbf16>, vector<128x64xf32> -> vector<128x64xf32>
    %360 = arith.addf %352, %359 : vector<128x64xf32>
    %c0_405 = arith.constant 0 : index
    %c2_406 = arith.constant 2 : index
    %c3_407 = arith.constant 3 : index
    %c1_408 = arith.constant 1 : index
    %c0_409 = arith.constant 0 : index
    %361 = vector.load %arg1[%c0_405, %c2_406, %c3_407, %c1_408, %c0_409] : memref<1x8x11x11x8xf32, #tpu.memory_space<vmem>>, vector<1x2x8x8x8xf32>
    %362 = vector.shape_cast %361 : vector<1x2x8x8x8xf32> to vector<2x8x8x8xf32>
    %363 = vector.shape_cast %362 : vector<2x8x8x8xf32> to vector<128x8xf32>
    %364 = arith.truncf %363 : vector<128x8xf32> to vector<128x8xbf16>
    %c0_410 = arith.constant 0 : index
    %c45 = arith.constant 45 : index
    %c0_411 = arith.constant 0 : index
    %c0_412 = arith.constant 0 : index
    %365 = vector.load %arg2[%c0_410, %c45, %c0_411, %c0_412] : memref<1x49x8x64xbf16, #tpu.memory_space<vmem>>, vector<1x1x8x64xbf16>
    %366 = vector.shape_cast %365 : vector<1x1x8x64xbf16> to vector<8x64xbf16>
    %cst_413 = arith.constant dense<0.000000e+00> : vector<128x64xf32>
    %367 = tpu.matmul %364, %366, %cst_413 {dimension_numbers = #tpu.dot_dimension_numbers<[1], [0], [0], [1], [0, 0, 1, 1], [], []>} : vector<128x8xbf16>, vector<8x64xbf16>, vector<128x64xf32> -> vector<128x64xf32>
    %368 = arith.addf %360, %367 : vector<128x64xf32>
    %c0_414 = arith.constant 0 : index
    %c0_415 = arith.constant 0 : index
    %c3_416 = arith.constant 3 : index
    %c2_417 = arith.constant 2 : index
    %c0_418 = arith.constant 0 : index
    %369 = vector.load %arg1[%c0_414, %c0_415, %c3_416, %c2_417, %c0_418] : memref<1x8x11x11x8xf32, #tpu.memory_space<vmem>>, vector<1x2x8x8x8xf32>
    %370 = vector.shape_cast %369 : vector<1x2x8x8x8xf32> to vector<2x8x8x8xf32>
    %371 = vector.shape_cast %370 : vector<2x8x8x8xf32> to vector<128x8xf32>
    %372 = arith.truncf %371 : vector<128x8xf32> to vector<128x8xbf16>
    %c0_419 = arith.constant 0 : index
    %c46 = arith.constant 46 : index
    %c0_420 = arith.constant 0 : index
    %c0_421 = arith.constant 0 : index
    %373 = vector.load %arg2[%c0_419, %c46, %c0_420, %c0_421] : memref<1x49x8x64xbf16, #tpu.memory_space<vmem>>, vector<1x1x8x64xbf16>
    %374 = vector.shape_cast %373 : vector<1x1x8x64xbf16> to vector<8x64xbf16>
    %cst_422 = arith.constant dense<0.000000e+00> : vector<128x64xf32>
    %375 = tpu.matmul %372, %374, %cst_422 {dimension_numbers = #tpu.dot_dimension_numbers<[1], [0], [0], [1], [0, 0, 1, 1], [], []>} : vector<128x8xbf16>, vector<8x64xbf16>, vector<128x64xf32> -> vector<128x64xf32>
    %376 = arith.addf %368, %375 : vector<128x64xf32>
    %c0_423 = arith.constant 0 : index
    %c2_424 = arith.constant 2 : index
    %c3_425 = arith.constant 3 : index
    %c2_426 = arith.constant 2 : index
    %c0_427 = arith.constant 0 : index
    %377 = vector.load %arg1[%c0_423, %c2_424, %c3_425, %c2_426, %c0_427] : memref<1x8x11x11x8xf32, #tpu.memory_space<vmem>>, vector<1x2x8x8x8xf32>
    %378 = vector.shape_cast %377 : vector<1x2x8x8x8xf32> to vector<2x8x8x8xf32>
    %379 = vector.shape_cast %378 : vector<2x8x8x8xf32> to vector<128x8xf32>
    %380 = arith.truncf %379 : vector<128x8xf32> to vector<128x8xbf16>
    %c0_428 = arith.constant 0 : index
    %c47 = arith.constant 47 : index
    %c0_429 = arith.constant 0 : index
    %c0_430 = arith.constant 0 : index
    %381 = vector.load %arg2[%c0_428, %c47, %c0_429, %c0_430] : memref<1x49x8x64xbf16, #tpu.memory_space<vmem>>, vector<1x1x8x64xbf16>
    %382 = vector.shape_cast %381 : vector<1x1x8x64xbf16> to vector<8x64xbf16>
    %cst_431 = arith.constant dense<0.000000e+00> : vector<128x64xf32>
    %383 = tpu.matmul %380, %382, %cst_431 {dimension_numbers = #tpu.dot_dimension_numbers<[1], [0], [0], [1], [0, 0, 1, 1], [], []>} : vector<128x8xbf16>, vector<8x64xbf16>, vector<128x64xf32> -> vector<128x64xf32>
    %384 = arith.addf %376, %383 : vector<128x64xf32>
    %c0_432 = arith.constant 0 : index
    %c0_433 = arith.constant 0 : index
    %c3_434 = arith.constant 3 : index
    %c3_435 = arith.constant 3 : index
    %c0_436 = arith.constant 0 : index
    %385 = vector.load %arg1[%c0_432, %c0_433, %c3_434, %c3_435, %c0_436] : memref<1x8x11x11x8xf32, #tpu.memory_space<vmem>>, vector<1x2x8x8x8xf32>
    %386 = vector.shape_cast %385 : vector<1x2x8x8x8xf32> to vector<2x8x8x8xf32>
    %387 = vector.shape_cast %386 : vector<2x8x8x8xf32> to vector<128x8xf32>
    %388 = arith.truncf %387 : vector<128x8xf32> to vector<128x8xbf16>
    %c0_437 = arith.constant 0 : index
    %c48 = arith.constant 48 : index
    %c0_438 = arith.constant 0 : index
    %c0_439 = arith.constant 0 : index
    %389 = vector.load %arg2[%c0_437, %c48, %c0_438, %c0_439] : memref<1x49x8x64xbf16, #tpu.memory_space<vmem>>, vector<1x1x8x64xbf16>
    %390 = vector.shape_cast %389 : vector<1x1x8x64xbf16> to vector<8x64xbf16>
    %cst_440 = arith.constant dense<0.000000e+00> : vector<128x64xf32>
    %391 = tpu.matmul %388, %390, %cst_440 {dimension_numbers = #tpu.dot_dimension_numbers<[1], [0], [0], [1], [0, 0, 1, 1], [], []>} : vector<128x8xbf16>, vector<8x64xbf16>, vector<128x64xf32> -> vector<128x64xf32>
    %392 = arith.addf %384, %391 : vector<128x64xf32>
    %cst_441 = arith.constant dense<0.000000e+00> : vector<64xf32>
    %393 = vector.multi_reduction <add>, %392, %cst_441 [0] : vector<128x64xf32> to vector<64xf32>
    %394 = vector.shape_cast %393 : vector<64xf32> to vector<1x64xf32>
    %cst_442 = arith.constant 1.280000e+02 : f32
    %395 = vector.broadcast %cst_442 : f32 to vector<1x64xf32>
    %396 = arith.divf %394, %395 : vector<1x64xf32>
    %397 = arith.mulf %392, %392 : vector<128x64xf32>
    %cst_443 = arith.constant dense<0.000000e+00> : vector<64xf32>
    %398 = vector.multi_reduction <add>, %397, %cst_443 [0] : vector<128x64xf32> to vector<64xf32>
    %399 = vector.shape_cast %398 : vector<64xf32> to vector<1x64xf32>
    %cst_444 = arith.constant 1.280000e+02 : f32
    %400 = vector.broadcast %cst_444 : f32 to vector<1x64xf32>
    %401 = arith.divf %399, %400 : vector<1x64xf32>
    %402 = arith.mulf %396, %396 : vector<1x64xf32>
    %403 = arith.subf %401, %402 : vector<1x64xf32>
    %c0_445 = arith.constant 0 : index
    %c0_446 = arith.constant 0 : index
    %c0_447 = arith.constant 0 : index
    %404 = vector.load %arg3[%c0_445, %c0_446, %c0_447] : memref<1x1x64xf32, #tpu.memory_space<vmem>>, vector<1x1x64xf32>
    %405 = vector.shape_cast %404 : vector<1x1x64xf32> to vector<1x64xf32>
    %cst_448 = arith.constant 9.99999974E-6 : f32
    %406 = vector.broadcast %cst_448 : f32 to vector<1x64xf32>
    %407 = arith.addf %403, %406 : vector<1x64xf32>
    %408 = math.rsqrt %407 : vector<1x64xf32>
    %409 = arith.mulf %405, %408 : vector<1x64xf32>
    %c0_449 = arith.constant 0 : index
    %c0_450 = arith.constant 0 : index
    %c0_451 = arith.constant 0 : index
    %410 = vector.load %arg4[%c0_449, %c0_450, %c0_451] : memref<1x1x64xf32, #tpu.memory_space<vmem>>, vector<1x1x64xf32>
    %411 = vector.shape_cast %410 : vector<1x1x64xf32> to vector<1x64xf32>
    %412 = arith.mulf %396, %409 : vector<1x64xf32>
    %413 = arith.subf %411, %412 : vector<1x64xf32>
    %414 = vector.broadcast %409 : vector<1x64xf32> to vector<128x64xf32>
    %415 = arith.mulf %392, %414 : vector<128x64xf32>
    %416 = vector.broadcast %413 : vector<1x64xf32> to vector<128x64xf32>
    %417 = arith.addf %415, %416 : vector<128x64xf32>
    %cst_452 = arith.constant 0.000000e+00 : f32
    %418 = vector.broadcast %cst_452 : f32 to vector<128x64xf32>
    %419 = arith.maximumf %417, %418 : vector<128x64xf32>
    %420 = vector.shape_cast %419 : vector<128x64xf32> to vector<2x8x8x64xf32>
    %421 = vector.extract_strided_slice %420 {offsets = [0, 0, 0, 0], sizes = [2, 2, 8, 64], strides = [1, 1, 1, 1]} : vector<2x8x8x64xf32> to vector<2x2x8x64xf32>
    %cst_453 = arith.constant dense<0xFF800000> : vector<2x8x64xf32>
    %422 = vector.multi_reduction <maximumf>, %421, %cst_453 [1] : vector<2x2x8x64xf32> to vector<2x8x64xf32>
    %423 = vector.shape_cast %422 : vector<2x8x64xf32> to vector<2x1x8x64xf32>
    %424 = vector.extract_strided_slice %420 {offsets = [0, 1, 0, 0], sizes = [2, 3, 8, 64], strides = [1, 1, 1, 1]} : vector<2x8x8x64xf32> to vector<2x3x8x64xf32>
    %cst_454 = arith.constant dense<0xFF800000> : vector<2x8x64xf32>
    %425 = vector.multi_reduction <maximumf>, %424, %cst_454 [1] : vector<2x3x8x64xf32> to vector<2x8x64xf32>
    %426 = vector.shape_cast %425 : vector<2x8x64xf32> to vector<2x1x8x64xf32>
    %427 = vector.extract_strided_slice %420 {offsets = [0, 3, 0, 0], sizes = [2, 3, 8, 64], strides = [1, 1, 1, 1]} : vector<2x8x8x64xf32> to vector<2x3x8x64xf32>
    %cst_455 = arith.constant dense<0xFF800000> : vector<2x8x64xf32>
    %428 = vector.multi_reduction <maximumf>, %427, %cst_455 [1] : vector<2x3x8x64xf32> to vector<2x8x64xf32>
    %429 = vector.shape_cast %428 : vector<2x8x64xf32> to vector<2x1x8x64xf32>
    %430 = vector.extract_strided_slice %420 {offsets = [0, 5, 0, 0], sizes = [2, 3, 8, 64], strides = [1, 1, 1, 1]} : vector<2x8x8x64xf32> to vector<2x3x8x64xf32>
    %cst_456 = arith.constant dense<0xFF800000> : vector<2x8x64xf32>
    %431 = vector.multi_reduction <maximumf>, %430, %cst_456 [1] : vector<2x3x8x64xf32> to vector<2x8x64xf32>
    %432 = vector.shape_cast %431 : vector<2x8x64xf32> to vector<2x1x8x64xf32>
    %433 = tpu.concatenate %423, %426, %429, %432 in 1 : vector<2x1x8x64xf32>, vector<2x1x8x64xf32>, vector<2x1x8x64xf32>, vector<2x1x8x64xf32> -> vector<2x4x8x64xf32>
    %434 = vector.extract_strided_slice %433 {offsets = [0, 0, 0, 0], sizes = [2, 4, 2, 64], strides = [1, 1, 1, 1]} : vector<2x4x8x64xf32> to vector<2x4x2x64xf32>
    %cst_457 = arith.constant dense<0xFF800000> : vector<2x4x64xf32>
    %435 = vector.multi_reduction <maximumf>, %434, %cst_457 [2] : vector<2x4x2x64xf32> to vector<2x4x64xf32>
    %436 = vector.shape_cast %435 : vector<2x4x64xf32> to vector<2x4x1x64xf32>
    %437 = vector.extract_strided_slice %433 {offsets = [0, 0, 1, 0], sizes = [2, 4, 3, 64], strides = [1, 1, 1, 1]} : vector<2x4x8x64xf32> to vector<2x4x3x64xf32>
    %cst_458 = arith.constant dense<0xFF800000> : vector<2x4x64xf32>
    %438 = vector.multi_reduction <maximumf>, %437, %cst_458 [2] : vector<2x4x3x64xf32> to vector<2x4x64xf32>
    %439 = vector.shape_cast %438 : vector<2x4x64xf32> to vector<2x4x1x64xf32>
    %440 = vector.extract_strided_slice %433 {offsets = [0, 0, 3, 0], sizes = [2, 4, 3, 64], strides = [1, 1, 1, 1]} : vector<2x4x8x64xf32> to vector<2x4x3x64xf32>
    %cst_459 = arith.constant dense<0xFF800000> : vector<2x4x64xf32>
    %441 = vector.multi_reduction <maximumf>, %440, %cst_459 [2] : vector<2x4x3x64xf32> to vector<2x4x64xf32>
    %442 = vector.shape_cast %441 : vector<2x4x64xf32> to vector<2x4x1x64xf32>
    %443 = vector.extract_strided_slice %433 {offsets = [0, 0, 5, 0], sizes = [2, 4, 3, 64], strides = [1, 1, 1, 1]} : vector<2x4x8x64xf32> to vector<2x4x3x64xf32>
    %cst_460 = arith.constant dense<0xFF800000> : vector<2x4x64xf32>
    %444 = vector.multi_reduction <maximumf>, %443, %cst_460 [2] : vector<2x4x3x64xf32> to vector<2x4x64xf32>
    %445 = vector.shape_cast %444 : vector<2x4x64xf32> to vector<2x4x1x64xf32>
    %446 = tpu.concatenate %436, %439, %442, %445 in 2 : vector<2x4x1x64xf32>, vector<2x4x1x64xf32>, vector<2x4x1x64xf32>, vector<2x4x1x64xf32> -> vector<2x4x4x64xf32>
    %447 = vector.shape_cast %446 : vector<2x4x4x64xf32> to vector<32x64xf32>
    %c0_461 = arith.constant 0 : index
    %c0_462 = arith.constant 0 : index
    %c0_463 = arith.constant 0 : index
    %448 = vector.load %arg5[%c0_461, %c0_462, %c0_463] : memref<1x32x64xf32, #tpu.memory_space<vmem>>, vector<1x32x64xf32>
    %449 = vector.shape_cast %448 : vector<1x32x64xf32> to vector<32x64xf32>
    %450 = vector.shape_cast %447 : vector<32x64xf32> to vector<1x32x64xf32>
    tpu.vector_store %arg5[%c0_461, %c0_462, %c0_463], %450 {strides = array<i32>} : memref<1x32x64xf32, #tpu.memory_space<vmem>>, vector<1x32x64xf32>,
    return
  }
  func.func @transform_0(%arg0: i32) -> (i32, i32, i32, i32, i32) {
    %c0_i32 = arith.constant 0 : i32
    %c0_i32_0 = arith.constant 0 : i32
    %c0_i32_1 = arith.constant 0 : i32
    %c0_i32_2 = arith.constant 0 : i32
    %c0_i32_3 = arith.constant 0 : i32
    return %arg0, %c0_i32, %c0_i32_0, %c0_i32_1, %c0_i32_2 : i32, i32, i32, i32, i32
  }
  func.func @transform_1(%arg0: i32) -> (i32, i32, i32, i32) {
    %c0_i32 = arith.constant 0 : i32
    %c0_i32_0 = arith.constant 0 : i32
    %c0_i32_1 = arith.constant 0 : i32
    %c0_i32_2 = arith.constant 0 : i32
    return %arg0, %c0_i32, %c0_i32_0, %c0_i32_1 : i32, i32, i32, i32
  }
  func.func @transform_2(%arg0: i32) -> (i32, i32, i32) {
    %c0_i32 = arith.constant 0 : i32
    %c0_i32_0 = arith.constant 0 : i32
    %c0_i32_1 = arith.constant 0 : i32
    return %arg0, %c0_i32, %c0_i32_0 : i32, i32, i32
  }
  func.func @transform_3(%arg0: i32) -> (i32, i32, i32) {
    %c0_i32 = arith.constant 0 : i32
    %c0_i32_0 = arith.constant 0 : i32
    %c0_i32_1 = arith.constant 0 : i32
    return %arg0, %c0_i32, %c0_i32_0 : i32, i32, i32
  }
  func.func @transform_4(%arg0: i32) -> (i32, i32, i32) {
    %c0_i32 = arith.constant 0 : i32
    %c0_i32_0 = arith.constant 0 : i32
    %c0_i32_1 = arith.constant 0 : i32
    return %arg0, %c0_i32, %c0_i32_0 : i32, i32, i32
  }
}

</mosaic_0001>

<llo_original>
// kernel: serial_conv_block.1
$region0: #{serial_conv_block.1}
  #allocation0 [shape = 'u32[]', space=smem, size = 0x4, offset = 0x4, fixed_abs, tag = 'smem constant byte address 0x4 - core index']
  #allocation1 [shape = 'u32[144,128]{1,0:T(1,128)}', space=vmem, size = 0x12000, scoped, tag = 'internal scratch']
  %s0 = inlined_call_operand.vmem [shape: f32[2,8,11,11,8], index: 0, kind: input, shape index: {}]
  %s1 = inlined_call_operand.vmem [shape: bf16[2,49,8,64], index: 1, kind: input, shape index: {}]
  %s2 = inlined_call_operand.vmem [shape: f32[2,1,64], index: 2, kind: input, shape index: {}]
  %s3 = inlined_call_operand.vmem [shape: f32[2,1,64], index: 3, kind: input, shape index: {}]
  %s4 = inlined_call_operand.vmem [shape: f32[2,32,64], index: 4, kind: output, shape index: {}]
  %s5 = sld [smem:[#allocation0]]
  $region49: #{serial_conv_block.1} parent=0
    _
  %s7 = ssub.s32 1, %s5
  %s8 = scalar_select 0, %s7, %s5
  loop: start=0, step=1, limit=4
  $region2: #{serial_conv_block.1} parent=0 // loop_pre_header
    _
  $region3: #{serial_conv_block.1} parent=0 // loop_header
    %s10 = sphi 0, %s14
    %p11 = scmp.ge.s32.totalorder %s10, 4
    %s20 = sphi 0, %s22
    %s23 = sphi 0, %s20
    %s24 = sphi 0, %s23
    %s40 = sphi 0, %s24
    %s46 = sphi 0, %s48
    %s49 = sphi 0, %s46
    %s50 = sphi 0, %s49
    %s66 = sphi 0, %s50
    %s72 = sphi 0, %s74
    %s75 = sphi 0, %s72
    %s76 = sphi 0, %s75
    %s92 = sphi 0, %s76
    %s98 = sphi 0, %s100
    %s101 = sphi 0, %s98
    %s102 = sphi 0, %s101
    %s118 = sphi 0, %s102
    %s124 = sphi 0, %s126
    %s127 = sphi 0, %s124
    %s128 = sphi 0, %s127
    %s144 = sphi 0, %s128
  $region4: #{serial_conv_block.1} parent=0 // loop_header_branch
    %13 = sbr.rel (%p11) target = $region8
  $region5: #{serial_conv_block.1} parent=0 // loop_body
    %s15 = ssub.s32 %s10, 1
    %s16 = ssub.s32 %s10, 2
    %s17 = sadd.s32 %s10, 1
    %s18 = ssub.s32 %s10, %s17
    %p19 = scmp.eq.s32.totalorder %s18, 0
    %s21 = sadd.s32 %s20, 1
    %s22 = scalar_select %p19, %s20, %s21
    %p25 = pneg %p19
    %p26 = scmp.eq.s32.totalorder %s10, 1
    %p27 = por %p25, %p26
    %p28 = scmp.ne.s32.totalorder %s20, %s23
    %p29 = scmp.eq.s32.totalorder %s10, 0
    %p30 = por %p28, %p29
    %p31 = scmp.ne.s32.totalorder %s20, %s23
    %p32 = scmp.eq.s32.totalorder %s15, 1
    %p33 = por %p31, %p32
    %p34 = scmp.ne.s32.totalorder %s23, %s24
    %p35 = scmp.eq.s32.totalorder %s15, 0
    %p36 = por %p34, %p35
    %p37 = scmp.ne.s32.totalorder %s23, %s24
    %p38 = scmp.eq.s32.totalorder %s16, 1
    %p39 = por %p37, %p38
    %p41 = scmp.ne.s32.totalorder %s24, %s40
    %p42 = scmp.eq.s32.totalorder %s16, 0
    %p43 = por %p41, %p42
    %s44 = ssub.s32 %s10, %s17
    %p45 = scmp.eq.s32.totalorder %s44, 0
    %s47 = sadd.s32 %s46, 1
    %s48 = scalar_select %p45, %s46, %s47
    %p51 = pneg %p45
    %p52 = scmp.eq.s32.totalorder %s10, 1
    %p53 = por %p51, %p52
    %p54 = scmp.ne.s32.totalorder %s46, %s49
    %p55 = scmp.eq.s32.totalorder %s10, 0
    %p56 = por %p54, %p55
    %p57 = scmp.ne.s32.totalorder %s46, %s49
    %p58 = scmp.eq.s32.totalorder %s15, 1
    %p59 = por %p57, %p58
    %p60 = scmp.ne.s32.totalorder %s49, %s50
    %p61 = scmp.eq.s32.totalorder %s15, 0
    %p62 = por %p60, %p61
    %p63 = scmp.ne.s32.totalorder %s49, %s50
    %p64 = scmp.eq.s32.totalorder %s16, 1
    %p65 = por %p63, %p64
    %p67 = scmp.ne.s32.totalorder %s50, %s66
    %p68 = scmp.eq.s32.totalorder %s16, 0
    %p69 = por %p67, %p68
    %s70 = ssub.s32 %s10, %s17
    %p71 = scmp.eq.s32.totalorder %s70, 0
    %s73 = sadd.s32 %s72, 1
    %s74 = scalar_select %p71, %s72, %s73
    %p77 = pneg %p71
    %p78 = scmp.eq.s32.totalorder %s10, 1
    %p79 = por %p77, %p78
    %p80 = scmp.ne.s32.totalorder %s72, %s75
    %p81 = scmp.eq.s32.totalorder %s10, 0
    %p82 = por %p80, %p81
    %p83 = scmp.ne.s32.totalorder %s72, %s75
    %p84 = scmp.eq.s32.totalorder %s15, 1
    %p85 = por %p83, %p84
    %p86 = scmp.ne.s32.totalorder %s75, %s76
    %p87 = scmp.eq.s32.totalorder %s15, 0
    %p88 = por %p86, %p87
    %p89 = scmp.ne.s32.totalorder %s75, %s76
    %p90 = scmp.eq.s32.totalorder %s16, 1
    %p91 = por %p89, %p90
    %p93 = scmp.ne.s32.totalorder %s76, %s92
    %p94 = scmp.eq.s32.totalorder %s16, 0
    %p95 = por %p93, %p94
    %s96 = ssub.s32 %s10, %s17
    %p97 = scmp.eq.s32.totalorder %s96, 0
    %s99 = sadd.s32 %s98, 1
    %s100 = scalar_select %p97, %s98, %s99
    %p103 = pneg %p97
    %p104 = scmp.eq.s32.totalorder %s10, 1
    %p105 = por %p103, %p104
    %p106 = scmp.ne.s32.totalorder %s98, %s101
    %p107 = scmp.eq.s32.totalorder %s10, 0
    %p108 = por %p106, %p107
    %p109 = scmp.ne.s32.totalorder %s98, %s101
    %p110 = scmp.eq.s32.totalorder %s15, 1
    %p111 = por %p109, %p110
    %p112 = scmp.ne.s32.totalorder %s101, %s102
    %p113 = scmp.eq.s32.totalorder %s15, 0
    %p114 = por %p112, %p113
    %p115 = scmp.ne.s32.totalorder %s101, %s102
    %p116 = scmp.eq.s32.totalorder %s16, 1
    %p117 = por %p115, %p116
    %p119 = scmp.ne.s32.totalorder %s102, %s118
    %p120 = scmp.eq.s32.totalorder %s16, 0
    %p121 = por %p119, %p120
    %s122 = ssub.s32 %s10, %s17
    %p123 = scmp.eq.s32.totalorder %s122, 0
    %s125 = sadd.s32 %s124, 1
    %s126 = scalar_select %p123, %s124, %s125
    %p129 = pneg %p123
    %p130 = scmp.eq.s32.totalorder %s10, 1
    %p131 = por %p129, %p130
    %p132 = scmp.ne.s32.totalorder %s124, %s127
    %p133 = scmp.eq.s32.totalorder %s10, 0
    %p134 = por %p132, %p133
    %p135 = scmp.ne.s32.totalorder %s124, %s127
    %p136 = scmp.eq.s32.totalorder %s15, 1
    %p137 = por %p135, %p136
    %p138 = scmp.ne.s32.totalorder %s127, %s128
    %p139 = scmp.eq.s32.totalorder %s15, 0
    %p140 = por %p138, %p139
    %p141 = scmp.ne.s32.totalorder %s127, %s128
    %p142 = scmp.eq.s32.totalorder %s16, 1
    %p143 = por %p141, %p142
    %p145 = scmp.ne.s32.totalorder %s128, %s144
    %p146 = scmp.eq.s32.totalorder %s16, 0
    %p147 = por %p145, %p146
    %p148 = scmp.le.s32.totalorder 1, %s10
    %p149 = scmp.lt.s32.totalorder %s10, 3
    %p150 = pnand %p148, %p149
    %p151 = pneg %p150
    // Predicated region
    $region9: #{serial_conv_block.1} parent=5 // pred_check
      _
    $region10: #{serial_conv_block.1} parent=5 // pred_check_branch
      %153 = sbr.rel (%p150) target = $region12
    $region11: #{serial_conv_block.1} parent=5 // pred_region
      %s154 = ssub.s32 %s10, 1
    $region12: #{serial_conv_block.1} parent=5 // pred_fallthru
      _
    %p155 = scmp.lt.s32.totalorder %s10, 2
    // Predicated region
    $region13: #{serial_conv_block.1} parent=5 // pred_check
      %p156 = pneg %p155
    $region14: #{serial_conv_block.1} parent=5 // pred_check_branch
      %158 = sbr.rel (%p156) target = $region16
    $region15: #{serial_conv_block.1} parent=5 // pred_region
      // Predicated region
      $region17: #{serial_conv_block.1} parent=15 // pred_check
        %p159 = pneg %p30
      $region18: #{serial_conv_block.1} parent=15 // pred_check_branch
        %161 = sbr.rel (%p159) target = $region20
      $region19: #{serial_conv_block.1} parent=15 // pred_region
        %p162 = scmp.lt.s32.totalorder %s10, 1
        %s163 = scalar_select %p162, %s10, 1
        %s164 = smul.addr %s163, 176
        %s165 = smul.addr %s164, 8
        %s166 = scalar_lea.vmem %s0, %s165
      $region20: #{serial_conv_block.1} parent=15 // pred_fallthru
        _
      // Predicated region
      $region21: #{serial_conv_block.1} parent=15 // pred_check
        %p167 = pneg %p56
      $region22: #{serial_conv_block.1} parent=15 // pred_check_branch
        %169 = sbr.rel (%p167) target = $region24
      $region23: #{serial_conv_block.1} parent=15 // pred_region
        %p170 = scmp.lt.s32.totalorder %s10, 1
        %s171 = scalar_select %p170, %s10, 1
        %s172 = smul.addr %s171, 49
        %s173 = smul.addr %s172, 4
        %s174 = scalar_lea.vmem %s1, %s173
      $region24: #{serial_conv_block.1} parent=15 // pred_fallthru
        _
      // Predicated region
      $region25: #{serial_conv_block.1} parent=15 // pred_check
        %p175 = pneg %p82
      $region26: #{serial_conv_block.1} parent=15 // pred_check_branch
        %177 = sbr.rel (%p175) target = $region28
      $region27: #{serial_conv_block.1} parent=15 // pred_region
        %p178 = scmp.lt.s32.totalorder %s10, 1
        %s179 = scalar_select %p178, %s10, 1
        %s180 = scalar_lea.vmem %s2, %s179
      $region28: #{serial_conv_block.1} parent=15 // pred_fallthru
        _
      // Predicated region
      $region29: #{serial_conv_block.1} parent=15 // pred_check
        %p181 = pneg %p108
      $region30: #{serial_conv_block.1} parent=15 // pred_check_branch
        %183 = sbr.rel (%p181) target = $region32
      $region31: #{serial_conv_block.1} parent=15 // pred_region
        %p184 = scmp.lt.s32.totalorder %s10, 1
        %s185 = scalar_select %p184, %s10, 1
        %s186 = scalar_lea.vmem %s3, %s185
      $region32: #{serial_conv_block.1} parent=15 // pred_fallthru
        _
    $region16: #{serial_conv_block.1} parent=5 // pred_fallthru
      _
    %p187 = scmp.le.s32.totalorder 1, %s10
    %p188 = scmp.lt.s32.totalorder %s10, 3
    %p189 = pnand %p187, %p188
    %p190 = pneg %p189
    // Predicated region
    $region33: #{serial_conv_block.1} parent=5 // pred_check
      _
    $region34: #{serial_conv_block.1} parent=5 // pred_check_branch
      %192 = sbr.rel (%p189) target = $region36
    $region35: #{serial_conv_block.1} parent=5 // pred_region
      %s193 = ssub.s32 %s10, 1
      %p194 = scmp.lt.s32.totalorder %s15, 1
      %s195 = scalar_select %p194, %s15, 1
      %s196 = smul.addr %s195, 176
      %s197 = smul.addr %s196, 8
      %s198 = scalar_lea.vmem %s0, %s197
      %p199 = pneg %p36
      %p200 = pneg %p33
      %p201 = scmp.lt.s32.totalorder %s15, 1
      %s202 = scalar_select %p201, %s15, 1
      %s203 = smul.addr %s202, 49
      %s204 = smul.addr %s203, 4
      %s205 = scalar_lea.vmem %s1, %s204
      %p206 = pneg %p62
      %p207 = pneg %p59
      %p208 = scmp.lt.s32.totalorder %s15, 1
      %s209 = scalar_select %p208, %s15, 1
      %s210 = scalar_lea.vmem %s2, %s209
      %p211 = pneg %p88
      %p212 = pneg %p85
      %p213 = scmp.lt.s32.totalorder %s15, 1
      %s214 = scalar_select %p213, %s15, 1
      %s215 = scalar_lea.vmem %s3, %s214
      %p216 = pneg %p114
      %p217 = pneg %p111
      %p218 = pneg %p140
      %p219 = pneg %p137
      %p220 = scmp.lt.s32.totalorder %s15, 1
      %s221 = scalar_select %p220, %s15, 1
      %s222 = smul.addr %s221, 4
      %s223 = smul.addr %s222, 8
      %s224 = scalar_lea.vmem %s4, %s223
      %p225 = scmp.lt.s32.totalorder %s15, 1
      %s226 = scalar_select %p225, %s15, 1
      %s227 = smul.addr %s226, 176
      %s228 = smul.addr %s227, 8
      %s229 = scalar_lea.vmem %s0, %s228
      %p230 = scmp.lt.s32.totalorder %s15, 1
      %s231 = scalar_select %p230, %s15, 1
      %s232 = smul.addr %s231, 49
      %s233 = smul.addr %s232, 4
      %s234 = scalar_lea.vmem %s1, %s233
      %p235 = scmp.lt.s32.totalorder %s15, 1
      %s236 = scalar_select %p235, %s15, 1
      %s237 = scalar_lea.vmem %s2, %s236
      %p238 = scmp.lt.s32.totalorder %s15, 1
      %s239 = scalar_select %p238, %s15, 1
      %s240 = scalar_lea.vmem %s3, %s239
      %p241 = scmp.lt.s32.totalorder %s15, 1
      %s242 = scalar_select %p241, %s15, 1
      %s243 = smul.addr %s242, 4
      %s244 = smul.addr %s243, 8
      %s245 = scalar_lea.vmem %s4, %s244
      %v247 = vld [vmem:[%s229] sm:$0xff]
      %v248 = vld [vmem:[%s229 + $0x10] sm:$0xff]
      %v249 = vld [vmem:[%s229 + $0x20] sm:$0xff]
      %v250 = vld [vmem:[%s229 + $0x30] sm:$0xff]
      %v251 = vld [vmem:[%s229 + $0x40] sm:$0xff]
      %v252 = vld [vmem:[%s229 + $0x50] sm:$0xff]
      %v253 = vld [vmem:[%s229 + $0x60] sm:$0xff]
      %v254 = vld [vmem:[%s229 + $0x70] sm:$0xff]
      %v255 = vld [vmem:[%s229 + $0xb0] sm:$0xff]
      %v256 = vld [vmem:[%s229 + $0xc0] sm:$0xff]
      %v257 = vld [vmem:[%s229 + $0xd0] sm:$0xff]
      %v258 = vld [vmem:[%s229 + $0xe0] sm:$0xff]
      %v259 = vld [vmem:[%s229 + $0xf0] sm:$0xff]
      %v260 = vld [vmem:[%s229 + $0x100] sm:$0xff]
      %v261 = vld [vmem:[%s229 + $0x110] sm:$0xff]
      %v262 = vld [vmem:[%s229 + $0x120] sm:$0xff]
      %v263 = vpack.c.bf16 %v248, %v247
      %v264 = vpack.c.bf16 %v250, %v249
      %v265 = vpack.c.bf16 %v252, %v251
      %v266 = vpack.c.bf16 %v254, %v253
      %v267 = vpack.c.bf16 %v256, %v255
      %v268 = vpack.c.bf16 %v258, %v257
      %v269 = vpack.c.bf16 %v260, %v259
      %v270 = vpack.c.bf16 %v262, %v261
      %v271 = vld [vmem:[%s234] sm:$0xf]
      %s272 = scalar_lea.vmem %s229, 352
      %v273 = vld [vmem:[%s272] sm:$0xff]
      %v274 = vld [vmem:[%s272 + $0x10] sm:$0xff]
      %v275 = vld [vmem:[%s272 + $0x20] sm:$0xff]
      %v276 = vld [vmem:[%s272 + $0x30] sm:$0xff]
      %v277 = vld [vmem:[%s272 + $0x40] sm:$0xff]
      %v278 = vld [vmem:[%s272 + $0x50] sm:$0xff]
      %v279 = vld [vmem:[%s272 + $0x60] sm:$0xff]
      %v280 = vld [vmem:[%s272 + $0x70] sm:$0xff]
      %v281 = vld [vmem:[%s272 + $0xb0] sm:$0xff]
      %v282 = vld [vmem:[%s272 + $0xc0] sm:$0xff]
      %v283 = vld [vmem:[%s272 + $0xd0] sm:$0xff]
      %v284 = vld [vmem:[%s272 + $0xe0] sm:$0xff]
      %v285 = vld [vmem:[%s272 + $0xf0] sm:$0xff]
      %v286 = vld [vmem:[%s272 + $0x100] sm:$0xff]
      %v287 = vld [vmem:[%s272 + $0x110] sm:$0xff]
      %v288 = vld [vmem:[%s272 + $0x120] sm:$0xff]
      %v289 = vpack.c.bf16 %v274, %v273
      %v290 = vpack.c.bf16 %v276, %v275
      %v291 = vpack.c.bf16 %v278, %v277
      %v292 = vpack.c.bf16 %v280, %v279
      %v293 = vpack.c.bf16 %v282, %v281
      %v294 = vpack.c.bf16 %v284, %v283
      %v295 = vpack.c.bf16 %v286, %v285
      %v296 = vpack.c.bf16 %v288, %v287
      %s297 = scalar_lea.vmem %s234, 4
      %v298 = vld [vmem:[%s297] sm:$0xf]
      %vm299 = vcmask 64512
      %v301 = vsel %vm299, %v289, 0
      %v304 = vsel %vm299, %v290, 0
      %v307 = vsel %vm299, %v291, 0
      %v310 = vsel %vm299, %v292, 0
      %v313 = vsel %vm299, %v293, 0
      %v316 = vsel %vm299, %v294, 0
      %v319 = vsel %vm299, %v295, 0
      %v322 = vsel %vm299, %v296, 0
      %vm324 = vcmask 1043456
      %v326 = vsel %vm324, %v298, 0
      %328 = vmatprep.subr.bf16.mxu0 0
      %329 = vmatpush1.bf16.msra.mxu0 %v326
      %330 = vmatprep.subr.bf16.mxu0 0
      %331 = vmatpush1.bf16.msra.mxu0 0
      %332 = vmatprep.subr.bf16.mxu0 0
      %333 = vmatpush1.bf16.msra.mxu0 0
      %334 = vmatprep.subr.bf16.mxu0 0
      %335 = vmatpush1.bf16.msra.mxu0 0
      %336 = vmatprep.subr.bf16.mxu0 0
      %337 = vmatpush1.bf16.msra.mxu0 0
      %338 = vmatprep.subr.bf16.mxu0 0
      %339 = vmatpush1.bf16.msra.mxu0 0
      %340 = vmatprep.subr.bf16.mxu0 0
      %341 = vmatpush1.bf16.msra.mxu0 0
      %342 = vmatprep.subr.bf16.mxu0 0
      %343 = vmatpush1.bf16.msra.mxu0 0
      %344 = vmatprep.subr.bf16.mxu0 0
      %345 = vmatpush1.bf16.msra.mxu0 0
      %346 = vmatprep.subr.bf16.mxu0 0
      %347 = vmatpush1.bf16.msra.mxu0 0
      %348 = vmatprep.subr.bf16.mxu0 0
      %349 = vmatpush1.bf16.msra.mxu0 0
      %350 = vmatprep.subr.bf16.mxu0 0
      %351 = vmatpush1.bf16.msra.mxu0 0
      %352 = vmatprep.subr.bf16.mxu0 0
      %353 = vmatpush1.bf16.msra.mxu0 0
      %354 = vmatprep.subr.bf16.mxu0 0
      %355 = vmatpush1.bf16.msra.mxu0 0
      %356 = vmatprep.subr.bf16.mxu0 0
      %357 = vmatpush1.bf16.msra.mxu0 0
      %358 = vmatprep.subr.bf16.mxu0 0
      %359 = vmatpush1.bf16.msra.mxu0 0
      %360 = vmatprep.mubr.bf16.mxu0 0
      %361 = vmatmul.mubr.bf16.gmra.mrb[0].mxu0 %v301
      %v362 = vpop.f32.mrb[0].mxu0
      %v363 = vadd.f32 0.0, %v362
      %v364 = vpop.f32.mrb[0].mxu0
      %v365 = vpop.f32.mrb[0].mxu0
      %v366 = vadd.f32 0.0, %v365
      %v367 = vpop.f32.mrb[0].mxu0
      %368 = vmatprep.mubr.bf16.mxu0 0
      %369 = vmatmul.mubr.bf16.gmra.mrb[0].mxu0 %v304
      %v370 = vpop.f32.mrb[0].mxu0
      %v371 = vadd.f32 0.0, %v370
      %v372 = vpop.f32.mrb[0].mxu0
      %v373 = vpop.f32.mrb[0].mxu0
      %v374 = vadd.f32 0.0, %v373
      %v375 = vpop.f32.mrb[0].mxu0
      %376 = vmatprep.mubr.bf16.mxu0 0
      %377 = vmatmul.mubr.bf16.gmra.mrb[0].mxu0 %v307
      %v378 = vpop.f32.mrb[0].mxu0
      %v379 = vadd.f32 0.0, %v378
      %v380 = vpop.f32.mrb[0].mxu0
      %v381 = vpop.f32.mrb[0].mxu0
      %v382 = vadd.f32 0.0, %v381
      %v383 = vpop.f32.mrb[0].mxu0
      %384 = vmatprep.mubr.bf16.mxu0 0
      %385 = vmatmul.mubr.bf16.gmra.mrb[0].mxu0 %v310
      %v386 = vpop.f32.mrb[0].mxu0
      %v387 = vadd.f32 0.0, %v386
      %v388 = vpop.f32.mrb[0].mxu0
      %v389 = vpop.f32.mrb[0].mxu0
      %v390 = vadd.f32 0.0, %v389
      %v391 = vpop.f32.mrb[0].mxu0
      %392 = vmatprep.mubr.bf16.mxu0 0
      %393 = vmatmul.mubr.bf16.gmra.mrb[0].mxu0 %v313
      %v394 = vpop.f32.mrb[0].mxu0
      %v395 = vadd.f32 0.0, %v394
      %v396 = vpop.f32.mrb[0].mxu0
      %v397 = vpop.f32.mrb[0].mxu0
      %v398 = vadd.f32 0.0, %v397
      %v399 = vpop.f32.mrb[0].mxu0
      %400 = vmatprep.mubr.bf16.mxu0 0
      %401 = vmatmul.mubr.bf16.gmra.mrb[0].mxu0 %v316
      %v402 = vpop.f32.mrb[0].mxu0
      %v403 = vadd.f32 0.0, %v402
      %v404 = vpop.f32.mrb[0].mxu0
      %v405 = vpop.f32.mrb[0].mxu0
      %v406 = vadd.f32 0.0, %v405
      %v407 = vpop.f32.mrb[0].mxu0
      %408 = vmatprep.mubr.bf16.mxu0 0
      %409 = vmatmul.mubr.bf16.gmra.mrb[0].mxu0 %v319
      %v410 = vpop.f32.mrb[0].mxu0
      %v411 = vadd.f32 0.0, %v410
      %v412 = vpop.f32.mrb[0].mxu0
      %v413 = vpop.f32.mrb[0].mxu0
      %v414 = vadd.f32 0.0, %v413
      %v415 = vpop.f32.mrb[0].mxu0
      %416 = vmatprep.mubr.bf16.mxu0 0
      %417 = vmatmul.mubr.bf16.gmra.mrb[0].mxu0 %v322
      %v418 = vpop.f32.mrb[0].mxu0
      %v419 = vadd.f32 0.0, %v418
      %v420 = vpop.f32.mrb[0].mxu0
      %v421 = vpop.f32.mrb[0].mxu0
      %v422 = vadd.f32 0.0, %v421
      %v423 = vpop.f32.mrb[0].mxu0
      %424 = vdwg.mxu0
      %v426 = vsel %vm299, %v263, 0
      %v429 = vsel %vm299, %v264, 0
      %v432 = vsel %vm299, %v265, 0
      %v435 = vsel %vm299, %v266, 0
      %v438 = vsel %vm299, %v267, 0
      %v441 = vsel %vm299, %v268, 0
      %v444 = vsel %vm299, %v269, 0
      %v447 = vsel %vm299, %v270, 0
      %v450 = vsel %vm324, %v271, 0
      %452 = vmatprep.subr.bf16.mxu0 0
      %453 = vmatpush1.bf16.msra.mxu0 %v450
      %454 = vmatprep.subr.bf16.mxu0 0
      %455 = vmatpush1.bf16.msra.mxu0 0
      %456 = vmatprep.subr.bf16.mxu0 0
      %457 = vmatpush1.bf16.msra.mxu0 0
      %458 = vmatprep.subr.bf16.mxu0 0
      %459 = vmatpush1.bf16.msra.mxu0 0
      %460 = vmatprep.subr.bf16.mxu0 0
      %461 = vmatpush1.bf16.msra.mxu0 0
      %462 = vmatprep.subr.bf16.mxu0 0
      %463 = vmatpush1.bf16.msra.mxu0 0
      %464 = vmatprep.subr.bf16.mxu0 0
      %465 = vmatpush1.bf16.msra.mxu0 0
      %466 = vmatprep.subr.bf16.mxu0 0
      %467 = vmatpush1.bf16.msra.mxu0 0
      %468 = vmatprep.subr.bf16.mxu0 0
      %469 = vmatpush1.bf16.msra.mxu0 0
      %470 = vmatprep.subr.bf16.mxu0 0
      %471 = vmatpush1.bf16.msra.mxu0 0
      %472 = vmatprep.subr.bf16.mxu0 0
      %473 = vmatpush1.bf16.msra.mxu0 0
      %474 = vmatprep.subr.bf16.mxu0 0
      %475 = vmatpush1.bf16.msra.mxu0 0
      %476 = vmatprep.subr.bf16.mxu0 0
      %477 = vmatpush1.bf16.msra.mxu0 0
      %478 = vmatprep.subr.bf16.mxu0 0
      %479 = vmatpush1.bf16.msra.mxu0 0
      %480 = vmatprep.subr.bf16.mxu0 0
      %481 = vmatpush1.bf16.msra.mxu0 0
      %482 = vmatprep.subr.bf16.mxu0 0
      %483 = vmatpush1.bf16.msra.mxu0 0
      %484 = vmatprep.mubr.bf16.mxu0 0
      %485 = vmatmul.mubr.bf16.gmra.mrb[0].mxu0 %v426
      %v486 = vpop.f32.mrb[0].mxu0
      %v487 = vadd.f32 %v363, %v486
      %v488 = vpop.f32.mrb[0].mxu0
      %v489 = vpop.f32.mrb[0].mxu0
      %v490 = vadd.f32 %v366, %v489
      %v491 = vpop.f32.mrb[0].mxu0
      %492 = vmatprep.mubr.bf16.mxu0 0
      %493 = vmatmul.mubr.bf16.gmra.mrb[0].mxu0 %v429
      %v494 = vpop.f32.mrb[0].mxu0
      %v495 = vadd.f32 %v371, %v494
      %v496 = vpop.f32.mrb[0].mxu0
      %v497 = vpop.f32.mrb[0].mxu0
      %v498 = vadd.f32 %v374, %v497
      %v499 = vpop.f32.mrb[0].mxu0
      %500 = vmatprep.mubr.bf16.mxu0 0
      %501 = vmatmul.mubr.bf16.gmra.mrb[0].mxu0 %v432
      %v502 = vpop.f32.mrb[0].mxu0
      %v503 = vadd.f32 %v379, %v502
      %v504 = vpop.f32.mrb[0].mxu0
      %v505 = vpop.f32.mrb[0].mxu0
      %v506 = vadd.f32 %v382, %v505
      %v507 = vpop.f32.mrb[0].mxu0
      %508 = vmatprep.mubr.bf16.mxu0 0
      %509 = vmatmul.mubr.bf16.gmra.mrb[0].mxu0 %v435
      %v510 = vpop.f32.mrb[0].mxu0
      %v511 = vadd.f32 %v387, %v510
      %v512 = vpop.f32.mrb[0].mxu0
      %v513 = vpop.f32.mrb[0].mxu0
      %v514 = vadd.f32 %v390, %v513
      %v515 = vpop.f32.mrb[0].mxu0
      %516 = vmatprep.mubr.bf16.mxu0 0
      %517 = vmatmul.mubr.bf16.gmra.mrb[0].mxu0 %v438
      %v518 = vpop.f32.mrb[0].mxu0
      %v519 = vadd.f32 %v395, %v518
      %v520 = vpop.f32.mrb[0].mxu0
      %v521 = vpop.f32.mrb[0].mxu0
      %v522 = vadd.f32 %v398, %v521
      %v523 = vpop.f32.mrb[0].mxu0
      %524 = vmatprep.mubr.bf16.mxu0 0
      %525 = vmatmul.mubr.bf16.gmra.mrb[0].mxu0 %v441
      %v526 = vpop.f32.mrb[0].mxu0
      %v527 = vadd.f32 %v403, %v526
      %v528 = vpop.f32.mrb[0].mxu0
      %v529 = vpop.f32.mrb[0].mxu0
      %v530 = vadd.f32 %v406, %v529
      %v531 = vpop.f32.mrb[0].mxu0
      %532 = vmatprep.mubr.bf16.mxu0 0
      %533 = vmatmul.mubr.bf16.gmra.mrb[0].mxu0 %v444
      %v534 = vpop.f32.mrb[0].mxu0
      %v535 = vadd.f32 %v411, %v534
      %v536 = vpop.f32.mrb[0].mxu0
      %v537 = vpop.f32.mrb[0].mxu0
      %v538 = vadd.f32 %v414, %v537
      %v539 = vpop.f32.mrb[0].mxu0
      %540 = vmatprep.mubr.bf16.mxu0 0
      %541 = vmatmul.mubr.bf16.gmra.mrb[0].mxu0 %v447
      %v542 = vpop.f32.mrb[0].mxu0
      %v543 = vadd.f32 %v419, %v542
      %v544 = vpop.f32.mrb[0].mxu0
      %v545 = vpop.f32.mrb[0].mxu0
      %v546 = vadd.f32 %v422, %v545
      %v547 = vpop.f32.mrb[0].mxu0
      %548 = vdwg.mxu0
      %v549 = vld [vmem:[%s229 + $0x1] sm:$0xff]
      %v550 = vld [vmem:[%s229 + $0x11] sm:$0xff]
      %v551 = vld [vmem:[%s229 + $0x21] sm:$0xff]
      %v552 = vld [vmem:[%s229 + $0x31] sm:$0xff]
      %v553 = vld [vmem:[%s229 + $0x41] sm:$0xff]
      %v554 = vld [vmem:[%s229 + $0x51] sm:$0xff]
      %v555 = vld [vmem:[%s229 + $0x61] sm:$0xff]
      %v556 = vld [vmem:[%s229 + $0x71] sm:$0xff]
      %v557 = vld [vmem:[%s229 + $0xb1] sm:$0xff]
      %v558 = vld [vmem:[%s229 + $0xc1] sm:$0xff]
      %v559 = vld [vmem:[%s229 + $0xd1] sm:$0xff]
      %v560 = vld [vmem:[%s229 + $0xe1] sm:$0xff]
      %v561 = vld [vmem:[%s229 + $0xf1] sm:$0xff]
      %v562 = vld [vmem:[%s229 + $0x101] sm:$0xff]
      %v563 = vld [vmem:[%s229 + $0x111] sm:$0xff]
      %v564 = vld [vmem:[%s229 + $0x121] sm:$0xff]
      %v565 = vpack.c.bf16 %v550, %v549
      %v566 = vpack.c.bf16 %v552, %v551
      %v567 = vpack.c.bf16 %v554, %v553
      %v568 = vpack.c.bf16 %v556, %v555
      %v569 = vpack.c.bf16 %v558, %v557
      %v570 = vpack.c.bf16 %v560, %v559
      %v571 = vpack.c.bf16 %v562, %v561
      %v572 = vpack.c.bf16 %v564, %v563
      %s573 = scalar_lea.vmem %s234, 8
      %v574 = vld [vmem:[%s573] sm:$0xf]
      %v576 = vsel %vm299, %v565, 0
      %v579 = vsel %vm299, %v566, 0
      %v582 = vsel %vm299, %v567, 0
      %v585 = vsel %vm299, %v568, 0
      %v588 = vsel %vm299, %v569, 0
      %v591 = vsel %vm299, %v570, 0
      %v594 = vsel %vm299, %v571, 0
      %v597 = vsel %vm299, %v572, 0
      %v600 = vsel %vm324, %v574, 0
      %602 = vmatprep.subr.bf16.mxu0 0
      %603 = vmatpush1.bf16.msra.mxu0 %v600
      %604 = vmatprep.subr.bf16.mxu0 0
      %605 = vmatpush1.bf16.msra.mxu0 0
      %606 = vmatprep.subr.bf16.mxu0 0
      %607 = vmatpush1.bf16.msra.mxu0 0
      %608 = vmatprep.subr.bf16.mxu0 0
      %609 = vmatpush1.bf16.msra.mxu0 0
      %610 = vmatprep.subr.bf16.mxu0 0
      %611 = vmatpush1.bf16.msra.mxu0 0
      %612 = vmatprep.subr.bf16.mxu0 0
      %613 = vmatpush1.bf16.msra.mxu0 0
      %614 = vmatprep.subr.bf16.mxu0 0
      %615 = vmatpush1.bf16.msra.mxu0 0
      %616 = vmatprep.subr.bf16.mxu0 0
      %617 = vmatpush1.bf16.msra.mxu0 0
      %618 = vmatprep.subr.bf16.mxu0 0
      %619 = vmatpush1.bf16.msra.mxu0 0
      %620 = vmatprep.subr.bf16.mxu0 0
      %621 = vmatpush1.bf16.msra.mxu0 0
      %622 = vmatprep.subr.bf16.mxu0 0
      %623 = vmatpush1.bf16.msra.mxu0 0
      %624 = vmatprep.subr.bf16.mxu0 0
      %625 = vmatpush1.bf16.msra.mxu0 0
      %626 = vmatprep.subr.bf16.mxu0 0
      %627 = vmatpush1.bf16.msra.mxu0 0
      %628 = vmatprep.subr.bf16.mxu0 0
      %629 = vmatpush1.bf16.msra.mxu0 0
      %630 = vmatprep.subr.bf16.mxu0 0
      %631 = vmatpush1.bf16.msra.mxu0 0
      %632 = vmatprep.subr.bf16.mxu0 0
      %633 = vmatpush1.bf16.msra.mxu0 0
      %634 = vmatprep.mubr.bf16.mxu0 0
      %635 = vmatmul.mubr.bf16.gmra.mrb[0].mxu0 %v576
      %v636 = vpop.f32.mrb[0].mxu0
      %v637 = vadd.f32 0.0, %v636
      %v638 = vpop.f32.mrb[0].mxu0
      %v639 = vpop.f32.mrb[0].mxu0
      %v640 = vadd.f32 0.0, %v639
      %v641 = vpop.f32.mrb[0].mxu0
      %642 = vmatprep.mubr.bf16.mxu0 0
      %643 = vmatmul.mubr.bf16.gmra.mrb[0].mxu0 %v579
      %v644 = vpop.f32.mrb[0].mxu0
      %v645 = vadd.f32 0.0, %v644
      %v646 = vpop.f32.mrb[0].mxu0
      %v647 = vpop.f32.mrb[0].mxu0
      %v648 = vadd.f32 0.0, %v647
      %v649 = vpop.f32.mrb[0].mxu0
      %650 = vmatprep.mubr.bf16.mxu0 0
      %651 = vmatmul.mubr.bf16.gmra.mrb[0].mxu0 %v582
      %v652 = vpop.f32.mrb[0].mxu0
      %v653 = vadd.f32 0.0, %v652
      %v654 = vpop.f32.mrb[0].mxu0
      %v655 = vpop.f32.mrb[0].mxu0
      %v656 = vadd.f32 0.0, %v655
      %v657 = vpop.f32.mrb[0].mxu0
      %658 = vmatprep.mubr.bf16.mxu0 0
      %659 = vmatmul.mubr.bf16.gmra.mrb[0].mxu0 %v585
      %v660 = vpop.f32.mrb[0].mxu0
      %v661 = vadd.f32 0.0, %v660
      %v662 = vpop.f32.mrb[0].mxu0
      %v663 = vpop.f32.mrb[0].mxu0
      %v664 = vadd.f32 0.0, %v663
      %v665 = vpop.f32.mrb[0].mxu0
      %666 = vmatprep.mubr.bf16.mxu0 0
      %667 = vmatmul.mubr.bf16.gmra.mrb[0].mxu0 %v588
      %v668 = vpop.f32.mrb[0].mxu0
      %v669 = vadd.f32 0.0, %v668
      %v670 = vpop.f32.mrb[0].mxu0
      %v671 = vpop.f32.mrb[0].mxu0
      %v672 = vadd.f32 0.0, %v671
      %v673 = vpop.f32.mrb[0].mxu0
      %674 = vmatprep.mubr.bf16.mxu0 0
      %675 = vmatmul.mubr.bf16.gmra.mrb[0].mxu0 %v591
      %v676 = vpop.f32.mrb[0].mxu0
      %v677 = vadd.f32 0.0, %v676
      %v678 = vpop.f32.mrb[0].mxu0
      %v679 = vpop.f32.mrb[0].mxu0
      %v680 = vadd.f32 0.0, %v679
      %v681 = vpop.f32.mrb[0].mxu0
      %682 = vmatprep.mubr.bf16.mxu0 0
      %683 = vmatmul.mubr.bf16.gmra.mrb[0].mxu0 %v594
      %v684 = vpop.f32.mrb[0].mxu0
      %v685 = vadd.f32 0.0, %v684
      %v686 = vpop.f32.mrb[0].mxu0
      %v687 = vpop.f32.mrb[0].mxu0
      %v688 = vadd.f32 0.0, %v687
      %v689 = vpop.f32.mrb[0].mxu0
      %690 = vmatprep.mubr.bf16.mxu0 0
      %691 = vmatmul.mubr.bf16.gmra.mrb[0].mxu0 %v597
      %v692 = vpop.f32.mrb[0].mxu0
      %v693 = vadd.f32 0.0, %v692
      %v694 = vpop.f32.mrb[0].mxu0
      %v695 = vpop.f32.mrb[0].mxu0
      %v696 = vadd.f32 0.0, %v695
      %v697 = vpop.f32.mrb[0].mxu0
      %698 = vdwg.mxu0
      %v699 = vadd.f32 %v487, %v637
      %v700 = vadd.f32 %v490, %v640
      %v701 = vadd.f32 %v495, %v645
      %v702 = vadd.f32 %v498, %v648
      %v703 = vadd.f32 %v503, %v653
      %v704 = vadd.f32 %v506, %v656
      %v705 = vadd.f32 %v511, %v661
      %v706 = vadd.f32 %v514, %v664
      %v707 = vadd.f32 %v519, %v669
      %v708 = vadd.f32 %v522, %v672
      %v709 = vadd.f32 %v527, %v677
      %v710 = vadd.f32 %v530, %v680
      %v711 = vadd.f32 %v535, %v685
      %v712 = vadd.f32 %v538, %v688
      %v713 = vadd.f32 %v543, %v693
      %v714 = vadd.f32 %v546, %v696
      %v715 = vld [vmem:[%s272 + $0x1] sm:$0xff]
      %v716 = vld [vmem:[%s272 + $0x11] sm:$0xff]
      %v717 = vld [vmem:[%s272 + $0x21] sm:$0xff]
      %v718 = vld [vmem:[%s272 + $0x31] sm:$0xff]
      %v719 = vld [vmem:[%s272 + $0x41] sm:$0xff]
      %v720 = vld [vmem:[%s272 + $0x51] sm:$0xff]
      %v721 = vld [vmem:[%s272 + $0x61] sm:$0xff]
      %v722 = vld [vmem:[%s272 + $0x71] sm:$0xff]
      %v723 = vld [vmem:[%s272 + $0xb1] sm:$0xff]
      %v724 = vld [vmem:[%s272 + $0xc1] sm:$0xff]
      %v725 = vld [vmem:[%s272 + $0xd1] sm:$0xff]
      %v726 = vld [vmem:[%s272 + $0xe1] sm:$0xff]
      %v727 = vld [vmem:[%s272 + $0xf1] sm:$0xff]
      %v728 = vld [vmem:[%s272 + $0x101] sm:$0xff]
      %v729 = vld [vmem:[%s272 + $0x111] sm:$0xff]
      %v730 = vld [vmem:[%s272 + $0x121] sm:$0xff]
      %v731 = vpack.c.bf16 %v716, %v715
      %v732 = vpack.c.bf16 %v718, %v717
      %v733 = vpack.c.bf16 %v720, %v719
      %v734 = vpack.c.bf16 %v722, %v721
      %v735 = vpack.c.bf16 %v724, %v723
      %v736 = vpack.c.bf16 %v726, %v725
      %v737 = vpack.c.bf16 %v728, %v727
      %v738 = vpack.c.bf16 %v730, %v729
      %s739 = scalar_lea.vmem %s234, 12
      %v740 = vld [vmem:[%s739] sm:$0xf]
      %v742 = vsel %vm299, %v731, 0
      %v745 = vsel %vm299, %v732, 0
      %v748 = vsel %vm299, %v733, 0
      %v751 = vsel %vm299, %v734, 0
      %v754 = vsel %vm299, %v735, 0
      %v757 = vsel %vm299, %v736, 0
      %v760 = vsel %vm299, %v737, 0
      %v763 = vsel %vm299, %v738, 0
      %v766 = vsel %vm324, %v740, 0
      %768 = vmatprep.subr.bf16.mxu0 0
      %769 = vmatpush1.bf16.msra.mxu0 %v766
      %770 = vmatprep.subr.bf16.mxu0 0
      %771 = vmatpush1.bf16.msra.mxu0 0
      %772 = vmatprep.subr.bf16.mxu0 0
      %773 = vmatpush1.bf16.msra.mxu0 0
      %774 = vmatprep.subr.bf16.mxu0 0
      %775 = vmatpush1.bf16.msra.mxu0 0
      %776 = vmatprep.subr.bf16.mxu0 0
      %777 = vmatpush1.bf16.msra.mxu0 0
      %778 = vmatprep.subr.bf16.mxu0 0
      %779 = vmatpush1.bf16.msra.mxu0 0
      %780 = vmatprep.subr.bf16.mxu0 0
      %781 = vmatpush1.bf16.msra.mxu0 0
      %782 = vmatprep.subr.bf16.mxu0 0
      %783 = vmatpush1.bf16.msra.mxu0 0
      %784 = vmatprep.subr.bf16.mxu0 0
      %785 = vmatpush1.bf16.msra.mxu0 0
      %786 = vmatprep.subr.bf16.mxu0 0
      %787 = vmatpush1.bf16.msra.mxu0 0
      %788 = vmatprep.subr.bf16.mxu0 0
      %789 = vmatpush1.bf16.msra.mxu0 0
      %790 = vmatprep.subr.bf16.mxu0 0
      %791 = vmatpush1.bf16.msra.mxu0 0
      %792 = vmatprep.subr.bf16.mxu0 0
      %793 = vmatpush1.bf16.msra.mxu0 0
      %794 = vmatprep.subr.bf16.mxu0 0
      %795 = vmatpush1.bf16.msra.mxu0 0
      %796 = vmatprep.subr.bf16.mxu0 0
      %797 = vmatpush1.bf16.msra.mxu0 0
      %798 = vmatprep.subr.bf16.mxu0 0
      %799 = vmatpush1.bf16.msra.mxu0 0
      %800 = vmatprep.mubr.bf16.mxu0 0
      %801 = vmatmul.mubr.bf16.gmra.mrb[0].mxu0 %v742
      %v802 = vpop.f32.mrb[0].mxu0
      %v803 = vadd.f32 0.0, %v802
      %v804 = vpop.f32.mrb[0].mxu0
      %v805 = vpop.f32.mrb[0].mxu0
      %v806 = vadd.f32 0.0, %v805
      %v807 = vpop.f32.mrb[0].mxu0
      %808 = vmatprep.mubr.bf16.mxu0 0
      %809 = vmatmul.mubr.bf16.gmra.mrb[0].mxu0 %v745
      %v810 = vpop.f32.mrb[0].mxu0
      %v811 = vadd.f32 0.0, %v810
      %v812 = vpop.f32.mrb[0].mxu0
      %v813 = vpop.f32.mrb[0].mxu0
      %v814 = vadd.f32 0.0, %v813
      %v815 = vpop.f32.mrb[0].mxu0
      %816 = vmatprep.mubr.bf16.mxu0 0
      %817 = vmatmul.mubr.bf16.gmra.mrb[0].mxu0 %v748
      %v818 = vpop.f32.mrb[0].mxu0
      %v819 = vadd.f32 0.0, %v818
      %v820 = vpop.f32.mrb[0].mxu0
      %v821 = vpop.f32.mrb[0].mxu0
      %v822 = vadd.f32 0.0, %v821
      %v823 = vpop.f32.mrb[0].mxu0
      %824 = vmatprep.mubr.bf16.mxu0 0
      %825 = vmatmul.mubr.bf16.gmra.mrb[0].mxu0 %v751
      %v826 = vpop.f32.mrb[0].mxu0
      %v827 = vadd.f32 0.0, %v826
      %v828 = vpop.f32.mrb[0].mxu0
      %v829 = vpop.f32.mrb[0].mxu0
      %v830 = vadd.f32 0.0, %v829
      %v831 = vpop.f32.mrb[0].mxu0
      %832 = vmatprep.mubr.bf16.mxu0 0
      %833 = vmatmul.mubr.bf16.gmra.mrb[0].mxu0 %v754
      %v834 = vpop.f32.mrb[0].mxu0
      %v835 = vadd.f32 0.0, %v834
      %v836 = vpop.f32.mrb[0].mxu0
      %v837 = vpop.f32.mrb[0].mxu0
      %v838 = vadd.f32 0.0, %v837
      %v839 = vpop.f32.mrb[0].mxu0
      %840 = vmatprep.mubr.bf16.mxu0 0
      %841 = vmatmul.mubr.bf16.gmra.mrb[0].mxu0 %v757
      %v842 = vpop.f32.mrb[0].mxu0
      %v843 = vadd.f32 0.0, %v842
      %v844 = vpop.f32.mrb[0].mxu0
      %v845 = vpop.f32.mrb[0].mxu0
      %v846 = vadd.f32 0.0, %v845
      %v847 = vpop.f32.mrb[0].mxu0
      %848 = vmatprep.mubr.bf16.mxu0 0
      %849 = vmatmul.mubr.bf16.gmra.mrb[0].mxu0 %v760
      %v850 = vpop.f32.mrb[0].mxu0
      %v851 = vadd.f32 0.0, %v850
      %v852 = vpop.f32.mrb[0].mxu0
      %v853 = vpop.f32.mrb[0].mxu0
      %v854 = vadd.f32 0.0, %v853
      %v855 = vpop.f32.mrb[0].mxu0
      %856 = vmatprep.mubr.bf16.mxu0 0
      %857 = vmatmul.mubr.bf16.gmra.mrb[0].mxu0 %v763
      %v858 = vpop.f32.mrb[0].mxu0
      %v859 = vadd.f32 0.0, %v858
      %v860 = vpop.f32.mrb[0].mxu0
      %v861 = vpop.f32.mrb[0].mxu0
      %v862 = vadd.f32 0.0, %v861
      %v863 = vpop.f32.mrb[0].mxu0
      %864 = vdwg.mxu0
      %v865 = vadd.f32 %v699, %v803
      %v866 = vadd.f32 %v700, %v806
      %v867 = vadd.f32 %v701, %v811
      %v868 = vadd.f32 %v702, %v814
      %v869 = vadd.f32 %v703, %v819
      %v870 = vadd.f32 %v704, %v822
      %v871 = vadd.f32 %v705, %v827
      %v872 = vadd.f32 %v706, %v830
      %v873 = vadd.f32 %v707, %v835
      %v874 = vadd.f32 %v708, %v838
      %v875 = vadd.f32 %v709, %v843
      %v876 = vadd.f32 %v710, %v846
      %v877 = vadd.f32 %v711, %v851
      %v878 = vadd.f32 %v712, %v854
      %v879 = vadd.f32 %v713, %v859
      %v880 = vadd.f32 %v714, %v862
      %v881 = vld [vmem:[%s229 + $0x2] sm:$0xff]
      %v882 = vld [vmem:[%s229 + $0x12] sm:$0xff]
      %v883 = vld [vmem:[%s229 + $0x22] sm:$0xff]
      %v884 = vld [vmem:[%s229 + $0x32] sm:$0xff]
      %v885 = vld [vmem:[%s229 + $0x42] sm:$0xff]
      %v886 = vld [vmem:[%s229 + $0x52] sm:$0xff]
      %v887 = vld [vmem:[%s229 + $0x62] sm:$0xff]
      %v888 = vld [vmem:[%s229 + $0x72] sm:$0xff]
      %v889 = vld [vmem:[%s229 + $0xb2] sm:$0xff]
      %v890 = vld [vmem:[%s229 + $0xc2] sm:$0xff]
      %v891 = vld [vmem:[%s229 + $0xd2] sm:$0xff]
      %v892 = vld [vmem:[%s229 + $0xe2] sm:$0xff]
      %v893 = vld [vmem:[%s229 + $0xf2] sm:$0xff]
      %v894 = vld [vmem:[%s229 + $0x102] sm:$0xff]
      %v895 = vld [vmem:[%s229 + $0x112] sm:$0xff]
      %v896 = vld [vmem:[%s229 + $0x122] sm:$0xff]
      %v897 = vpack.c.bf16 %v882, %v881
      %v898 = vpack.c.bf16 %v884, %v883
      %v899 = vpack.c.bf16 %v886, %v885
      %v900 = vpack.c.bf16 %v888, %v887
      %v901 = vpack.c.bf16 %v890, %v889
      %v902 = vpack.c.bf16 %v892, %v891
      %v903 = vpack.c.bf16 %v894, %v893
      %v904 = vpack.c.bf16 %v896, %v895
      %s905 = scalar_lea.vmem %s234, 16
      %v906 = vld [vmem:[%s905] sm:$0xf]
      %v908 = vsel %vm299, %v897, 0
      %v911 = vsel %vm299, %v898, 0
      %v914 = vsel %vm299, %v899, 0
      %v917 = vsel %vm299, %v900, 0
      %v920 = vsel %vm299, %v901, 0
      %v923 = vsel %vm299, %v902, 0
      %v926 = vsel %vm299, %v903, 0
      %v929 = vsel %vm299, %v904, 0
      %v932 = vsel %vm324, %v906, 0
      %934 = vmatprep.subr.bf16.mxu0 0
      %935 = vmatpush1.bf16.msra.mxu0 %v932
      %936 = vmatprep.subr.bf16.mxu0 0
      %937 = vmatpush1.bf16.msra.mxu0 0
      %938 = vmatprep.subr.bf16.mxu0 0
      %939 = vmatpush1.bf16.msra.mxu0 0
      %940 = vmatprep.subr.bf16.mxu0 0
      %941 = vmatpush1.bf16.msra.mxu0 0
      %942 = vmatprep.subr.bf16.mxu0 0
      %943 = vmatpush1.bf16.msra.mxu0 0
      %944 = vmatprep.subr.bf16.mxu0 0
      %945 = vmatpush1.bf16.msra.mxu0 0
      %946 = vmatprep.subr.bf16.mxu0 0
      %947 = vmatpush1.bf16.msra.mxu0 0
      %948 = vmatprep.subr.bf16.mxu0 0
      %949 = vmatpush1.bf16.msra.mxu0 0
      %950 = vmatprep.subr.bf16.mxu0 0
      %951 = vmatpush1.bf16.msra.mxu0 0
      %952 = vmatprep.subr.bf16.mxu0 0
      %953 = vmatpush1.bf16.msra.mxu0 0
      %954 = vmatprep.subr.bf16.mxu0 0
      %955 = vmatpush1.bf16.msra.mxu0 0
      %956 = vmatprep.subr.bf16.mxu0 0
      %957 = vmatpush1.bf16.msra.mxu0 0
      %958 = vmatprep.subr.bf16.mxu0 0
      %959 = vmatpush1.bf16.msra.mxu0 0
      %960 = vmatprep.subr.bf16.mxu0 0
      %961 = vmatpush1.bf16.msra.mxu0 0
      %962 = vmatprep.subr.bf16.mxu0 0
      %963 = vmatpush1.bf16.msra.mxu0 0
      %964 = vmatprep.subr.bf16.mxu0 0
      %965 = vmatpush1.bf16.msra.mxu0 0
      %966 = vmatprep.mubr.bf16.mxu0 0
      %967 = vmatmul.mubr.bf16.gmra.mrb[0].mxu0 %v908
      %v968 = vpop.f32.mrb[0].mxu0
      %v969 = vadd.f32 0.0, %v968
      %v970 = vpop.f32.mrb[0].mxu0
      %v971 = vpop.f32.mrb[0].mxu0
      %v972 = vadd.f32 0.0, %v971
      %v973 = vpop.f32.mrb[0].mxu0
      %974 = vmatprep.mubr.bf16.mxu0 0
      %975 = vmatmul.mubr.bf16.gmra.mrb[0].mxu0 %v911
      %v976 = vpop.f32.mrb[0].mxu0
      %v977 = vadd.f32 0.0, %v976
      %v978 = vpop.f32.mrb[0].mxu0
      %v979 = vpop.f32.mrb[0].mxu0
      %v980 = vadd.f32 0.0, %v979
      %v981 = vpop.f32.mrb[0].mxu0
      %982 = vmatprep.mubr.bf16.mxu0 0
      %983 = vmatmul.mubr.bf16.gmra.mrb[0].mxu0 %v914
      %v984 = vpop.f32.mrb[0].mxu0
      %v985 = vadd.f32 0.0, %v984
      %v986 = vpop.f32.mrb[0].mxu0
      %v987 = vpop.f32.mrb[0].mxu0
      %v988 = vadd.f32 0.0, %v987
      %v989 = vpop.f32.mrb[0].mxu0
      %990 = vmatprep.mubr.bf16.mxu0 0
      %991 = vmatmul.mubr.bf16.gmra.mrb[0].mxu0 %v917
      %v992 = vpop.f32.mrb[0].mxu0
      %v993 = vadd.f32 0.0, %v992
      %v994 = vpop.f32.mrb[0].mxu0
      %v995 = vpop.f32.mrb[0].mxu0
      %v996 = vadd.f32 0.0, %v995
      %v997 = vpop.f32.mrb[0].mxu0
      %998 = vmatprep.mubr.bf16.mxu0 0
      %999 = vmatmul.mubr.bf16.gmra.mrb[0].mxu0 %v920
      %v1000 = vpop.f32.mrb[0].mxu0
      %v1001 = vadd.f32 0.0, %v1000
      %v1002 = vpop.f32.mrb[0].mxu0
      %v1003 = vpop.f32.mrb[0].mxu0
      %v1004 = vadd.f32 0.0, %v1003
      %v1005 = vpop.f32.mrb[0].mxu0
      %1006 = vmatprep.mubr.bf16.mxu0 0
      %1007 = vmatmul.mubr.bf16.gmra.mrb[0].mxu0 %v923
      %v1008 = vpop.f32.mrb[0].mxu0
      %v1009 = vadd.f32 0.0, %v1008
      %v1010 = vpop.f32.mrb[0].mxu0
      %v1011 = vpop.f32.mrb[0].mxu0
      %v1012 = vadd.f32 0.0, %v1011
      %v1013 = vpop.f32.mrb[0].mxu0
      %1014 = vmatprep.mubr.bf16.mxu0 0
      %1015 = vmatmul.mubr.bf16.gmra.mrb[0].mxu0 %v926
      %v1016 = vpop.f32.mrb[0].mxu0
      %v1017 = vadd.f32 0.0, %v1016
      %v1018 = vpop.f32.mrb[0].mxu0
      %v1019 = vpop.f32.mrb[0].mxu0
      %v1020 = vadd.f32 0.0, %v1019
      %v1021 = vpop.f32.mrb[0].mxu0
      %1022 = vmatprep.mubr.bf16.mxu0 0
      %1023 = vmatmul.mubr.bf16.gmra.mrb[0].mxu0 %v929
      %v1024 = vpop.f32.mrb[0].mxu0
      %v1025 = vadd.f32 0.0, %v1024
      %v1026 = vpop.f32.mrb[0].mxu0
      %v1027 = vpop.f32.mrb[0].mxu0
      %v1028 = vadd.f32 0.0, %v1027
      %v1029 = vpop.f32.mrb[0].mxu0
      %1030 = vdwg.mxu0
      %v1031 = vadd.f32 %v865, %v969
      %v1032 = vadd.f32 %v866, %v972
      %v1033 = vadd.f32 %v867, %v977
      %v1034 = vadd.f32 %v868, %v980
      %v1035 = vadd.f32 %v869, %v985
      %v1036 = vadd.f32 %v870, %v988
      %v1037 = vadd.f32 %v871, %v993
      %v1038 = vadd.f32 %v872, %v996
      %v1039 = vadd.f32 %v873, %v1001
      %v1040 = vadd.f32 %v874, %v1004
      %v1041 = vadd.f32 %v875, %v1009
      %v1042 = vadd.f32 %v876, %v1012
      %v1043 = vadd.f32 %v877, %v1017
      %v1044 = vadd.f32 %v878, %v1020
      %v1045 = vadd.f32 %v879, %v1025
      %v1046 = vadd.f32 %v880, %v1028
      %v1047 = vld [vmem:[%s272 + $0x2] sm:$0xff]
      %v1048 = vld [vmem:[%s272 + $0x12] sm:$0xff]
      %v1049 = vld [vmem:[%s272 + $0x22] sm:$0xff]
      %v1050 = vld [vmem:[%s272 + $0x32] sm:$0xff]
      %v1051 = vld [vmem:[%s272 + $0x42] sm:$0xff]
      %v1052 = vld [vmem:[%s272 + $0x52] sm:$0xff]
      %v1053 = vld [vmem:[%s272 + $0x62] sm:$0xff]
      %v1054 = vld [vmem:[%s272 + $0x72] sm:$0xff]
      %v1055 = vld [vmem:[%s272 + $0xb2] sm:$0xff]
      %v1056 = vld [vmem:[%s272 + $0xc2] sm:$0xff]
      %v1057 = vld [vmem:[%s272 + $0xd2] sm:$0xff]
      %v1058 = vld [vmem:[%s272 + $0xe2] sm:$0xff]
      %v1059 = vld [vmem:[%s272 + $0xf2] sm:$0xff]
      %v1060 = vld [vmem:[%s272 + $0x102] sm:$0xff]
      %v1061 = vld [vmem:[%s272 + $0x112] sm:$0xff]
      %v1062 = vld [vmem:[%s272 + $0x122] sm:$0xff]
      %v1063 = vpack.c.bf16 %v1048, %v1047
      %v1064 = vpack.c.bf16 %v1050, %v1049
      %v1065 = vpack.c.bf16 %v1052, %v1051
      %v1066 = vpack.c.bf16 %v1054, %v1053
      %v1067 = vpack.c.bf16 %v1056, %v1055
      %v1068 = vpack.c.bf16 %v1058, %v1057
      %v1069 = vpack.c.bf16 %v1060, %v1059
      %v1070 = vpack.c.bf16 %v1062, %v1061
      %s1071 = scalar_lea.vmem %s234, 20
      %v1072 = vld [vmem:[%s1071] sm:$0xf]
      %v1074 = vsel %vm299, %v1063, 0
      %v1077 = vsel %vm299, %v1064, 0
      %v1080 = vsel %vm299, %v1065, 0
      %v1083 = vsel %vm299, %v1066, 0
      %v1086 = vsel %vm299, %v1067, 0
      %v1089 = vsel %vm299, %v1068, 0
      %v1092 = vsel %vm299, %v1069, 0
      %v1095 = vsel %vm299, %v1070, 0
      %v1098 = vsel %vm324, %v1072, 0
      %1100 = vmatprep.subr.bf16.mxu0 0
      %1101 = vmatpush1.bf16.msra.mxu0 %v1098
      %1102 = vmatprep.subr.bf16.mxu0 0
      %1103 = vmatpush1.bf16.msra.mxu0 0
      %1104 = vmatprep.subr.bf16.mxu0 0
      %1105 = vmatpush1.bf16.msra.mxu0 0
      %1106 = vmatprep.subr.bf16.mxu0 0
      %1107 = vmatpush1.bf16.msra.mxu0 0
      %1108 = vmatprep.subr.bf16.mxu0 0
      %1109 = vmatpush1.bf16.msra.mxu0 0
      %1110 = vmatprep.subr.bf16.mxu0 0
      %1111 = vmatpush1.bf16.msra.mxu0 0
      %1112 = vmatprep.subr.bf16.mxu0 0
      %1113 = vmatpush1.bf16.msra.mxu0 0
      %1114 = vmatprep.subr.bf16.mxu0 0
      %1115 = vmatpush1.bf16.msra.mxu0 0
      %1116 = vmatprep.subr.bf16.mxu0 0
      %1117 = vmatpush1.bf16.msra.mxu0 0
      %1118 = vmatprep.subr.bf16.mxu0 0
      %1119 = vmatpush1.bf16.msra.mxu0 0
      %1120 = vmatprep.subr.bf16.mxu0 0
      %1121 = vmatpush1.bf16.msra.mxu0 0
      %1122 = vmatprep.subr.bf16.mxu0 0
      %1123 = vmatpush1.bf16.msra.mxu0 0
      %1124 = vmatprep.subr.bf16.mxu0 0
      %1125 = vmatpush1.bf16.msra.mxu0 0
      %1126 = vmatprep.subr.bf16.mxu0 0
      %1127 = vmatpush1.bf16.msra.mxu0 0
      %1128 = vmatprep.subr.bf16.mxu0 0
      %1129 = vmatpush1.bf16.msra.mxu0 0
      %1130 = vmatprep.subr.bf16.mxu0 0
      %1131 = vmatpush1.bf16.msra.mxu0 0
      %1132 = vmatprep.mubr.bf16.mxu0 0
      %1133 = vmatmul.mubr.bf16.gmra.mrb[0].mxu0 %v1074
      %v1134 = vpop.f32.mrb[0].mxu0
      %v1135 = vadd.f32 0.0, %v1134
      %v1136 = vpop.f32.mrb[0].mxu0
      %v1137 = vpop.f32.mrb[0].mxu0
      %v1138 = vadd.f32 0.0, %v1137
      %v1139 = vpop.f32.mrb[0].mxu0
      %1140 = vmatprep.mubr.bf16.mxu0 0
      %1141 = vmatmul.mubr.bf16.gmra.mrb[0].mxu0 %v1077
      %v1142 = vpop.f32.mrb[0].mxu0
      %v1143 = vadd.f32 0.0, %v1142
      %v1144 = vpop.f32.mrb[0].mxu0
      %v1145 = vpop.f32.mrb[0].mxu0
      %v1146 = vadd.f32 0.0, %v1145
      %v1147 = vpop.f32.mrb[0].mxu0
      %1148 = vmatprep.mubr.bf16.mxu0 0
      %1149 = vmatmul.mubr.bf16.gmra.mrb[0].mxu0 %v1080
      %v1150 = vpop.f32.mrb[0].mxu0
      %v1151 = vadd.f32 0.0, %v1150
      %v1152 = vpop.f32.mrb[0].mxu0
      %v1153 = vpop.f32.mrb[0].mxu0
      %v1154 = vadd.f32 0.0, %v1153
      %v1155 = vpop.f32.mrb[0].mxu0
      %1156 = vmatprep.mubr.bf16.mxu0 0
      %1157 = vmatmul.mubr.bf16.gmra.mrb[0].mxu0 %v1083
      %v1158 = vpop.f32.mrb[0].mxu0
      %v1159 = vadd.f32 0.0, %v1158
      %v1160 = vpop.f32.mrb[0].mxu0
      %v1161 = vpop.f32.mrb[0].mxu0
      %v1162 = vadd.f32 0.0, %v1161
      %v1163 = vpop.f32.mrb[0].mxu0
      %1164 = vmatprep.mubr.bf16.mxu0 0
      %1165 = vmatmul.mubr.bf16.gmra.mrb[0].mxu0 %v1086
      %v1166 = vpop.f32.mrb[0].mxu0
      %v1167 = vadd.f32 0.0, %v1166
      %v1168 = vpop.f32.mrb[0].mxu0
      %v1169 = vpop.f32.mrb[0].mxu0
      %v1170 = vadd.f32 0.0, %v1169
      %v1171 = vpop.f32.mrb[0].mxu0
      %1172 = vmatprep.mubr.bf16.mxu0 0
      %1173 = vmatmul.mubr.bf16.gmra.mrb[0].mxu0 %v1089
      %v1174 = vpop.f32.mrb[0].mxu0
      %v1175 = vadd.f32 0.0, %v1174
      %v1176 = vpop.f32.mrb[0].mxu0
      %v1177 = vpop.f32.mrb[0].mxu0
      %v1178 = vadd.f32 0.0, %v1177
      %v1179 = vpop.f32.mrb[0].mxu0
      %1180 = vmatprep.mubr.bf16.mxu0 0
      %1181 = vmatmul.mubr.bf16.gmra.mrb[0].mxu0 %v1092
      %v1182 = vpop.f32.mrb[0].mxu0
      %v1183 = vadd.f32 0.0, %v1182
      %v1184 = vpop.f32.mrb[0].mxu0
      %v1185 = vpop.f32.mrb[0].mxu0
      %v1186 = vadd.f32 0.0, %v1185
      %v1187 = vpop.f32.mrb[0].mxu0
      %1188 = vmatprep.mubr.bf16.mxu0 0
      %1189 = vmatmul.mubr.bf16.gmra.mrb[0].mxu0 %v1095
      %v1190 = vpop.f32.mrb[0].mxu0
      %v1191 = vadd.f32 0.0, %v1190
      %v1192 = vpop.f32.mrb[0].mxu0
      %v1193 = vpop.f32.mrb[0].mxu0
      %v1194 = vadd.f32 0.0, %v1193
      %v1195 = vpop.f32.mrb[0].mxu0
      %1196 = vdwg.mxu0
      %v1197 = vadd.f32 %v1031, %v1135
      %v1198 = vadd.f32 %v1032, %v1138
      %v1199 = vadd.f32 %v1033, %v1143
      %v1200 = vadd.f32 %v1034, %v1146
      %v1201 = vadd.f32 %v1035, %v1151
      %v1202 = vadd.f32 %v1036, %v1154
      %v1203 = vadd.f32 %v1037, %v1159
      %v1204 = vadd.f32 %v1038, %v1162
      %v1205 = vadd.f32 %v1039, %v1167
      %v1206 = vadd.f32 %v1040, %v1170
      %v1207 = vadd.f32 %v1041, %v1175
      %v1208 = vadd.f32 %v1042, %v1178
      %v1209 = vadd.f32 %v1043, %v1183
      %v1210 = vadd.f32 %v1044, %v1186
      %v1211 = vadd.f32 %v1045, %v1191
      %v1212 = vadd.f32 %v1046, %v1194
      %v1213 = vld [vmem:[%s229 + $0x3] sm:$0xff]
      %v1214 = vld [vmem:[%s229 + $0x13] sm:$0xff]
      %v1215 = vld [vmem:[%s229 + $0x23] sm:$0xff]
      %v1216 = vld [vmem:[%s229 + $0x33] sm:$0xff]
      %v1217 = vld [vmem:[%s229 + $0x43] sm:$0xff]
      %v1218 = vld [vmem:[%s229 + $0x53] sm:$0xff]
      %v1219 = vld [vmem:[%s229 + $0x63] sm:$0xff]
      %v1220 = vld [vmem:[%s229 + $0x73] sm:$0xff]
      %v1221 = vld [vmem:[%s229 + $0xb3] sm:$0xff]
      %v1222 = vld [vmem:[%s229 + $0xc3] sm:$0xff]
      %v1223 = vld [vmem:[%s229 + $0xd3] sm:$0xff]
      %v1224 = vld [vmem:[%s229 + $0xe3] sm:$0xff]
      %v1225 = vld [vmem:[%s229 + $0xf3] sm:$0xff]
      %v1226 = vld [vmem:[%s229 + $0x103] sm:$0xff]
      %v1227 = vld [vmem:[%s229 + $0x113] sm:$0xff]
      %v1228 = vld [vmem:[%s229 + $0x123] sm:$0xff]
      %v1229 = vpack.c.bf16 %v1214, %v1213
      %v1230 = vpack.c.bf16 %v1216, %v1215
      %v1231 = vpack.c.bf16 %v1218, %v1217
      %v1232 = vpack.c.bf16 %v1220, %v1219
      %v1233 = vpack.c.bf16 %v1222, %v1221
      %v1234 = vpack.c.bf16 %v1224, %v1223
      %v1235 = vpack.c.bf16 %v1226, %v1225
      %v1236 = vpack.c.bf16 %v1228, %v1227
      %s1237 = scalar_lea.vmem %s234, 24
      %v1238 = vld [vmem:[%s1237] sm:$0xf]
      %v1240 = vsel %vm299, %v1229, 0
      %v1243 = vsel %vm299, %v1230, 0
      %v1246 = vsel %vm299, %v1231, 0
      %v1249 = vsel %vm299, %v1232, 0
      %v1252 = vsel %vm299, %v1233, 0
      %v1255 = vsel %vm299, %v1234, 0
      %v1258 = vsel %vm299, %v1235, 0
      %v1261 = vsel %vm299, %v1236, 0
      %v1264 = vsel %vm324, %v1238, 0
      %1266 = vmatprep.subr.bf16.mxu0 0
      %1267 = vmatpush1.bf16.msra.mxu0 %v1264
      %1268 = vmatprep.subr.bf16.mxu0 0
      %1269 = vmatpush1.bf16.msra.mxu0 0
      %1270 = vmatprep.subr.bf16.mxu0 0
      %1271 = vmatpush1.bf16.msra.mxu0 0
      %1272 = vmatprep.subr.bf16.mxu0 0
      %1273 = vmatpush1.bf16.msra.mxu0 0
      %1274 = vmatprep.subr.bf16.mxu0 0
      %1275 = vmatpush1.bf16.msra.mxu0 0
      %1276 = vmatprep.subr.bf16.mxu0 0
      %1277 = vmatpush1.bf16.msra.mxu0 0
      %1278 = vmatprep.subr.bf16.mxu0 0
      %1279 = vmatpush1.bf16.msra.mxu0 0
      %1280 = vmatprep.subr.bf16.mxu0 0
      %1281 = vmatpush1.bf16.msra.mxu0 0
      %1282 = vmatprep.subr.bf16.mxu0 0
      %1283 = vmatpush1.bf16.msra.mxu0 0
      %1284 = vmatprep.subr.bf16.mxu0 0
      %1285 = vmatpush1.bf16.msra.mxu0 0
      %1286 = vmatprep.subr.bf16.mxu0 0
      %1287 = vmatpush1.bf16.msra.mxu0 0
      %1288 = vmatprep.subr.bf16.mxu0 0
      %1289 = vmatpush1.bf16.msra.mxu0 0
      %1290 = vmatprep.subr.bf16.mxu0 0
      %1291 = vmatpush1.bf16.msra.mxu0 0
      %1292 = vmatprep.subr.bf16.mxu0 0
      %1293 = vmatpush1.bf16.msra.mxu0 0
      %1294 = vmatprep.subr.bf16.mxu0 0
      %1295 = vmatpush1.bf16.msra.mxu0 0
      %1296 = vmatprep.subr.bf16.mxu0 0
      %1297 = vmatpush1.bf16.msra.mxu0 0
      %1298 = vmatprep.mubr.bf16.mxu0 0
      %1299 = vmatmul.mubr.bf16.gmra.mrb[0].mxu0 %v1240
      %v1300 = vpop.f32.mrb[0].mxu0
      %v1301 = vadd.f32 0.0, %v1300
      %v1302 = vpop.f32.mrb[0].mxu0
      %v1303 = vpop.f32.mrb[0].mxu0
      %v1304 = vadd.f32 0.0, %v1303
      %v1305 = vpop.f32.mrb[0].mxu0
      %1306 = vmatprep.mubr.bf16.mxu0 0
      %1307 = vmatmul.mubr.bf16.gmra.mrb[0].mxu0 %v1243
      %v1308 = vpop.f32.mrb[0].mxu0
      %v1309 = vadd.f32 0.0, %v1308
      %v1310 = vpop.f32.mrb[0].mxu0
      %v1311 = vpop.f32.mrb[0].mxu0
      %v1312 = vadd.f32 0.0, %v1311
      %v1313 = vpop.f32.mrb[0].mxu0
      %1314 = vmatprep.mubr.bf16.mxu0 0
      %1315 = vmatmul.mubr.bf16.gmra.mrb[0].mxu0 %v1246
      %v1316 = vpop.f32.mrb[0].mxu0
      %v1317 = vadd.f32 0.0, %v1316
      %v1318 = vpop.f32.mrb[0].mxu0
      %v1319 = vpop.f32.mrb[0].mxu0
      %v1320 = vadd.f32 0.0, %v1319
      %v1321 = vpop.f32.mrb[0].mxu0
      %1322 = vmatprep.mubr.bf16.mxu0 0
      %1323 = vmatmul.mubr.bf16.gmra.mrb[0].mxu0 %v1249
      %v1324 = vpop.f32.mrb[0].mxu0
      %v1325 = vadd.f32 0.0, %v1324
      %v1326 = vpop.f32.mrb[0].mxu0
      %v1327 = vpop.f32.mrb[0].mxu0
      %v1328 = vadd.f32 0.0, %v1327
      %v1329 = vpop.f32.mrb[0].mxu0
      %1330 = vmatprep.mubr.bf16.mxu0 0
      %1331 = vmatmul.mubr.bf16.gmra.mrb[0].mxu0 %v1252
      %v1332 = vpop.f32.mrb[0].mxu0
      %v1333 = vadd.f32 0.0, %v1332
      %v1334 = vpop.f32.mrb[0].mxu0
      %v1335 = vpop.f32.mrb[0].mxu0
      %v1336 = vadd.f32 0.0, %v1335
      %v1337 = vpop.f32.mrb[0].mxu0
      %1338 = vmatprep.mubr.bf16.mxu0 0
      %1339 = vmatmul.mubr.bf16.gmra.mrb[0].mxu0 %v1255
      %v1340 = vpop.f32.mrb[0].mxu0
      %v1341 = vadd.f32 0.0, %v1340
      %v1342 = vpop.f32.mrb[0].mxu0
      %v1343 = vpop.f32.mrb[0].mxu0
      %v1344 = vadd.f32 0.0, %v1343
      %v1345 = vpop.f32.mrb[0].mxu0
      %1346 = vmatprep.mubr.bf16.mxu0 0
      %1347 = vmatmul.mubr.bf16.gmra.mrb[0].mxu0 %v1258
      %v1348 = vpop.f32.mrb[0].mxu0
      %v1349 = vadd.f32 0.0, %v1348
      %v1350 = vpop.f32.mrb[0].mxu0
      %v1351 = vpop.f32.mrb[0].mxu0
      %v1352 = vadd.f32 0.0, %v1351
      %v1353 = vpop.f32.mrb[0].mxu0
      %1354 = vmatprep.mubr.bf16.mxu0 0
      %1355 = vmatmul.mubr.bf16.gmra.mrb[0].mxu0 %v1261
      %v1356 = vpop.f32.mrb[0].mxu0
      %v1357 = vadd.f32 0.0, %v1356
      %v1358 = vpop.f32.mrb[0].mxu0
      %v1359 = vpop.f32.mrb[0].mxu0
      %v1360 = vadd.f32 0.0, %v1359
      %v1361 = vpop.f32.mrb[0].mxu0
      %1362 = vdwg.mxu0
      %v1363 = vadd.f32 %v1197, %v1301
      %v1364 = vadd.f32 %v1198, %v1304
      %v1365 = vadd.f32 %v1199, %v1309
      %v1366 = vadd.f32 %v1200, %v1312
      %v1367 = vadd.f32 %v1201, %v1317
      %v1368 = vadd.f32 %v1202, %v1320
      %v1369 = vadd.f32 %v1203, %v1325
      %v1370 = vadd.f32 %v1204, %v1328
      %v1371 = vadd.f32 %v1205, %v1333
      %v1372 = vadd.f32 %v1206, %v1336
      %v1373 = vadd.f32 %v1207, %v1341
      %v1374 = vadd.f32 %v1208, %v1344
      %v1375 = vadd.f32 %v1209, %v1349
      %v1376 = vadd.f32 %v1210, %v1352
      %v1377 = vadd.f32 %v1211, %v1357
      %v1378 = vadd.f32 %v1212, %v1360
      %s1379 = scalar_lea.vmem %s229, 704
      %v1380 = vld [vmem:[%s1379] sm:$0xff]
      %v1381 = vld [vmem:[%s1379 + $0x10] sm:$0xff]
      %v1382 = vld [vmem:[%s1379 + $0x20] sm:$0xff]
      %v1383 = vld [vmem:[%s1379 + $0x30] sm:$0xff]
      %v1384 = vld [vmem:[%s1379 + $0x40] sm:$0xff]
      %v1385 = vld [vmem:[%s1379 + $0x50] sm:$0xff]
      %v1386 = vld [vmem:[%s1379 + $0x60] sm:$0xff]
      %v1387 = vld [vmem:[%s1379 + $0x70] sm:$0xff]
      %v1388 = vld [vmem:[%s1379 + $0xb0] sm:$0xff]
      %v1389 = vld [vmem:[%s1379 + $0xc0] sm:$0xff]
      %v1390 = vld [vmem:[%s1379 + $0xd0] sm:$0xff]
      %v1391 = vld [vmem:[%s1379 + $0xe0] sm:$0xff]
      %v1392 = vld [vmem:[%s1379 + $0xf0] sm:$0xff]
      %v1393 = vld [vmem:[%s1379 + $0x100] sm:$0xff]
      %v1394 = vld [vmem:[%s1379 + $0x110] sm:$0xff]
      %v1395 = vld [vmem:[%s1379 + $0x120] sm:$0xff]
      %v1396 = vpack.c.bf16 %v1381, %v1380
      %v1397 = vpack.c.bf16 %v1383, %v1382
      %v1398 = vpack.c.bf16 %v1385, %v1384
      %v1399 = vpack.c.bf16 %v1387, %v1386
      %v1400 = vpack.c.bf16 %v1389, %v1388
      %v1401 = vpack.c.bf16 %v1391, %v1390
      %v1402 = vpack.c.bf16 %v1393, %v1392
      %v1403 = vpack.c.bf16 %v1395, %v1394
      %s1404 = scalar_lea.vmem %s234, 28
      %v1405 = vld [vmem:[%s1404] sm:$0xf]
      %v1407 = vsel %vm299, %v1396, 0
      %v1410 = vsel %vm299, %v1397, 0
      %v1413 = vsel %vm299, %v1398, 0
      %v1416 = vsel %vm299, %v1399, 0
      %v1419 = vsel %vm299, %v1400, 0
      %v1422 = vsel %vm299, %v1401, 0
      %v1425 = vsel %vm299, %v1402, 0
      %v1428 = vsel %vm299, %v1403, 0
      %v1431 = vsel %vm324, %v1405, 0
      %1433 = vmatprep.subr.bf16.mxu0 0
      %1434 = vmatpush1.bf16.msra.mxu0 %v1431
      %1435 = vmatprep.subr.bf16.mxu0 0
      %1436 = vmatpush1.bf16.msra.mxu0 0
      %1437 = vmatprep.subr.bf16.mxu0 0
      %1438 = vmatpush1.bf16.msra.mxu0 0
      %1439 = vmatprep.subr.bf16.mxu0 0
      %1440 = vmatpush1.bf16.msra.mxu0 0
      %1441 = vmatprep.subr.bf16.mxu0 0
      %1442 = vmatpush1.bf16.msra.mxu0 0
      %1443 = vmatprep.subr.bf16.mxu0 0
      %1444 = vmatpush1.bf16.msra.mxu0 0
      %1445 = vmatprep.subr.bf16.mxu0 0
      %1446 = vmatpush1.bf16.msra.mxu0 0
      %1447 = vmatprep.subr.bf16.mxu0 0
      %1448 = vmatpush1.bf16.msra.mxu0 0
      %1449 = vmatprep.subr.bf16.mxu0 0
      %1450 = vmatpush1.bf16.msra.mxu0 0
      %1451 = vmatprep.subr.bf16.mxu0 0
      %1452 = vmatpush1.bf16.msra.mxu0 0
      %1453 = vmatprep.subr.bf16.mxu0 0
      %1454 = vmatpush1.bf16.msra.mxu0 0
      %1455 = vmatprep.subr.bf16.mxu0 0
      %1456 = vmatpush1.bf16.msra.mxu0 0
      %1457 = vmatprep.subr.bf16.mxu0 0
      %1458 = vmatpush1.bf16.msra.mxu0 0
      %1459 = vmatprep.subr.bf16.mxu0 0
      %1460 = vmatpush1.bf16.msra.mxu0 0
      %1461 = vmatprep.subr.bf16.mxu0 0
      %1462 = vmatpush1.bf16.msra.mxu0 0
      %1463 = vmatprep.subr.bf16.mxu0 0
      %1464 = vmatpush1.bf16.msra.mxu0 0
      %1465 = vmatprep.mubr.bf16.mxu0 0
      %1466 = vmatmul.mubr.bf16.gmra.mrb[0].mxu0 %v1407
      %v1467 = vpop.f32.mrb[0].mxu0
      %v1468 = vadd.f32 0.0, %v1467
      %v1469 = vpop.f32.mrb[0].mxu0
      %v1470 = vpop.f32.mrb[0].mxu0
      %v1471 = vadd.f32 0.0, %v1470
      %v1472 = vpop.f32.mrb[0].mxu0
      %1473 = vmatprep.mubr.bf16.mxu0 0
      %1474 = vmatmul.mubr.bf16.gmra.mrb[0].mxu0 %v1410
      %v1475 = vpop.f32.mrb[0].mxu0
      %v1476 = vadd.f32 0.0, %v1475
      %v1477 = vpop.f32.mrb[0].mxu0
      %v1478 = vpop.f32.mrb[0].mxu0
      %v1479 = vadd.f32 0.0, %v1478
      %v1480 = vpop.f32.mrb[0].mxu0
      %1481 = vmatprep.mubr.bf16.mxu0 0
      %1482 = vmatmul.mubr.bf16.gmra.mrb[0].mxu0 %v1413
      %v1483 = vpop.f32.mrb[0].mxu0
      %v1484 = vadd.f32 0.0, %v1483
      %v1485 = vpop.f32.mrb[0].mxu0
      %v1486 = vpop.f32.mrb[0].mxu0
      %v1487 = vadd.f32 0.0, %v1486
      %v1488 = vpop.f32.mrb[0].mxu0
      %1489 = vmatprep.mubr.bf16.mxu0 0
      %1490 = vmatmul.mubr.bf16.gmra.mrb[0].mxu0 %v1416
      %v1491 = vpop.f32.mrb[0].mxu0
      %v1492 = vadd.f32 0.0, %v1491
      %v1493 = vpop.f32.mrb[0].mxu0
      %v1494 = vpop.f32.mrb[0].mxu0
      %v1495 = vadd.f32 0.0, %v1494
      %v1496 = vpop.f32.mrb[0].mxu0
      %1497 = vmatprep.mubr.bf16.mxu0 0
      %1498 = vmatmul.mubr.bf16.gmra.mrb[0].mxu0 %v1419
      %v1499 = vpop.f32.mrb[0].mxu0
      %v1500 = vadd.f32 0.0, %v1499
      %v1501 = vpop.f32.mrb[0].mxu0
      %v1502 = vpop.f32.mrb[0].mxu0
      %v1503 = vadd.f32 0.0, %v1502
      %v1504 = vpop.f32.mrb[0].mxu0
      %1505 = vmatprep.mubr.bf16.mxu0 0
      %1506 = vmatmul.mubr.bf16.gmra.mrb[0].mxu0 %v1422
      %v1507 = vpop.f32.mrb[0].mxu0
      %v1508 = vadd.f32 0.0, %v1507
      %v1509 = vpop.f32.mrb[0].mxu0
      %v1510 = vpop.f32.mrb[0].mxu0
      %v1511 = vadd.f32 0.0, %v1510
      %v1512 = vpop.f32.mrb[0].mxu0
      %1513 = vmatprep.mubr.bf16.mxu0 0
      %1514 = vmatmul.mubr.bf16.gmra.mrb[0].mxu0 %v1425
      %v1515 = vpop.f32.mrb[0].mxu0
      %v1516 = vadd.f32 0.0, %v1515
      %v1517 = vpop.f32.mrb[0].mxu0
      %v1518 = vpop.f32.mrb[0].mxu0
      %v1519 = vadd.f32 0.0, %v1518
      %v1520 = vpop.f32.mrb[0].mxu0
      %1521 = vmatprep.mubr.bf16.mxu0 0
      %1522 = vmatmul.mubr.bf16.gmra.mrb[0].mxu0 %v1428
      %v1523 = vpop.f32.mrb[0].mxu0
      %v1524 = vadd.f32 0.0, %v1523
      %v1525 = vpop.f32.mrb[0].mxu0
      %v1526 = vpop.f32.mrb[0].mxu0
      %v1527 = vadd.f32 0.0, %v1526
      %v1528 = vpop.f32.mrb[0].mxu0
      %1529 = vdwg.mxu0
      %v1530 = vadd.f32 %v1363, %v1468
      %v1531 = vadd.f32 %v1364, %v1471
      %v1532 = vadd.f32 %v1365, %v1476
      %v1533 = vadd.f32 %v1366, %v1479
      %v1534 = vadd.f32 %v1367, %v1484
      %v1535 = vadd.f32 %v1368, %v1487
      %v1536 = vadd.f32 %v1369, %v1492
      %v1537 = vadd.f32 %v1370, %v1495
      %v1538 = vadd.f32 %v1371, %v1500
      %v1539 = vadd.f32 %v1372, %v1503
      %v1540 = vadd.f32 %v1373, %v1508
      %v1541 = vadd.f32 %v1374, %v1511
      %v1542 = vadd.f32 %v1375, %v1516
      %v1543 = vadd.f32 %v1376, %v1519
      %v1544 = vadd.f32 %v1377, %v1524
      %v1545 = vadd.f32 %v1378, %v1527
      %s1546 = scalar_lea.vmem %s229, 1056
      %v1547 = vld [vmem:[%s1546] sm:$0xff]
      %v1548 = vld [vmem:[%s1546 + $0x10] sm:$0xff]
      %v1549 = vld [vmem:[%s1546 + $0x20] sm:$0xff]
      %v1550 = vld [vmem:[%s1546 + $0x30] sm:$0xff]
      %v1551 = vld [vmem:[%s1546 + $0x40] sm:$0xff]
      %v1552 = vld [vmem:[%s1546 + $0x50] sm:$0xff]
      %v1553 = vld [vmem:[%s1546 + $0x60] sm:$0xff]
      %v1554 = vld [vmem:[%s1546 + $0x70] sm:$0xff]
      %v1555 = vld [vmem:[%s1546 + $0xb0] sm:$0xff]
      %v1556 = vld [vmem:[%s1546 + $0xc0] sm:$0xff]
      %v1557 = vld [vmem:[%s1546 + $0xd0] sm:$0xff]
      %v1558 = vld [vmem:[%s1546 + $0xe0] sm:$0xff]
      %v1559 = vld [vmem:[%s1546 + $0xf0] sm:$0xff]
      %v1560 = vld [vmem:[%s1546 + $0x100] sm:$0xff]
      %v1561 = vld [vmem:[%s1546 + $0x110] sm:$0xff]
      %v1562 = vld [vmem:[%s1546 + $0x120] sm:$0xff]
      %v1563 = vpack.c.bf16 %v1548, %v1547
      %v1564 = vpack.c.bf16 %v1550, %v1549
      %v1565 = vpack.c.bf16 %v1552, %v1551
      %v1566 = vpack.c.bf16 %v1554, %v1553
      %v1567 = vpack.c.bf16 %v1556, %v1555
      %v1568 = vpack.c.bf16 %v1558, %v1557
      %v1569 = vpack.c.bf16 %v1560, %v1559
      %v1570 = vpack.c.bf16 %v1562, %v1561
      %s1571 = scalar_lea.vmem %s234, 32
      %v1572 = vld [vmem:[%s1571] sm:$0xf]
      %v1574 = vsel %vm299, %v1563, 0
      %v1577 = vsel %vm299, %v1564, 0
      %v1580 = vsel %vm299, %v1565, 0
      %v1583 = vsel %vm299, %v1566, 0
      %v1586 = vsel %vm299, %v1567, 0
      %v1589 = vsel %vm299, %v1568, 0
      %v1592 = vsel %vm299, %v1569, 0
      %v1595 = vsel %vm299, %v1570, 0
      %v1598 = vsel %vm324, %v1572, 0
      %1600 = vmatprep.subr.bf16.mxu0 0
      %1601 = vmatpush1.bf16.msra.mxu0 %v1598
      %1602 = vmatprep.subr.bf16.mxu0 0
      %1603 = vmatpush1.bf16.msra.mxu0 0
      %1604 = vmatprep.subr.bf16.mxu0 0
      %1605 = vmatpush1.bf16.msra.mxu0 0
      %1606 = vmatprep.subr.bf16.mxu0 0
      %1607 = vmatpush1.bf16.msra.mxu0 0
      %1608 = vmatprep.subr.bf16.mxu0 0
      %1609 = vmatpush1.bf16.msra.mxu0 0
      %1610 = vmatprep.subr.bf16.mxu0 0
      %1611 = vmatpush1.bf16.msra.mxu0 0
      %1612 = vmatprep.subr.bf16.mxu0 0
      %1613 = vmatpush1.bf16.msra.mxu0 0
      %1614 = vmatprep.subr.bf16.mxu0 0
      %1615 = vmatpush1.bf16.msra.mxu0 0
      %1616 = vmatprep.subr.bf16.mxu0 0
      %1617 = vmatpush1.bf16.msra.mxu0 0
      %1618 = vmatprep.subr.bf16.mxu0 0
      %1619 = vmatpush1.bf16.msra.mxu0 0
      %1620 = vmatprep.subr.bf16.mxu0 0
      %1621 = vmatpush1.bf16.msra.mxu0 0
      %1622 = vmatprep.subr.bf16.mxu0 0
      %1623 = vmatpush1.bf16.msra.mxu0 0
      %1624 = vmatprep.subr.bf16.mxu0 0
      %1625 = vmatpush1.bf16.msra.mxu0 0
      %1626 = vmatprep.subr.bf16.mxu0 0
      %1627 = vmatpush1.bf16.msra.mxu0 0
      %1628 = vmatprep.subr.bf16.mxu0 0
      %1629 = vmatpush1.bf16.msra.mxu0 0
      %1630 = vmatprep.subr.bf16.mxu0 0
      %1631 = vmatpush1.bf16.msra.mxu0 0
      %1632 = vmatprep.mubr.bf16.mxu0 0
      %1633 = vmatmul.mubr.bf16.gmra.mrb[0].mxu0 %v1574
      %v1634 = vpop.f32.mrb[0].mxu0
      %v1635 = vadd.f32 0.0, %v1634
      %v1636 = vpop.f32.mrb[0].mxu0
      %v1637 = vpop.f32.mrb[0].mxu0
      %v1638 = vadd.f32 0.0, %v1637
      %v1639 = vpop.f32.mrb[0].mxu0
      %1640 = vmatprep.mubr.bf16.mxu0 0
      %1641 = vmatmul.mubr.bf16.gmra.mrb[0].mxu0 %v1577
      %v1642 = vpop.f32.mrb[0].mxu0
      %v1643 = vadd.f32 0.0, %v1642
      %v1644 = vpop.f32.mrb[0].mxu0
      %v1645 = vpop.f32.mrb[0].mxu0
      %v1646 = vadd.f32 0.0, %v1645
      %v1647 = vpop.f32.mrb[0].mxu0
      %1648 = vmatprep.mubr.bf16.mxu0 0
      %1649 = vmatmul.mubr.bf16.gmra.mrb[0].mxu0 %v1580
      %v1650 = vpop.f32.mrb[0].mxu0
      %v1651 = vadd.f32 0.0, %v1650
      %v1652 = vpop.f32.mrb[0].mxu0
      %v1653 = vpop.f32.mrb[0].mxu0
      %v1654 = vadd.f32 0.0, %v1653
      %v1655 = vpop.f32.mrb[0].mxu0
      %1656 = vmatprep.mubr.bf16.mxu0 0
      %1657 = vmatmul.mubr.bf16.gmra.mrb[0].mxu0 %v1583
      %v1658 = vpop.f32.mrb[0].mxu0
      %v1659 = vadd.f32 0.0, %v1658
      %v1660 = vpop.f32.mrb[0].mxu0
      %v1661 = vpop.f32.mrb[0].mxu0
      %v1662 = vadd.f32 0.0, %v1661
      %v1663 = vpop.f32.mrb[0].mxu0
      %1664 = vmatprep.mubr.bf16.mxu0 0
      %1665 = vmatmul.mubr.bf16.gmra.mrb[0].mxu0 %v1586
      %v1666 = vpop.f32.mrb[0].mxu0
      %v1667 = vadd.f32 0.0, %v1666
      %v1668 = vpop.f32.mrb[0].mxu0
      %v1669 = vpop.f32.mrb[0].mxu0
      %v1670 = vadd.f32 0.0, %v1669
      %v1671 = vpop.f32.mrb[0].mxu0
      %1672 = vmatprep.mubr.bf16.mxu0 0
      %1673 = vmatmul.mubr.bf16.gmra.mrb[0].mxu0 %v1589
      %v1674 = vpop.f32.mrb[0].mxu0
      %v1675 = vadd.f32 0.0, %v1674
      %v1676 = vpop.f32.mrb[0].mxu0
      %v1677 = vpop.f32.mrb[0].mxu0
      %v1678 = vadd.f32 0.0, %v1677
      %v1679 = vpop.f32.mrb[0].mxu0
      %1680 = vmatprep.mubr.bf16.mxu0 0
      %1681 = vmatmul.mubr.bf16.gmra.mrb[0].mxu0 %v1592
      %v1682 = vpop.f32.mrb[0].mxu0
      %v1683 = vadd.f32 0.0, %v1682
      %v1684 = vpop.f32.mrb[0].mxu0
      %v1685 = vpop.f32.mrb[0].mxu0
      %v1686 = vadd.f32 0.0, %v1685
      %v1687 = vpop.f32.mrb[0].mxu0
      %1688 = vmatprep.mubr.bf16.mxu0 0
      %1689 = vmatmul.mubr.bf16.gmra.mrb[0].mxu0 %v1595
      %v1690 = vpop.f32.mrb[0].mxu0
      %v1691 = vadd.f32 0.0, %v1690
      %v1692 = vpop.f32.mrb[0].mxu0
      %v1693 = vpop.f32.mrb[0].mxu0
      %v1694 = vadd.f32 0.0, %v1693
      %v1695 = vpop.f32.mrb[0].mxu0
      %1696 = vdwg.mxu0
      %v1697 = vadd.f32 %v1530, %v1635
      %v1698 = vadd.f32 %v1531, %v1638
      %v1699 = vadd.f32 %v1532, %v1643
      %v1700 = vadd.f32 %v1533, %v1646
      %v1701 = vadd.f32 %v1534, %v1651
      %v1702 = vadd.f32 %v1535, %v1654
      %v1703 = vadd.f32 %v1536, %v1659
      %v1704 = vadd.f32 %v1537, %v1662
      %v1705 = vadd.f32 %v1538, %v1667
      %v1706 = vadd.f32 %v1539, %v1670
      %v1707 = vadd.f32 %v1540, %v1675
      %v1708 = vadd.f32 %v1541, %v1678
      %v1709 = vadd.f32 %v1542, %v1683
      %v1710 = vadd.f32 %v1543, %v1686
      %v1711 = vadd.f32 %v1544, %v1691
      %v1712 = vadd.f32 %v1545, %v1694
      %v1713 = vld [vmem:[%s1379 + $0x1] sm:$0xff]
      %v1714 = vld [vmem:[%s1379 + $0x11] sm:$0xff]
      %v1715 = vld [vmem:[%s1379 + $0x21] sm:$0xff]
      %v1716 = vld [vmem:[%s1379 + $0x31] sm:$0xff]
      %v1717 = vld [vmem:[%s1379 + $0x41] sm:$0xff]
      %v1718 = vld [vmem:[%s1379 + $0x51] sm:$0xff]
      %v1719 = vld [vmem:[%s1379 + $0x61] sm:$0xff]
      %v1720 = vld [vmem:[%s1379 + $0x71] sm:$0xff]
      %v1721 = vld [vmem:[%s1379 + $0xb1] sm:$0xff]
      %v1722 = vld [vmem:[%s1379 + $0xc1] sm:$0xff]
      %v1723 = vld [vmem:[%s1379 + $0xd1] sm:$0xff]
      %v1724 = vld [vmem:[%s1379 + $0xe1] sm:$0xff]
      %v1725 = vld [vmem:[%s1379 + $0xf1] sm:$0xff]
      %v1726 = vld [vmem:[%s1379 + $0x101] sm:$0xff]
      %v1727 = vld [vmem:[%s1379 + $0x111] sm:$0xff]
      %v1728 = vld [vmem:[%s1379 + $0x121] sm:$0xff]
      %v1729 = vpack.c.bf16 %v1714, %v1713
      %v1730 = vpack.c.bf16 %v1716, %v1715
      %v1731 = vpack.c.bf16 %v1718, %v1717
      %v1732 = vpack.c.bf16 %v1720, %v1719
      %v1733 = vpack.c.bf16 %v1722, %v1721
      %v1734 = vpack.c.bf16 %v1724, %v1723
      %v1735 = vpack.c.bf16 %v1726, %v1725
      %v1736 = vpack.c.bf16 %v1728, %v1727
      %s1737 = scalar_lea.vmem %s234, 36
      %v1738 = vld [vmem:[%s1737] sm:$0xf]
      %v1740 = vsel %vm299, %v1729, 0
      %v1743 = vsel %vm299, %v1730, 0
      %v1746 = vsel %vm299, %v1731, 0
      %v1749 = vsel %vm299, %v1732, 0
      %v1752 = vsel %vm299, %v1733, 0
      %v1755 = vsel %vm299, %v1734, 0
      %v1758 = vsel %vm299, %v1735, 0
      %v1761 = vsel %vm299, %v1736, 0
      %v1764 = vsel %vm324, %v1738, 0
      %1766 = vmatprep.subr.bf16.mxu0 0
      %1767 = vmatpush1.bf16.msra.mxu0 %v1764
      %1768 = vmatprep.subr.bf16.mxu0 0
      %1769 = vmatpush1.bf16.msra.mxu0 0
      %1770 = vmatprep.subr.bf16.mxu0 0
      %1771 = vmatpush1.bf16.msra.mxu0 0
      %1772 = vmatprep.subr.bf16.mxu0 0
      %1773 = vmatpush1.bf16.msra.mxu0 0
      %1774 = vmatprep.subr.bf16.mxu0 0
      %1775 = vmatpush1.bf16.msra.mxu0 0
      %1776 = vmatprep.subr.bf16.mxu0 0
      %1777 = vmatpush1.bf16.msra.mxu0 0
      %1778 = vmatprep.subr.bf16.mxu0 0
      %1779 = vmatpush1.bf16.msra.mxu0 0
      %1780 = vmatprep.subr.bf16.mxu0 0
      %1781 = vmatpush1.bf16.msra.mxu0 0
      %1782 = vmatprep.subr.bf16.mxu0 0
      %1783 = vmatpush1.bf16.msra.mxu0 0
      %1784 = vmatprep.subr.bf16.mxu0 0
      %1785 = vmatpush1.bf16.msra.mxu0 0
      %1786 = vmatprep.subr.bf16.mxu0 0
      %1787 = vmatpush1.bf16.msra.mxu0 0
      %1788 = vmatprep.subr.bf16.mxu0 0
      %1789 = vmatpush1.bf16.msra.mxu0 0
      %1790 = vmatprep.subr.bf16.mxu0 0
      %1791 = vmatpush1.bf16.msra.mxu0 0
      %1792 = vmatprep.subr.bf16.mxu0 0
      %1793 = vmatpush1.bf16.msra.mxu0 0
      %1794 = vmatprep.subr.bf16.mxu0 0
      %1795 = vmatpush1.bf16.msra.mxu0 0
      %1796 = vmatprep.subr.bf16.mxu0 0
      %1797 = vmatpush1.bf16.msra.mxu0 0
      %1798 = vmatprep.mubr.bf16.mxu0 0
      %1799 = vmatmul.mubr.bf16.gmra.mrb[0].mxu0 %v1740
      %v1800 = vpop.f32.mrb[0].mxu0
      %v1801 = vadd.f32 0.0, %v1800
      %v1802 = vpop.f32.mrb[0].mxu0
      %v1803 = vpop.f32.mrb[0].mxu0
      %v1804 = vadd.f32 0.0, %v1803
      %v1805 = vpop.f32.mrb[0].mxu0
      %1806 = vmatprep.mubr.bf16.mxu0 0
      %1807 = vmatmul.mubr.bf16.gmra.mrb[0].mxu0 %v1743
      %v1808 = vpop.f32.mrb[0].mxu0
      %v1809 = vadd.f32 0.0, %v1808
      %v1810 = vpop.f32.mrb[0].mxu0
      %v1811 = vpop.f32.mrb[0].mxu0
      %v1812 = vadd.f32 0.0, %v1811
      %v1813 = vpop.f32.mrb[0].mxu0
      %1814 = vmatprep.mubr.bf16.mxu0 0
      %1815 = vmatmul.mubr.bf16.gmra.mrb[0].mxu0 %v1746
      %v1816 = vpop.f32.mrb[0].mxu0
      %v1817 = vadd.f32 0.0, %v1816
      %v1818 = vpop.f32.mrb[0].mxu0
      %v1819 = vpop.f32.mrb[0].mxu0
      %v1820 = vadd.f32 0.0, %v1819
      %v1821 = vpop.f32.mrb[0].mxu0
      %1822 = vmatprep.mubr.bf16.mxu0 0
      %1823 = vmatmul.mubr.bf16.gmra.mrb[0].mxu0 %v1749
      %v1824 = vpop.f32.mrb[0].mxu0
      %v1825 = vadd.f32 0.0, %v1824
      %v1826 = vpop.f32.mrb[0].mxu0
      %v1827 = vpop.f32.mrb[0].mxu0
      %v1828 = vadd.f32 0.0, %v1827
      %v1829 = vpop.f32.mrb[0].mxu0
      %1830 = vmatprep.mubr.bf16.mxu0 0
      %1831 = vmatmul.mubr.bf16.gmra.mrb[0].mxu0 %v1752
      %v1832 = vpop.f32.mrb[0].mxu0
      %v1833 = vadd.f32 0.0, %v1832
      %v1834 = vpop.f32.mrb[0].mxu0
      %v1835 = vpop.f32.mrb[0].mxu0
      %v1836 = vadd.f32 0.0, %v1835
      %v1837 = vpop.f32.mrb[0].mxu0
      %1838 = vmatprep.mubr.bf16.mxu0 0
      %1839 = vmatmul.mubr.bf16.gmra.mrb[0].mxu0 %v1755
      %v1840 = vpop.f32.mrb[0].mxu0
      %v1841 = vadd.f32 0.0, %v1840
      %v1842 = vpop.f32.mrb[0].mxu0
      %v1843 = vpop.f32.mrb[0].mxu0
      %v1844 = vadd.f32 0.0, %v1843
      %v1845 = vpop.f32.mrb[0].mxu0
      %1846 = vmatprep.mubr.bf16.mxu0 0
      %1847 = vmatmul.mubr.bf16.gmra.mrb[0].mxu0 %v1758
      %v1848 = vpop.f32.mrb[0].mxu0
      %v1849 = vadd.f32 0.0, %v1848
      %v1850 = vpop.f32.mrb[0].mxu0
      %v1851 = vpop.f32.mrb[0].mxu0
      %v1852 = vadd.f32 0.0, %v1851
      %v1853 = vpop.f32.mrb[0].mxu0
      %1854 = vmatprep.mubr.bf16.mxu0 0
      %1855 = vmatmul.mubr.bf16.gmra.mrb[0].mxu0 %v1761
      %v1856 = vpop.f32.mrb[0].mxu0
      %v1857 = vadd.f32 0.0, %v1856
      %v1858 = vpop.f32.mrb[0].mxu0
      %v1859 = vpop.f32.mrb[0].mxu0
      %v1860 = vadd.f32 0.0, %v1859
      %v1861 = vpop.f32.mrb[0].mxu0
      %1862 = vdwg.mxu0
      %v1863 = vadd.f32 %v1697, %v1801
      %v1864 = vadd.f32 %v1698, %v1804
      %v1865 = vadd.f32 %v1699, %v1809
      %v1866 = vadd.f32 %v1700, %v1812
      %v1867 = vadd.f32 %v1701, %v1817
      %v1868 = vadd.f32 %v1702, %v1820
      %v1869 = vadd.f32 %v1703, %v1825
      %v1870 = vadd.f32 %v1704, %v1828
      %v1871 = vadd.f32 %v1705, %v1833
      %v1872 = vadd.f32 %v1706, %v1836
      %v1873 = vadd.f32 %v1707, %v1841
      %v1874 = vadd.f32 %v1708, %v1844
      %v1875 = vadd.f32 %v1709, %v1849
      %v1876 = vadd.f32 %v1710, %v1852
      %v1877 = vadd.f32 %v1711, %v1857
      %v1878 = vadd.f32 %v1712, %v1860
      %v1879 = vld [vmem:[%s1546 + $0x1] sm:$0xff]
      %v1880 = vld [vmem:[%s1546 + $0x11] sm:$0xff]
      %v1881 = vld [vmem:[%s1546 + $0x21] sm:$0xff]
      %v1882 = vld [vmem:[%s1546 + $0x31] sm:$0xff]
      %v1883 = vld [vmem:[%s1546 + $0x41] sm:$0xff]
      %v1884 = vld [vmem:[%s1546 + $0x51] sm:$0xff]
      %v1885 = vld [vmem:[%s1546 + $0x61] sm:$0xff]
      %v1886 = vld [vmem:[%s1546 + $0x71] sm:$0xff]
      %v1887 = vld [vmem:[%s1546 + $0xb1] sm:$0xff]
      %v1888 = vld [vmem:[%s1546 + $0xc1] sm:$0xff]
      %v1889 = vld [vmem:[%s1546 + $0xd1] sm:$0xff]
      %v1890 = vld [vmem:[%s1546 + $0xe1] sm:$0xff]
      %v1891 = vld [vmem:[%s1546 + $0xf1] sm:$0xff]
      %v1892 = vld [vmem:[%s1546 + $0x101] sm:$0xff]
      %v1893 = vld [vmem:[%s1546 + $0x111] sm:$0xff]
      %v1894 = vld [vmem:[%s1546 + $0x121] sm:$0xff]
      %v1895 = vpack.c.bf16 %v1880, %v1879
      %v1896 = vpack.c.bf16 %v1882, %v1881
      %v1897 = vpack.c.bf16 %v1884, %v1883
      %v1898 = vpack.c.bf16 %v1886, %v1885
      %v1899 = vpack.c.bf16 %v1888, %v1887
      %v1900 = vpack.c.bf16 %v1890, %v1889
      %v1901 = vpack.c.bf16 %v1892, %v1891
      %v1902 = vpack.c.bf16 %v1894, %v1893
      %s1903 = scalar_lea.vmem %s234, 40
      %v1904 = vld [vmem:[%s1903] sm:$0xf]
      %v1906 = vsel %vm299, %v1895, 0
      %v1909 = vsel %vm299, %v1896, 0
      %v1912 = vsel %vm299, %v1897, 0
      %v1915 = vsel %vm299, %v1898, 0
      %v1918 = vsel %vm299, %v1899, 0
      %v1921 = vsel %vm299, %v1900, 0
      %v1924 = vsel %vm299, %v1901, 0
      %v1927 = vsel %vm299, %v1902, 0
      %v1930 = vsel %vm324, %v1904, 0
      %1932 = vmatprep.subr.bf16.mxu0 0
      %1933 = vmatpush1.bf16.msra.mxu0 %v1930
      %1934 = vmatprep.subr.bf16.mxu0 0
      %1935 = vmatpush1.bf16.msra.mxu0 0
      %1936 = vmatprep.subr.bf16.mxu0 0
      %1937 = vmatpush1.bf16.msra.mxu0 0
      %1938 = vmatprep.subr.bf16.mxu0 0
      %1939 = vmatpush1.bf16.msra.mxu0 0
      %1940 = vmatprep.subr.bf16.mxu0 0
      %1941 = vmatpush1.bf16.msra.mxu0 0
      %1942 = vmatprep.subr.bf16.mxu0 0
      %1943 = vmatpush1.bf16.msra.mxu0 0
      %1944 = vmatprep.subr.bf16.mxu0 0
      %1945 = vmatpush1.bf16.msra.mxu0 0
      %1946 = vmatprep.subr.bf16.mxu0 0
      %1947 = vmatpush1.bf16.msra.mxu0 0
      %1948 = vmatprep.subr.bf16.mxu0 0
      %1949 = vmatpush1.bf16.msra.mxu0 0
      %1950 = vmatprep.subr.bf16.mxu0 0
      %1951 = vmatpush1.bf16.msra.mxu0 0
      %1952 = vmatprep.subr.bf16.mxu0 0
      %1953 = vmatpush1.bf16.msra.mxu0 0
      %1954 = vmatprep.subr.bf16.mxu0 0
      %1955 = vmatpush1.bf16.msra.mxu0 0
      %1956 = vmatprep.subr.bf16.mxu0 0
      %1957 = vmatpush1.bf16.msra.mxu0 0
      %1958 = vmatprep.subr.bf16.mxu0 0
      %1959 = vmatpush1.bf16.msra.mxu0 0
      %1960 = vmatprep.subr.bf16.mxu0 0
      %1961 = vmatpush1.bf16.msra.mxu0 0
      %1962 = vmatprep.subr.bf16.mxu0 0
      %1963 = vmatpush1.bf16.msra.mxu0 0
      %1964 = vmatprep.mubr.bf16.mxu0 0
      %1965 = vmatmul.mubr.bf16.gmra.mrb[0].mxu0 %v1906
      %v1966 = vpop.f32.mrb[0].mxu0
      %v1967 = vadd.f32 0.0, %v1966
      %v1968 = vpop.f32.mrb[0].mxu0
      %v1969 = vpop.f32.mrb[0].mxu0
      %v1970 = vadd.f32 0.0, %v1969
      %v1971 = vpop.f32.mrb[0].mxu0
      %1972 = vmatprep.mubr.bf16.mxu0 0
      %1973 = vmatmul.mubr.bf16.gmra.mrb[0].mxu0 %v1909
      %v1974 = vpop.f32.mrb[0].mxu0
      %v1975 = vadd.f32 0.0, %v1974
      %v1976 = vpop.f32.mrb[0].mxu0
      %v1977 = vpop.f32.mrb[0].mxu0
      %v1978 = vadd.f32 0.0, %v1977
      %v1979 = vpop.f32.mrb[0].mxu0
      %1980 = vmatprep.mubr.bf16.mxu0 0
      %1981 = vmatmul.mubr.bf16.gmra.mrb[0].mxu0 %v1912
      %v1982 = vpop.f32.mrb[0].mxu0
      %v1983 = vadd.f32 0.0, %v1982
      %v1984 = vpop.f32.mrb[0].mxu0
      %v1985 = vpop.f32.mrb[0].mxu0
      %v1986 = vadd.f32 0.0, %v1985
      %v1987 = vpop.f32.mrb[0].mxu0
      %1988 = vmatprep.mubr.bf16.mxu0 0
      %1989 = vmatmul.mubr.bf16.gmra.mrb[0].mxu0 %v1915
      %v1990 = vpop.f32.mrb[0].mxu0
      %v1991 = vadd.f32 0.0, %v1990
      %v1992 = vpop.f32.mrb[0].mxu0
      %v1993 = vpop.f32.mrb[0].mxu0
      %v1994 = vadd.f32 0.0, %v1993
      %v1995 = vpop.f32.mrb[0].mxu0
      %1996 = vmatprep.mubr.bf16.mxu0 0
      %1997 = vmatmul.mubr.bf16.gmra.mrb[0].mxu0 %v1918
      %v1998 = vpop.f32.mrb[0].mxu0
      %v1999 = vadd.f32 0.0, %v1998
      %v2000 = vpop.f32.mrb[0].mxu0
      %v2001 = vpop.f32.mrb[0].mxu0
      %v2002 = vadd.f32 0.0, %v2001
      %v2003 = vpop.f32.mrb[0].mxu0
      %2004 = vmatprep.mubr.bf16.mxu0 0
      %2005 = vmatmul.mubr.bf16.gmra.mrb[0].mxu0 %v1921
      %v2006 = vpop.f32.mrb[0].mxu0
      %v2007 = vadd.f32 0.0, %v2006
      %v2008 = vpop.f32.mrb[0].mxu0
      %v2009 = vpop.f32.mrb[0].mxu0
      %v2010 = vadd.f32 0.0, %v2009
      %v2011 = vpop.f32.mrb[0].mxu0
      %2012 = vmatprep.mubr.bf16.mxu0 0
      %2013 = vmatmul.mubr.bf16.gmra.mrb[0].mxu0 %v1924
      %v2014 = vpop.f32.mrb[0].mxu0
      %v2015 = vadd.f32 0.0, %v2014
      %v2016 = vpop.f32.mrb[0].mxu0
      %v2017 = vpop.f32.mrb[0].mxu0
      %v2018 = vadd.f32 0.0, %v2017
      %v2019 = vpop.f32.mrb[0].mxu0
      %2020 = vmatprep.mubr.bf16.mxu0 0
      %2021 = vmatmul.mubr.bf16.gmra.mrb[0].mxu0 %v1927
      %v2022 = vpop.f32.mrb[0].mxu0
      %v2023 = vadd.f32 0.0, %v2022
      %v2024 = vpop.f32.mrb[0].mxu0
      %v2025 = vpop.f32.mrb[0].mxu0
      %v2026 = vadd.f32 0.0, %v2025
      %v2027 = vpop.f32.mrb[0].mxu0
      %2028 = vdwg.mxu0
      %v2029 = vadd.f32 %v1863, %v1967
      %v2030 = vadd.f32 %v1864, %v1970
      %v2031 = vadd.f32 %v1865, %v1975
      %v2032 = vadd.f32 %v1866, %v1978
      %v2033 = vadd.f32 %v1867, %v1983
      %v2034 = vadd.f32 %v1868, %v1986
      %v2035 = vadd.f32 %v1869, %v1991
      %v2036 = vadd.f32 %v1870, %v1994
      %v2037 = vadd.f32 %v1871, %v1999
      %v2038 = vadd.f32 %v1872, %v2002
      %v2039 = vadd.f32 %v1873, %v2007
      %v2040 = vadd.f32 %v1874, %v2010
      %v2041 = vadd.f32 %v1875, %v2015
      %v2042 = vadd.f32 %v1876, %v2018
      %v2043 = vadd.f32 %v1877, %v2023
      %v2044 = vadd.f32 %v1878, %v2026
      %v2045 = vld [vmem:[%s1379 + $0x2] sm:$0xff]
      %v2046 = vld [vmem:[%s1379 + $0x12] sm:$0xff]
      %v2047 = vld [vmem:[%s1379 + $0x22] sm:$0xff]
      %v2048 = vld [vmem:[%s1379 + $0x32] sm:$0xff]
      %v2049 = vld [vmem:[%s1379 + $0x42] sm:$0xff]
      %v2050 = vld [vmem:[%s1379 + $0x52] sm:$0xff]
      %v2051 = vld [vmem:[%s1379 + $0x62] sm:$0xff]
      %v2052 = vld [vmem:[%s1379 + $0x72] sm:$0xff]
      %v2053 = vld [vmem:[%s1379 + $0xb2] sm:$0xff]
      %v2054 = vld [vmem:[%s1379 + $0xc2] sm:$0xff]
      %v2055 = vld [vmem:[%s1379 + $0xd2] sm:$0xff]
      %v2056 = vld [vmem:[%s1379 + $0xe2] sm:$0xff]
      %v2057 = vld [vmem:[%s1379 + $0xf2] sm:$0xff]
      %v2058 = vld [vmem:[%s1379 + $0x102] sm:$0xff]
      %v2059 = vld [vmem:[%s1379 + $0x112] sm:$0xff]
      %v2060 = vld [vmem:[%s1379 + $0x122] sm:$0xff]
      %v2061 = vpack.c.bf16 %v2046, %v2045
      %v2062 = vpack.c.bf16 %v2048, %v2047
      %v2063 = vpack.c.bf16 %v2050, %v2049
      %v2064 = vpack.c.bf16 %v2052, %v2051
      %v2065 = vpack.c.bf16 %v2054, %v2053
      %v2066 = vpack.c.bf16 %v2056, %v2055
      %v2067 = vpack.c.bf16 %v2058, %v2057
      %v2068 = vpack.c.bf16 %v2060, %v2059
      %s2069 = scalar_lea.vmem %s234, 44
      %v2070 = vld [vmem:[%s2069] sm:$0xf]
      %v2072 = vsel %vm299, %v2061, 0
      %v2075 = vsel %vm299, %v2062, 0
      %v2078 = vsel %vm299, %v2063, 0
      %v2081 = vsel %vm299, %v2064, 0
      %v2084 = vsel %vm299, %v2065, 0
      %v2087 = vsel %vm299, %v2066, 0
      %v2090 = vsel %vm299, %v2067, 0
      %v2093 = vsel %vm299, %v2068, 0
      %v2096 = vsel %vm324, %v2070, 0
      %2098 = vmatprep.subr.bf16.mxu0 0
      %2099 = vmatpush1.bf16.msra.mxu0 %v2096
      %2100 = vmatprep.subr.bf16.mxu0 0
      %2101 = vmatpush1.bf16.msra.mxu0 0
      %2102 = vmatprep.subr.bf16.mxu0 0
      %2103 = vmatpush1.bf16.msra.mxu0 0
      %2104 = vmatprep.subr.bf16.mxu0 0
      %2105 = vmatpush1.bf16.msra.mxu0 0
      %2106 = vmatprep.subr.bf16.mxu0 0
      %2107 = vmatpush1.bf16.msra.mxu0 0
      %2108 = vmatprep.subr.bf16.mxu0 0
      %2109 = vmatpush1.bf16.msra.mxu0 0
      %2110 = vmatprep.subr.bf16.mxu0 0
      %2111 = vmatpush1.bf16.msra.mxu0 0
      %2112 = vmatprep.subr.bf16.mxu0 0
      %2113 = vmatpush1.bf16.msra.mxu0 0
      %2114 = vmatprep.subr.bf16.mxu0 0
      %2115 = vmatpush1.bf16.msra.mxu0 0
      %2116 = vmatprep.subr.bf16.mxu0 0
      %2117 = vmatpush1.bf16.msra.mxu0 0
      %2118 = vmatprep.subr.bf16.mxu0 0
      %2119 = vmatpush1.bf16.msra.mxu0 0
      %2120 = vmatprep.subr.bf16.mxu0 0
      %2121 = vmatpush1.bf16.msra.mxu0 0
      %2122 = vmatprep.subr.bf16.mxu0 0
      %2123 = vmatpush1.bf16.msra.mxu0 0
      %2124 = vmatprep.subr.bf16.mxu0 0
      %2125 = vmatpush1.bf16.msra.mxu0 0
      %2126 = vmatprep.subr.bf16.mxu0 0
      %2127 = vmatpush1.bf16.msra.mxu0 0
      %2128 = vmatprep.subr.bf16.mxu0 0
      %2129 = vmatpush1.bf16.msra.mxu0 0
      %2130 = vmatprep.mubr.bf16.mxu0 0
      %2131 = vmatmul.mubr.bf16.gmra.mrb[0].mxu0 %v2072
      %v2132 = vpop.f32.mrb[0].mxu0
      %v2133 = vadd.f32 0.0, %v2132
      %v2134 = vpop.f32.mrb[0].mxu0
      %v2135 = vpop.f32.mrb[0].mxu0
      %v2136 = vadd.f32 0.0, %v2135
      %v2137 = vpop.f32.mrb[0].mxu0
      %2138 = vmatprep.mubr.bf16.mxu0 0
      %2139 = vmatmul.mubr.bf16.gmra.mrb[0].mxu0 %v2075
      %v2140 = vpop.f32.mrb[0].mxu0
      %v2141 = vadd.f32 0.0, %v2140
      %v2142 = vpop.f32.mrb[0].mxu0
      %v2143 = vpop.f32.mrb[0].mxu0
      %v2144 = vadd.f32 0.0, %v2143
      %v2145 = vpop.f32.mrb[0].mxu0
      %2146 = vmatprep.mubr.bf16.mxu0 0
      %2147 = vmatmul.mubr.bf16.gmra.mrb[0].mxu0 %v2078
      %v2148 = vpop.f32.mrb[0].mxu0
      %v2149 = vadd.f32 0.0, %v2148
      %v2150 = vpop.f32.mrb[0].mxu0
      %v2151 = vpop.f32.mrb[0].mxu0
      %v2152 = vadd.f32 0.0, %v2151
      %v2153 = vpop.f32.mrb[0].mxu0
      %2154 = vmatprep.mubr.bf16.mxu0 0
      %2155 = vmatmul.mubr.bf16.gmra.mrb[0].mxu0 %v2081
      %v2156 = vpop.f32.mrb[0].mxu0
      %v2157 = vadd.f32 0.0, %v2156
      %v2158 = vpop.f32.mrb[0].mxu0
      %v2159 = vpop.f32.mrb[0].mxu0
      %v2160 = vadd.f32 0.0, %v2159
      %v2161 = vpop.f32.mrb[0].mxu0
      %2162 = vmatprep.mubr.bf16.mxu0 0
      %2163 = vmatmul.mubr.bf16.gmra.mrb[0].mxu0 %v2084
      %v2164 = vpop.f32.mrb[0].mxu0
      %v2165 = vadd.f32 0.0, %v2164
      %v2166 = vpop.f32.mrb[0].mxu0
      %v2167 = vpop.f32.mrb[0].mxu0
      %v2168 = vadd.f32 0.0, %v2167
      %v2169 = vpop.f32.mrb[0].mxu0
      %2170 = vmatprep.mubr.bf16.mxu0 0
      %2171 = vmatmul.mubr.bf16.gmra.mrb[0].mxu0 %v2087
      %v2172 = vpop.f32.mrb[0].mxu0
      %v2173 = vadd.f32 0.0, %v2172
      %v2174 = vpop.f32.mrb[0].mxu0
      %v2175 = vpop.f32.mrb[0].mxu0
      %v2176 = vadd.f32 0.0, %v2175
      %v2177 = vpop.f32.mrb[0].mxu0
      %2178 = vmatprep.mubr.bf16.mxu0 0
      %2179 = vmatmul.mubr.bf16.gmra.mrb[0].mxu0 %v2090
      %v2180 = vpop.f32.mrb[0].mxu0
      %v2181 = vadd.f32 0.0, %v2180
      %v2182 = vpop.f32.mrb[0].mxu0
      %v2183 = vpop.f32.mrb[0].mxu0
      %v2184 = vadd.f32 0.0, %v2183
      %v2185 = vpop.f32.mrb[0].mxu0
      %2186 = vmatprep.mubr.bf16.mxu0 0
      %2187 = vmatmul.mubr.bf16.gmra.mrb[0].mxu0 %v2093
      %v2188 = vpop.f32.mrb[0].mxu0
      %v2189 = vadd.f32 0.0, %v2188
      %v2190 = vpop.f32.mrb[0].mxu0
      %v2191 = vpop.f32.mrb[0].mxu0
      %v2192 = vadd.f32 0.0, %v2191
      %v2193 = vpop.f32.mrb[0].mxu0
      %2194 = vdwg.mxu0
      %v2195 = vadd.f32 %v2029, %v2133
      %v2196 = vadd.f32 %v2030, %v2136
      %v2197 = vadd.f32 %v2031, %v2141
      %v2198 = vadd.f32 %v2032, %v2144
      %v2199 = vadd.f32 %v2033, %v2149
      %v2200 = vadd.f32 %v2034, %v2152
      %v2201 = vadd.f32 %v2035, %v2157
      %v2202 = vadd.f32 %v2036, %v2160
      %v2203 = vadd.f32 %v2037, %v2165
      %v2204 = vadd.f32 %v2038, %v2168
      %v2205 = vadd.f32 %v2039, %v2173
      %v2206 = vadd.f32 %v2040, %v2176
      %v2207 = vadd.f32 %v2041, %v2181
      %v2208 = vadd.f32 %v2042, %v2184
      %v2209 = vadd.f32 %v2043, %v2189
      %v2210 = vadd.f32 %v2044, %v2192
      %v2211 = vld [vmem:[%s1546 + $0x2] sm:$0xff]
      %v2212 = vld [vmem:[%s1546 + $0x12] sm:$0xff]
      %v2213 = vld [vmem:[%s1546 + $0x22] sm:$0xff]
      %v2214 = vld [vmem:[%s1546 + $0x32] sm:$0xff]
      %v2215 = vld [vmem:[%s1546 + $0x42] sm:$0xff]
      %v2216 = vld [vmem:[%s1546 + $0x52] sm:$0xff]
      %v2217 = vld [vmem:[%s1546 + $0x62] sm:$0xff]
      %v2218 = vld [vmem:[%s1546 + $0x72] sm:$0xff]
      %v2219 = vld [vmem:[%s1546 + $0xb2] sm:$0xff]
      %v2220 = vld [vmem:[%s1546 + $0xc2] sm:$0xff]
      %v2221 = vld [vmem:[%s1546 + $0xd2] sm:$0xff]
      %v2222 = vld [vmem:[%s1546 + $0xe2] sm:$0xff]
      %v2223 = vld [vmem:[%s1546 + $0xf2] sm:$0xff]
      %v2224 = vld [vmem:[%s1546 + $0x102] sm:$0xff]
      %v2225 = vld [vmem:[%s1546 + $0x112] sm:$0xff]
      %v2226 = vld [vmem:[%s1546 + $0x122] sm:$0xff]
      %v2227 = vpack.c.bf16 %v2212, %v2211
      %v2228 = vpack.c.bf16 %v2214, %v2213
      %v2229 = vpack.c.bf16 %v2216, %v2215
      %v2230 = vpack.c.bf16 %v2218, %v2217
      %v2231 = vpack.c.bf16 %v2220, %v2219
      %v2232 = vpack.c.bf16 %v2222, %v2221
      %v2233 = vpack.c.bf16 %v2224, %v2223
      %v2234 = vpack.c.bf16 %v2226, %v2225
      %s2235 = scalar_lea.vmem %s234, 48
      %v2236 = vld [vmem:[%s2235] sm:$0xf]
      %v2238 = vsel %vm299, %v2227, 0
      %v2241 = vsel %vm299, %v2228, 0
      %v2244 = vsel %vm299, %v2229, 0
      %v2247 = vsel %vm299, %v2230, 0
      %v2250 = vsel %vm299, %v2231, 0
      %v2253 = vsel %vm299, %v2232, 0
      %v2256 = vsel %vm299, %v2233, 0
      %v2259 = vsel %vm299, %v2234, 0
      %v2262 = vsel %vm324, %v2236, 0
      %2264 = vmatprep.subr.bf16.mxu0 0
      %2265 = vmatpush1.bf16.msra.mxu0 %v2262
      %2266 = vmatprep.subr.bf16.mxu0 0
      %2267 = vmatpush1.bf16.msra.mxu0 0
      %2268 = vmatprep.subr.bf16.mxu0 0
      %2269 = vmatpush1.bf16.msra.mxu0 0
      %2270 = vmatprep.subr.bf16.mxu0 0
      %2271 = vmatpush1.bf16.msra.mxu0 0
      %2272 = vmatprep.subr.bf16.mxu0 0
      %2273 = vmatpush1.bf16.msra.mxu0 0
      %2274 = vmatprep.subr.bf16.mxu0 0
      %2275 = vmatpush1.bf16.msra.mxu0 0
      %2276 = vmatprep.subr.bf16.mxu0 0
      %2277 = vmatpush1.bf16.msra.mxu0 0
      %2278 = vmatprep.subr.bf16.mxu0 0
      %2279 = vmatpush1.bf16.msra.mxu0 0
      %2280 = vmatprep.subr.bf16.mxu0 0
      %2281 = vmatpush1.bf16.msra.mxu0 0
      %2282 = vmatprep.subr.bf16.mxu0 0
      %2283 = vmatpush1.bf16.msra.mxu0 0
      %2284 = vmatprep.subr.bf16.mxu0 0
      %2285 = vmatpush1.bf16.msra.mxu0 0
      %2286 = vmatprep.subr.bf16.mxu0 0
      %2287 = vmatpush1.bf16.msra.mxu0 0
      %2288 = vmatprep.subr.bf16.mxu0 0
      %2289 = vmatpush1.bf16.msra.mxu0 0
      %2290 = vmatprep.subr.bf16.mxu0 0
      %2291 = vmatpush1.bf16.msra.mxu0 0
      %2292 = vmatprep.subr.bf16.mxu0 0
      %2293 = vmatpush1.bf16.msra.mxu0 0
      %2294 = vmatprep.subr.bf16.mxu0 0
      %2295 = vmatpush1.bf16.msra.mxu0 0
      %2296 = vmatprep.mubr.bf16.mxu0 0
      %2297 = vmatmul.mubr.bf16.gmra.mrb[0].mxu0 %v2238
      %v2298 = vpop.f32.mrb[0].mxu0
      %v2299 = vadd.f32 0.0, %v2298
      %v2300 = vpop.f32.mrb[0].mxu0
      %v2301 = vpop.f32.mrb[0].mxu0
      %v2302 = vadd.f32 0.0, %v2301
      %v2303 = vpop.f32.mrb[0].mxu0
      %2304 = vmatprep.mubr.bf16.mxu0 0
      %2305 = vmatmul.mubr.bf16.gmra.mrb[0].mxu0 %v2241
      %v2306 = vpop.f32.mrb[0].mxu0
      %v2307 = vadd.f32 0.0, %v2306
      %v2308 = vpop.f32.mrb[0].mxu0
      %v2309 = vpop.f32.mrb[0].mxu0
      %v2310 = vadd.f32 0.0, %v2309
      %v2311 = vpop.f32.mrb[0].mxu0
      %2312 = vmatprep.mubr.bf16.mxu0 0
      %2313 = vmatmul.mubr.bf16.gmra.mrb[0].mxu0 %v2244
      %v2314 = vpop.f32.mrb[0].mxu0
      %v2315 = vadd.f32 0.0, %v2314
      %v2316 = vpop.f32.mrb[0].mxu0
      %v2317 = vpop.f32.mrb[0].mxu0
      %v2318 = vadd.f32 0.0, %v2317
      %v2319 = vpop.f32.mrb[0].mxu0
      %2320 = vmatprep.mubr.bf16.mxu0 0
      %2321 = vmatmul.mubr.bf16.gmra.mrb[0].mxu0 %v2247
      %v2322 = vpop.f32.mrb[0].mxu0
      %v2323 = vadd.f32 0.0, %v2322
      %v2324 = vpop.f32.mrb[0].mxu0
      %v2325 = vpop.f32.mrb[0].mxu0
      %v2326 = vadd.f32 0.0, %v2325
      %v2327 = vpop.f32.mrb[0].mxu0
      %2328 = vmatprep.mubr.bf16.mxu0 0
      %2329 = vmatmul.mubr.bf16.gmra.mrb[0].mxu0 %v2250
      %v2330 = vpop.f32.mrb[0].mxu0
      %v2331 = vadd.f32 0.0, %v2330
      %v2332 = vpop.f32.mrb[0].mxu0
      %v2333 = vpop.f32.mrb[0].mxu0
      %v2334 = vadd.f32 0.0, %v2333
      %v2335 = vpop.f32.mrb[0].mxu0
      %2336 = vmatprep.mubr.bf16.mxu0 0
      %2337 = vmatmul.mubr.bf16.gmra.mrb[0].mxu0 %v2253
      %v2338 = vpop.f32.mrb[0].mxu0
      %v2339 = vadd.f32 0.0, %v2338
      %v2340 = vpop.f32.mrb[0].mxu0
      %v2341 = vpop.f32.mrb[0].mxu0
      %v2342 = vadd.f32 0.0, %v2341
      %v2343 = vpop.f32.mrb[0].mxu0
      %2344 = vmatprep.mubr.bf16.mxu0 0
      %2345 = vmatmul.mubr.bf16.gmra.mrb[0].mxu0 %v2256
      %v2346 = vpop.f32.mrb[0].mxu0
      %v2347 = vadd.f32 0.0, %v2346
      %v2348 = vpop.f32.mrb[0].mxu0
      %v2349 = vpop.f32.mrb[0].mxu0
      %v2350 = vadd.f32 0.0, %v2349
      %v2351 = vpop.f32.mrb[0].mxu0
      %2352 = vmatprep.mubr.bf16.mxu0 0
      %2353 = vmatmul.mubr.bf16.gmra.mrb[0].mxu0 %v2259
      %v2354 = vpop.f32.mrb[0].mxu0
      %v2355 = vadd.f32 0.0, %v2354
      %v2356 = vpop.f32.mrb[0].mxu0
      %v2357 = vpop.f32.mrb[0].mxu0
      %v2358 = vadd.f32 0.0, %v2357
      %v2359 = vpop.f32.mrb[0].mxu0
      %2360 = vdwg.mxu0
      %v2361 = vadd.f32 %v2195, %v2299
      %v2362 = vadd.f32 %v2196, %v2302
      %v2363 = vadd.f32 %v2197, %v2307
      %v2364 = vadd.f32 %v2198, %v2310
      %v2365 = vadd.f32 %v2199, %v2315
      %v2366 = vadd.f32 %v2200, %v2318
      %v2367 = vadd.f32 %v2201, %v2323
      %v2368 = vadd.f32 %v2202, %v2326
      %v2369 = vadd.f32 %v2203, %v2331
      %v2370 = vadd.f32 %v2204, %v2334
      %v2371 = vadd.f32 %v2205, %v2339
      %v2372 = vadd.f32 %v2206, %v2342
      %v2373 = vadd.f32 %v2207, %v2347
      %v2374 = vadd.f32 %v2208, %v2350
      %v2375 = vadd.f32 %v2209, %v2355
      %v2376 = vadd.f32 %v2210, %v2358
      %v2377 = vld [vmem:[%s1379 + $0x3] sm:$0xff]
      %v2378 = vld [vmem:[%s1379 + $0x13] sm:$0xff]
      %v2379 = vld [vmem:[%s1379 + $0x23] sm:$0xff]
      %v2380 = vld [vmem:[%s1379 + $0x33] sm:$0xff]
      %v2381 = vld [vmem:[%s1379 + $0x43] sm:$0xff]
      %v2382 = vld [vmem:[%s1379 + $0x53] sm:$0xff]
      %v2383 = vld [vmem:[%s1379 + $0x63] sm:$0xff]
      %v2384 = vld [vmem:[%s1379 + $0x73] sm:$0xff]
      %v2385 = vld [vmem:[%s1379 + $0xb3] sm:$0xff]
      %v2386 = vld [vmem:[%s1379 + $0xc3] sm:$0xff]
      %v2387 = vld [vmem:[%s1379 + $0xd3] sm:$0xff]
      %v2388 = vld [vmem:[%s1379 + $0xe3] sm:$0xff]
      %v2389 = vld [vmem:[%s1379 + $0xf3] sm:$0xff]
      %v2390 = vld [vmem:[%s1379 + $0x103] sm:$0xff]
      %v2391 = vld [vmem:[%s1379 + $0x113] sm:$0xff]
      %v2392 = vld [vmem:[%s1379 + $0x123] sm:$0xff]
      %v2393 = vpack.c.bf16 %v2378, %v2377
      %v2394 = vpack.c.bf16 %v2380, %v2379
      %v2395 = vpack.c.bf16 %v2382, %v2381
      %v2396 = vpack.c.bf16 %v2384, %v2383
      %v2397 = vpack.c.bf16 %v2386, %v2385
      %v2398 = vpack.c.bf16 %v2388, %v2387
      %v2399 = vpack.c.bf16 %v2390, %v2389
      %v2400 = vpack.c.bf16 %v2392, %v2391
      %s2401 = scalar_lea.vmem %s234, 52
      %v2402 = vld [vmem:[%s2401] sm:$0xf]
      %v2404 = vsel %vm299, %v2393, 0
      %v2407 = vsel %vm299, %v2394, 0
      %v2410 = vsel %vm299, %v2395, 0
      %v2413 = vsel %vm299, %v2396, 0
      %v2416 = vsel %vm299, %v2397, 0
      %v2419 = vsel %vm299, %v2398, 0
      %v2422 = vsel %vm299, %v2399, 0
      %v2425 = vsel %vm299, %v2400, 0
      %v2428 = vsel %vm324, %v2402, 0
      %2430 = vmatprep.subr.bf16.mxu0 0
      %2431 = vmatpush1.bf16.msra.mxu0 %v2428
      %2432 = vmatprep.subr.bf16.mxu0 0
      %2433 = vmatpush1.bf16.msra.mxu0 0
      %2434 = vmatprep.subr.bf16.mxu0 0
      %2435 = vmatpush1.bf16.msra.mxu0 0
      %2436 = vmatprep.subr.bf16.mxu0 0
      %2437 = vmatpush1.bf16.msra.mxu0 0
      %2438 = vmatprep.subr.bf16.mxu0 0
      %2439 = vmatpush1.bf16.msra.mxu0 0
      %2440 = vmatprep.subr.bf16.mxu0 0
      %2441 = vmatpush1.bf16.msra.mxu0 0
      %2442 = vmatprep.subr.bf16.mxu0 0
      %2443 = vmatpush1.bf16.msra.mxu0 0
      %2444 = vmatprep.subr.bf16.mxu0 0
      %2445 = vmatpush1.bf16.msra.mxu0 0
      %2446 = vmatprep.subr.bf16.mxu0 0
      %2447 = vmatpush1.bf16.msra.mxu0 0
      %2448 = vmatprep.subr.bf16.mxu0 0
      %2449 = vmatpush1.bf16.msra.mxu0 0
      %2450 = vmatprep.subr.bf16.mxu0 0
      %2451 = vmatpush1.bf16.msra.mxu0 0
      %2452 = vmatprep.subr.bf16.mxu0 0
      %2453 = vmatpush1.bf16.msra.mxu0 0
      %2454 = vmatprep.subr.bf16.mxu0 0
      %2455 = vmatpush1.bf16.msra.mxu0 0
      %2456 = vmatprep.subr.bf16.mxu0 0
      %2457 = vmatpush1.bf16.msra.mxu0 0
      %2458 = vmatprep.subr.bf16.mxu0 0
      %2459 = vmatpush1.bf16.msra.mxu0 0
      %2460 = vmatprep.subr.bf16.mxu0 0
      %2461 = vmatpush1.bf16.msra.mxu0 0
      %2462 = vmatprep.mubr.bf16.mxu0 0
      %2463 = vmatmul.mubr.bf16.gmra.mrb[0].mxu0 %v2404
      %v2464 = vpop.f32.mrb[0].mxu0
      %v2465 = vadd.f32 0.0, %v2464
      %v2466 = vpop.f32.mrb[0].mxu0
      %v2467 = vpop.f32.mrb[0].mxu0
      %v2468 = vadd.f32 0.0, %v2467
      %v2469 = vpop.f32.mrb[0].mxu0
      %2470 = vmatprep.mubr.bf16.mxu0 0
      %2471 = vmatmul.mubr.bf16.gmra.mrb[0].mxu0 %v2407
      %v2472 = vpop.f32.mrb[0].mxu0
      %v2473 = vadd.f32 0.0, %v2472
      %v2474 = vpop.f32.mrb[0].mxu0
      %v2475 = vpop.f32.mrb[0].mxu0
      %v2476 = vadd.f32 0.0, %v2475
      %v2477 = vpop.f32.mrb[0].mxu0
      %2478 = vmatprep.mubr.bf16.mxu0 0
      %2479 = vmatmul.mubr.bf16.gmra.mrb[0].mxu0 %v2410
      %v2480 = vpop.f32.mrb[0].mxu0
      %v2481 = vadd.f32 0.0, %v2480
      %v2482 = vpop.f32.mrb[0].mxu0
      %v2483 = vpop.f32.mrb[0].mxu0
      %v2484 = vadd.f32 0.0, %v2483
      %v2485 = vpop.f32.mrb[0].mxu0
      %2486 = vmatprep.mubr.bf16.mxu0 0
      %2487 = vmatmul.mubr.bf16.gmra.mrb[0].mxu0 %v2413
      %v2488 = vpop.f32.mrb[0].mxu0
      %v2489 = vadd.f32 0.0, %v2488
      %v2490 = vpop.f32.mrb[0].mxu0
      %v2491 = vpop.f32.mrb[0].mxu0
      %v2492 = vadd.f32 0.0, %v2491
      %v2493 = vpop.f32.mrb[0].mxu0
      %2494 = vmatprep.mubr.bf16.mxu0 0
      %2495 = vmatmul.mubr.bf16.gmra.mrb[0].mxu0 %v2416
      %v2496 = vpop.f32.mrb[0].mxu0
      %v2497 = vadd.f32 0.0, %v2496
      %v2498 = vpop.f32.mrb[0].mxu0
      %v2499 = vpop.f32.mrb[0].mxu0
      %v2500 = vadd.f32 0.0, %v2499
      %v2501 = vpop.f32.mrb[0].mxu0
      %2502 = vmatprep.mubr.bf16.mxu0 0
      %2503 = vmatmul.mubr.bf16.gmra.mrb[0].mxu0 %v2419
      %v2504 = vpop.f32.mrb[0].mxu0
      %v2505 = vadd.f32 0.0, %v2504
      %v2506 = vpop.f32.mrb[0].mxu0
      %v2507 = vpop.f32.mrb[0].mxu0
      %v2508 = vadd.f32 0.0, %v2507
      %v2509 = vpop.f32.mrb[0].mxu0
      %2510 = vmatprep.mubr.bf16.mxu0 0
      %2511 = vmatmul.mubr.bf16.gmra.mrb[0].mxu0 %v2422
      %v2512 = vpop.f32.mrb[0].mxu0
      %v2513 = vadd.f32 0.0, %v2512
      %v2514 = vpop.f32.mrb[0].mxu0
      %v2515 = vpop.f32.mrb[0].mxu0
      %v2516 = vadd.f32 0.0, %v2515
      %v2517 = vpop.f32.mrb[0].mxu0
      %2518 = vmatprep.mubr.bf16.mxu0 0
      %2519 = vmatmul.mubr.bf16.gmra.mrb[0].mxu0 %v2425
      %v2520 = vpop.f32.mrb[0].mxu0
      %v2521 = vadd.f32 0.0, %v2520
      %v2522 = vpop.f32.mrb[0].mxu0
      %v2523 = vpop.f32.mrb[0].mxu0
      %v2524 = vadd.f32 0.0, %v2523
      %v2525 = vpop.f32.mrb[0].mxu0
      %2526 = vdwg.mxu0
      %v2527 = vadd.f32 %v2361, %v2465
      %v2528 = vadd.f32 %v2362, %v2468
      %v2529 = vadd.f32 %v2363, %v2473
      %v2530 = vadd.f32 %v2364, %v2476
      %v2531 = vadd.f32 %v2365, %v2481
      %v2532 = vadd.f32 %v2366, %v2484
      %v2533 = vadd.f32 %v2367, %v2489
      %v2534 = vadd.f32 %v2368, %v2492
      %v2535 = vadd.f32 %v2369, %v2497
      %v2536 = vadd.f32 %v2370, %v2500
      %v2537 = vadd.f32 %v2371, %v2505
      %v2538 = vadd.f32 %v2372, %v2508
      %v2539 = vadd.f32 %v2373, %v2513
      %v2540 = vadd.f32 %v2374, %v2516
      %v2541 = vadd.f32 %v2375, %v2521
      %v2542 = vadd.f32 %v2376, %v2524
      %s2543 = scalar_lea.vmem %s229, 16
      %v2544 = vld [vmem:[%s2543] sm:$0xff]
      %v2545 = vld [vmem:[%s2543 + $0x10] sm:$0xff]
      %v2546 = vld [vmem:[%s2543 + $0x20] sm:$0xff]
      %v2547 = vld [vmem:[%s2543 + $0x30] sm:$0xff]
      %v2548 = vld [vmem:[%s2543 + $0x40] sm:$0xff]
      %v2549 = vld [vmem:[%s2543 + $0x50] sm:$0xff]
      %v2550 = vld [vmem:[%s2543 + $0x60] sm:$0xff]
      %v2551 = vld [vmem:[%s2543 + $0x70] sm:$0xff]
      %v2552 = vld [vmem:[%s2543 + $0xb0] sm:$0xff]
      %v2553 = vld [vmem:[%s2543 + $0xc0] sm:$0xff]
      %v2554 = vld [vmem:[%s2543 + $0xd0] sm:$0xff]
      %v2555 = vld [vmem:[%s2543 + $0xe0] sm:$0xff]
      %v2556 = vld [vmem:[%s2543 + $0xf0] sm:$0xff]
      %v2557 = vld [vmem:[%s2543 + $0x100] sm:$0xff]
      %v2558 = vld [vmem:[%s2543 + $0x110] sm:$0xff]
      %v2559 = vld [vmem:[%s2543 + $0x120] sm:$0xff]
      %v2560 = vpack.c.bf16 %v2545, %v2544
      %v2561 = vpack.c.bf16 %v2547, %v2546
      %v2562 = vpack.c.bf16 %v2549, %v2548
      %v2563 = vpack.c.bf16 %v2551, %v2550
      %v2564 = vpack.c.bf16 %v2553, %v2552
      %v2565 = vpack.c.bf16 %v2555, %v2554
      %v2566 = vpack.c.bf16 %v2557, %v2556
      %v2567 = vpack.c.bf16 %v2559, %v2558
      %s2568 = scalar_lea.vmem %s234, 56
      %v2569 = vld [vmem:[%s2568] sm:$0xf]
      %v2571 = vsel %vm299, %v2560, 0
      %v2574 = vsel %vm299, %v2561, 0
      %v2577 = vsel %vm299, %v2562, 0
      %v2580 = vsel %vm299, %v2563, 0
      %v2583 = vsel %vm299, %v2564, 0
      %v2586 = vsel %vm299, %v2565, 0
      %v2589 = vsel %vm299, %v2566, 0
      %v2592 = vsel %vm299, %v2567, 0
      %v2595 = vsel %vm324, %v2569, 0
      %2597 = vmatprep.subr.bf16.mxu0 0
      %2598 = vmatpush1.bf16.msra.mxu0 %v2595
      %2599 = vmatprep.subr.bf16.mxu0 0
      %2600 = vmatpush1.bf16.msra.mxu0 0
      %2601 = vmatprep.subr.bf16.mxu0 0
      %2602 = vmatpush1.bf16.msra.mxu0 0
      %2603 = vmatprep.subr.bf16.mxu0 0
      %2604 = vmatpush1.bf16.msra.mxu0 0
      %2605 = vmatprep.subr.bf16.mxu0 0
      %2606 = vmatpush1.bf16.msra.mxu0 0
      %2607 = vmatprep.subr.bf16.mxu0 0
      %2608 = vmatpush1.bf16.msra.mxu0 0
      %2609 = vmatprep.subr.bf16.mxu0 0
      %2610 = vmatpush1.bf16.msra.mxu0 0
      %2611 = vmatprep.subr.bf16.mxu0 0
      %2612 = vmatpush1.bf16.msra.mxu0 0
      %2613 = vmatprep.subr.bf16.mxu0 0
      %2614 = vmatpush1.bf16.msra.mxu0 0
      %2615 = vmatprep.subr.bf16.mxu0 0
      %2616 = vmatpush1.bf16.msra.mxu0 0
      %2617 = vmatprep.subr.bf16.mxu0 0
      %2618 = vmatpush1.bf16.msra.mxu0 0
      %2619 = vmatprep.subr.bf16.mxu0 0
      %2620 = vmatpush1.bf16.msra.mxu0 0
      %2621 = vmatprep.subr.bf16.mxu0 0
      %2622 = vmatpush1.bf16.msra.mxu0 0
      %2623 = vmatprep.subr.bf16.mxu0 0
      %2624 = vmatpush1.bf16.msra.mxu0 0
      %2625 = vmatprep.subr.bf16.mxu0 0
      %2626 = vmatpush1.bf16.msra.mxu0 0
      %2627 = vmatprep.subr.bf16.mxu0 0
      %2628 = vmatpush1.bf16.msra.mxu0 0
      %2629 = vmatprep.mubr.bf16.mxu0 0
      %2630 = vmatmul.mubr.bf16.gmra.mrb[0].mxu0 %v2571
      %v2631 = vpop.f32.mrb[0].mxu0
      %v2632 = vadd.f32 0.0, %v2631
      %v2633 = vpop.f32.mrb[0].mxu0
      %v2634 = vpop.f32.mrb[0].mxu0
      %v2635 = vadd.f32 0.0, %v2634
      %v2636 = vpop.f32.mrb[0].mxu0
      %2637 = vmatprep.mubr.bf16.mxu0 0
      %2638 = vmatmul.mubr.bf16.gmra.mrb[0].mxu0 %v2574
      %v2639 = vpop.f32.mrb[0].mxu0
      %v2640 = vadd.f32 0.0, %v2639
      %v2641 = vpop.f32.mrb[0].mxu0
      %v2642 = vpop.f32.mrb[0].mxu0
      %v2643 = vadd.f32 0.0, %v2642
      %v2644 = vpop.f32.mrb[0].mxu0
      %2645 = vmatprep.mubr.bf16.mxu0 0
      %2646 = vmatmul.mubr.bf16.gmra.mrb[0].mxu0 %v2577
      %v2647 = vpop.f32.mrb[0].mxu0
      %v2648 = vadd.f32 0.0, %v2647
      %v2649 = vpop.f32.mrb[0].mxu0
      %v2650 = vpop.f32.mrb[0].mxu0
      %v2651 = vadd.f32 0.0, %v2650
      %v2652 = vpop.f32.mrb[0].mxu0
      %2653 = vmatprep.mubr.bf16.mxu0 0
      %2654 = vmatmul.mubr.bf16.gmra.mrb[0].mxu0 %v2580
      %v2655 = vpop.f32.mrb[0].mxu0
      %v2656 = vadd.f32 0.0, %v2655
      %v2657 = vpop.f32.mrb[0].mxu0
      %v2658 = vpop.f32.mrb[0].mxu0
      %v2659 = vadd.f32 0.0, %v2658
      %v2660 = vpop.f32.mrb[0].mxu0
      %2661 = vmatprep.mubr.bf16.mxu0 0
      %2662 = vmatmul.mubr.bf16.gmra.mrb[0].mxu0 %v2583
      %v2663 = vpop.f32.mrb[0].mxu0
      %v2664 = vadd.f32 0.0, %v2663
      %v2665 = vpop.f32.mrb[0].mxu0
      %v2666 = vpop.f32.mrb[0].mxu0
      %v2667 = vadd.f32 0.0, %v2666
      %v2668 = vpop.f32.mrb[0].mxu0
      %2669 = vmatprep.mubr.bf16.mxu0 0
      %2670 = vmatmul.mubr.bf16.gmra.mrb[0].mxu0 %v2586
      %v2671 = vpop.f32.mrb[0].mxu0
      %v2672 = vadd.f32 0.0, %v2671
      %v2673 = vpop.f32.mrb[0].mxu0
      %v2674 = vpop.f32.mrb[0].mxu0
      %v2675 = vadd.f32 0.0, %v2674
      %v2676 = vpop.f32.mrb[0].mxu0
      %2677 = vmatprep.mubr.bf16.mxu0 0
      %2678 = vmatmul.mubr.bf16.gmra.mrb[0].mxu0 %v2589
      %v2679 = vpop.f32.mrb[0].mxu0
      %v2680 = vadd.f32 0.0, %v2679
      %v2681 = vpop.f32.mrb[0].mxu0
      %v2682 = vpop.f32.mrb[0].mxu0
      %v2683 = vadd.f32 0.0, %v2682
      %v2684 = vpop.f32.mrb[0].mxu0
      %2685 = vmatprep.mubr.bf16.mxu0 0
      %2686 = vmatmul.mubr.bf16.gmra.mrb[0].mxu0 %v2592
      %v2687 = vpop.f32.mrb[0].mxu0
      %v2688 = vadd.f32 0.0, %v2687
      %v2689 = vpop.f32.mrb[0].mxu0
      %v2690 = vpop.f32.mrb[0].mxu0
      %v2691 = vadd.f32 0.0, %v2690
      %v2692 = vpop.f32.mrb[0].mxu0
      %2693 = vdwg.mxu0
      %v2694 = vadd.f32 %v2527, %v2632
      %v2695 = vadd.f32 %v2528, %v2635
      %v2696 = vadd.f32 %v2529, %v2640
      %v2697 = vadd.f32 %v2530, %v2643
      %v2698 = vadd.f32 %v2531, %v2648
      %v2699 = vadd.f32 %v2532, %v2651
      %v2700 = vadd.f32 %v2533, %v2656
      %v2701 = vadd.f32 %v2534, %v2659
      %v2702 = vadd.f32 %v2535, %v2664
      %v2703 = vadd.f32 %v2536, %v2667
      %v2704 = vadd.f32 %v2537, %v2672
      %v2705 = vadd.f32 %v2538, %v2675
      %v2706 = vadd.f32 %v2539, %v2680
      %v2707 = vadd.f32 %v2540, %v2683
      %v2708 = vadd.f32 %v2541, %v2688
      %v2709 = vadd.f32 %v2542, %v2691
      %s2710 = scalar_lea.vmem %s229, 368
      %v2711 = vld [vmem:[%s2710] sm:$0xff]
      %v2712 = vld [vmem:[%s2710 + $0x10] sm:$0xff]
      %v2713 = vld [vmem:[%s2710 + $0x20] sm:$0xff]
      %v2714 = vld [vmem:[%s2710 + $0x30] sm:$0xff]
      %v2715 = vld [vmem:[%s2710 + $0x40] sm:$0xff]
      %v2716 = vld [vmem:[%s2710 + $0x50] sm:$0xff]
      %v2717 = vld [vmem:[%s2710 + $0x60] sm:$0xff]
      %v2718 = vld [vmem:[%s2710 + $0x70] sm:$0xff]
      %v2719 = vld [vmem:[%s2710 + $0xb0] sm:$0xff]
      %v2720 = vld [vmem:[%s2710 + $0xc0] sm:$0xff]
      %v2721 = vld [vmem:[%s2710 + $0xd0] sm:$0xff]
      %v2722 = vld [vmem:[%s2710 + $0xe0] sm:$0xff]
      %v2723 = vld [vmem:[%s2710 + $0xf0] sm:$0xff]
      %v2724 = vld [vmem:[%s2710 + $0x100] sm:$0xff]
      %v2725 = vld [vmem:[%s2710 + $0x110] sm:$0xff]
      %v2726 = vld [vmem:[%s2710 + $0x120] sm:$0xff]
      %v2727 = vpack.c.bf16 %v2712, %v2711
      %v2728 = vpack.c.bf16 %v2714, %v2713
      %v2729 = vpack.c.bf16 %v2716, %v2715
      %v2730 = vpack.c.bf16 %v2718, %v2717
      %v2731 = vpack.c.bf16 %v2720, %v2719
      %v2732 = vpack.c.bf16 %v2722, %v2721
      %v2733 = vpack.c.bf16 %v2724, %v2723
      %v2734 = vpack.c.bf16 %v2726, %v2725
      %s2735 = scalar_lea.vmem %s234, 60
      %v2736 = vld [vmem:[%s2735] sm:$0xf]
      %v2738 = vsel %vm299, %v2727, 0
      %v2741 = vsel %vm299, %v2728, 0
      %v2744 = vsel %vm299, %v2729, 0
      %v2747 = vsel %vm299, %v2730, 0
      %v2750 = vsel %vm299, %v2731, 0
      %v2753 = vsel %vm299, %v2732, 0
      %v2756 = vsel %vm299, %v2733, 0
      %v2759 = vsel %vm299, %v2734, 0
      %v2762 = vsel %vm324, %v2736, 0
      %2764 = vmatprep.subr.bf16.mxu0 0
      %2765 = vmatpush1.bf16.msra.mxu0 %v2762
      %2766 = vmatprep.subr.bf16.mxu0 0
      %2767 = vmatpush1.bf16.msra.mxu0 0
      %2768 = vmatprep.subr.bf16.mxu0 0
      %2769 = vmatpush1.bf16.msra.mxu0 0
      %2770 = vmatprep.subr.bf16.mxu0 0
      %2771 = vmatpush1.bf16.msra.mxu0 0
      %2772 = vmatprep.subr.bf16.mxu0 0
      %2773 = vmatpush1.bf16.msra.mxu0 0
      %2774 = vmatprep.subr.bf16.mxu0 0
      %2775 = vmatpush1.bf16.msra.mxu0 0
      %2776 = vmatprep.subr.bf16.mxu0 0
      %2777 = vmatpush1.bf16.msra.mxu0 0
      %2778 = vmatprep.subr.bf16.mxu0 0
      %2779 = vmatpush1.bf16.msra.mxu0 0
      %2780 = vmatprep.subr.bf16.mxu0 0
      %2781 = vmatpush1.bf16.msra.mxu0 0
      %2782 = vmatprep.subr.bf16.mxu0 0
      %2783 = vmatpush1.bf16.msra.mxu0 0
      %2784 = vmatprep.subr.bf16.mxu0 0
      %2785 = vmatpush1.bf16.msra.mxu0 0
      %2786 = vmatprep.subr.bf16.mxu0 0
      %2787 = vmatpush1.bf16.msra.mxu0 0
      %2788 = vmatprep.subr.bf16.mxu0 0
      %2789 = vmatpush1.bf16.msra.mxu0 0
      %2790 = vmatprep.subr.bf16.mxu0 0
      %2791 = vmatpush1.bf16.msra.mxu0 0
      %2792 = vmatprep.subr.bf16.mxu0 0
      %2793 = vmatpush1.bf16.msra.mxu0 0
      %2794 = vmatprep.subr.bf16.mxu0 0
      %2795 = vmatpush1.bf16.msra.mxu0 0
      %2796 = vmatprep.mubr.bf16.mxu0 0
      %2797 = vmatmul.mubr.bf16.gmra.mrb[0].mxu0 %v2738
      %v2798 = vpop.f32.mrb[0].mxu0
      %v2799 = vadd.f32 0.0, %v2798
      %v2800 = vpop.f32.mrb[0].mxu0
      %v2801 = vpop.f32.mrb[0].mxu0
      %v2802 = vadd.f32 0.0, %v2801
      %v2803 = vpop.f32.mrb[0].mxu0
      %2804 = vmatprep.mubr.bf16.mxu0 0
      %2805 = vmatmul.mubr.bf16.gmra.mrb[0].mxu0 %v2741
      %v2806 = vpop.f32.mrb[0].mxu0
      %v2807 = vadd.f32 0.0, %v2806
      %v2808 = vpop.f32.mrb[0].mxu0
      %v2809 = vpop.f32.mrb[0].mxu0
      %v2810 = vadd.f32 0.0, %v2809
      %v2811 = vpop.f32.mrb[0].mxu0
      %2812 = vmatprep.mubr.bf16.mxu0 0
      %2813 = vmatmul.mubr.bf16.gmra.mrb[0].mxu0 %v2744
      %v2814 = vpop.f32.mrb[0].mxu0
      %v2815 = vadd.f32 0.0, %v2814
      %v2816 = vpop.f32.mrb[0].mxu0
      %v2817 = vpop.f32.mrb[0].mxu0
      %v2818 = vadd.f32 0.0, %v2817
      %v2819 = vpop.f32.mrb[0].mxu0
      %2820 = vmatprep.mubr.bf16.mxu0 0
      %2821 = vmatmul.mubr.bf16.gmra.mrb[0].mxu0 %v2747
      %v2822 = vpop.f32.mrb[0].mxu0
      %v2823 = vadd.f32 0.0, %v2822
      %v2824 = vpop.f32.mrb[0].mxu0
      %v2825 = vpop.f32.mrb[0].mxu0
      %v2826 = vadd.f32 0.0, %v2825
      %v2827 = vpop.f32.mrb[0].mxu0
      %2828 = vmatprep.mubr.bf16.mxu0 0
      %2829 = vmatmul.mubr.bf16.gmra.mrb[0].mxu0 %v2750
      %v2830 = vpop.f32.mrb[0].mxu0
      %v2831 = vadd.f32 0.0, %v2830
      %v2832 = vpop.f32.mrb[0].mxu0
      %v2833 = vpop.f32.mrb[0].mxu0
      %v2834 = vadd.f32 0.0, %v2833
      %v2835 = vpop.f32.mrb[0].mxu0
      %2836 = vmatprep.mubr.bf16.mxu0 0
      %2837 = vmatmul.mubr.bf16.gmra.mrb[0].mxu0 %v2753
      %v2838 = vpop.f32.mrb[0].mxu0
      %v2839 = vadd.f32 0.0, %v2838
      %v2840 = vpop.f32.mrb[0].mxu0
      %v2841 = vpop.f32.mrb[0].mxu0
      %v2842 = vadd.f32 0.0, %v2841
      %v2843 = vpop.f32.mrb[0].mxu0
      %2844 = vmatprep.mubr.bf16.mxu0 0
      %2845 = vmatmul.mubr.bf16.gmra.mrb[0].mxu0 %v2756
      %v2846 = vpop.f32.mrb[0].mxu0
      %v2847 = vadd.f32 0.0, %v2846
      %v2848 = vpop.f32.mrb[0].mxu0
      %v2849 = vpop.f32.mrb[0].mxu0
      %v2850 = vadd.f32 0.0, %v2849
      %v2851 = vpop.f32.mrb[0].mxu0
      %2852 = vmatprep.mubr.bf16.mxu0 0
      %2853 = vmatmul.mubr.bf16.gmra.mrb[0].mxu0 %v2759
      %v2854 = vpop.f32.mrb[0].mxu0
      %v2855 = vadd.f32 0.0, %v2854
      %v2856 = vpop.f32.mrb[0].mxu0
      %v2857 = vpop.f32.mrb[0].mxu0
      %v2858 = vadd.f32 0.0, %v2857
      %v2859 = vpop.f32.mrb[0].mxu0
      %2860 = vdwg.mxu0
      %v2861 = vadd.f32 %v2694, %v2799
      %v2862 = vadd.f32 %v2695, %v2802
      %v2863 = vadd.f32 %v2696, %v2807
      %v2864 = vadd.f32 %v2697, %v2810
      %v2865 = vadd.f32 %v2698, %v2815
      %v2866 = vadd.f32 %v2699, %v2818
      %v2867 = vadd.f32 %v2700, %v2823
      %v2868 = vadd.f32 %v2701, %v2826
      %v2869 = vadd.f32 %v2702, %v2831
      %v2870 = vadd.f32 %v2703, %v2834
      %v2871 = vadd.f32 %v2704, %v2839
      %v2872 = vadd.f32 %v2705, %v2842
      %v2873 = vadd.f32 %v2706, %v2847
      %v2874 = vadd.f32 %v2707, %v2850
      %v2875 = vadd.f32 %v2708, %v2855
      %v2876 = vadd.f32 %v2709, %v2858
      %v2877 = vld [vmem:[%s2543 + $0x1] sm:$0xff]
      %v2878 = vld [vmem:[%s2543 + $0x11] sm:$0xff]
      %v2879 = vld [vmem:[%s2543 + $0x21] sm:$0xff]
      %v2880 = vld [vmem:[%s2543 + $0x31] sm:$0xff]
      %v2881 = vld [vmem:[%s2543 + $0x41] sm:$0xff]
      %v2882 = vld [vmem:[%s2543 + $0x51] sm:$0xff]
      %v2883 = vld [vmem:[%s2543 + $0x61] sm:$0xff]
      %v2884 = vld [vmem:[%s2543 + $0x71] sm:$0xff]
      %v2885 = vld [vmem:[%s2543 + $0xb1] sm:$0xff]
      %v2886 = vld [vmem:[%s2543 + $0xc1] sm:$0xff]
      %v2887 = vld [vmem:[%s2543 + $0xd1] sm:$0xff]
      %v2888 = vld [vmem:[%s2543 + $0xe1] sm:$0xff]
      %v2889 = vld [vmem:[%s2543 + $0xf1] sm:$0xff]
      %v2890 = vld [vmem:[%s2543 + $0x101] sm:$0xff]
      %v2891 = vld [vmem:[%s2543 + $0x111] sm:$0xff]
      %v2892 = vld [vmem:[%s2543 + $0x121] sm:$0xff]
      %v2893 = vpack.c.bf16 %v2878, %v2877
      %v2894 = vpack.c.bf16 %v2880, %v2879
      %v2895 = vpack.c.bf16 %v2882, %v2881
      %v2896 = vpack.c.bf16 %v2884, %v2883
      %v2897 = vpack.c.bf16 %v2886, %v2885
      %v2898 = vpack.c.bf16 %v2888, %v2887
      %v2899 = vpack.c.bf16 %v2890, %v2889
      %v2900 = vpack.c.bf16 %v2892, %v2891
      %s2901 = scalar_lea.vmem %s234, 64
      %v2902 = vld [vmem:[%s2901] sm:$0xf]
      %v2904 = vsel %vm299, %v2893, 0
      %v2907 = vsel %vm299, %v2894, 0
      %v2910 = vsel %vm299, %v2895, 0
      %v2913 = vsel %vm299, %v2896, 0
      %v2916 = vsel %vm299, %v2897, 0
      %v2919 = vsel %vm299, %v2898, 0
      %v2922 = vsel %vm299, %v2899, 0
      %v2925 = vsel %vm299, %v2900, 0
      %v2928 = vsel %vm324, %v2902, 0
      %2930 = vmatprep.subr.bf16.mxu0 0
      %2931 = vmatpush1.bf16.msra.mxu0 %v2928
      %2932 = vmatprep.subr.bf16.mxu0 0
      %2933 = vmatpush1.bf16.msra.mxu0 0
      %2934 = vmatprep.subr.bf16.mxu0 0
      %2935 = vmatpush1.bf16.msra.mxu0 0
      %2936 = vmatprep.subr.bf16.mxu0 0
      %2937 = vmatpush1.bf16.msra.mxu0 0
      %2938 = vmatprep.subr.bf16.mxu0 0
      %2939 = vmatpush1.bf16.msra.mxu0 0
      %2940 = vmatprep.subr.bf16.mxu0 0
      %2941 = vmatpush1.bf16.msra.mxu0 0
      %2942 = vmatprep.subr.bf16.mxu0 0
      %2943 = vmatpush1.bf16.msra.mxu0 0
      %2944 = vmatprep.subr.bf16.mxu0 0
      %2945 = vmatpush1.bf16.msra.mxu0 0
      %2946 = vmatprep.subr.bf16.mxu0 0
      %2947 = vmatpush1.bf16.msra.mxu0 0
      %2948 = vmatprep.subr.bf16.mxu0 0
      %2949 = vmatpush1.bf16.msra.mxu0 0
      %2950 = vmatprep.subr.bf16.mxu0 0
      %2951 = vmatpush1.bf16.msra.mxu0 0
      %2952 = vmatprep.subr.bf16.mxu0 0
      %2953 = vmatpush1.bf16.msra.mxu0 0
      %2954 = vmatprep.subr.bf16.mxu0 0
      %2955 = vmatpush1.bf16.msra.mxu0 0
      %2956 = vmatprep.subr.bf16.mxu0 0
      %2957 = vmatpush1.bf16.msra.mxu0 0
      %2958 = vmatprep.subr.bf16.mxu0 0
      %2959 = vmatpush1.bf16.msra.mxu0 0
      %2960 = vmatprep.subr.bf16.mxu0 0
      %2961 = vmatpush1.bf16.msra.mxu0 0
      %2962 = vmatprep.mubr.bf16.mxu0 0
      %2963 = vmatmul.mubr.bf16.gmra.mrb[0].mxu0 %v2904
      %v2964 = vpop.f32.mrb[0].mxu0
      %v2965 = vadd.f32 0.0, %v2964
      %v2966 = vpop.f32.mrb[0].mxu0
      %v2967 = vpop.f32.mrb[0].mxu0
      %v2968 = vadd.f32 0.0, %v2967
      %v2969 = vpop.f32.mrb[0].mxu0
      %2970 = vmatprep.mubr.bf16.mxu0 0
      %2971 = vmatmul.mubr.bf16.gmra.mrb[0].mxu0 %v2907
      %v2972 = vpop.f32.mrb[0].mxu0
      %v2973 = vadd.f32 0.0, %v2972
      %v2974 = vpop.f32.mrb[0].mxu0
      %v2975 = vpop.f32.mrb[0].mxu0
      %v2976 = vadd.f32 0.0, %v2975
      %v2977 = vpop.f32.mrb[0].mxu0
      %2978 = vmatprep.mubr.bf16.mxu0 0
      %2979 = vmatmul.mubr.bf16.gmra.mrb[0].mxu0 %v2910
      %v2980 = vpop.f32.mrb[0].mxu0
      %v2981 = vadd.f32 0.0, %v2980
      %v2982 = vpop.f32.mrb[0].mxu0
      %v2983 = vpop.f32.mrb[0].mxu0
      %v2984 = vadd.f32 0.0, %v2983
      %v2985 = vpop.f32.mrb[0].mxu0
      %2986 = vmatprep.mubr.bf16.mxu0 0
      %2987 = vmatmul.mubr.bf16.gmra.mrb[0].mxu0 %v2913
      %v2988 = vpop.f32.mrb[0].mxu0
      %v2989 = vadd.f32 0.0, %v2988
      %v2990 = vpop.f32.mrb[0].mxu0
      %v2991 = vpop.f32.mrb[0].mxu0
      %v2992 = vadd.f32 0.0, %v2991
      %v2993 = vpop.f32.mrb[0].mxu0
      %2994 = vmatprep.mubr.bf16.mxu0 0
      %2995 = vmatmul.mubr.bf16.gmra.mrb[0].mxu0 %v2916
      %v2996 = vpop.f32.mrb[0].mxu0
      %v2997 = vadd.f32 0.0, %v2996
      %v2998 = vpop.f32.mrb[0].mxu0
      %v2999 = vpop.f32.mrb[0].mxu0
      %v3000 = vadd.f32 0.0, %v2999
      %v3001 = vpop.f32.mrb[0].mxu0
      %3002 = vmatprep.mubr.bf16.mxu0 0
      %3003 = vmatmul.mubr.bf16.gmra.mrb[0].mxu0 %v2919
      %v3004 = vpop.f32.mrb[0].mxu0
      %v3005 = vadd.f32 0.0, %v3004
      %v3006 = vpop.f32.mrb[0].mxu0
      %v3007 = vpop.f32.mrb[0].mxu0
      %v3008 = vadd.f32 0.0, %v3007
      %v3009 = vpop.f32.mrb[0].mxu0
      %3010 = vmatprep.mubr.bf16.mxu0 0
      %3011 = vmatmul.mubr.bf16.gmra.mrb[0].mxu0 %v2922
      %v3012 = vpop.f32.mrb[0].mxu0
      %v3013 = vadd.f32 0.0, %v3012
      %v3014 = vpop.f32.mrb[0].mxu0
      %v3015 = vpop.f32.mrb[0].mxu0
      %v3016 = vadd.f32 0.0, %v3015
      %v3017 = vpop.f32.mrb[0].mxu0
      %3018 = vmatprep.mubr.bf16.mxu0 0
      %3019 = vmatmul.mubr.bf16.gmra.mrb[0].mxu0 %v2925
      %v3020 = vpop.f32.mrb[0].mxu0
      %v3021 = vadd.f32 0.0, %v3020
      %v3022 = vpop.f32.mrb[0].mxu0
      %v3023 = vpop.f32.mrb[0].mxu0
      %v3024 = vadd.f32 0.0, %v3023
      %v3025 = vpop.f32.mrb[0].mxu0
      %3026 = vdwg.mxu0
      %v3027 = vadd.f32 %v2861, %v2965
      %v3028 = vadd.f32 %v2862, %v2968
      %v3029 = vadd.f32 %v2863, %v2973
      %v3030 = vadd.f32 %v2864, %v2976
      %v3031 = vadd.f32 %v2865, %v2981
      %v3032 = vadd.f32 %v2866, %v2984
      %v3033 = vadd.f32 %v2867, %v2989
      %v3034 = vadd.f32 %v2868, %v2992
      %v3035 = vadd.f32 %v2869, %v2997
      %v3036 = vadd.f32 %v2870, %v3000
      %v3037 = vadd.f32 %v2871, %v3005
      %v3038 = vadd.f32 %v2872, %v3008
      %v3039 = vadd.f32 %v2873, %v3013
      %v3040 = vadd.f32 %v2874, %v3016
      %v3041 = vadd.f32 %v2875, %v3021
      %v3042 = vadd.f32 %v2876, %v3024
      %v3043 = vld [vmem:[%s2710 + $0x1] sm:$0xff]
      %v3044 = vld [vmem:[%s2710 + $0x11] sm:$0xff]
      %v3045 = vld [vmem:[%s2710 + $0x21] sm:$0xff]
      %v3046 = vld [vmem:[%s2710 + $0x31] sm:$0xff]
      %v3047 = vld [vmem:[%s2710 + $0x41] sm:$0xff]
      %v3048 = vld [vmem:[%s2710 + $0x51] sm:$0xff]
      %v3049 = vld [vmem:[%s2710 + $0x61] sm:$0xff]
      %v3050 = vld [vmem:[%s2710 + $0x71] sm:$0xff]
      %v3051 = vld [vmem:[%s2710 + $0xb1] sm:$0xff]
      %v3052 = vld [vmem:[%s2710 + $0xc1] sm:$0xff]
      %v3053 = vld [vmem:[%s2710 + $0xd1] sm:$0xff]
      %v3054 = vld [vmem:[%s2710 + $0xe1] sm:$0xff]
      %v3055 = vld [vmem:[%s2710 + $0xf1] sm:$0xff]
      %v3056 = vld [vmem:[%s2710 + $0x101] sm:$0xff]
      %v3057 = vld [vmem:[%s2710 + $0x111] sm:$0xff]
      %v3058 = vld [vmem:[%s2710 + $0x121] sm:$0xff]
      %v3059 = vpack.c.bf16 %v3044, %v3043
      %v3060 = vpack.c.bf16 %v3046, %v3045
      %v3061 = vpack.c.bf16 %v3048, %v3047
      %v3062 = vpack.c.bf16 %v3050, %v3049
      %v3063 = vpack.c.bf16 %v3052, %v3051
      %v3064 = vpack.c.bf16 %v3054, %v3053
      %v3065 = vpack.c.bf16 %v3056, %v3055
      %v3066 = vpack.c.bf16 %v3058, %v3057
      %s3067 = scalar_lea.vmem %s234, 68
      %v3068 = vld [vmem:[%s3067] sm:$0xf]
      %v3070 = vsel %vm299, %v3059, 0
      %v3073 = vsel %vm299, %v3060, 0
      %v3076 = vsel %vm299, %v3061, 0
      %v3079 = vsel %vm299, %v3062, 0
      %v3082 = vsel %vm299, %v3063, 0
      %v3085 = vsel %vm299, %v3064, 0
      %v3088 = vsel %vm299, %v3065, 0
      %v3091 = vsel %vm299, %v3066, 0
      %v3094 = vsel %vm324, %v3068, 0
      %3096 = vmatprep.subr.bf16.mxu0 0
      %3097 = vmatpush1.bf16.msra.mxu0 %v3094
      %3098 = vmatprep.subr.bf16.mxu0 0
      %3099 = vmatpush1.bf16.msra.mxu0 0
      %3100 = vmatprep.subr.bf16.mxu0 0
      %3101 = vmatpush1.bf16.msra.mxu0 0
      %3102 = vmatprep.subr.bf16.mxu0 0
      %3103 = vmatpush1.bf16.msra.mxu0 0
      %3104 = vmatprep.subr.bf16.mxu0 0
      %3105 = vmatpush1.bf16.msra.mxu0 0
      %3106 = vmatprep.subr.bf16.mxu0 0
      %3107 = vmatpush1.bf16.msra.mxu0 0
      %3108 = vmatprep.subr.bf16.mxu0 0
      %3109 = vmatpush1.bf16.msra.mxu0 0
      %3110 = vmatprep.subr.bf16.mxu0 0
      %3111 = vmatpush1.bf16.msra.mxu0 0
      %3112 = vmatprep.subr.bf16.mxu0 0
      %3113 = vmatpush1.bf16.msra.mxu0 0
      %3114 = vmatprep.subr.bf16.mxu0 0
      %3115 = vmatpush1.bf16.msra.mxu0 0
      %3116 = vmatprep.subr.bf16.mxu0 0
      %3117 = vmatpush1.bf16.msra.mxu0 0
      %3118 = vmatprep.subr.bf16.mxu0 0
      %3119 = vmatpush1.bf16.msra.mxu0 0
      %3120 = vmatprep.subr.bf16.mxu0 0
      %3121 = vmatpush1.bf16.msra.mxu0 0
      %3122 = vmatprep.subr.bf16.mxu0 0
      %3123 = vmatpush1.bf16.msra.mxu0 0
      %3124 = vmatprep.subr.bf16.mxu0 0
      %3125 = vmatpush1.bf16.msra.mxu0 0
      %3126 = vmatprep.subr.bf16.mxu0 0
      %3127 = vmatpush1.bf16.msra.mxu0 0
      %3128 = vmatprep.mubr.bf16.mxu0 0
      %3129 = vmatmul.mubr.bf16.gmra.mrb[0].mxu0 %v3070
      %v3130 = vpop.f32.mrb[0].mxu0
      %v3131 = vadd.f32 0.0, %v3130
      %v3132 = vpop.f32.mrb[0].mxu0
      %v3133 = vpop.f32.mrb[0].mxu0
      %v3134 = vadd.f32 0.0, %v3133
      %v3135 = vpop.f32.mrb[0].mxu0
      %3136 = vmatprep.mubr.bf16.mxu0 0
      %3137 = vmatmul.mubr.bf16.gmra.mrb[0].mxu0 %v3073
      %v3138 = vpop.f32.mrb[0].mxu0
      %v3139 = vadd.f32 0.0, %v3138
      %v3140 = vpop.f32.mrb[0].mxu0
      %v3141 = vpop.f32.mrb[0].mxu0
      %v3142 = vadd.f32 0.0, %v3141
      %v3143 = vpop.f32.mrb[0].mxu0
      %3144 = vmatprep.mubr.bf16.mxu0 0
      %3145 = vmatmul.mubr.bf16.gmra.mrb[0].mxu0 %v3076
      %v3146 = vpop.f32.mrb[0].mxu0
      %v3147 = vadd.f32 0.0, %v3146
      %v3148 = vpop.f32.mrb[0].mxu0
      %v3149 = vpop.f32.mrb[0].mxu0
      %v3150 = vadd.f32 0.0, %v3149
      %v3151 = vpop.f32.mrb[0].mxu0
      %3152 = vmatprep.mubr.bf16.mxu0 0
      %3153 = vmatmul.mubr.bf16.gmra.mrb[0].mxu0 %v3079
      %v3154 = vpop.f32.mrb[0].mxu0
      %v3155 = vadd.f32 0.0, %v3154
      %v3156 = vpop.f32.mrb[0].mxu0
      %v3157 = vpop.f32.mrb[0].mxu0
      %v3158 = vadd.f32 0.0, %v3157
      %v3159 = vpop.f32.mrb[0].mxu0
      %3160 = vmatprep.mubr.bf16.mxu0 0
      %3161 = vmatmul.mubr.bf16.gmra.mrb[0].mxu0 %v3082
      %v3162 = vpop.f32.mrb[0].mxu0
      %v3163 = vadd.f32 0.0, %v3162
      %v3164 = vpop.f32.mrb[0].mxu0
      %v3165 = vpop.f32.mrb[0].mxu0
      %v3166 = vadd.f32 0.0, %v3165
      %v3167 = vpop.f32.mrb[0].mxu0
      %3168 = vmatprep.mubr.bf16.mxu0 0
      %3169 = vmatmul.mubr.bf16.gmra.mrb[0].mxu0 %v3085
      %v3170 = vpop.f32.mrb[0].mxu0
      %v3171 = vadd.f32 0.0, %v3170
      %v3172 = vpop.f32.mrb[0].mxu0
      %v3173 = vpop.f32.mrb[0].mxu0
      %v3174 = vadd.f32 0.0, %v3173
      %v3175 = vpop.f32.mrb[0].mxu0
      %3176 = vmatprep.mubr.bf16.mxu0 0
      %3177 = vmatmul.mubr.bf16.gmra.mrb[0].mxu0 %v3088
      %v3178 = vpop.f32.mrb[0].mxu0
      %v3179 = vadd.f32 0.0, %v3178
      %v3180 = vpop.f32.mrb[0].mxu0
      %v3181 = vpop.f32.mrb[0].mxu0
      %v3182 = vadd.f32 0.0, %v3181
      %v3183 = vpop.f32.mrb[0].mxu0
      %3184 = vmatprep.mubr.bf16.mxu0 0
      %3185 = vmatmul.mubr.bf16.gmra.mrb[0].mxu0 %v3091
      %v3186 = vpop.f32.mrb[0].mxu0
      %v3187 = vadd.f32 0.0, %v3186
      %v3188 = vpop.f32.mrb[0].mxu0
      %v3189 = vpop.f32.mrb[0].mxu0
      %v3190 = vadd.f32 0.0, %v3189
      %v3191 = vpop.f32.mrb[0].mxu0
      %3192 = vdwg.mxu0
      %v3193 = vadd.f32 %v3027, %v3131
      %v3194 = vadd.f32 %v3028, %v3134
      %v3195 = vadd.f32 %v3029, %v3139
      %v3196 = vadd.f32 %v3030, %v3142
      %v3197 = vadd.f32 %v3031, %v3147
      %v3198 = vadd.f32 %v3032, %v3150
      %v3199 = vadd.f32 %v3033, %v3155
      %v3200 = vadd.f32 %v3034, %v3158
      %v3201 = vadd.f32 %v3035, %v3163
      %v3202 = vadd.f32 %v3036, %v3166
      %v3203 = vadd.f32 %v3037, %v3171
      %v3204 = vadd.f32 %v3038, %v3174
      %v3205 = vadd.f32 %v3039, %v3179
      %v3206 = vadd.f32 %v3040, %v3182
      %v3207 = vadd.f32 %v3041, %v3187
      %v3208 = vadd.f32 %v3042, %v3190
      %v3209 = vld [vmem:[%s2543 + $0x2] sm:$0xff]
      %v3210 = vld [vmem:[%s2543 + $0x12] sm:$0xff]
      %v3211 = vld [vmem:[%s2543 + $0x22] sm:$0xff]
      %v3212 = vld [vmem:[%s2543 + $0x32] sm:$0xff]
      %v3213 = vld [vmem:[%s2543 + $0x42] sm:$0xff]
      %v3214 = vld [vmem:[%s2543 + $0x52] sm:$0xff]
      %v3215 = vld [vmem:[%s2543 + $0x62] sm:$0xff]
      %v3216 = vld [vmem:[%s2543 + $0x72] sm:$0xff]
      %v3217 = vld [vmem:[%s2543 + $0xb2] sm:$0xff]
      %v3218 = vld [vmem:[%s2543 + $0xc2] sm:$0xff]
      %v3219 = vld [vmem:[%s2543 + $0xd2] sm:$0xff]
      %v3220 = vld [vmem:[%s2543 + $0xe2] sm:$0xff]
      %v3221 = vld [vmem:[%s2543 + $0xf2] sm:$0xff]
      %v3222 = vld [vmem:[%s2543 + $0x102] sm:$0xff]
      %v3223 = vld [vmem:[%s2543 + $0x112] sm:$0xff]
      %v3224 = vld [vmem:[%s2543 + $0x122] sm:$0xff]
      %v3225 = vpack.c.bf16 %v3210, %v3209
      %v3226 = vpack.c.bf16 %v3212, %v3211
      %v3227 = vpack.c.bf16 %v3214, %v3213
      %v3228 = vpack.c.bf16 %v3216, %v3215
      %v3229 = vpack.c.bf16 %v3218, %v3217
      %v3230 = vpack.c.bf16 %v3220, %v3219
      %v3231 = vpack.c.bf16 %v3222, %v3221
      %v3232 = vpack.c.bf16 %v3224, %v3223
      %s3233 = scalar_lea.vmem %s234, 72
      %v3234 = vld [vmem:[%s3233] sm:$0xf]
      %v3236 = vsel %vm299, %v3225, 0
      %v3239 = vsel %vm299, %v3226, 0
      %v3242 = vsel %vm299, %v3227, 0
      %v3245 = vsel %vm299, %v3228, 0
      %v3248 = vsel %vm299, %v3229, 0
      %v3251 = vsel %vm299, %v3230, 0
      %v3254 = vsel %vm299, %v3231, 0
      %v3257 = vsel %vm299, %v3232, 0
      %v3260 = vsel %vm324, %v3234, 0
      %3262 = vmatprep.subr.bf16.mxu0 0
      %3263 = vmatpush1.bf16.msra.mxu0 %v3260
      %3264 = vmatprep.subr.bf16.mxu0 0
      %3265 = vmatpush1.bf16.msra.mxu0 0
      %3266 = vmatprep.subr.bf16.mxu0 0
      %3267 = vmatpush1.bf16.msra.mxu0 0
      %3268 = vmatprep.subr.bf16.mxu0 0
      %3269 = vmatpush1.bf16.msra.mxu0 0
      %3270 = vmatprep.subr.bf16.mxu0 0
      %3271 = vmatpush1.bf16.msra.mxu0 0
      %3272 = vmatprep.subr.bf16.mxu0 0
      %3273 = vmatpush1.bf16.msra.mxu0 0
      %3274 = vmatprep.subr.bf16.mxu0 0
      %3275 = vmatpush1.bf16.msra.mxu0 0
      %3276 = vmatprep.subr.bf16.mxu0 0
      %3277 = vmatpush1.bf16.msra.mxu0 0
      %3278 = vmatprep.subr.bf16.mxu0 0
      %3279 = vmatpush1.bf16.msra.mxu0 0
      %3280 = vmatprep.subr.bf16.mxu0 0
      %3281 = vmatpush1.bf16.msra.mxu0 0
      %3282 = vmatprep.subr.bf16.mxu0 0
      %3283 = vmatpush1.bf16.msra.mxu0 0
      %3284 = vmatprep.subr.bf16.mxu0 0
      %3285 = vmatpush1.bf16.msra.mxu0 0
      %3286 = vmatprep.subr.bf16.mxu0 0
      %3287 = vmatpush1.bf16.msra.mxu0 0
      %3288 = vmatprep.subr.bf16.mxu0 0
      %3289 = vmatpush1.bf16.msra.mxu0 0
      %3290 = vmatprep.subr.bf16.mxu0 0
      %3291 = vmatpush1.bf16.msra.mxu0 0
      %3292 = vmatprep.subr.bf16.mxu0 0
      %3293 = vmatpush1.bf16.msra.mxu0 0
      %3294 = vmatprep.mubr.bf16.mxu0 0
      %3295 = vmatmul.mubr.bf16.gmra.mrb[0].mxu0 %v3236
      %v3296 = vpop.f32.mrb[0].mxu0
      %v3297 = vadd.f32 0.0, %v3296
      %v3298 = vpop.f32.mrb[0].mxu0
      %v3299 = vpop.f32.mrb[0].mxu0
      %v3300 = vadd.f32 0.0, %v3299
      %v3301 = vpop.f32.mrb[0].mxu0
      %3302 = vmatprep.mubr.bf16.mxu0 0
      %3303 = vmatmul.mubr.bf16.gmra.mrb[0].mxu0 %v3239
      %v3304 = vpop.f32.mrb[0].mxu0
      %v3305 = vadd.f32 0.0, %v3304
      %v3306 = vpop.f32.mrb[0].mxu0
      %v3307 = vpop.f32.mrb[0].mxu0
      %v3308 = vadd.f32 0.0, %v3307
      %v3309 = vpop.f32.mrb[0].mxu0
      %3310 = vmatprep.mubr.bf16.mxu0 0
      %3311 = vmatmul.mubr.bf16.gmra.mrb[0].mxu0 %v3242
      %v3312 = vpop.f32.mrb[0].mxu0
      %v3313 = vadd.f32 0.0, %v3312
      %v3314 = vpop.f32.mrb[0].mxu0
      %v3315 = vpop.f32.mrb[0].mxu0
      %v3316 = vadd.f32 0.0, %v3315
      %v3317 = vpop.f32.mrb[0].mxu0
      %3318 = vmatprep.mubr.bf16.mxu0 0
      %3319 = vmatmul.mubr.bf16.gmra.mrb[0].mxu0 %v3245
      %v3320 = vpop.f32.mrb[0].mxu0
      %v3321 = vadd.f32 0.0, %v3320
      %v3322 = vpop.f32.mrb[0].mxu0
      %v3323 = vpop.f32.mrb[0].mxu0
      %v3324 = vadd.f32 0.0, %v3323
      %v3325 = vpop.f32.mrb[0].mxu0
      %3326 = vmatprep.mubr.bf16.mxu0 0
      %3327 = vmatmul.mubr.bf16.gmra.mrb[0].mxu0 %v3248
      %v3328 = vpop.f32.mrb[0].mxu0
      %v3329 = vadd.f32 0.0, %v3328
      %v3330 = vpop.f32.mrb[0].mxu0
      %v3331 = vpop.f32.mrb[0].mxu0
      %v3332 = vadd.f32 0.0, %v3331
      %v3333 = vpop.f32.mrb[0].mxu0
      %3334 = vmatprep.mubr.bf16.mxu0 0
      %3335 = vmatmul.mubr.bf16.gmra.mrb[0].mxu0 %v3251
      %v3336 = vpop.f32.mrb[0].mxu0
      %v3337 = vadd.f32 0.0, %v3336
      %v3338 = vpop.f32.mrb[0].mxu0
      %v3339 = vpop.f32.mrb[0].mxu0
      %v3340 = vadd.f32 0.0, %v3339
      %v3341 = vpop.f32.mrb[0].mxu0
      %3342 = vmatprep.mubr.bf16.mxu0 0
      %3343 = vmatmul.mubr.bf16.gmra.mrb[0].mxu0 %v3254
      %v3344 = vpop.f32.mrb[0].mxu0
      %v3345 = vadd.f32 0.0, %v3344
      %v3346 = vpop.f32.mrb[0].mxu0
      %v3347 = vpop.f32.mrb[0].mxu0
      %v3348 = vadd.f32 0.0, %v3347
      %v3349 = vpop.f32.mrb[0].mxu0
      %3350 = vmatprep.mubr.bf16.mxu0 0
      %3351 = vmatmul.mubr.bf16.gmra.mrb[0].mxu0 %v3257
      %v3352 = vpop.f32.mrb[0].mxu0
      %v3353 = vadd.f32 0.0, %v3352
      %v3354 = vpop.f32.mrb[0].mxu0
      %v3355 = vpop.f32.mrb[0].mxu0
      %v3356 = vadd.f32 0.0, %v3355
      %v3357 = vpop.f32.mrb[0].mxu0
      %3358 = vdwg.mxu0
      %v3359 = vadd.f32 %v3193, %v3297
      %v3360 = vadd.f32 %v3194, %v3300
      %v3361 = vadd.f32 %v3195, %v3305
      %v3362 = vadd.f32 %v3196, %v3308
      %v3363 = vadd.f32 %v3197, %v3313
      %v3364 = vadd.f32 %v3198, %v3316
      %v3365 = vadd.f32 %v3199, %v3321
      %v3366 = vadd.f32 %v3200, %v3324
      %v3367 = vadd.f32 %v3201, %v3329
      %v3368 = vadd.f32 %v3202, %v3332
      %v3369 = vadd.f32 %v3203, %v3337
      %v3370 = vadd.f32 %v3204, %v3340
      %v3371 = vadd.f32 %v3205, %v3345
      %v3372 = vadd.f32 %v3206, %v3348
      %v3373 = vadd.f32 %v3207, %v3353
      %v3374 = vadd.f32 %v3208, %v3356
      %v3375 = vld [vmem:[%s2710 + $0x2] sm:$0xff]
      %v3376 = vld [vmem:[%s2710 + $0x12] sm:$0xff]
      %v3377 = vld [vmem:[%s2710 + $0x22] sm:$0xff]
      %v3378 = vld [vmem:[%s2710 + $0x32] sm:$0xff]
      %v3379 = vld [vmem:[%s2710 + $0x42] sm:$0xff]
      %v3380 = vld [vmem:[%s2710 + $0x52] sm:$0xff]
      %v3381 = vld [vmem:[%s2710 + $0x62] sm:$0xff]
      %v3382 = vld [vmem:[%s2710 + $0x72] sm:$0xff]
      %v3383 = vld [vmem:[%s2710 + $0xb2] sm:$0xff]
      %v3384 = vld [vmem:[%s2710 + $0xc2] sm:$0xff]
      %v3385 = vld [vmem:[%s2710 + $0xd2] sm:$0xff]
      %v3386 = vld [vmem:[%s2710 + $0xe2] sm:$0xff]
      %v3387 = vld [vmem:[%s2710 + $0xf2] sm:$0xff]
      %v3388 = vld [vmem:[%s2710 + $0x102] sm:$0xff]
      %v3389 = vld [vmem:[%s2710 + $0x112] sm:$0xff]
      %v3390 = vld [vmem:[%s2710 + $0x122] sm:$0xff]
      %v3391 = vpack.c.bf16 %v3376, %v3375
      %v3392 = vpack.c.bf16 %v3378, %v3377
      %v3393 = vpack.c.bf16 %v3380, %v3379
      %v3394 = vpack.c.bf16 %v3382, %v3381
      %v3395 = vpack.c.bf16 %v3384, %v3383
      %v3396 = vpack.c.bf16 %v3386, %v3385
      %v3397 = vpack.c.bf16 %v3388, %v3387
      %v3398 = vpack.c.bf16 %v3390, %v3389
      %s3399 = scalar_lea.vmem %s234, 76
      %v3400 = vld [vmem:[%s3399] sm:$0xf]
      %v3402 = vsel %vm299, %v3391, 0
      %v3405 = vsel %vm299, %v3392, 0
      %v3408 = vsel %vm299, %v3393, 0
      %v3411 = vsel %vm299, %v3394, 0
      %v3414 = vsel %vm299, %v3395, 0
      %v3417 = vsel %vm299, %v3396, 0
      %v3420 = vsel %vm299, %v3397, 0
      %v3423 = vsel %vm299, %v3398, 0
      %v3426 = vsel %vm324, %v3400, 0
      %3428 = vmatprep.subr.bf16.mxu0 0
      %3429 = vmatpush1.bf16.msra.mxu0 %v3426
      %3430 = vmatprep.subr.bf16.mxu0 0
      %3431 = vmatpush1.bf16.msra.mxu0 0
      %3432 = vmatprep.subr.bf16.mxu0 0
      %3433 = vmatpush1.bf16.msra.mxu0 0
      %3434 = vmatprep.subr.bf16.mxu0 0
      %3435 = vmatpush1.bf16.msra.mxu0 0
      %3436 = vmatprep.subr.bf16.mxu0 0
      %3437 = vmatpush1.bf16.msra.mxu0 0
      %3438 = vmatprep.subr.bf16.mxu0 0
      %3439 = vmatpush1.bf16.msra.mxu0 0
      %3440 = vmatprep.subr.bf16.mxu0 0
      %3441 = vmatpush1.bf16.msra.mxu0 0
      %3442 = vmatprep.subr.bf16.mxu0 0
      %3443 = vmatpush1.bf16.msra.mxu0 0
      %3444 = vmatprep.subr.bf16.mxu0 0
      %3445 = vmatpush1.bf16.msra.mxu0 0
      %3446 = vmatprep.subr.bf16.mxu0 0
      %3447 = vmatpush1.bf16.msra.mxu0 0
      %3448 = vmatprep.subr.bf16.mxu0 0
      %3449 = vmatpush1.bf16.msra.mxu0 0
      %3450 = vmatprep.subr.bf16.mxu0 0
      %3451 = vmatpush1.bf16.msra.mxu0 0
      %3452 = vmatprep.subr.bf16.mxu0 0
      %3453 = vmatpush1.bf16.msra.mxu0 0
      %3454 = vmatprep.subr.bf16.mxu0 0
      %3455 = vmatpush1.bf16.msra.mxu0 0
      %3456 = vmatprep.subr.bf16.mxu0 0
      %3457 = vmatpush1.bf16.msra.mxu0 0
      %3458 = vmatprep.subr.bf16.mxu0 0
      %3459 = vmatpush1.bf16.msra.mxu0 0
      %3460 = vmatprep.mubr.bf16.mxu0 0
      %3461 = vmatmul.mubr.bf16.gmra.mrb[0].mxu0 %v3402
      %v3462 = vpop.f32.mrb[0].mxu0
      %v3463 = vadd.f32 0.0, %v3462
      %v3464 = vpop.f32.mrb[0].mxu0
      %v3465 = vpop.f32.mrb[0].mxu0
      %v3466 = vadd.f32 0.0, %v3465
      %v3467 = vpop.f32.mrb[0].mxu0
      %3468 = vmatprep.mubr.bf16.mxu0 0
      %3469 = vmatmul.mubr.bf16.gmra.mrb[0].mxu0 %v3405
      %v3470 = vpop.f32.mrb[0].mxu0
      %v3471 = vadd.f32 0.0, %v3470
      %v3472 = vpop.f32.mrb[0].mxu0
      %v3473 = vpop.f32.mrb[0].mxu0
      %v3474 = vadd.f32 0.0, %v3473
      %v3475 = vpop.f32.mrb[0].mxu0
      %3476 = vmatprep.mubr.bf16.mxu0 0
      %3477 = vmatmul.mubr.bf16.gmra.mrb[0].mxu0 %v3408
      %v3478 = vpop.f32.mrb[0].mxu0
      %v3479 = vadd.f32 0.0, %v3478
      %v3480 = vpop.f32.mrb[0].mxu0
      %v3481 = vpop.f32.mrb[0].mxu0
      %v3482 = vadd.f32 0.0, %v3481
      %v3483 = vpop.f32.mrb[0].mxu0
      %3484 = vmatprep.mubr.bf16.mxu0 0
      %3485 = vmatmul.mubr.bf16.gmra.mrb[0].mxu0 %v3411
      %v3486 = vpop.f32.mrb[0].mxu0
      %v3487 = vadd.f32 0.0, %v3486
      %v3488 = vpop.f32.mrb[0].mxu0
      %v3489 = vpop.f32.mrb[0].mxu0
      %v3490 = vadd.f32 0.0, %v3489
      %v3491 = vpop.f32.mrb[0].mxu0
      %3492 = vmatprep.mubr.bf16.mxu0 0
      %3493 = vmatmul.mubr.bf16.gmra.mrb[0].mxu0 %v3414
      %v3494 = vpop.f32.mrb[0].mxu0
      %v3495 = vadd.f32 0.0, %v3494
      %v3496 = vpop.f32.mrb[0].mxu0
      %v3497 = vpop.f32.mrb[0].mxu0
      %v3498 = vadd.f32 0.0, %v3497
      %v3499 = vpop.f32.mrb[0].mxu0
      %3500 = vmatprep.mubr.bf16.mxu0 0
      %3501 = vmatmul.mubr.bf16.gmra.mrb[0].mxu0 %v3417
      %v3502 = vpop.f32.mrb[0].mxu0
      %v3503 = vadd.f32 0.0, %v3502
      %v3504 = vpop.f32.mrb[0].mxu0
      %v3505 = vpop.f32.mrb[0].mxu0
      %v3506 = vadd.f32 0.0, %v3505
      %v3507 = vpop.f32.mrb[0].mxu0
      %3508 = vmatprep.mubr.bf16.mxu0 0
      %3509 = vmatmul.mubr.bf16.gmra.mrb[0].mxu0 %v3420
      %v3510 = vpop.f32.mrb[0].mxu0
      %v3511 = vadd.f32 0.0, %v3510
      %v3512 = vpop.f32.mrb[0].mxu0
      %v3513 = vpop.f32.mrb[0].mxu0
      %v3514 = vadd.f32 0.0, %v3513
      %v3515 = vpop.f32.mrb[0].mxu0
      %3516 = vmatprep.mubr.bf16.mxu0 0
      %3517 = vmatmul.mubr.bf16.gmra.mrb[0].mxu0 %v3423
      %v3518 = vpop.f32.mrb[0].mxu0
      %v3519 = vadd.f32 0.0, %v3518
      %v3520 = vpop.f32.mrb[0].mxu0
      %v3521 = vpop.f32.mrb[0].mxu0
      %v3522 = vadd.f32 0.0, %v3521
      %v3523 = vpop.f32.mrb[0].mxu0
      %3524 = vdwg.mxu0
      %v3525 = vadd.f32 %v3359, %v3463
      %v3526 = vadd.f32 %v3360, %v3466
      %v3527 = vadd.f32 %v3361, %v3471
      %v3528 = vadd.f32 %v3362, %v3474
      %v3529 = vadd.f32 %v3363, %v3479
      %v3530 = vadd.f32 %v3364, %v3482
      %v3531 = vadd.f32 %v3365, %v3487
      %v3532 = vadd.f32 %v3366, %v3490
      %v3533 = vadd.f32 %v3367, %v3495
      %v3534 = vadd.f32 %v3368, %v3498
      %v3535 = vadd.f32 %v3369, %v3503
      %v3536 = vadd.f32 %v3370, %v3506
      %v3537 = vadd.f32 %v3371, %v3511
      %v3538 = vadd.f32 %v3372, %v3514
      %v3539 = vadd.f32 %v3373, %v3519
      %v3540 = vadd.f32 %v3374, %v3522
      %v3541 = vld [vmem:[%s2543 + $0x3] sm:$0xff]
      %v3542 = vld [vmem:[%s2543 + $0x13] sm:$0xff]
      %v3543 = vld [vmem:[%s2543 + $0x23] sm:$0xff]
      %v3544 = vld [vmem:[%s2543 + $0x33] sm:$0xff]
      %v3545 = vld [vmem:[%s2543 + $0x43] sm:$0xff]
      %v3546 = vld [vmem:[%s2543 + $0x53] sm:$0xff]
      %v3547 = vld [vmem:[%s2543 + $0x63] sm:$0xff]
      %v3548 = vld [vmem:[%s2543 + $0x73] sm:$0xff]
      %v3549 = vld [vmem:[%s2543 + $0xb3] sm:$0xff]
      %v3550 = vld [vmem:[%s2543 + $0xc3] sm:$0xff]
      %v3551 = vld [vmem:[%s2543 + $0xd3] sm:$0xff]
      %v3552 = vld [vmem:[%s2543 + $0xe3] sm:$0xff]
      %v3553 = vld [vmem:[%s2543 + $0xf3] sm:$0xff]
      %v3554 = vld [vmem:[%s2543 + $0x103] sm:$0xff]
      %v3555 = vld [vmem:[%s2543 + $0x113] sm:$0xff]
      %v3556 = vld [vmem:[%s2543 + $0x123] sm:$0xff]
      %v3557 = vpack.c.bf16 %v3542, %v3541
      %v3558 = vpack.c.bf16 %v3544, %v3543
      %v3559 = vpack.c.bf16 %v3546, %v3545
      %v3560 = vpack.c.bf16 %v3548, %v3547
      %v3561 = vpack.c.bf16 %v3550, %v3549
      %v3562 = vpack.c.bf16 %v3552, %v3551
      %v3563 = vpack.c.bf16 %v3554, %v3553
      %v3564 = vpack.c.bf16 %v3556, %v3555
      %s3565 = scalar_lea.vmem %s234, 80
      %v3566 = vld [vmem:[%s3565] sm:$0xf]
      %v3568 = vsel %vm299, %v3557, 0
      %v3571 = vsel %vm299, %v3558, 0
      %v3574 = vsel %vm299, %v3559, 0
      %v3577 = vsel %vm299, %v3560, 0
      %v3580 = vsel %vm299, %v3561, 0
      %v3583 = vsel %vm299, %v3562, 0
      %v3586 = vsel %vm299, %v3563, 0
      %v3589 = vsel %vm299, %v3564, 0
      %v3592 = vsel %vm324, %v3566, 0
      %3594 = vmatprep.subr.bf16.mxu0 0
      %3595 = vmatpush1.bf16.msra.mxu0 %v3592
      %3596 = vmatprep.subr.bf16.mxu0 0
      %3597 = vmatpush1.bf16.msra.mxu0 0
      %3598 = vmatprep.subr.bf16.mxu0 0
      %3599 = vmatpush1.bf16.msra.mxu0 0
      %3600 = vmatprep.subr.bf16.mxu0 0
      %3601 = vmatpush1.bf16.msra.mxu0 0
      %3602 = vmatprep.subr.bf16.mxu0 0
      %3603 = vmatpush1.bf16.msra.mxu0 0
      %3604 = vmatprep.subr.bf16.mxu0 0
      %3605 = vmatpush1.bf16.msra.mxu0 0
      %3606 = vmatprep.subr.bf16.mxu0 0
      %3607 = vmatpush1.bf16.msra.mxu0 0
      %3608 = vmatprep.subr.bf16.mxu0 0
      %3609 = vmatpush1.bf16.msra.mxu0 0
      %3610 = vmatprep.subr.bf16.mxu0 0
      %3611 = vmatpush1.bf16.msra.mxu0 0
      %3612 = vmatprep.subr.bf16.mxu0 0
      %3613 = vmatpush1.bf16.msra.mxu0 0
      %3614 = vmatprep.subr.bf16.mxu0 0
      %3615 = vmatpush1.bf16.msra.mxu0 0
      %3616 = vmatprep.subr.bf16.mxu0 0
      %3617 = vmatpush1.bf16.msra.mxu0 0
      %3618 = vmatprep.subr.bf16.mxu0 0
      %3619 = vmatpush1.bf16.msra.mxu0 0
      %3620 = vmatprep.subr.bf16.mxu0 0
      %3621 = vmatpush1.bf16.msra.mxu0 0
      %3622 = vmatprep.subr.bf16.mxu0 0
      %3623 = vmatpush1.bf16.msra.mxu0 0
      %3624 = vmatprep.subr.bf16.mxu0 0
      %3625 = vmatpush1.bf16.msra.mxu0 0
      %3626 = vmatprep.mubr.bf16.mxu0 0
      %3627 = vmatmul.mubr.bf16.gmra.mrb[0].mxu0 %v3568
      %v3628 = vpop.f32.mrb[0].mxu0
      %v3629 = vadd.f32 0.0, %v3628
      %v3630 = vpop.f32.mrb[0].mxu0
      %v3631 = vpop.f32.mrb[0].mxu0
      %v3632 = vadd.f32 0.0, %v3631
      %v3633 = vpop.f32.mrb[0].mxu0
      %3634 = vmatprep.mubr.bf16.mxu0 0
      %3635 = vmatmul.mubr.bf16.gmra.mrb[0].mxu0 %v3571
      %v3636 = vpop.f32.mrb[0].mxu0
      %v3637 = vadd.f32 0.0, %v3636
      %v3638 = vpop.f32.mrb[0].mxu0
      %v3639 = vpop.f32.mrb[0].mxu0
      %v3640 = vadd.f32 0.0, %v3639
      %v3641 = vpop.f32.mrb[0].mxu0
      %3642 = vmatprep.mubr.bf16.mxu0 0
      %3643 = vmatmul.mubr.bf16.gmra.mrb[0].mxu0 %v3574
      %v3644 = vpop.f32.mrb[0].mxu0
      %v3645 = vadd.f32 0.0, %v3644
      %v3646 = vpop.f32.mrb[0].mxu0
      %v3647 = vpop.f32.mrb[0].mxu0
      %v3648 = vadd.f32 0.0, %v3647
      %v3649 = vpop.f32.mrb[0].mxu0
      %3650 = vmatprep.mubr.bf16.mxu0 0
      %3651 = vmatmul.mubr.bf16.gmra.mrb[0].mxu0 %v3577
      %v3652 = vpop.f32.mrb[0].mxu0
      %v3653 = vadd.f32 0.0, %v3652
      %v3654 = vpop.f32.mrb[0].mxu0
      %v3655 = vpop.f32.mrb[0].mxu0
      %v3656 = vadd.f32 0.0, %v3655
      %v3657 = vpop.f32.mrb[0].mxu0
      %3658 = vmatprep.mubr.bf16.mxu0 0
      %3659 = vmatmul.mubr.bf16.gmra.mrb[0].mxu0 %v3580
      %v3660 = vpop.f32.mrb[0].mxu0
      %v3661 = vadd.f32 0.0, %v3660
      %v3662 = vpop.f32.mrb[0].mxu0
      %v3663 = vpop.f32.mrb[0].mxu0
      %v3664 = vadd.f32 0.0, %v3663
      %v3665 = vpop.f32.mrb[0].mxu0
      %3666 = vmatprep.mubr.bf16.mxu0 0
      %3667 = vmatmul.mubr.bf16.gmra.mrb[0].mxu0 %v3583
      %v3668 = vpop.f32.mrb[0].mxu0
      %v3669 = vadd.f32 0.0, %v3668
      %v3670 = vpop.f32.mrb[0].mxu0
      %v3671 = vpop.f32.mrb[0].mxu0
      %v3672 = vadd.f32 0.0, %v3671
      %v3673 = vpop.f32.mrb[0].mxu0
      %3674 = vmatprep.mubr.bf16.mxu0 0
      %3675 = vmatmul.mubr.bf16.gmra.mrb[0].mxu0 %v3586
      %v3676 = vpop.f32.mrb[0].mxu0
      %v3677 = vadd.f32 0.0, %v3676
      %v3678 = vpop.f32.mrb[0].mxu0
      %v3679 = vpop.f32.mrb[0].mxu0
      %v3680 = vadd.f32 0.0, %v3679
      %v3681 = vpop.f32.mrb[0].mxu0
      %3682 = vmatprep.mubr.bf16.mxu0 0
      %3683 = vmatmul.mubr.bf16.gmra.mrb[0].mxu0 %v3589
      %v3684 = vpop.f32.mrb[0].mxu0
      %v3685 = vadd.f32 0.0, %v3684
      %v3686 = vpop.f32.mrb[0].mxu0
      %v3687 = vpop.f32.mrb[0].mxu0
      %v3688 = vadd.f32 0.0, %v3687
      %v3689 = vpop.f32.mrb[0].mxu0
      %3690 = vdwg.mxu0
      %v3691 = vadd.f32 %v3525, %v3629
      %v3692 = vadd.f32 %v3526, %v3632
      %v3693 = vadd.f32 %v3527, %v3637
      %v3694 = vadd.f32 %v3528, %v3640
      %v3695 = vadd.f32 %v3529, %v3645
      %v3696 = vadd.f32 %v3530, %v3648
      %v3697 = vadd.f32 %v3531, %v3653
      %v3698 = vadd.f32 %v3532, %v3656
      %v3699 = vadd.f32 %v3533, %v3661
      %v3700 = vadd.f32 %v3534, %v3664
      %v3701 = vadd.f32 %v3535, %v3669
      %v3702 = vadd.f32 %v3536, %v3672
      %v3703 = vadd.f32 %v3537, %v3677
      %v3704 = vadd.f32 %v3538, %v3680
      %v3705 = vadd.f32 %v3539, %v3685
      %v3706 = vadd.f32 %v3540, %v3688
      %s3707 = scalar_lea.vmem %s229, 720
      %v3708 = vld [vmem:[%s3707] sm:$0xff]
      %v3709 = vld [vmem:[%s3707 + $0x10] sm:$0xff]
      %v3710 = vld [vmem:[%s3707 + $0x20] sm:$0xff]
      %v3711 = vld [vmem:[%s3707 + $0x30] sm:$0xff]
      %v3712 = vld [vmem:[%s3707 + $0x40] sm:$0xff]
      %v3713 = vld [vmem:[%s3707 + $0x50] sm:$0xff]
      %v3714 = vld [vmem:[%s3707 + $0x60] sm:$0xff]
      %v3715 = vld [vmem:[%s3707 + $0x70] sm:$0xff]
      %v3716 = vld [vmem:[%s3707 + $0xb0] sm:$0xff]
      %v3717 = vld [vmem:[%s3707 + $0xc0] sm:$0xff]
      %v3718 = vld [vmem:[%s3707 + $0xd0] sm:$0xff]
      %v3719 = vld [vmem:[%s3707 + $0xe0] sm:$0xff]
      %v3720 = vld [vmem:[%s3707 + $0xf0] sm:$0xff]
      %v3721 = vld [vmem:[%s3707 + $0x100] sm:$0xff]
      %v3722 = vld [vmem:[%s3707 + $0x110] sm:$0xff]
      %v3723 = vld [vmem:[%s3707 + $0x120] sm:$0xff]
      %v3724 = vpack.c.bf16 %v3709, %v3708
      %v3725 = vpack.c.bf16 %v3711, %v3710
      %v3726 = vpack.c.bf16 %v3713, %v3712
      %v3727 = vpack.c.bf16 %v3715, %v3714
      %v3728 = vpack.c.bf16 %v3717, %v3716
      %v3729 = vpack.c.bf16 %v3719, %v3718
      %v3730 = vpack.c.bf16 %v3721, %v3720
      %v3731 = vpack.c.bf16 %v3723, %v3722
      %s3732 = scalar_lea.vmem %s234, 84
      %v3733 = vld [vmem:[%s3732] sm:$0xf]
      %v3735 = vsel %vm299, %v3724, 0
      %v3738 = vsel %vm299, %v3725, 0
      %v3741 = vsel %vm299, %v3726, 0
      %v3744 = vsel %vm299, %v3727, 0
      %v3747 = vsel %vm299, %v3728, 0
      %v3750 = vsel %vm299, %v3729, 0
      %v3753 = vsel %vm299, %v3730, 0
      %v3756 = vsel %vm299, %v3731, 0
      %v3759 = vsel %vm324, %v3733, 0
      %3761 = vmatprep.subr.bf16.mxu0 0
      %3762 = vmatpush1.bf16.msra.mxu0 %v3759
      %3763 = vmatprep.subr.bf16.mxu0 0
      %3764 = vmatpush1.bf16.msra.mxu0 0
      %3765 = vmatprep.subr.bf16.mxu0 0
      %3766 = vmatpush1.bf16.msra.mxu0 0
      %3767 = vmatprep.subr.bf16.mxu0 0
      %3768 = vmatpush1.bf16.msra.mxu0 0
      %3769 = vmatprep.subr.bf16.mxu0 0
      %3770 = vmatpush1.bf16.msra.mxu0 0
      %3771 = vmatprep.subr.bf16.mxu0 0
      %3772 = vmatpush1.bf16.msra.mxu0 0
      %3773 = vmatprep.subr.bf16.mxu0 0
      %3774 = vmatpush1.bf16.msra.mxu0 0
      %3775 = vmatprep.subr.bf16.mxu0 0
      %3776 = vmatpush1.bf16.msra.mxu0 0
      %3777 = vmatprep.subr.bf16.mxu0 0
      %3778 = vmatpush1.bf16.msra.mxu0 0
      %3779 = vmatprep.subr.bf16.mxu0 0
      %3780 = vmatpush1.bf16.msra.mxu0 0
      %3781 = vmatprep.subr.bf16.mxu0 0
      %3782 = vmatpush1.bf16.msra.mxu0 0
      %3783 = vmatprep.subr.bf16.mxu0 0
      %3784 = vmatpush1.bf16.msra.mxu0 0
      %3785 = vmatprep.subr.bf16.mxu0 0
      %3786 = vmatpush1.bf16.msra.mxu0 0
      %3787 = vmatprep.subr.bf16.mxu0 0
      %3788 = vmatpush1.bf16.msra.mxu0 0
      %3789 = vmatprep.subr.bf16.mxu0 0
      %3790 = vmatpush1.bf16.msra.mxu0 0
      %3791 = vmatprep.subr.bf16.mxu0 0
      %3792 = vmatpush1.bf16.msra.mxu0 0
      %3793 = vmatprep.mubr.bf16.mxu0 0
      %3794 = vmatmul.mubr.bf16.gmra.mrb[0].mxu0 %v3735
      %v3795 = vpop.f32.mrb[0].mxu0
      %v3796 = vadd.f32 0.0, %v3795
      %v3797 = vpop.f32.mrb[0].mxu0
      %v3798 = vpop.f32.mrb[0].mxu0
      %v3799 = vadd.f32 0.0, %v3798
      %v3800 = vpop.f32.mrb[0].mxu0
      %3801 = vmatprep.mubr.bf16.mxu0 0
      %3802 = vmatmul.mubr.bf16.gmra.mrb[0].mxu0 %v3738
      %v3803 = vpop.f32.mrb[0].mxu0
      %v3804 = vadd.f32 0.0, %v3803
      %v3805 = vpop.f32.mrb[0].mxu0
      %v3806 = vpop.f32.mrb[0].mxu0
      %v3807 = vadd.f32 0.0, %v3806
      %v3808 = vpop.f32.mrb[0].mxu0
      %3809 = vmatprep.mubr.bf16.mxu0 0
      %3810 = vmatmul.mubr.bf16.gmra.mrb[0].mxu0 %v3741
      %v3811 = vpop.f32.mrb[0].mxu0
      %v3812 = vadd.f32 0.0, %v3811
      %v3813 = vpop.f32.mrb[0].mxu0
      %v3814 = vpop.f32.mrb[0].mxu0
      %v3815 = vadd.f32 0.0, %v3814
      %v3816 = vpop.f32.mrb[0].mxu0
      %3817 = vmatprep.mubr.bf16.mxu0 0
      %3818 = vmatmul.mubr.bf16.gmra.mrb[0].mxu0 %v3744
      %v3819 = vpop.f32.mrb[0].mxu0
      %v3820 = vadd.f32 0.0, %v3819
      %v3821 = vpop.f32.mrb[0].mxu0
      %v3822 = vpop.f32.mrb[0].mxu0
      %v3823 = vadd.f32 0.0, %v3822
      %v3824 = vpop.f32.mrb[0].mxu0
      %3825 = vmatprep.mubr.bf16.mxu0 0
      %3826 = vmatmul.mubr.bf16.gmra.mrb[0].mxu0 %v3747
      %v3827 = vpop.f32.mrb[0].mxu0
      %v3828 = vadd.f32 0.0, %v3827
      %v3829 = vpop.f32.mrb[0].mxu0
      %v3830 = vpop.f32.mrb[0].mxu0
      %v3831 = vadd.f32 0.0, %v3830
      %v3832 = vpop.f32.mrb[0].mxu0
      %3833 = vmatprep.mubr.bf16.mxu0 0
      %3834 = vmatmul.mubr.bf16.gmra.mrb[0].mxu0 %v3750
      %v3835 = vpop.f32.mrb[0].mxu0
      %v3836 = vadd.f32 0.0, %v3835
      %v3837 = vpop.f32.mrb[0].mxu0
      %v3838 = vpop.f32.mrb[0].mxu0
      %v3839 = vadd.f32 0.0, %v3838
      %v3840 = vpop.f32.mrb[0].mxu0
      %3841 = vmatprep.mubr.bf16.mxu0 0
      %3842 = vmatmul.mubr.bf16.gmra.mrb[0].mxu0 %v3753
      %v3843 = vpop.f32.mrb[0].mxu0
      %v3844 = vadd.f32 0.0, %v3843
      %v3845 = vpop.f32.mrb[0].mxu0
      %v3846 = vpop.f32.mrb[0].mxu0
      %v3847 = vadd.f32 0.0, %v3846
      %v3848 = vpop.f32.mrb[0].mxu0
      %3849 = vmatprep.mubr.bf16.mxu0 0
      %3850 = vmatmul.mubr.bf16.gmra.mrb[0].mxu0 %v3756
      %v3851 = vpop.f32.mrb[0].mxu0
      %v3852 = vadd.f32 0.0, %v3851
      %v3853 = vpop.f32.mrb[0].mxu0
      %v3854 = vpop.f32.mrb[0].mxu0
      %v3855 = vadd.f32 0.0, %v3854
      %v3856 = vpop.f32.mrb[0].mxu0
      %3857 = vdwg.mxu0
      %v3858 = vadd.f32 %v3691, %v3796
      %v3859 = vadd.f32 %v3692, %v3799
      %v3860 = vadd.f32 %v3693, %v3804
      %v3861 = vadd.f32 %v3694, %v3807
      %v3862 = vadd.f32 %v3695, %v3812
      %v3863 = vadd.f32 %v3696, %v3815
      %v3864 = vadd.f32 %v3697, %v3820
      %v3865 = vadd.f32 %v3698, %v3823
      %v3866 = vadd.f32 %v3699, %v3828
      %v3867 = vadd.f32 %v3700, %v3831
      %v3868 = vadd.f32 %v3701, %v3836
      %v3869 = vadd.f32 %v3702, %v3839
      %v3870 = vadd.f32 %v3703, %v3844
      %v3871 = vadd.f32 %v3704, %v3847
      %v3872 = vadd.f32 %v3705, %v3852
      %v3873 = vadd.f32 %v3706, %v3855
      %s3874 = scalar_lea.vmem %s229, 1072
      %v3875 = vld [vmem:[%s3874] sm:$0xff]
      %v3876 = vld [vmem:[%s3874 + $0x10] sm:$0xff]
      %v3877 = vld [vmem:[%s3874 + $0x20] sm:$0xff]
      %v3878 = vld [vmem:[%s3874 + $0x30] sm:$0xff]
      %v3879 = vld [vmem:[%s3874 + $0x40] sm:$0xff]
      %v3880 = vld [vmem:[%s3874 + $0x50] sm:$0xff]
      %v3881 = vld [vmem:[%s3874 + $0x60] sm:$0xff]
      %v3882 = vld [vmem:[%s3874 + $0x70] sm:$0xff]
      %v3883 = vld [vmem:[%s3874 + $0xb0] sm:$0xff]
      %v3884 = vld [vmem:[%s3874 + $0xc0] sm:$0xff]
      %v3885 = vld [vmem:[%s3874 + $0xd0] sm:$0xff]
      %v3886 = vld [vmem:[%s3874 + $0xe0] sm:$0xff]
      %v3887 = vld [vmem:[%s3874 + $0xf0] sm:$0xff]
      %v3888 = vld [vmem:[%s3874 + $0x100] sm:$0xff]
      %v3889 = vld [vmem:[%s3874 + $0x110] sm:$0xff]
      %v3890 = vld [vmem:[%s3874 + $0x120] sm:$0xff]
      %v3891 = vpack.c.bf16 %v3876, %v3875
      %v3892 = vpack.c.bf16 %v3878, %v3877
      %v3893 = vpack.c.bf16 %v3880, %v3879
      %v3894 = vpack.c.bf16 %v3882, %v3881
      %v3895 = vpack.c.bf16 %v3884, %v3883
      %v3896 = vpack.c.bf16 %v3886, %v3885
      %v3897 = vpack.c.bf16 %v3888, %v3887
      %v3898 = vpack.c.bf16 %v3890, %v3889
      %s3899 = scalar_lea.vmem %s234, 88
      %v3900 = vld [vmem:[%s3899] sm:$0xf]
      %v3902 = vsel %vm299, %v3891, 0
      %v3905 = vsel %vm299, %v3892, 0
      %v3908 = vsel %vm299, %v3893, 0
      %v3911 = vsel %vm299, %v3894, 0
      %v3914 = vsel %vm299, %v3895, 0
      %v3917 = vsel %vm299, %v3896, 0
      %v3920 = vsel %vm299, %v3897, 0
      %v3923 = vsel %vm299, %v3898, 0
      %v3926 = vsel %vm324, %v3900, 0
      %3928 = vmatprep.subr.bf16.mxu0 0
      %3929 = vmatpush1.bf16.msra.mxu0 %v3926
      %3930 = vmatprep.subr.bf16.mxu0 0
      %3931 = vmatpush1.bf16.msra.mxu0 0
      %3932 = vmatprep.subr.bf16.mxu0 0
      %3933 = vmatpush1.bf16.msra.mxu0 0
      %3934 = vmatprep.subr.bf16.mxu0 0
      %3935 = vmatpush1.bf16.msra.mxu0 0
      %3936 = vmatprep.subr.bf16.mxu0 0
      %3937 = vmatpush1.bf16.msra.mxu0 0
      %3938 = vmatprep.subr.bf16.mxu0 0
      %3939 = vmatpush1.bf16.msra.mxu0 0
      %3940 = vmatprep.subr.bf16.mxu0 0
      %3941 = vmatpush1.bf16.msra.mxu0 0
      %3942 = vmatprep.subr.bf16.mxu0 0
      %3943 = vmatpush1.bf16.msra.mxu0 0
      %3944 = vmatprep.subr.bf16.mxu0 0
      %3945 = vmatpush1.bf16.msra.mxu0 0
      %3946 = vmatprep.subr.bf16.mxu0 0
      %3947 = vmatpush1.bf16.msra.mxu0 0
      %3948 = vmatprep.subr.bf16.mxu0 0
      %3949 = vmatpush1.bf16.msra.mxu0 0
      %3950 = vmatprep.subr.bf16.mxu0 0
      %3951 = vmatpush1.bf16.msra.mxu0 0
      %3952 = vmatprep.subr.bf16.mxu0 0
      %3953 = vmatpush1.bf16.msra.mxu0 0
      %3954 = vmatprep.subr.bf16.mxu0 0
      %3955 = vmatpush1.bf16.msra.mxu0 0
      %3956 = vmatprep.subr.bf16.mxu0 0
      %3957 = vmatpush1.bf16.msra.mxu0 0
      %3958 = vmatprep.subr.bf16.mxu0 0
      %3959 = vmatpush1.bf16.msra.mxu0 0
      %3960 = vmatprep.mubr.bf16.mxu0 0
      %3961 = vmatmul.mubr.bf16.gmra.mrb[0].mxu0 %v3902
      %v3962 = vpop.f32.mrb[0].mxu0
      %v3963 = vadd.f32 0.0, %v3962
      %v3964 = vpop.f32.mrb[0].mxu0
      %v3965 = vpop.f32.mrb[0].mxu0
      %v3966 = vadd.f32 0.0, %v3965
      %v3967 = vpop.f32.mrb[0].mxu0
      %3968 = vmatprep.mubr.bf16.mxu0 0
      %3969 = vmatmul.mubr.bf16.gmra.mrb[0].mxu0 %v3905
      %v3970 = vpop.f32.mrb[0].mxu0
      %v3971 = vadd.f32 0.0, %v3970
      %v3972 = vpop.f32.mrb[0].mxu0
      %v3973 = vpop.f32.mrb[0].mxu0
      %v3974 = vadd.f32 0.0, %v3973
      %v3975 = vpop.f32.mrb[0].mxu0
      %3976 = vmatprep.mubr.bf16.mxu0 0
      %3977 = vmatmul.mubr.bf16.gmra.mrb[0].mxu0 %v3908
      %v3978 = vpop.f32.mrb[0].mxu0
      %v3979 = vadd.f32 0.0, %v3978
      %v3980 = vpop.f32.mrb[0].mxu0
      %v3981 = vpop.f32.mrb[0].mxu0
      %v3982 = vadd.f32 0.0, %v3981
      %v3983 = vpop.f32.mrb[0].mxu0
      %3984 = vmatprep.mubr.bf16.mxu0 0
      %3985 = vmatmul.mubr.bf16.gmra.mrb[0].mxu0 %v3911
      %v3986 = vpop.f32.mrb[0].mxu0
      %v3987 = vadd.f32 0.0, %v3986
      %v3988 = vpop.f32.mrb[0].mxu0
      %v3989 = vpop.f32.mrb[0].mxu0
      %v3990 = vadd.f32 0.0, %v3989
      %v3991 = vpop.f32.mrb[0].mxu0
      %3992 = vmatprep.mubr.bf16.mxu0 0
      %3993 = vmatmul.mubr.bf16.gmra.mrb[0].mxu0 %v3914
      %v3994 = vpop.f32.mrb[0].mxu0
      %v3995 = vadd.f32 0.0, %v3994
      %v3996 = vpop.f32.mrb[0].mxu0
      %v3997 = vpop.f32.mrb[0].mxu0
      %v3998 = vadd.f32 0.0, %v3997
      %v3999 = vpop.f32.mrb[0].mxu0
      %4000 = vmatprep.mubr.bf16.mxu0 0
      %4001 = vmatmul.mubr.bf16.gmra.mrb[0].mxu0 %v3917
      %v4002 = vpop.f32.mrb[0].mxu0
      %v4003 = vadd.f32 0.0, %v4002
      %v4004 = vpop.f32.mrb[0].mxu0
      %v4005 = vpop.f32.mrb[0].mxu0
      %v4006 = vadd.f32 0.0, %v4005
      %v4007 = vpop.f32.mrb[0].mxu0
      %4008 = vmatprep.mubr.bf16.mxu0 0
      %4009 = vmatmul.mubr.bf16.gmra.mrb[0].mxu0 %v3920
      %v4010 = vpop.f32.mrb[0].mxu0
      %v4011 = vadd.f32 0.0, %v4010
      %v4012 = vpop.f32.mrb[0].mxu0
      %v4013 = vpop.f32.mrb[0].mxu0
      %v4014 = vadd.f32 0.0, %v4013
      %v4015 = vpop.f32.mrb[0].mxu0
      %4016 = vmatprep.mubr.bf16.mxu0 0
      %4017 = vmatmul.mubr.bf16.gmra.mrb[0].mxu0 %v3923
      %v4018 = vpop.f32.mrb[0].mxu0
      %v4019 = vadd.f32 0.0, %v4018
      %v4020 = vpop.f32.mrb[0].mxu0
      %v4021 = vpop.f32.mrb[0].mxu0
      %v4022 = vadd.f32 0.0, %v4021
      %v4023 = vpop.f32.mrb[0].mxu0
      %4024 = vdwg.mxu0
      %v4025 = vadd.f32 %v3858, %v3963
      %v4026 = vadd.f32 %v3859, %v3966
      %v4027 = vadd.f32 %v3860, %v3971
      %v4028 = vadd.f32 %v3861, %v3974
      %v4029 = vadd.f32 %v3862, %v3979
      %v4030 = vadd.f32 %v3863, %v3982
      %v4031 = vadd.f32 %v3864, %v3987
      %v4032 = vadd.f32 %v3865, %v3990
      %v4033 = vadd.f32 %v3866, %v3995
      %v4034 = vadd.f32 %v3867, %v3998
      %v4035 = vadd.f32 %v3868, %v4003
      %v4036 = vadd.f32 %v3869, %v4006
      %v4037 = vadd.f32 %v3870, %v4011
      %v4038 = vadd.f32 %v3871, %v4014
      %v4039 = vadd.f32 %v3872, %v4019
      %v4040 = vadd.f32 %v3873, %v4022
      %v4041 = vld [vmem:[%s3707 + $0x1] sm:$0xff]
      %v4042 = vld [vmem:[%s3707 + $0x11] sm:$0xff]
      %v4043 = vld [vmem:[%s3707 + $0x21] sm:$0xff]
      %v4044 = vld [vmem:[%s3707 + $0x31] sm:$0xff]
      %v4045 = vld [vmem:[%s3707 + $0x41] sm:$0xff]
      %v4046 = vld [vmem:[%s3707 + $0x51] sm:$0xff]
      %v4047 = vld [vmem:[%s3707 + $0x61] sm:$0xff]
      %v4048 = vld [vmem:[%s3707 + $0x71] sm:$0xff]
      %v4049 = vld [vmem:[%s3707 + $0xb1] sm:$0xff]
      %v4050 = vld [vmem:[%s3707 + $0xc1] sm:$0xff]
      %v4051 = vld [vmem:[%s3707 + $0xd1] sm:$0xff]
      %v4052 = vld [vmem:[%s3707 + $0xe1] sm:$0xff]
      %v4053 = vld [vmem:[%s3707 + $0xf1] sm:$0xff]
      %v4054 = vld [vmem:[%s3707 + $0x101] sm:$0xff]
      %v4055 = vld [vmem:[%s3707 + $0x111] sm:$0xff]
      %v4056 = vld [vmem:[%s3707 + $0x121] sm:$0xff]
      %v4057 = vpack.c.bf16 %v4042, %v4041
      %v4058 = vpack.c.bf16 %v4044, %v4043
      %v4059 = vpack.c.bf16 %v4046, %v4045
      %v4060 = vpack.c.bf16 %v4048, %v4047
      %v4061 = vpack.c.bf16 %v4050, %v4049
      %v4062 = vpack.c.bf16 %v4052, %v4051
      %v4063 = vpack.c.bf16 %v4054, %v4053
      %v4064 = vpack.c.bf16 %v4056, %v4055
      %s4065 = scalar_lea.vmem %s234, 92
      %v4066 = vld [vmem:[%s4065] sm:$0xf]
      %v4068 = vsel %vm299, %v4057, 0
      %v4071 = vsel %vm299, %v4058, 0
      %v4074 = vsel %vm299, %v4059, 0
      %v4077 = vsel %vm299, %v4060, 0
      %v4080 = vsel %vm299, %v4061, 0
      %v4083 = vsel %vm299, %v4062, 0
      %v4086 = vsel %vm299, %v4063, 0
      %v4089 = vsel %vm299, %v4064, 0
      %v4092 = vsel %vm324, %v4066, 0
      %4094 = vmatprep.subr.bf16.mxu0 0
      %4095 = vmatpush1.bf16.msra.mxu0 %v4092
      %4096 = vmatprep.subr.bf16.mxu0 0
      %4097 = vmatpush1.bf16.msra.mxu0 0
      %4098 = vmatprep.subr.bf16.mxu0 0
      %4099 = vmatpush1.bf16.msra.mxu0 0
      %4100 = vmatprep.subr.bf16.mxu0 0
      %4101 = vmatpush1.bf16.msra.mxu0 0
      %4102 = vmatprep.subr.bf16.mxu0 0
      %4103 = vmatpush1.bf16.msra.mxu0 0
      %4104 = vmatprep.subr.bf16.mxu0 0
      %4105 = vmatpush1.bf16.msra.mxu0 0
      %4106 = vmatprep.subr.bf16.mxu0 0
      %4107 = vmatpush1.bf16.msra.mxu0 0
      %4108 = vmatprep.subr.bf16.mxu0 0
      %4109 = vmatpush1.bf16.msra.mxu0 0
      %4110 = vmatprep.subr.bf16.mxu0 0
      %4111 = vmatpush1.bf16.msra.mxu0 0
      %4112 = vmatprep.subr.bf16.mxu0 0
      %4113 = vmatpush1.bf16.msra.mxu0 0
      %4114 = vmatprep.subr.bf16.mxu0 0
      %4115 = vmatpush1.bf16.msra.mxu0 0
      %4116 = vmatprep.subr.bf16.mxu0 0
      %4117 = vmatpush1.bf16.msra.mxu0 0
      %4118 = vmatprep.subr.bf16.mxu0 0
      %4119 = vmatpush1.bf16.msra.mxu0 0
      %4120 = vmatprep.subr.bf16.mxu0 0
      %4121 = vmatpush1.bf16.msra.mxu0 0
      %4122 = vmatprep.subr.bf16.mxu0 0
      %4123 = vmatpush1.bf16.msra.mxu0 0
      %4124 = vmatprep.subr.bf16.mxu0 0
      %4125 = vmatpush1.bf16.msra.mxu0 0
      %4126 = vmatprep.mubr.bf16.mxu0 0
      %4127 = vmatmul.mubr.bf16.gmra.mrb[0].mxu0 %v4068
      %v4128 = vpop.f32.mrb[0].mxu0
      %v4129 = vadd.f32 0.0, %v4128
      %v4130 = vpop.f32.mrb[0].mxu0
      %v4131 = vpop.f32.mrb[0].mxu0
      %v4132 = vadd.f32 0.0, %v4131
      %v4133 = vpop.f32.mrb[0].mxu0
      %4134 = vmatprep.mubr.bf16.mxu0 0
      %4135 = vmatmul.mubr.bf16.gmra.mrb[0].mxu0 %v4071
      %v4136 = vpop.f32.mrb[0].mxu0
      %v4137 = vadd.f32 0.0, %v4136
      %v4138 = vpop.f32.mrb[0].mxu0
      %v4139 = vpop.f32.mrb[0].mxu0
      %v4140 = vadd.f32 0.0, %v4139
      %v4141 = vpop.f32.mrb[0].mxu0
      %4142 = vmatprep.mubr.bf16.mxu0 0
      %4143 = vmatmul.mubr.bf16.gmra.mrb[0].mxu0 %v4074
      %v4144 = vpop.f32.mrb[0].mxu0
      %v4145 = vadd.f32 0.0, %v4144
      %v4146 = vpop.f32.mrb[0].mxu0
      %v4147 = vpop.f32.mrb[0].mxu0
      %v4148 = vadd.f32 0.0, %v4147
      %v4149 = vpop.f32.mrb[0].mxu0
      %4150 = vmatprep.mubr.bf16.mxu0 0
      %4151 = vmatmul.mubr.bf16.gmra.mrb[0].mxu0 %v4077
      %v4152 = vpop.f32.mrb[0].mxu0
      %v4153 = vadd.f32 0.0, %v4152
      %v4154 = vpop.f32.mrb[0].mxu0
      %v4155 = vpop.f32.mrb[0].mxu0
      %v4156 = vadd.f32 0.0, %v4155
      %v4157 = vpop.f32.mrb[0].mxu0
      %4158 = vmatprep.mubr.bf16.mxu0 0
      %4159 = vmatmul.mubr.bf16.gmra.mrb[0].mxu0 %v4080
      %v4160 = vpop.f32.mrb[0].mxu0
      %v4161 = vadd.f32 0.0, %v4160
      %v4162 = vpop.f32.mrb[0].mxu0
      %v4163 = vpop.f32.mrb[0].mxu0
      %v4164 = vadd.f32 0.0, %v4163
      %v4165 = vpop.f32.mrb[0].mxu0
      %4166 = vmatprep.mubr.bf16.mxu0 0
      %4167 = vmatmul.mubr.bf16.gmra.mrb[0].mxu0 %v4083
      %v4168 = vpop.f32.mrb[0].mxu0
      %v4169 = vadd.f32 0.0, %v4168
      %v4170 = vpop.f32.mrb[0].mxu0
      %v4171 = vpop.f32.mrb[0].mxu0
      %v4172 = vadd.f32 0.0, %v4171
      %v4173 = vpop.f32.mrb[0].mxu0
      %4174 = vmatprep.mubr.bf16.mxu0 0
      %4175 = vmatmul.mubr.bf16.gmra.mrb[0].mxu0 %v4086
      %v4176 = vpop.f32.mrb[0].mxu0
      %v4177 = vadd.f32 0.0, %v4176
      %v4178 = vpop.f32.mrb[0].mxu0
      %v4179 = vpop.f32.mrb[0].mxu0
      %v4180 = vadd.f32 0.0, %v4179
      %v4181 = vpop.f32.mrb[0].mxu0
      %4182 = vmatprep.mubr.bf16.mxu0 0
      %4183 = vmatmul.mubr.bf16.gmra.mrb[0].mxu0 %v4089
      %v4184 = vpop.f32.mrb[0].mxu0
      %v4185 = vadd.f32 0.0, %v4184
      %v4186 = vpop.f32.mrb[0].mxu0
      %v4187 = vpop.f32.mrb[0].mxu0
      %v4188 = vadd.f32 0.0, %v4187
      %v4189 = vpop.f32.mrb[0].mxu0
      %4190 = vdwg.mxu0
      %v4191 = vadd.f32 %v4025, %v4129
      %v4192 = vadd.f32 %v4026, %v4132
      %v4193 = vadd.f32 %v4027, %v4137
      %v4194 = vadd.f32 %v4028, %v4140
      %v4195 = vadd.f32 %v4029, %v4145
      %v4196 = vadd.f32 %v4030, %v4148
      %v4197 = vadd.f32 %v4031, %v4153
      %v4198 = vadd.f32 %v4032, %v4156
      %v4199 = vadd.f32 %v4033, %v4161
      %v4200 = vadd.f32 %v4034, %v4164
      %v4201 = vadd.f32 %v4035, %v4169
      %v4202 = vadd.f32 %v4036, %v4172
      %v4203 = vadd.f32 %v4037, %v4177
      %v4204 = vadd.f32 %v4038, %v4180
      %v4205 = vadd.f32 %v4039, %v4185
      %v4206 = vadd.f32 %v4040, %v4188
      %v4207 = vld [vmem:[%s3874 + $0x1] sm:$0xff]
      %v4208 = vld [vmem:[%s3874 + $0x11] sm:$0xff]
      %v4209 = vld [vmem:[%s3874 + $0x21] sm:$0xff]
      %v4210 = vld [vmem:[%s3874 + $0x31] sm:$0xff]
      %v4211 = vld [vmem:[%s3874 + $0x41] sm:$0xff]
      %v4212 = vld [vmem:[%s3874 + $0x51] sm:$0xff]
      %v4213 = vld [vmem:[%s3874 + $0x61] sm:$0xff]
      %v4214 = vld [vmem:[%s3874 + $0x71] sm:$0xff]
      %v4215 = vld [vmem:[%s3874 + $0xb1] sm:$0xff]
      %v4216 = vld [vmem:[%s3874 + $0xc1] sm:$0xff]
      %v4217 = vld [vmem:[%s3874 + $0xd1] sm:$0xff]
      %v4218 = vld [vmem:[%s3874 + $0xe1] sm:$0xff]
      %v4219 = vld [vmem:[%s3874 + $0xf1] sm:$0xff]
      %v4220 = vld [vmem:[%s3874 + $0x101] sm:$0xff]
      %v4221 = vld [vmem:[%s3874 + $0x111] sm:$0xff]
      %v4222 = vld [vmem:[%s3874 + $0x121] sm:$0xff]
      %v4223 = vpack.c.bf16 %v4208, %v4207
      %v4224 = vpack.c.bf16 %v4210, %v4209
      %v4225 = vpack.c.bf16 %v4212, %v4211
      %v4226 = vpack.c.bf16 %v4214, %v4213
      %v4227 = vpack.c.bf16 %v4216, %v4215
      %v4228 = vpack.c.bf16 %v4218, %v4217
      %v4229 = vpack.c.bf16 %v4220, %v4219
      %v4230 = vpack.c.bf16 %v4222, %v4221
      %s4231 = scalar_lea.vmem %s234, 96
      %v4232 = vld [vmem:[%s4231] sm:$0xf]
      %v4234 = vsel %vm299, %v4223, 0
      %v4237 = vsel %vm299, %v4224, 0
      %v4240 = vsel %vm299, %v4225, 0
      %v4243 = vsel %vm299, %v4226, 0
      %v4246 = vsel %vm299, %v4227, 0
      %v4249 = vsel %vm299, %v4228, 0
      %v4252 = vsel %vm299, %v4229, 0
      %v4255 = vsel %vm299, %v4230, 0
      %v4258 = vsel %vm324, %v4232, 0
      %4260 = vmatprep.subr.bf16.mxu0 0
      %4261 = vmatpush1.bf16.msra.mxu0 %v4258
      %4262 = vmatprep.subr.bf16.mxu0 0
      %4263 = vmatpush1.bf16.msra.mxu0 0
      %4264 = vmatprep.subr.bf16.mxu0 0
      %4265 = vmatpush1.bf16.msra.mxu0 0
      %4266 = vmatprep.subr.bf16.mxu0 0
      %4267 = vmatpush1.bf16.msra.mxu0 0
      %4268 = vmatprep.subr.bf16.mxu0 0
      %4269 = vmatpush1.bf16.msra.mxu0 0
      %4270 = vmatprep.subr.bf16.mxu0 0
      %4271 = vmatpush1.bf16.msra.mxu0 0
      %4272 = vmatprep.subr.bf16.mxu0 0
      %4273 = vmatpush1.bf16.msra.mxu0 0
      %4274 = vmatprep.subr.bf16.mxu0 0
      %4275 = vmatpush1.bf16.msra.mxu0 0
      %4276 = vmatprep.subr.bf16.mxu0 0
      %4277 = vmatpush1.bf16.msra.mxu0 0
      %4278 = vmatprep.subr.bf16.mxu0 0
      %4279 = vmatpush1.bf16.msra.mxu0 0
      %4280 = vmatprep.subr.bf16.mxu0 0
      %4281 = vmatpush1.bf16.msra.mxu0 0
      %4282 = vmatprep.subr.bf16.mxu0 0
      %4283 = vmatpush1.bf16.msra.mxu0 0
      %4284 = vmatprep.subr.bf16.mxu0 0
      %4285 = vmatpush1.bf16.msra.mxu0 0
      %4286 = vmatprep.subr.bf16.mxu0 0
      %4287 = vmatpush1.bf16.msra.mxu0 0
      %4288 = vmatprep.subr.bf16.mxu0 0
      %4289 = vmatpush1.bf16.msra.mxu0 0
      %4290 = vmatprep.subr.bf16.mxu0 0
      %4291 = vmatpush1.bf16.msra.mxu0 0
      %4292 = vmatprep.mubr.bf16.mxu0 0
      %4293 = vmatmul.mubr.bf16.gmra.mrb[0].mxu0 %v4234
      %v4294 = vpop.f32.mrb[0].mxu0
      %v4295 = vadd.f32 0.0, %v4294
      %v4296 = vpop.f32.mrb[0].mxu0
      %v4297 = vpop.f32.mrb[0].mxu0
      %v4298 = vadd.f32 0.0, %v4297
      %v4299 = vpop.f32.mrb[0].mxu0
      %4300 = vmatprep.mubr.bf16.mxu0 0
      %4301 = vmatmul.mubr.bf16.gmra.mrb[0].mxu0 %v4237
      %v4302 = vpop.f32.mrb[0].mxu0
      %v4303 = vadd.f32 0.0, %v4302
      %v4304 = vpop.f32.mrb[0].mxu0
      %v4305 = vpop.f32.mrb[0].mxu0
      %v4306 = vadd.f32 0.0, %v4305
      %v4307 = vpop.f32.mrb[0].mxu0
      %4308 = vmatprep.mubr.bf16.mxu0 0
      %4309 = vmatmul.mubr.bf16.gmra.mrb[0].mxu0 %v4240
      %v4310 = vpop.f32.mrb[0].mxu0
      %v4311 = vadd.f32 0.0, %v4310
      %v4312 = vpop.f32.mrb[0].mxu0
      %v4313 = vpop.f32.mrb[0].mxu0
      %v4314 = vadd.f32 0.0, %v4313
      %v4315 = vpop.f32.mrb[0].mxu0
      %4316 = vmatprep.mubr.bf16.mxu0 0
      %4317 = vmatmul.mubr.bf16.gmra.mrb[0].mxu0 %v4243
      %v4318 = vpop.f32.mrb[0].mxu0
      %v4319 = vadd.f32 0.0, %v4318
      %v4320 = vpop.f32.mrb[0].mxu0
      %v4321 = vpop.f32.mrb[0].mxu0
      %v4322 = vadd.f32 0.0, %v4321
      %v4323 = vpop.f32.mrb[0].mxu0
      %4324 = vmatprep.mubr.bf16.mxu0 0
      %4325 = vmatmul.mubr.bf16.gmra.mrb[0].mxu0 %v4246
      %v4326 = vpop.f32.mrb[0].mxu0
      %v4327 = vadd.f32 0.0, %v4326
      %v4328 = vpop.f32.mrb[0].mxu0
      %v4329 = vpop.f32.mrb[0].mxu0
      %v4330 = vadd.f32 0.0, %v4329
      %v4331 = vpop.f32.mrb[0].mxu0
      %4332 = vmatprep.mubr.bf16.mxu0 0
      %4333 = vmatmul.mubr.bf16.gmra.mrb[0].mxu0 %v4249
      %v4334 = vpop.f32.mrb[0].mxu0
      %v4335 = vadd.f32 0.0, %v4334
      %v4336 = vpop.f32.mrb[0].mxu0
      %v4337 = vpop.f32.mrb[0].mxu0
      %v4338 = vadd.f32 0.0, %v4337
      %v4339 = vpop.f32.mrb[0].mxu0
      %4340 = vmatprep.mubr.bf16.mxu0 0
      %4341 = vmatmul.mubr.bf16.gmra.mrb[0].mxu0 %v4252
      %v4342 = vpop.f32.mrb[0].mxu0
      %v4343 = vadd.f32 0.0, %v4342
      %v4344 = vpop.f32.mrb[0].mxu0
      %v4345 = vpop.f32.mrb[0].mxu0
      %v4346 = vadd.f32 0.0, %v4345
      %v4347 = vpop.f32.mrb[0].mxu0
      %4348 = vmatprep.mubr.bf16.mxu0 0
      %4349 = vmatmul.mubr.bf16.gmra.mrb[0].mxu0 %v4255
      %v4350 = vpop.f32.mrb[0].mxu0
      %v4351 = vadd.f32 0.0, %v4350
      %v4352 = vpop.f32.mrb[0].mxu0
      %v4353 = vpop.f32.mrb[0].mxu0
      %v4354 = vadd.f32 0.0, %v4353
      %v4355 = vpop.f32.mrb[0].mxu0
      %4356 = vdwg.mxu0
      %v4357 = vadd.f32 %v4191, %v4295
      %v4358 = vadd.f32 %v4192, %v4298
      %v4359 = vadd.f32 %v4193, %v4303
      %v4360 = vadd.f32 %v4194, %v4306
      %v4361 = vadd.f32 %v4195, %v4311
      %v4362 = vadd.f32 %v4196, %v4314
      %v4363 = vadd.f32 %v4197, %v4319
      %v4364 = vadd.f32 %v4198, %v4322
      %v4365 = vadd.f32 %v4199, %v4327
      %v4366 = vadd.f32 %v4200, %v4330
      %v4367 = vadd.f32 %v4201, %v4335
      %v4368 = vadd.f32 %v4202, %v4338
      %v4369 = vadd.f32 %v4203, %v4343
      %v4370 = vadd.f32 %v4204, %v4346
      %v4371 = vadd.f32 %v4205, %v4351
      %v4372 = vadd.f32 %v4206, %v4354
      %v4373 = vld [vmem:[%s3707 + $0x2] sm:$0xff]
      %v4374 = vld [vmem:[%s3707 + $0x12] sm:$0xff]
      %v4375 = vld [vmem:[%s3707 + $0x22] sm:$0xff]
      %v4376 = vld [vmem:[%s3707 + $0x32] sm:$0xff]
      %v4377 = vld [vmem:[%s3707 + $0x42] sm:$0xff]
      %v4378 = vld [vmem:[%s3707 + $0x52] sm:$0xff]
      %v4379 = vld [vmem:[%s3707 + $0x62] sm:$0xff]
      %v4380 = vld [vmem:[%s3707 + $0x72] sm:$0xff]
      %v4381 = vld [vmem:[%s3707 + $0xb2] sm:$0xff]
      %v4382 = vld [vmem:[%s3707 + $0xc2] sm:$0xff]
      %v4383 = vld [vmem:[%s3707 + $0xd2] sm:$0xff]
      %v4384 = vld [vmem:[%s3707 + $0xe2] sm:$0xff]
      %v4385 = vld [vmem:[%s3707 + $0xf2] sm:$0xff]
      %v4386 = vld [vmem:[%s3707 + $0x102] sm:$0xff]
      %v4387 = vld [vmem:[%s3707 + $0x112] sm:$0xff]
      %v4388 = vld [vmem:[%s3707 + $0x122] sm:$0xff]
      %v4389 = vpack.c.bf16 %v4374, %v4373
      %v4390 = vpack.c.bf16 %v4376, %v4375
      %v4391 = vpack.c.bf16 %v4378, %v4377
      %v4392 = vpack.c.bf16 %v4380, %v4379
      %v4393 = vpack.c.bf16 %v4382, %v4381
      %v4394 = vpack.c.bf16 %v4384, %v4383
      %v4395 = vpack.c.bf16 %v4386, %v4385
      %v4396 = vpack.c.bf16 %v4388, %v4387
      %s4397 = scalar_lea.vmem %s234, 100
      %v4398 = vld [vmem:[%s4397] sm:$0xf]
      %v4400 = vsel %vm299, %v4389, 0
      %v4403 = vsel %vm299, %v4390, 0
      %v4406 = vsel %vm299, %v4391, 0
      %v4409 = vsel %vm299, %v4392, 0
      %v4412 = vsel %vm299, %v4393, 0
      %v4415 = vsel %vm299, %v4394, 0
      %v4418 = vsel %vm299, %v4395, 0
      %v4421 = vsel %vm299, %v4396, 0
      %v4424 = vsel %vm324, %v4398, 0
      %4426 = vmatprep.subr.bf16.mxu0 0
      %4427 = vmatpush1.bf16.msra.mxu0 %v4424
      %4428 = vmatprep.subr.bf16.mxu0 0
      %4429 = vmatpush1.bf16.msra.mxu0 0
      %4430 = vmatprep.subr.bf16.mxu0 0
      %4431 = vmatpush1.bf16.msra.mxu0 0
      %4432 = vmatprep.subr.bf16.mxu0 0
      %4433 = vmatpush1.bf16.msra.mxu0 0
      %4434 = vmatprep.subr.bf16.mxu0 0
      %4435 = vmatpush1.bf16.msra.mxu0 0
      %4436 = vmatprep.subr.bf16.mxu0 0
      %4437 = vmatpush1.bf16.msra.mxu0 0
      %4438 = vmatprep.subr.bf16.mxu0 0
      %4439 = vmatpush1.bf16.msra.mxu0 0
      %4440 = vmatprep.subr.bf16.mxu0 0
      %4441 = vmatpush1.bf16.msra.mxu0 0
      %4442 = vmatprep.subr.bf16.mxu0 0
      %4443 = vmatpush1.bf16.msra.mxu0 0
      %4444 = vmatprep.subr.bf16.mxu0 0
      %4445 = vmatpush1.bf16.msra.mxu0 0
      %4446 = vmatprep.subr.bf16.mxu0 0
      %4447 = vmatpush1.bf16.msra.mxu0 0
      %4448 = vmatprep.subr.bf16.mxu0 0
      %4449 = vmatpush1.bf16.msra.mxu0 0
      %4450 = vmatprep.subr.bf16.mxu0 0
      %4451 = vmatpush1.bf16.msra.mxu0 0
      %4452 = vmatprep.subr.bf16.mxu0 0
      %4453 = vmatpush1.bf16.msra.mxu0 0
      %4454 = vmatprep.subr.bf16.mxu0 0
      %4455 = vmatpush1.bf16.msra.mxu0 0
      %4456 = vmatprep.subr.bf16.mxu0 0
      %4457 = vmatpush1.bf16.msra.mxu0 0
      %4458 = vmatprep.mubr.bf16.mxu0 0
      %4459 = vmatmul.mubr.bf16.gmra.mrb[0].mxu0 %v4400
      %v4460 = vpop.f32.mrb[0].mxu0
      %v4461 = vadd.f32 0.0, %v4460
      %v4462 = vpop.f32.mrb[0].mxu0
      %v4463 = vpop.f32.mrb[0].mxu0
      %v4464 = vadd.f32 0.0, %v4463
      %v4465 = vpop.f32.mrb[0].mxu0
      %4466 = vmatprep.mubr.bf16.mxu0 0
      %4467 = vmatmul.mubr.bf16.gmra.mrb[0].mxu0 %v4403
      %v4468 = vpop.f32.mrb[0].mxu0
      %v4469 = vadd.f32 0.0, %v4468
      %v4470 = vpop.f32.mrb[0].mxu0
      %v4471 = vpop.f32.mrb[0].mxu0
      %v4472 = vadd.f32 0.0, %v4471
      %v4473 = vpop.f32.mrb[0].mxu0
      %4474 = vmatprep.mubr.bf16.mxu0 0
      %4475 = vmatmul.mubr.bf16.gmra.mrb[0].mxu0 %v4406
      %v4476 = vpop.f32.mrb[0].mxu0
      %v4477 = vadd.f32 0.0, %v4476
      %v4478 = vpop.f32.mrb[0].mxu0
      %v4479 = vpop.f32.mrb[0].mxu0
      %v4480 = vadd.f32 0.0, %v4479
      %v4481 = vpop.f32.mrb[0].mxu0
      %4482 = vmatprep.mubr.bf16.mxu0 0
      %4483 = vmatmul.mubr.bf16.gmra.mrb[0].mxu0 %v4409
      %v4484 = vpop.f32.mrb[0].mxu0
      %v4485 = vadd.f32 0.0, %v4484
      %v4486 = vpop.f32.mrb[0].mxu0
      %v4487 = vpop.f32.mrb[0].mxu0
      %v4488 = vadd.f32 0.0, %v4487
      %v4489 = vpop.f32.mrb[0].mxu0
      %4490 = vmatprep.mubr.bf16.mxu0 0
      %4491 = vmatmul.mubr.bf16.gmra.mrb[0].mxu0 %v4412
      %v4492 = vpop.f32.mrb[0].mxu0
      %v4493 = vadd.f32 0.0, %v4492
      %v4494 = vpop.f32.mrb[0].mxu0
      %v4495 = vpop.f32.mrb[0].mxu0
      %v4496 = vadd.f32 0.0, %v4495
      %v4497 = vpop.f32.mrb[0].mxu0
      %4498 = vmatprep.mubr.bf16.mxu0 0
      %4499 = vmatmul.mubr.bf16.gmra.mrb[0].mxu0 %v4415
      %v4500 = vpop.f32.mrb[0].mxu0
      %v4501 = vadd.f32 0.0, %v4500
      %v4502 = vpop.f32.mrb[0].mxu0
      %v4503 = vpop.f32.mrb[0].mxu0
      %v4504 = vadd.f32 0.0, %v4503
      %v4505 = vpop.f32.mrb[0].mxu0
      %4506 = vmatprep.mubr.bf16.mxu0 0
      %4507 = vmatmul.mubr.bf16.gmra.mrb[0].mxu0 %v4418
      %v4508 = vpop.f32.mrb[0].mxu0
      %v4509 = vadd.f32 0.0, %v4508
      %v4510 = vpop.f32.mrb[0].mxu0
      %v4511 = vpop.f32.mrb[0].mxu0
      %v4512 = vadd.f32 0.0, %v4511
      %v4513 = vpop.f32.mrb[0].mxu0
      %4514 = vmatprep.mubr.bf16.mxu0 0
      %4515 = vmatmul.mubr.bf16.gmra.mrb[0].mxu0 %v4421
      %v4516 = vpop.f32.mrb[0].mxu0
      %v4517 = vadd.f32 0.0, %v4516
      %v4518 = vpop.f32.mrb[0].mxu0
      %v4519 = vpop.f32.mrb[0].mxu0
      %v4520 = vadd.f32 0.0, %v4519
      %v4521 = vpop.f32.mrb[0].mxu0
      %4522 = vdwg.mxu0
      %v4523 = vadd.f32 %v4357, %v4461
      %v4524 = vadd.f32 %v4358, %v4464
      %v4525 = vadd.f32 %v4359, %v4469
      %v4526 = vadd.f32 %v4360, %v4472
      %v4527 = vadd.f32 %v4361, %v4477
      %v4528 = vadd.f32 %v4362, %v4480
      %v4529 = vadd.f32 %v4363, %v4485
      %v4530 = vadd.f32 %v4364, %v4488
      %v4531 = vadd.f32 %v4365, %v4493
      %v4532 = vadd.f32 %v4366, %v4496
      %v4533 = vadd.f32 %v4367, %v4501
      %v4534 = vadd.f32 %v4368, %v4504
      %v4535 = vadd.f32 %v4369, %v4509
      %v4536 = vadd.f32 %v4370, %v4512
      %v4537 = vadd.f32 %v4371, %v4517
      %v4538 = vadd.f32 %v4372, %v4520
      %v4539 = vld [vmem:[%s3874 + $0x2] sm:$0xff]
      %v4540 = vld [vmem:[%s3874 + $0x12] sm:$0xff]
      %v4541 = vld [vmem:[%s3874 + $0x22] sm:$0xff]
      %v4542 = vld [vmem:[%s3874 + $0x32] sm:$0xff]
      %v4543 = vld [vmem:[%s3874 + $0x42] sm:$0xff]
      %v4544 = vld [vmem:[%s3874 + $0x52] sm:$0xff]
      %v4545 = vld [vmem:[%s3874 + $0x62] sm:$0xff]
      %v4546 = vld [vmem:[%s3874 + $0x72] sm:$0xff]
      %v4547 = vld [vmem:[%s3874 + $0xb2] sm:$0xff]
      %v4548 = vld [vmem:[%s3874 + $0xc2] sm:$0xff]
      %v4549 = vld [vmem:[%s3874 + $0xd2] sm:$0xff]
      %v4550 = vld [vmem:[%s3874 + $0xe2] sm:$0xff]
      %v4551 = vld [vmem:[%s3874 + $0xf2] sm:$0xff]
      %v4552 = vld [vmem:[%s3874 + $0x102] sm:$0xff]
      %v4553 = vld [vmem:[%s3874 + $0x112] sm:$0xff]
      %v4554 = vld [vmem:[%s3874 + $0x122] sm:$0xff]
      %v4555 = vpack.c.bf16 %v4540, %v4539
      %v4556 = vpack.c.bf16 %v4542, %v4541
      %v4557 = vpack.c.bf16 %v4544, %v4543
      %v4558 = vpack.c.bf16 %v4546, %v4545
      %v4559 = vpack.c.bf16 %v4548, %v4547
      %v4560 = vpack.c.bf16 %v4550, %v4549
      %v4561 = vpack.c.bf16 %v4552, %v4551
      %v4562 = vpack.c.bf16 %v4554, %v4553
      %s4563 = scalar_lea.vmem %s234, 104
      %v4564 = vld [vmem:[%s4563] sm:$0xf]
      %v4566 = vsel %vm299, %v4555, 0
      %v4569 = vsel %vm299, %v4556, 0
      %v4572 = vsel %vm299, %v4557, 0
      %v4575 = vsel %vm299, %v4558, 0
      %v4578 = vsel %vm299, %v4559, 0
      %v4581 = vsel %vm299, %v4560, 0
      %v4584 = vsel %vm299, %v4561, 0
      %v4587 = vsel %vm299, %v4562, 0
      %v4590 = vsel %vm324, %v4564, 0
      %4592 = vmatprep.subr.bf16.mxu0 0
      %4593 = vmatpush1.bf16.msra.mxu0 %v4590
      %4594 = vmatprep.subr.bf16.mxu0 0
      %4595 = vmatpush1.bf16.msra.mxu0 0
      %4596 = vmatprep.subr.bf16.mxu0 0
      %4597 = vmatpush1.bf16.msra.mxu0 0
      %4598 = vmatprep.subr.bf16.mxu0 0
      %4599 = vmatpush1.bf16.msra.mxu0 0
      %4600 = vmatprep.subr.bf16.mxu0 0
      %4601 = vmatpush1.bf16.msra.mxu0 0
      %4602 = vmatprep.subr.bf16.mxu0 0
      %4603 = vmatpush1.bf16.msra.mxu0 0
      %4604 = vmatprep.subr.bf16.mxu0 0
      %4605 = vmatpush1.bf16.msra.mxu0 0
      %4606 = vmatprep.subr.bf16.mxu0 0
      %4607 = vmatpush1.bf16.msra.mxu0 0
      %4608 = vmatprep.subr.bf16.mxu0 0
      %4609 = vmatpush1.bf16.msra.mxu0 0
      %4610 = vmatprep.subr.bf16.mxu0 0
      %4611 = vmatpush1.bf16.msra.mxu0 0
      %4612 = vmatprep.subr.bf16.mxu0 0
      %4613 = vmatpush1.bf16.msra.mxu0 0
      %4614 = vmatprep.subr.bf16.mxu0 0
      %4615 = vmatpush1.bf16.msra.mxu0 0
      %4616 = vmatprep.subr.bf16.mxu0 0
      %4617 = vmatpush1.bf16.msra.mxu0 0
      %4618 = vmatprep.subr.bf16.mxu0 0
      %4619 = vmatpush1.bf16.msra.mxu0 0
      %4620 = vmatprep.subr.bf16.mxu0 0
      %4621 = vmatpush1.bf16.msra.mxu0 0
      %4622 = vmatprep.subr.bf16.mxu0 0
      %4623 = vmatpush1.bf16.msra.mxu0 0
      %4624 = vmatprep.mubr.bf16.mxu0 0
      %4625 = vmatmul.mubr.bf16.gmra.mrb[0].mxu0 %v4566
      %v4626 = vpop.f32.mrb[0].mxu0
      %v4627 = vadd.f32 0.0, %v4626
      %v4628 = vpop.f32.mrb[0].mxu0
      %v4629 = vpop.f32.mrb[0].mxu0
      %v4630 = vadd.f32 0.0, %v4629
      %v4631 = vpop.f32.mrb[0].mxu0
      %4632 = vmatprep.mubr.bf16.mxu0 0
      %4633 = vmatmul.mubr.bf16.gmra.mrb[0].mxu0 %v4569
      %v4634 = vpop.f32.mrb[0].mxu0
      %v4635 = vadd.f32 0.0, %v4634
      %v4636 = vpop.f32.mrb[0].mxu0
      %v4637 = vpop.f32.mrb[0].mxu0
      %v4638 = vadd.f32 0.0, %v4637
      %v4639 = vpop.f32.mrb[0].mxu0
      %4640 = vmatprep.mubr.bf16.mxu0 0
      %4641 = vmatmul.mubr.bf16.gmra.mrb[0].mxu0 %v4572
      %v4642 = vpop.f32.mrb[0].mxu0
      %v4643 = vadd.f32 0.0, %v4642
      %v4644 = vpop.f32.mrb[0].mxu0
      %v4645 = vpop.f32.mrb[0].mxu0
      %v4646 = vadd.f32 0.0, %v4645
      %v4647 = vpop.f32.mrb[0].mxu0
      %4648 = vmatprep.mubr.bf16.mxu0 0
      %4649 = vmatmul.mubr.bf16.gmra.mrb[0].mxu0 %v4575
      %v4650 = vpop.f32.mrb[0].mxu0
      %v4651 = vadd.f32 0.0, %v4650
      %v4652 = vpop.f32.mrb[0].mxu0
      %v4653 = vpop.f32.mrb[0].mxu0
      %v4654 = vadd.f32 0.0, %v4653
      %v4655 = vpop.f32.mrb[0].mxu0
      %4656 = vmatprep.mubr.bf16.mxu0 0
      %4657 = vmatmul.mubr.bf16.gmra.mrb[0].mxu0 %v4578
      %v4658 = vpop.f32.mrb[0].mxu0
      %v4659 = vadd.f32 0.0, %v4658
      %v4660 = vpop.f32.mrb[0].mxu0
      %v4661 = vpop.f32.mrb[0].mxu0
      %v4662 = vadd.f32 0.0, %v4661
      %v4663 = vpop.f32.mrb[0].mxu0
      %4664 = vmatprep.mubr.bf16.mxu0 0
      %4665 = vmatmul.mubr.bf16.gmra.mrb[0].mxu0 %v4581
      %v4666 = vpop.f32.mrb[0].mxu0
      %v4667 = vadd.f32 0.0, %v4666
      %v4668 = vpop.f32.mrb[0].mxu0
      %v4669 = vpop.f32.mrb[0].mxu0
      %v4670 = vadd.f32 0.0, %v4669
      %v4671 = vpop.f32.mrb[0].mxu0
      %4672 = vmatprep.mubr.bf16.mxu0 0
      %4673 = vmatmul.mubr.bf16.gmra.mrb[0].mxu0 %v4584
      %v4674 = vpop.f32.mrb[0].mxu0
      %v4675 = vadd.f32 0.0, %v4674
      %v4676 = vpop.f32.mrb[0].mxu0
      %v4677 = vpop.f32.mrb[0].mxu0
      %v4678 = vadd.f32 0.0, %v4677
      %v4679 = vpop.f32.mrb[0].mxu0
      %4680 = vmatprep.mubr.bf16.mxu0 0
      %4681 = vmatmul.mubr.bf16.gmra.mrb[0].mxu0 %v4587
      %v4682 = vpop.f32.mrb[0].mxu0
      %v4683 = vadd.f32 0.0, %v4682
      %v4684 = vpop.f32.mrb[0].mxu0
      %v4685 = vpop.f32.mrb[0].mxu0
      %v4686 = vadd.f32 0.0, %v4685
      %v4687 = vpop.f32.mrb[0].mxu0
      %4688 = vdwg.mxu0
      %v4689 = vadd.f32 %v4523, %v4627
      %v4690 = vadd.f32 %v4524, %v4630
      %v4691 = vadd.f32 %v4525, %v4635
      %v4692 = vadd.f32 %v4526, %v4638
      %v4693 = vadd.f32 %v4527, %v4643
      %v4694 = vadd.f32 %v4528, %v4646
      %v4695 = vadd.f32 %v4529, %v4651
      %v4696 = vadd.f32 %v4530, %v4654
      %v4697 = vadd.f32 %v4531, %v4659
      %v4698 = vadd.f32 %v4532, %v4662
      %v4699 = vadd.f32 %v4533, %v4667
      %v4700 = vadd.f32 %v4534, %v4670
      %v4701 = vadd.f32 %v4535, %v4675
      %v4702 = vadd.f32 %v4536, %v4678
      %v4703 = vadd.f32 %v4537, %v4683
      %v4704 = vadd.f32 %v4538, %v4686
      %v4705 = vld [vmem:[%s3707 + $0x3] sm:$0xff]
      %v4706 = vld [vmem:[%s3707 + $0x13] sm:$0xff]
      %v4707 = vld [vmem:[%s3707 + $0x23] sm:$0xff]
      %v4708 = vld [vmem:[%s3707 + $0x33] sm:$0xff]
      %v4709 = vld [vmem:[%s3707 + $0x43] sm:$0xff]
      %v4710 = vld [vmem:[%s3707 + $0x53] sm:$0xff]
      %v4711 = vld [vmem:[%s3707 + $0x63] sm:$0xff]
      %v4712 = vld [vmem:[%s3707 + $0x73] sm:$0xff]
      %v4713 = vld [vmem:[%s3707 + $0xb3] sm:$0xff]
      %v4714 = vld [vmem:[%s3707 + $0xc3] sm:$0xff]
      %v4715 = vld [vmem:[%s3707 + $0xd3] sm:$0xff]
      %v4716 = vld [vmem:[%s3707 + $0xe3] sm:$0xff]
      %v4717 = vld [vmem:[%s3707 + $0xf3] sm:$0xff]
      %v4718 = vld [vmem:[%s3707 + $0x103] sm:$0xff]
      %v4719 = vld [vmem:[%s3707 + $0x113] sm:$0xff]
      %v4720 = vld [vmem:[%s3707 + $0x123] sm:$0xff]
      %v4721 = vpack.c.bf16 %v4706, %v4705
      %v4722 = vpack.c.bf16 %v4708, %v4707
      %v4723 = vpack.c.bf16 %v4710, %v4709
      %v4724 = vpack.c.bf16 %v4712, %v4711
      %v4725 = vpack.c.bf16 %v4714, %v4713
      %v4726 = vpack.c.bf16 %v4716, %v4715
      %v4727 = vpack.c.bf16 %v4718, %v4717
      %v4728 = vpack.c.bf16 %v4720, %v4719
      %s4729 = scalar_lea.vmem %s234, 108
      %v4730 = vld [vmem:[%s4729] sm:$0xf]
      %v4732 = vsel %vm299, %v4721, 0
      %v4735 = vsel %vm299, %v4722, 0
      %v4738 = vsel %vm299, %v4723, 0
      %v4741 = vsel %vm299, %v4724, 0
      %v4744 = vsel %vm299, %v4725, 0
      %v4747 = vsel %vm299, %v4726, 0
      %v4750 = vsel %vm299, %v4727, 0
      %v4753 = vsel %vm299, %v4728, 0
      %v4756 = vsel %vm324, %v4730, 0
      %4758 = vmatprep.subr.bf16.mxu0 0
      %4759 = vmatpush1.bf16.msra.mxu0 %v4756
      %4760 = vmatprep.subr.bf16.mxu0 0
      %4761 = vmatpush1.bf16.msra.mxu0 0
      %4762 = vmatprep.subr.bf16.mxu0 0
      %4763 = vmatpush1.bf16.msra.mxu0 0
      %4764 = vmatprep.subr.bf16.mxu0 0
      %4765 = vmatpush1.bf16.msra.mxu0 0
      %4766 = vmatprep.subr.bf16.mxu0 0
      %4767 = vmatpush1.bf16.msra.mxu0 0
      %4768 = vmatprep.subr.bf16.mxu0 0
      %4769 = vmatpush1.bf16.msra.mxu0 0
      %4770 = vmatprep.subr.bf16.mxu0 0
      %4771 = vmatpush1.bf16.msra.mxu0 0
      %4772 = vmatprep.subr.bf16.mxu0 0
      %4773 = vmatpush1.bf16.msra.mxu0 0
      %4774 = vmatprep.subr.bf16.mxu0 0
      %4775 = vmatpush1.bf16.msra.mxu0 0
      %4776 = vmatprep.subr.bf16.mxu0 0
      %4777 = vmatpush1.bf16.msra.mxu0 0
      %4778 = vmatprep.subr.bf16.mxu0 0
      %4779 = vmatpush1.bf16.msra.mxu0 0
      %4780 = vmatprep.subr.bf16.mxu0 0
      %4781 = vmatpush1.bf16.msra.mxu0 0
      %4782 = vmatprep.subr.bf16.mxu0 0
      %4783 = vmatpush1.bf16.msra.mxu0 0
      %4784 = vmatprep.subr.bf16.mxu0 0
      %4785 = vmatpush1.bf16.msra.mxu0 0
      %4786 = vmatprep.subr.bf16.mxu0 0
      %4787 = vmatpush1.bf16.msra.mxu0 0
      %4788 = vmatprep.subr.bf16.mxu0 0
      %4789 = vmatpush1.bf16.msra.mxu0 0
      %4790 = vmatprep.mubr.bf16.mxu0 0
      %4791 = vmatmul.mubr.bf16.gmra.mrb[0].mxu0 %v4732
      %v4792 = vpop.f32.mrb[0].mxu0
      %v4793 = vadd.f32 0.0, %v4792
      %v4794 = vpop.f32.mrb[0].mxu0
      %v4795 = vpop.f32.mrb[0].mxu0
      %v4796 = vadd.f32 0.0, %v4795
      %v4797 = vpop.f32.mrb[0].mxu0
      %4798 = vmatprep.mubr.bf16.mxu0 0
      %4799 = vmatmul.mubr.bf16.gmra.mrb[0].mxu0 %v4735
      %v4800 = vpop.f32.mrb[0].mxu0
      %v4801 = vadd.f32 0.0, %v4800
      %v4802 = vpop.f32.mrb[0].mxu0
      %v4803 = vpop.f32.mrb[0].mxu0
      %v4804 = vadd.f32 0.0, %v4803
      %v4805 = vpop.f32.mrb[0].mxu0
      %4806 = vmatprep.mubr.bf16.mxu0 0
      %4807 = vmatmul.mubr.bf16.gmra.mrb[0].mxu0 %v4738
      %v4808 = vpop.f32.mrb[0].mxu0
      %v4809 = vadd.f32 0.0, %v4808
      %v4810 = vpop.f32.mrb[0].mxu0
      %v4811 = vpop.f32.mrb[0].mxu0
      %v4812 = vadd.f32 0.0, %v4811
      %v4813 = vpop.f32.mrb[0].mxu0
      %4814 = vmatprep.mubr.bf16.mxu0 0
      %4815 = vmatmul.mubr.bf16.gmra.mrb[0].mxu0 %v4741
      %v4816 = vpop.f32.mrb[0].mxu0
      %v4817 = vadd.f32 0.0, %v4816
      %v4818 = vpop.f32.mrb[0].mxu0
      %v4819 = vpop.f32.mrb[0].mxu0
      %v4820 = vadd.f32 0.0, %v4819
      %v4821 = vpop.f32.mrb[0].mxu0
      %4822 = vmatprep.mubr.bf16.mxu0 0
      %4823 = vmatmul.mubr.bf16.gmra.mrb[0].mxu0 %v4744
      %v4824 = vpop.f32.mrb[0].mxu0
      %v4825 = vadd.f32 0.0, %v4824
      %v4826 = vpop.f32.mrb[0].mxu0
      %v4827 = vpop.f32.mrb[0].mxu0
      %v4828 = vadd.f32 0.0, %v4827
      %v4829 = vpop.f32.mrb[0].mxu0
      %4830 = vmatprep.mubr.bf16.mxu0 0
      %4831 = vmatmul.mubr.bf16.gmra.mrb[0].mxu0 %v4747
      %v4832 = vpop.f32.mrb[0].mxu0
      %v4833 = vadd.f32 0.0, %v4832
      %v4834 = vpop.f32.mrb[0].mxu0
      %v4835 = vpop.f32.mrb[0].mxu0
      %v4836 = vadd.f32 0.0, %v4835
      %v4837 = vpop.f32.mrb[0].mxu0
      %4838 = vmatprep.mubr.bf16.mxu0 0
      %4839 = vmatmul.mubr.bf16.gmra.mrb[0].mxu0 %v4750
      %v4840 = vpop.f32.mrb[0].mxu0
      %v4841 = vadd.f32 0.0, %v4840
      %v4842 = vpop.f32.mrb[0].mxu0
      %v4843 = vpop.f32.mrb[0].mxu0
      %v4844 = vadd.f32 0.0, %v4843
      %v4845 = vpop.f32.mrb[0].mxu0
      %4846 = vmatprep.mubr.bf16.mxu0 0
      %4847 = vmatmul.mubr.bf16.gmra.mrb[0].mxu0 %v4753
      %v4848 = vpop.f32.mrb[0].mxu0
      %v4849 = vadd.f32 0.0, %v4848
      %v4850 = vpop.f32.mrb[0].mxu0
      %v4851 = vpop.f32.mrb[0].mxu0
      %v4852 = vadd.f32 0.0, %v4851
      %v4853 = vpop.f32.mrb[0].mxu0
      %4854 = vdwg.mxu0
      %v4855 = vadd.f32 %v4689, %v4793
      %v4856 = vadd.f32 %v4690, %v4796
      %v4857 = vadd.f32 %v4691, %v4801
      %v4858 = vadd.f32 %v4692, %v4804
      %v4859 = vadd.f32 %v4693, %v4809
      %v4860 = vadd.f32 %v4694, %v4812
      %v4861 = vadd.f32 %v4695, %v4817
      %v4862 = vadd.f32 %v4696, %v4820
      %v4863 = vadd.f32 %v4697, %v4825
      %v4864 = vadd.f32 %v4698, %v4828
      %v4865 = vadd.f32 %v4699, %v4833
      %v4866 = vadd.f32 %v4700, %v4836
      %v4867 = vadd.f32 %v4701, %v4841
      %v4868 = vadd.f32 %v4702, %v4844
      %v4869 = vadd.f32 %v4703, %v4849
      %v4870 = vadd.f32 %v4704, %v4852
      %s4871 = scalar_lea.vmem %s229, 32
      %v4872 = vld [vmem:[%s4871] sm:$0xff]
      %v4873 = vld [vmem:[%s4871 + $0x10] sm:$0xff]
      %v4874 = vld [vmem:[%s4871 + $0x20] sm:$0xff]
      %v4875 = vld [vmem:[%s4871 + $0x30] sm:$0xff]
      %v4876 = vld [vmem:[%s4871 + $0x40] sm:$0xff]
      %v4877 = vld [vmem:[%s4871 + $0x50] sm:$0xff]
      %v4878 = vld [vmem:[%s4871 + $0x60] sm:$0xff]
      %v4879 = vld [vmem:[%s4871 + $0x70] sm:$0xff]
      %v4880 = vld [vmem:[%s4871 + $0xb0] sm:$0xff]
      %v4881 = vld [vmem:[%s4871 + $0xc0] sm:$0xff]
      %v4882 = vld [vmem:[%s4871 + $0xd0] sm:$0xff]
      %v4883 = vld [vmem:[%s4871 + $0xe0] sm:$0xff]
      %v4884 = vld [vmem:[%s4871 + $0xf0] sm:$0xff]
      %v4885 = vld [vmem:[%s4871 + $0x100] sm:$0xff]
      %v4886 = vld [vmem:[%s4871 + $0x110] sm:$0xff]
      %v4887 = vld [vmem:[%s4871 + $0x120] sm:$0xff]
      %v4888 = vpack.c.bf16 %v4873, %v4872
      %v4889 = vpack.c.bf16 %v4875, %v4874
      %v4890 = vpack.c.bf16 %v4877, %v4876
      %v4891 = vpack.c.bf16 %v4879, %v4878
      %v4892 = vpack.c.bf16 %v4881, %v4880
      %v4893 = vpack.c.bf16 %v4883, %v4882
      %v4894 = vpack.c.bf16 %v4885, %v4884
      %v4895 = vpack.c.bf16 %v4887, %v4886
      %s4896 = scalar_lea.vmem %s234, 112
      %v4897 = vld [vmem:[%s4896] sm:$0xf]
      %v4899 = vsel %vm299, %v4888, 0
      %v4902 = vsel %vm299, %v4889, 0
      %v4905 = vsel %vm299, %v4890, 0
      %v4908 = vsel %vm299, %v4891, 0
      %v4911 = vsel %vm299, %v4892, 0
      %v4914 = vsel %vm299, %v4893, 0
      %v4917 = vsel %vm299, %v4894, 0
      %v4920 = vsel %vm299, %v4895, 0
      %v4923 = vsel %vm324, %v4897, 0
      %4925 = vmatprep.subr.bf16.mxu0 0
      %4926 = vmatpush1.bf16.msra.mxu0 %v4923
      %4927 = vmatprep.subr.bf16.mxu0 0
      %4928 = vmatpush1.bf16.msra.mxu0 0
      %4929 = vmatprep.subr.bf16.mxu0 0
      %4930 = vmatpush1.bf16.msra.mxu0 0
      %4931 = vmatprep.subr.bf16.mxu0 0
      %4932 = vmatpush1.bf16.msra.mxu0 0
      %4933 = vmatprep.subr.bf16.mxu0 0
      %4934 = vmatpush1.bf16.msra.mxu0 0
      %4935 = vmatprep.subr.bf16.mxu0 0
      %4936 = vmatpush1.bf16.msra.mxu0 0
      %4937 = vmatprep.subr.bf16.mxu0 0
      %4938 = vmatpush1.bf16.msra.mxu0 0
      %4939 = vmatprep.subr.bf16.mxu0 0
      %4940 = vmatpush1.bf16.msra.mxu0 0
      %4941 = vmatprep.subr.bf16.mxu0 0
      %4942 = vmatpush1.bf16.msra.mxu0 0
      %4943 = vmatprep.subr.bf16.mxu0 0
      %4944 = vmatpush1.bf16.msra.mxu0 0
      %4945 = vmatprep.subr.bf16.mxu0 0
      %4946 = vmatpush1.bf16.msra.mxu0 0
      %4947 = vmatprep.subr.bf16.mxu0 0
      %4948 = vmatpush1.bf16.msra.mxu0 0
      %4949 = vmatprep.subr.bf16.mxu0 0
      %4950 = vmatpush1.bf16.msra.mxu0 0
      %4951 = vmatprep.subr.bf16.mxu0 0
      %4952 = vmatpush1.bf16.msra.mxu0 0
      %4953 = vmatprep.subr.bf16.mxu0 0
      %4954 = vmatpush1.bf16.msra.mxu0 0
      %4955 = vmatprep.subr.bf16.mxu0 0
      %4956 = vmatpush1.bf16.msra.mxu0 0
      %4957 = vmatprep.mubr.bf16.mxu0 0
      %4958 = vmatmul.mubr.bf16.gmra.mrb[0].mxu0 %v4899
      %v4959 = vpop.f32.mrb[0].mxu0
      %v4960 = vadd.f32 0.0, %v4959
      %v4961 = vpop.f32.mrb[0].mxu0
      %v4962 = vpop.f32.mrb[0].mxu0
      %v4963 = vadd.f32 0.0, %v4962
      %v4964 = vpop.f32.mrb[0].mxu0
      %4965 = vmatprep.mubr.bf16.mxu0 0
      %4966 = vmatmul.mubr.bf16.gmra.mrb[0].mxu0 %v4902
      %v4967 = vpop.f32.mrb[0].mxu0
      %v4968 = vadd.f32 0.0, %v4967
      %v4969 = vpop.f32.mrb[0].mxu0
      %v4970 = vpop.f32.mrb[0].mxu0
      %v4971 = vadd.f32 0.0, %v4970
      %v4972 = vpop.f32.mrb[0].mxu0
      %4973 = vmatprep.mubr.bf16.mxu0 0
      %4974 = vmatmul.mubr.bf16.gmra.mrb[0].mxu0 %v4905
      %v4975 = vpop.f32.mrb[0].mxu0
      %v4976 = vadd.f32 0.0, %v4975
      %v4977 = vpop.f32.mrb[0].mxu0
      %v4978 = vpop.f32.mrb[0].mxu0
      %v4979 = vadd.f32 0.0, %v4978
      %v4980 = vpop.f32.mrb[0].mxu0
      %4981 = vmatprep.mubr.bf16.mxu0 0
      %4982 = vmatmul.mubr.bf16.gmra.mrb[0].mxu0 %v4908
      %v4983 = vpop.f32.mrb[0].mxu0
      %v4984 = vadd.f32 0.0, %v4983
      %v4985 = vpop.f32.mrb[0].mxu0
      %v4986 = vpop.f32.mrb[0].mxu0
      %v4987 = vadd.f32 0.0, %v4986
      %v4988 = vpop.f32.mrb[0].mxu0
      %4989 = vmatprep.mubr.bf16.mxu0 0
      %4990 = vmatmul.mubr.bf16.gmra.mrb[0].mxu0 %v4911
      %v4991 = vpop.f32.mrb[0].mxu0
      %v4992 = vadd.f32 0.0, %v4991
      %v4993 = vpop.f32.mrb[0].mxu0
      %v4994 = vpop.f32.mrb[0].mxu0
      %v4995 = vadd.f32 0.0, %v4994
      %v4996 = vpop.f32.mrb[0].mxu0
      %4997 = vmatprep.mubr.bf16.mxu0 0
      %4998 = vmatmul.mubr.bf16.gmra.mrb[0].mxu0 %v4914
      %v4999 = vpop.f32.mrb[0].mxu0
      %v5000 = vadd.f32 0.0, %v4999
      %v5001 = vpop.f32.mrb[0].mxu0
      %v5002 = vpop.f32.mrb[0].mxu0
      %v5003 = vadd.f32 0.0, %v5002
      %v5004 = vpop.f32.mrb[0].mxu0
      %5005 = vmatprep.mubr.bf16.mxu0 0
      %5006 = vmatmul.mubr.bf16.gmra.mrb[0].mxu0 %v4917
      %v5007 = vpop.f32.mrb[0].mxu0
      %v5008 = vadd.f32 0.0, %v5007
      %v5009 = vpop.f32.mrb[0].mxu0
      %v5010 = vpop.f32.mrb[0].mxu0
      %v5011 = vadd.f32 0.0, %v5010
      %v5012 = vpop.f32.mrb[0].mxu0
      %5013 = vmatprep.mubr.bf16.mxu0 0
      %5014 = vmatmul.mubr.bf16.gmra.mrb[0].mxu0 %v4920
      %v5015 = vpop.f32.mrb[0].mxu0
      %v5016 = vadd.f32 0.0, %v5015
      %v5017 = vpop.f32.mrb[0].mxu0
      %v5018 = vpop.f32.mrb[0].mxu0
      %v5019 = vadd.f32 0.0, %v5018
      %v5020 = vpop.f32.mrb[0].mxu0
      %5021 = vdwg.mxu0
      %v5022 = vadd.f32 %v4855, %v4960
      %v5023 = vadd.f32 %v4856, %v4963
      %v5024 = vadd.f32 %v4857, %v4968
      %v5025 = vadd.f32 %v4858, %v4971
      %v5026 = vadd.f32 %v4859, %v4976
      %v5027 = vadd.f32 %v4860, %v4979
      %v5028 = vadd.f32 %v4861, %v4984
      %v5029 = vadd.f32 %v4862, %v4987
      %v5030 = vadd.f32 %v4863, %v4992
      %v5031 = vadd.f32 %v4864, %v4995
      %v5032 = vadd.f32 %v4865, %v5000
      %v5033 = vadd.f32 %v4866, %v5003
      %v5034 = vadd.f32 %v4867, %v5008
      %v5035 = vadd.f32 %v4868, %v5011
      %v5036 = vadd.f32 %v4869, %v5016
      %v5037 = vadd.f32 %v4870, %v5019
      %s5038 = scalar_lea.vmem %s229, 384
      %v5039 = vld [vmem:[%s5038] sm:$0xff]
      %v5040 = vld [vmem:[%s5038 + $0x10] sm:$0xff]
      %v5041 = vld [vmem:[%s5038 + $0x20] sm:$0xff]
      %v5042 = vld [vmem:[%s5038 + $0x30] sm:$0xff]
      %v5043 = vld [vmem:[%s5038 + $0x40] sm:$0xff]
      %v5044 = vld [vmem:[%s5038 + $0x50] sm:$0xff]
      %v5045 = vld [vmem:[%s5038 + $0x60] sm:$0xff]
      %v5046 = vld [vmem:[%s5038 + $0x70] sm:$0xff]
      %v5047 = vld [vmem:[%s5038 + $0xb0] sm:$0xff]
      %v5048 = vld [vmem:[%s5038 + $0xc0] sm:$0xff]
      %v5049 = vld [vmem:[%s5038 + $0xd0] sm:$0xff]
      %v5050 = vld [vmem:[%s5038 + $0xe0] sm:$0xff]
      %v5051 = vld [vmem:[%s5038 + $0xf0] sm:$0xff]
      %v5052 = vld [vmem:[%s5038 + $0x100] sm:$0xff]
      %v5053 = vld [vmem:[%s5038 + $0x110] sm:$0xff]
      %v5054 = vld [vmem:[%s5038 + $0x120] sm:$0xff]
      %v5055 = vpack.c.bf16 %v5040, %v5039
      %v5056 = vpack.c.bf16 %v5042, %v5041
      %v5057 = vpack.c.bf16 %v5044, %v5043
      %v5058 = vpack.c.bf16 %v5046, %v5045
      %v5059 = vpack.c.bf16 %v5048, %v5047
      %v5060 = vpack.c.bf16 %v5050, %v5049
      %v5061 = vpack.c.bf16 %v5052, %v5051
      %v5062 = vpack.c.bf16 %v5054, %v5053
      %s5063 = scalar_lea.vmem %s234, 116
      %v5064 = vld [vmem:[%s5063] sm:$0xf]
      %v5066 = vsel %vm299, %v5055, 0
      %v5069 = vsel %vm299, %v5056, 0
      %v5072 = vsel %vm299, %v5057, 0
      %v5075 = vsel %vm299, %v5058, 0
      %v5078 = vsel %vm299, %v5059, 0
      %v5081 = vsel %vm299, %v5060, 0
      %v5084 = vsel %vm299, %v5061, 0
      %v5087 = vsel %vm299, %v5062, 0
      %v5090 = vsel %vm324, %v5064, 0
      %5092 = vmatprep.subr.bf16.mxu0 0
      %5093 = vmatpush1.bf16.msra.mxu0 %v5090
      %5094 = vmatprep.subr.bf16.mxu0 0
      %5095 = vmatpush1.bf16.msra.mxu0 0
      %5096 = vmatprep.subr.bf16.mxu0 0
      %5097 = vmatpush1.bf16.msra.mxu0 0
      %5098 = vmatprep.subr.bf16.mxu0 0
      %5099 = vmatpush1.bf16.msra.mxu0 0
      %5100 = vmatprep.subr.bf16.mxu0 0
      %5101 = vmatpush1.bf16.msra.mxu0 0
      %5102 = vmatprep.subr.bf16.mxu0 0
      %5103 = vmatpush1.bf16.msra.mxu0 0
      %5104 = vmatprep.subr.bf16.mxu0 0
      %5105 = vmatpush1.bf16.msra.mxu0 0
      %5106 = vmatprep.subr.bf16.mxu0 0
      %5107 = vmatpush1.bf16.msra.mxu0 0
      %5108 = vmatprep.subr.bf16.mxu0 0
      %5109 = vmatpush1.bf16.msra.mxu0 0
      %5110 = vmatprep.subr.bf16.mxu0 0
      %5111 = vmatpush1.bf16.msra.mxu0 0
      %5112 = vmatprep.subr.bf16.mxu0 0
      %5113 = vmatpush1.bf16.msra.mxu0 0
      %5114 = vmatprep.subr.bf16.mxu0 0
      %5115 = vmatpush1.bf16.msra.mxu0 0
      %5116 = vmatprep.subr.bf16.mxu0 0
      %5117 = vmatpush1.bf16.msra.mxu0 0
      %5118 = vmatprep.subr.bf16.mxu0 0
      %5119 = vmatpush1.bf16.msra.mxu0 0
      %5120 = vmatprep.subr.bf16.mxu0 0
      %5121 = vmatpush1.bf16.msra.mxu0 0
      %5122 = vmatprep.subr.bf16.mxu0 0
      %5123 = vmatpush1.bf16.msra.mxu0 0
      %5124 = vmatprep.mubr.bf16.mxu0 0
      %5125 = vmatmul.mubr.bf16.gmra.mrb[0].mxu0 %v5066
      %v5126 = vpop.f32.mrb[0].mxu0
      %v5127 = vadd.f32 0.0, %v5126
      %v5128 = vpop.f32.mrb[0].mxu0
      %v5129 = vpop.f32.mrb[0].mxu0
      %v5130 = vadd.f32 0.0, %v5129
      %v5131 = vpop.f32.mrb[0].mxu0
      %5132 = vmatprep.mubr.bf16.mxu0 0
      %5133 = vmatmul.mubr.bf16.gmra.mrb[0].mxu0 %v5069
      %v5134 = vpop.f32.mrb[0].mxu0
      %v5135 = vadd.f32 0.0, %v5134
      %v5136 = vpop.f32.mrb[0].mxu0
      %v5137 = vpop.f32.mrb[0].mxu0
      %v5138 = vadd.f32 0.0, %v5137
      %v5139 = vpop.f32.mrb[0].mxu0
      %5140 = vmatprep.mubr.bf16.mxu0 0
      %5141 = vmatmul.mubr.bf16.gmra.mrb[0].mxu0 %v5072
      %v5142 = vpop.f32.mrb[0].mxu0
      %v5143 = vadd.f32 0.0, %v5142
      %v5144 = vpop.f32.mrb[0].mxu0
      %v5145 = vpop.f32.mrb[0].mxu0
      %v5146 = vadd.f32 0.0, %v5145
      %v5147 = vpop.f32.mrb[0].mxu0
      %5148 = vmatprep.mubr.bf16.mxu0 0
      %5149 = vmatmul.mubr.bf16.gmra.mrb[0].mxu0 %v5075
      %v5150 = vpop.f32.mrb[0].mxu0
      %v5151 = vadd.f32 0.0, %v5150
      %v5152 = vpop.f32.mrb[0].mxu0
      %v5153 = vpop.f32.mrb[0].mxu0
      %v5154 = vadd.f32 0.0, %v5153
      %v5155 = vpop.f32.mrb[0].mxu0
      %5156 = vmatprep.mubr.bf16.mxu0 0
      %5157 = vmatmul.mubr.bf16.gmra.mrb[0].mxu0 %v5078
      %v5158 = vpop.f32.mrb[0].mxu0
      %v5159 = vadd.f32 0.0, %v5158
      %v5160 = vpop.f32.mrb[0].mxu0
      %v5161 = vpop.f32.mrb[0].mxu0
      %v5162 = vadd.f32 0.0, %v5161
      %v5163 = vpop.f32.mrb[0].mxu0
      %5164 = vmatprep.mubr.bf16.mxu0 0
      %5165 = vmatmul.mubr.bf16.gmra.mrb[0].mxu0 %v5081
      %v5166 = vpop.f32.mrb[0].mxu0
      %v5167 = vadd.f32 0.0, %v5166
      %v5168 = vpop.f32.mrb[0].mxu0
      %v5169 = vpop.f32.mrb[0].mxu0
      %v5170 = vadd.f32 0.0, %v5169
      %v5171 = vpop.f32.mrb[0].mxu0
      %5172 = vmatprep.mubr.bf16.mxu0 0
      %5173 = vmatmul.mubr.bf16.gmra.mrb[0].mxu0 %v5084
      %v5174 = vpop.f32.mrb[0].mxu0
      %v5175 = vadd.f32 0.0, %v5174
      %v5176 = vpop.f32.mrb[0].mxu0
      %v5177 = vpop.f32.mrb[0].mxu0
      %v5178 = vadd.f32 0.0, %v5177
      %v5179 = vpop.f32.mrb[0].mxu0
      %5180 = vmatprep.mubr.bf16.mxu0 0
      %5181 = vmatmul.mubr.bf16.gmra.mrb[0].mxu0 %v5087
      %v5182 = vpop.f32.mrb[0].mxu0
      %v5183 = vadd.f32 0.0, %v5182
      %v5184 = vpop.f32.mrb[0].mxu0
      %v5185 = vpop.f32.mrb[0].mxu0
      %v5186 = vadd.f32 0.0, %v5185
      %v5187 = vpop.f32.mrb[0].mxu0
      %5188 = vdwg.mxu0
      %v5189 = vadd.f32 %v5022, %v5127
      %v5190 = vadd.f32 %v5023, %v5130
      %v5191 = vadd.f32 %v5024, %v5135
      %v5192 = vadd.f32 %v5025, %v5138
      %v5193 = vadd.f32 %v5026, %v5143
      %v5194 = vadd.f32 %v5027, %v5146
      %v5195 = vadd.f32 %v5028, %v5151
      %v5196 = vadd.f32 %v5029, %v5154
      %v5197 = vadd.f32 %v5030, %v5159
      %v5198 = vadd.f32 %v5031, %v5162
      %v5199 = vadd.f32 %v5032, %v5167
      %v5200 = vadd.f32 %v5033, %v5170
      %v5201 = vadd.f32 %v5034, %v5175
      %v5202 = vadd.f32 %v5035, %v5178
      %v5203 = vadd.f32 %v5036, %v5183
      %v5204 = vadd.f32 %v5037, %v5186
      %v5205 = vld [vmem:[%s4871 + $0x1] sm:$0xff]
      %v5206 = vld [vmem:[%s4871 + $0x11] sm:$0xff]
      %v5207 = vld [vmem:[%s4871 + $0x21] sm:$0xff]
      %v5208 = vld [vmem:[%s4871 + $0x31] sm:$0xff]
      %v5209 = vld [vmem:[%s4871 + $0x41] sm:$0xff]
      %v5210 = vld [vmem:[%s4871 + $0x51] sm:$0xff]
      %v5211 = vld [vmem:[%s4871 + $0x61] sm:$0xff]
      %v5212 = vld [vmem:[%s4871 + $0x71] sm:$0xff]
      %v5213 = vld [vmem:[%s4871 + $0xb1] sm:$0xff]
      %v5214 = vld [vmem:[%s4871 + $0xc1] sm:$0xff]
      %v5215 = vld [vmem:[%s4871 + $0xd1] sm:$0xff]
      %v5216 = vld [vmem:[%s4871 + $0xe1] sm:$0xff]
      %v5217 = vld [vmem:[%s4871 + $0xf1] sm:$0xff]
      %v5218 = vld [vmem:[%s4871 + $0x101] sm:$0xff]
      %v5219 = vld [vmem:[%s4871 + $0x111] sm:$0xff]
      %v5220 = vld [vmem:[%s4871 + $0x121] sm:$0xff]
      %v5221 = vpack.c.bf16 %v5206, %v5205
      %v5222 = vpack.c.bf16 %v5208, %v5207
      %v5223 = vpack.c.bf16 %v5210, %v5209
      %v5224 = vpack.c.bf16 %v5212, %v5211
      %v5225 = vpack.c.bf16 %v5214, %v5213
      %v5226 = vpack.c.bf16 %v5216, %v5215
      %v5227 = vpack.c.bf16 %v5218, %v5217
      %v5228 = vpack.c.bf16 %v5220, %v5219
      %s5229 = scalar_lea.vmem %s234, 120
      %v5230 = vld [vmem:[%s5229] sm:$0xf]
      %v5232 = vsel %vm299, %v5221, 0
      %v5235 = vsel %vm299, %v5222, 0
      %v5238 = vsel %vm299, %v5223, 0
      %v5241 = vsel %vm299, %v5224, 0
      %v5244 = vsel %vm299, %v5225, 0
      %v5247 = vsel %vm299, %v5226, 0
      %v5250 = vsel %vm299, %v5227, 0
      %v5253 = vsel %vm299, %v5228, 0
      %v5256 = vsel %vm324, %v5230, 0
      %5258 = vmatprep.subr.bf16.mxu0 0
      %5259 = vmatpush1.bf16.msra.mxu0 %v5256
      %5260 = vmatprep.subr.bf16.mxu0 0
      %5261 = vmatpush1.bf16.msra.mxu0 0
      %5262 = vmatprep.subr.bf16.mxu0 0
      %5263 = vmatpush1.bf16.msra.mxu0 0
      %5264 = vmatprep.subr.bf16.mxu0 0
      %5265 = vmatpush1.bf16.msra.mxu0 0
      %5266 = vmatprep.subr.bf16.mxu0 0
      %5267 = vmatpush1.bf16.msra.mxu0 0
      %5268 = vmatprep.subr.bf16.mxu0 0
      %5269 = vmatpush1.bf16.msra.mxu0 0
      %5270 = vmatprep.subr.bf16.mxu0 0
      %5271 = vmatpush1.bf16.msra.mxu0 0
      %5272 = vmatprep.subr.bf16.mxu0 0
      %5273 = vmatpush1.bf16.msra.mxu0 0
      %5274 = vmatprep.subr.bf16.mxu0 0
      %5275 = vmatpush1.bf16.msra.mxu0 0
      %5276 = vmatprep.subr.bf16.mxu0 0
      %5277 = vmatpush1.bf16.msra.mxu0 0
      %5278 = vmatprep.subr.bf16.mxu0 0
      %5279 = vmatpush1.bf16.msra.mxu0 0
      %5280 = vmatprep.subr.bf16.mxu0 0
      %5281 = vmatpush1.bf16.msra.mxu0 0
      %5282 = vmatprep.subr.bf16.mxu0 0
      %5283 = vmatpush1.bf16.msra.mxu0 0
      %5284 = vmatprep.subr.bf16.mxu0 0
      %5285 = vmatpush1.bf16.msra.mxu0 0
      %5286 = vmatprep.subr.bf16.mxu0 0
      %5287 = vmatpush1.bf16.msra.mxu0 0
      %5288 = vmatprep.subr.bf16.mxu0 0
      %5289 = vmatpush1.bf16.msra.mxu0 0
      %5290 = vmatprep.mubr.bf16.mxu0 0
      %5291 = vmatmul.mubr.bf16.gmra.mrb[0].mxu0 %v5232
      %v5292 = vpop.f32.mrb[0].mxu0
      %v5293 = vadd.f32 0.0, %v5292
      %v5294 = vpop.f32.mrb[0].mxu0
      %v5295 = vpop.f32.mrb[0].mxu0
      %v5296 = vadd.f32 0.0, %v5295
      %v5297 = vpop.f32.mrb[0].mxu0
      %5298 = vmatprep.mubr.bf16.mxu0 0
      %5299 = vmatmul.mubr.bf16.gmra.mrb[0].mxu0 %v5235
      %v5300 = vpop.f32.mrb[0].mxu0
      %v5301 = vadd.f32 0.0, %v5300
      %v5302 = vpop.f32.mrb[0].mxu0
      %v5303 = vpop.f32.mrb[0].mxu0
      %v5304 = vadd.f32 0.0, %v5303
      %v5305 = vpop.f32.mrb[0].mxu0
      %5306 = vmatprep.mubr.bf16.mxu0 0
      %5307 = vmatmul.mubr.bf16.gmra.mrb[0].mxu0 %v5238
      %v5308 = vpop.f32.mrb[0].mxu0
      %v5309 = vadd.f32 0.0, %v5308
      %v5310 = vpop.f32.mrb[0].mxu0
      %v5311 = vpop.f32.mrb[0].mxu0
      %v5312 = vadd.f32 0.0, %v5311
      %v5313 = vpop.f32.mrb[0].mxu0
      %5314 = vmatprep.mubr.bf16.mxu0 0
      %5315 = vmatmul.mubr.bf16.gmra.mrb[0].mxu0 %v5241
      %v5316 = vpop.f32.mrb[0].mxu0
      %v5317 = vadd.f32 0.0, %v5316
      %v5318 = vpop.f32.mrb[0].mxu0
      %v5319 = vpop.f32.mrb[0].mxu0
      %v5320 = vadd.f32 0.0, %v5319
      %v5321 = vpop.f32.mrb[0].mxu0
      %5322 = vmatprep.mubr.bf16.mxu0 0
      %5323 = vmatmul.mubr.bf16.gmra.mrb[0].mxu0 %v5244
      %v5324 = vpop.f32.mrb[0].mxu0
      %v5325 = vadd.f32 0.0, %v5324
      %v5326 = vpop.f32.mrb[0].mxu0
      %v5327 = vpop.f32.mrb[0].mxu0
      %v5328 = vadd.f32 0.0, %v5327
      %v5329 = vpop.f32.mrb[0].mxu0
      %5330 = vmatprep.mubr.bf16.mxu0 0
      %5331 = vmatmul.mubr.bf16.gmra.mrb[0].mxu0 %v5247
      %v5332 = vpop.f32.mrb[0].mxu0
      %v5333 = vadd.f32 0.0, %v5332
      %v5334 = vpop.f32.mrb[0].mxu0
      %v5335 = vpop.f32.mrb[0].mxu0
      %v5336 = vadd.f32 0.0, %v5335
      %v5337 = vpop.f32.mrb[0].mxu0
      %5338 = vmatprep.mubr.bf16.mxu0 0
      %5339 = vmatmul.mubr.bf16.gmra.mrb[0].mxu0 %v5250
      %v5340 = vpop.f32.mrb[0].mxu0
      %v5341 = vadd.f32 0.0, %v5340
      %v5342 = vpop.f32.mrb[0].mxu0
      %v5343 = vpop.f32.mrb[0].mxu0
      %v5344 = vadd.f32 0.0, %v5343
      %v5345 = vpop.f32.mrb[0].mxu0
      %5346 = vmatprep.mubr.bf16.mxu0 0
      %5347 = vmatmul.mubr.bf16.gmra.mrb[0].mxu0 %v5253
      %v5348 = vpop.f32.mrb[0].mxu0
      %v5349 = vadd.f32 0.0, %v5348
      %v5350 = vpop.f32.mrb[0].mxu0
      %v5351 = vpop.f32.mrb[0].mxu0
      %v5352 = vadd.f32 0.0, %v5351
      %v5353 = vpop.f32.mrb[0].mxu0
      %5354 = vdwg.mxu0
      %v5355 = vadd.f32 %v5189, %v5293
      %v5356 = vadd.f32 %v5190, %v5296
      %v5357 = vadd.f32 %v5191, %v5301
      %v5358 = vadd.f32 %v5192, %v5304
      %v5359 = vadd.f32 %v5193, %v5309
      %v5360 = vadd.f32 %v5194, %v5312
      %v5361 = vadd.f32 %v5195, %v5317
      %v5362 = vadd.f32 %v5196, %v5320
      %v5363 = vadd.f32 %v5197, %v5325
      %v5364 = vadd.f32 %v5198, %v5328
      %v5365 = vadd.f32 %v5199, %v5333
      %v5366 = vadd.f32 %v5200, %v5336
      %v5367 = vadd.f32 %v5201, %v5341
      %v5368 = vadd.f32 %v5202, %v5344
      %v5369 = vadd.f32 %v5203, %v5349
      %v5370 = vadd.f32 %v5204, %v5352
      %v5371 = vld [vmem:[%s5038 + $0x1] sm:$0xff]
      %v5372 = vld [vmem:[%s5038 + $0x11] sm:$0xff]
      %v5373 = vld [vmem:[%s5038 + $0x21] sm:$0xff]
      %v5374 = vld [vmem:[%s5038 + $0x31] sm:$0xff]
      %v5375 = vld [vmem:[%s5038 + $0x41] sm:$0xff]
      %v5376 = vld [vmem:[%s5038 + $0x51] sm:$0xff]
      %v5377 = vld [vmem:[%s5038 + $0x61] sm:$0xff]
      %v5378 = vld [vmem:[%s5038 + $0x71] sm:$0xff]
      %v5379 = vld [vmem:[%s5038 + $0xb1] sm:$0xff]
      %v5380 = vld [vmem:[%s5038 + $0xc1] sm:$0xff]
      %v5381 = vld [vmem:[%s5038 + $0xd1] sm:$0xff]
      %v5382 = vld [vmem:[%s5038 + $0xe1] sm:$0xff]
      %v5383 = vld [vmem:[%s5038 + $0xf1] sm:$0xff]
      %v5384 = vld [vmem:[%s5038 + $0x101] sm:$0xff]
      %v5385 = vld [vmem:[%s5038 + $0x111] sm:$0xff]
      %v5386 = vld [vmem:[%s5038 + $0x121] sm:$0xff]
      %v5387 = vpack.c.bf16 %v5372, %v5371
      %v5388 = vpack.c.bf16 %v5374, %v5373
      %v5389 = vpack.c.bf16 %v5376, %v5375
      %v5390 = vpack.c.bf16 %v5378, %v5377
      %v5391 = vpack.c.bf16 %v5380, %v5379
      %v5392 = vpack.c.bf16 %v5382, %v5381
      %v5393 = vpack.c.bf16 %v5384, %v5383
      %v5394 = vpack.c.bf16 %v5386, %v5385
      %s5395 = scalar_lea.vmem %s234, 124
      %v5396 = vld [vmem:[%s5395] sm:$0xf]
      %v5398 = vsel %vm299, %v5387, 0
      %v5401 = vsel %vm299, %v5388, 0
      %v5404 = vsel %vm299, %v5389, 0
      %v5407 = vsel %vm299, %v5390, 0
      %v5410 = vsel %vm299, %v5391, 0
      %v5413 = vsel %vm299, %v5392, 0
      %v5416 = vsel %vm299, %v5393, 0
      %v5419 = vsel %vm299, %v5394, 0
      %v5422 = vsel %vm324, %v5396, 0
      %5424 = vmatprep.subr.bf16.mxu0 0
      %5425 = vmatpush1.bf16.msra.mxu0 %v5422
      %5426 = vmatprep.subr.bf16.mxu0 0
      %5427 = vmatpush1.bf16.msra.mxu0 0
      %5428 = vmatprep.subr.bf16.mxu0 0
      %5429 = vmatpush1.bf16.msra.mxu0 0
      %5430 = vmatprep.subr.bf16.mxu0 0
      %5431 = vmatpush1.bf16.msra.mxu0 0
      %5432 = vmatprep.subr.bf16.mxu0 0
      %5433 = vmatpush1.bf16.msra.mxu0 0
      %5434 = vmatprep.subr.bf16.mxu0 0
      %5435 = vmatpush1.bf16.msra.mxu0 0
      %5436 = vmatprep.subr.bf16.mxu0 0
      %5437 = vmatpush1.bf16.msra.mxu0 0
      %5438 = vmatprep.subr.bf16.mxu0 0
      %5439 = vmatpush1.bf16.msra.mxu0 0
      %5440 = vmatprep.subr.bf16.mxu0 0
      %5441 = vmatpush1.bf16.msra.mxu0 0
      %5442 = vmatprep.subr.bf16.mxu0 0
      %5443 = vmatpush1.bf16.msra.mxu0 0
      %5444 = vmatprep.subr.bf16.mxu0 0
      %5445 = vmatpush1.bf16.msra.mxu0 0
      %5446 = vmatprep.subr.bf16.mxu0 0
      %5447 = vmatpush1.bf16.msra.mxu0 0
      %5448 = vmatprep.subr.bf16.mxu0 0
      %5449 = vmatpush1.bf16.msra.mxu0 0
      %5450 = vmatprep.subr.bf16.mxu0 0
      %5451 = vmatpush1.bf16.msra.mxu0 0
      %5452 = vmatprep.subr.bf16.mxu0 0
      %5453 = vmatpush1.bf16.msra.mxu0 0
      %5454 = vmatprep.subr.bf16.mxu0 0
      %5455 = vmatpush1.bf16.msra.mxu0 0
      %5456 = vmatprep.mubr.bf16.mxu0 0
      %5457 = vmatmul.mubr.bf16.gmra.mrb[0].mxu0 %v5398
      %v5458 = vpop.f32.mrb[0].mxu0
      %v5459 = vadd.f32 0.0, %v5458
      %v5460 = vpop.f32.mrb[0].mxu0
      %v5461 = vpop.f32.mrb[0].mxu0
      %v5462 = vadd.f32 0.0, %v5461
      %v5463 = vpop.f32.mrb[0].mxu0
      %5464 = vmatprep.mubr.bf16.mxu0 0
      %5465 = vmatmul.mubr.bf16.gmra.mrb[0].mxu0 %v5401
      %v5466 = vpop.f32.mrb[0].mxu0
      %v5467 = vadd.f32 0.0, %v5466
      %v5468 = vpop.f32.mrb[0].mxu0
      %v5469 = vpop.f32.mrb[0].mxu0
      %v5470 = vadd.f32 0.0, %v5469
      %v5471 = vpop.f32.mrb[0].mxu0
      %5472 = vmatprep.mubr.bf16.mxu0 0
      %5473 = vmatmul.mubr.bf16.gmra.mrb[0].mxu0 %v5404
      %v5474 = vpop.f32.mrb[0].mxu0
      %v5475 = vadd.f32 0.0, %v5474
      %v5476 = vpop.f32.mrb[0].mxu0
      %v5477 = vpop.f32.mrb[0].mxu0
      %v5478 = vadd.f32 0.0, %v5477
      %v5479 = vpop.f32.mrb[0].mxu0
      %5480 = vmatprep.mubr.bf16.mxu0 0
      %5481 = vmatmul.mubr.bf16.gmra.mrb[0].mxu0 %v5407
      %v5482 = vpop.f32.mrb[0].mxu0
      %v5483 = vadd.f32 0.0, %v5482
      %v5484 = vpop.f32.mrb[0].mxu0
      %v5485 = vpop.f32.mrb[0].mxu0
      %v5486 = vadd.f32 0.0, %v5485
      %v5487 = vpop.f32.mrb[0].mxu0
      %5488 = vmatprep.mubr.bf16.mxu0 0
      %5489 = vmatmul.mubr.bf16.gmra.mrb[0].mxu0 %v5410
      %v5490 = vpop.f32.mrb[0].mxu0
      %v5491 = vadd.f32 0.0, %v5490
      %v5492 = vpop.f32.mrb[0].mxu0
      %v5493 = vpop.f32.mrb[0].mxu0
      %v5494 = vadd.f32 0.0, %v5493
      %v5495 = vpop.f32.mrb[0].mxu0
      %5496 = vmatprep.mubr.bf16.mxu0 0
      %5497 = vmatmul.mubr.bf16.gmra.mrb[0].mxu0 %v5413
      %v5498 = vpop.f32.mrb[0].mxu0
      %v5499 = vadd.f32 0.0, %v5498
      %v5500 = vpop.f32.mrb[0].mxu0
      %v5501 = vpop.f32.mrb[0].mxu0
      %v5502 = vadd.f32 0.0, %v5501
      %v5503 = vpop.f32.mrb[0].mxu0
      %5504 = vmatprep.mubr.bf16.mxu0 0
      %5505 = vmatmul.mubr.bf16.gmra.mrb[0].mxu0 %v5416
      %v5506 = vpop.f32.mrb[0].mxu0
      %v5507 = vadd.f32 0.0, %v5506
      %v5508 = vpop.f32.mrb[0].mxu0
      %v5509 = vpop.f32.mrb[0].mxu0
      %v5510 = vadd.f32 0.0, %v5509
      %v5511 = vpop.f32.mrb[0].mxu0
      %5512 = vmatprep.mubr.bf16.mxu0 0
      %5513 = vmatmul.mubr.bf16.gmra.mrb[0].mxu0 %v5419
      %v5514 = vpop.f32.mrb[0].mxu0
      %v5515 = vadd.f32 0.0, %v5514
      %v5516 = vpop.f32.mrb[0].mxu0
      %v5517 = vpop.f32.mrb[0].mxu0
      %v5518 = vadd.f32 0.0, %v5517
      %v5519 = vpop.f32.mrb[0].mxu0
      %5520 = vdwg.mxu0
      %v5521 = vadd.f32 %v5355, %v5459
      %v5522 = vadd.f32 %v5356, %v5462
      %v5523 = vadd.f32 %v5357, %v5467
      %v5524 = vadd.f32 %v5358, %v5470
      %v5525 = vadd.f32 %v5359, %v5475
      %v5526 = vadd.f32 %v5360, %v5478
      %v5527 = vadd.f32 %v5361, %v5483
      %v5528 = vadd.f32 %v5362, %v5486
      %v5529 = vadd.f32 %v5363, %v5491
      %v5530 = vadd.f32 %v5364, %v5494
      %v5531 = vadd.f32 %v5365, %v5499
      %v5532 = vadd.f32 %v5366, %v5502
      %v5533 = vadd.f32 %v5367, %v5507
      %v5534 = vadd.f32 %v5368, %v5510
      %v5535 = vadd.f32 %v5369, %v5515
      %v5536 = vadd.f32 %v5370, %v5518
      %v5537 = vld [vmem:[%s4871 + $0x2] sm:$0xff]
      %v5538 = vld [vmem:[%s4871 + $0x12] sm:$0xff]
      %v5539 = vld [vmem:[%s4871 + $0x22] sm:$0xff]
      %v5540 = vld [vmem:[%s4871 + $0x32] sm:$0xff]
      %v5541 = vld [vmem:[%s4871 + $0x42] sm:$0xff]
      %v5542 = vld [vmem:[%s4871 + $0x52] sm:$0xff]
      %v5543 = vld [vmem:[%s4871 + $0x62] sm:$0xff]
      %v5544 = vld [vmem:[%s4871 + $0x72] sm:$0xff]
      %v5545 = vld [vmem:[%s4871 + $0xb2] sm:$0xff]
      %v5546 = vld [vmem:[%s4871 + $0xc2] sm:$0xff]
      %v5547 = vld [vmem:[%s4871 + $0xd2] sm:$0xff]
      %v5548 = vld [vmem:[%s4871 + $0xe2] sm:$0xff]
      %v5549 = vld [vmem:[%s4871 + $0xf2] sm:$0xff]
      %v5550 = vld [vmem:[%s4871 + $0x102] sm:$0xff]
      %v5551 = vld [vmem:[%s4871 + $0x112] sm:$0xff]
      %v5552 = vld [vmem:[%s4871 + $0x122] sm:$0xff]
      %v5553 = vpack.c.bf16 %v5538, %v5537
      %v5554 = vpack.c.bf16 %v5540, %v5539
      %v5555 = vpack.c.bf16 %v5542, %v5541
      %v5556 = vpack.c.bf16 %v5544, %v5543
      %v5557 = vpack.c.bf16 %v5546, %v5545
      %v5558 = vpack.c.bf16 %v5548, %v5547
      %v5559 = vpack.c.bf16 %v5550, %v5549
      %v5560 = vpack.c.bf16 %v5552, %v5551
      %s5561 = scalar_lea.vmem %s234, 128
      %v5562 = vld [vmem:[%s5561] sm:$0xf]
      %v5564 = vsel %vm299, %v5553, 0
      %v5567 = vsel %vm299, %v5554, 0
      %v5570 = vsel %vm299, %v5555, 0
      %v5573 = vsel %vm299, %v5556, 0
      %v5576 = vsel %vm299, %v5557, 0
      %v5579 = vsel %vm299, %v5558, 0
      %v5582 = vsel %vm299, %v5559, 0
      %v5585 = vsel %vm299, %v5560, 0
      %v5588 = vsel %vm324, %v5562, 0
      %5590 = vmatprep.subr.bf16.mxu0 0
      %5591 = vmatpush1.bf16.msra.mxu0 %v5588
      %5592 = vmatprep.subr.bf16.mxu0 0
      %5593 = vmatpush1.bf16.msra.mxu0 0
      %5594 = vmatprep.subr.bf16.mxu0 0
      %5595 = vmatpush1.bf16.msra.mxu0 0
      %5596 = vmatprep.subr.bf16.mxu0 0
      %5597 = vmatpush1.bf16.msra.mxu0 0
      %5598 = vmatprep.subr.bf16.mxu0 0
      %5599 = vmatpush1.bf16.msra.mxu0 0
      %5600 = vmatprep.subr.bf16.mxu0 0
      %5601 = vmatpush1.bf16.msra.mxu0 0
      %5602 = vmatprep.subr.bf16.mxu0 0
      %5603 = vmatpush1.bf16.msra.mxu0 0
      %5604 = vmatprep.subr.bf16.mxu0 0
      %5605 = vmatpush1.bf16.msra.mxu0 0
      %5606 = vmatprep.subr.bf16.mxu0 0
      %5607 = vmatpush1.bf16.msra.mxu0 0
      %5608 = vmatprep.subr.bf16.mxu0 0
      %5609 = vmatpush1.bf16.msra.mxu0 0
      %5610 = vmatprep.subr.bf16.mxu0 0
      %5611 = vmatpush1.bf16.msra.mxu0 0
      %5612 = vmatprep.subr.bf16.mxu0 0
      %5613 = vmatpush1.bf16.msra.mxu0 0
      %5614 = vmatprep.subr.bf16.mxu0 0
      %5615 = vmatpush1.bf16.msra.mxu0 0
      %5616 = vmatprep.subr.bf16.mxu0 0
      %5617 = vmatpush1.bf16.msra.mxu0 0
      %5618 = vmatprep.subr.bf16.mxu0 0
      %5619 = vmatpush1.bf16.msra.mxu0 0
      %5620 = vmatprep.subr.bf16.mxu0 0
      %5621 = vmatpush1.bf16.msra.mxu0 0
      %5622 = vmatprep.mubr.bf16.mxu0 0
      %5623 = vmatmul.mubr.bf16.gmra.mrb[0].mxu0 %v5564
      %v5624 = vpop.f32.mrb[0].mxu0
      %v5625 = vadd.f32 0.0, %v5624
      %v5626 = vpop.f32.mrb[0].mxu0
      %v5627 = vpop.f32.mrb[0].mxu0
      %v5628 = vadd.f32 0.0, %v5627
      %v5629 = vpop.f32.mrb[0].mxu0
      %5630 = vmatprep.mubr.bf16.mxu0 0
      %5631 = vmatmul.mubr.bf16.gmra.mrb[0].mxu0 %v5567
      %v5632 = vpop.f32.mrb[0].mxu0
      %v5633 = vadd.f32 0.0, %v5632
      %v5634 = vpop.f32.mrb[0].mxu0
      %v5635 = vpop.f32.mrb[0].mxu0
      %v5636 = vadd.f32 0.0, %v5635
      %v5637 = vpop.f32.mrb[0].mxu0
      %5638 = vmatprep.mubr.bf16.mxu0 0
      %5639 = vmatmul.mubr.bf16.gmra.mrb[0].mxu0 %v5570
      %v5640 = vpop.f32.mrb[0].mxu0
      %v5641 = vadd.f32 0.0, %v5640
      %v5642 = vpop.f32.mrb[0].mxu0
      %v5643 = vpop.f32.mrb[0].mxu0
      %v5644 = vadd.f32 0.0, %v5643
      %v5645 = vpop.f32.mrb[0].mxu0
      %5646 = vmatprep.mubr.bf16.mxu0 0
      %5647 = vmatmul.mubr.bf16.gmra.mrb[0].mxu0 %v5573
      %v5648 = vpop.f32.mrb[0].mxu0
      %v5649 = vadd.f32 0.0, %v5648
      %v5650 = vpop.f32.mrb[0].mxu0
      %v5651 = vpop.f32.mrb[0].mxu0
      %v5652 = vadd.f32 0.0, %v5651
      %v5653 = vpop.f32.mrb[0].mxu0
      %5654 = vmatprep.mubr.bf16.mxu0 0
      %5655 = vmatmul.mubr.bf16.gmra.mrb[0].mxu0 %v5576
      %v5656 = vpop.f32.mrb[0].mxu0
      %v5657 = vadd.f32 0.0, %v5656
      %v5658 = vpop.f32.mrb[0].mxu0
      %v5659 = vpop.f32.mrb[0].mxu0
      %v5660 = vadd.f32 0.0, %v5659
      %v5661 = vpop.f32.mrb[0].mxu0
      %5662 = vmatprep.mubr.bf16.mxu0 0
      %5663 = vmatmul.mubr.bf16.gmra.mrb[0].mxu0 %v5579
      %v5664 = vpop.f32.mrb[0].mxu0
      %v5665 = vadd.f32 0.0, %v5664
      %v5666 = vpop.f32.mrb[0].mxu0
      %v5667 = vpop.f32.mrb[0].mxu0
      %v5668 = vadd.f32 0.0, %v5667
      %v5669 = vpop.f32.mrb[0].mxu0
      %5670 = vmatprep.mubr.bf16.mxu0 0
      %5671 = vmatmul.mubr.bf16.gmra.mrb[0].mxu0 %v5582
      %v5672 = vpop.f32.mrb[0].mxu0
      %v5673 = vadd.f32 0.0, %v5672
      %v5674 = vpop.f32.mrb[0].mxu0
      %v5675 = vpop.f32.mrb[0].mxu0
      %v5676 = vadd.f32 0.0, %v5675
      %v5677 = vpop.f32.mrb[0].mxu0
      %5678 = vmatprep.mubr.bf16.mxu0 0
      %5679 = vmatmul.mubr.bf16.gmra.mrb[0].mxu0 %v5585
      %v5680 = vpop.f32.mrb[0].mxu0
      %v5681 = vadd.f32 0.0, %v5680
      %v5682 = vpop.f32.mrb[0].mxu0
      %v5683 = vpop.f32.mrb[0].mxu0
      %v5684 = vadd.f32 0.0, %v5683
      %v5685 = vpop.f32.mrb[0].mxu0
      %5686 = vdwg.mxu0
      %v5687 = vadd.f32 %v5521, %v5625
      %v5688 = vadd.f32 %v5522, %v5628
      %v5689 = vadd.f32 %v5523, %v5633
      %v5690 = vadd.f32 %v5524, %v5636
      %v5691 = vadd.f32 %v5525, %v5641
      %v5692 = vadd.f32 %v5526, %v5644
      %v5693 = vadd.f32 %v5527, %v5649
      %v5694 = vadd.f32 %v5528, %v5652
      %v5695 = vadd.f32 %v5529, %v5657
      %v5696 = vadd.f32 %v5530, %v5660
      %v5697 = vadd.f32 %v5531, %v5665
      %v5698 = vadd.f32 %v5532, %v5668
      %v5699 = vadd.f32 %v5533, %v5673
      %v5700 = vadd.f32 %v5534, %v5676
      %v5701 = vadd.f32 %v5535, %v5681
      %v5702 = vadd.f32 %v5536, %v5684
      %v5703 = vld [vmem:[%s5038 + $0x2] sm:$0xff]
      %v5704 = vld [vmem:[%s5038 + $0x12] sm:$0xff]
      %v5705 = vld [vmem:[%s5038 + $0x22] sm:$0xff]
      %v5706 = vld [vmem:[%s5038 + $0x32] sm:$0xff]
      %v5707 = vld [vmem:[%s5038 + $0x42] sm:$0xff]
      %v5708 = vld [vmem:[%s5038 + $0x52] sm:$0xff]
      %v5709 = vld [vmem:[%s5038 + $0x62] sm:$0xff]
      %v5710 = vld [vmem:[%s5038 + $0x72] sm:$0xff]
      %v5711 = vld [vmem:[%s5038 + $0xb2] sm:$0xff]
      %v5712 = vld [vmem:[%s5038 + $0xc2] sm:$0xff]
      %v5713 = vld [vmem:[%s5038 + $0xd2] sm:$0xff]
      %v5714 = vld [vmem:[%s5038 + $0xe2] sm:$0xff]
      %v5715 = vld [vmem:[%s5038 + $0xf2] sm:$0xff]
      %v5716 = vld [vmem:[%s5038 + $0x102] sm:$0xff]
      %v5717 = vld [vmem:[%s5038 + $0x112] sm:$0xff]
      %v5718 = vld [vmem:[%s5038 + $0x122] sm:$0xff]
      %v5719 = vpack.c.bf16 %v5704, %v5703
      %v5720 = vpack.c.bf16 %v5706, %v5705
      %v5721 = vpack.c.bf16 %v5708, %v5707
      %v5722 = vpack.c.bf16 %v5710, %v5709
      %v5723 = vpack.c.bf16 %v5712, %v5711
      %v5724 = vpack.c.bf16 %v5714, %v5713
      %v5725 = vpack.c.bf16 %v5716, %v5715
      %v5726 = vpack.c.bf16 %v5718, %v5717
      %s5727 = scalar_lea.vmem %s234, 132
      %v5728 = vld [vmem:[%s5727] sm:$0xf]
      %v5730 = vsel %vm299, %v5719, 0
      %v5733 = vsel %vm299, %v5720, 0
      %v5736 = vsel %vm299, %v5721, 0
      %v5739 = vsel %vm299, %v5722, 0
      %v5742 = vsel %vm299, %v5723, 0
      %v5745 = vsel %vm299, %v5724, 0
      %v5748 = vsel %vm299, %v5725, 0
      %v5751 = vsel %vm299, %v5726, 0
      %v5754 = vsel %vm324, %v5728, 0
      %5756 = vmatprep.subr.bf16.mxu0 0
      %5757 = vmatpush1.bf16.msra.mxu0 %v5754
      %5758 = vmatprep.subr.bf16.mxu0 0
      %5759 = vmatpush1.bf16.msra.mxu0 0
      %5760 = vmatprep.subr.bf16.mxu0 0
      %5761 = vmatpush1.bf16.msra.mxu0 0
      %5762 = vmatprep.subr.bf16.mxu0 0
      %5763 = vmatpush1.bf16.msra.mxu0 0
      %5764 = vmatprep.subr.bf16.mxu0 0
      %5765 = vmatpush1.bf16.msra.mxu0 0
      %5766 = vmatprep.subr.bf16.mxu0 0
      %5767 = vmatpush1.bf16.msra.mxu0 0
      %5768 = vmatprep.subr.bf16.mxu0 0
      %5769 = vmatpush1.bf16.msra.mxu0 0
      %5770 = vmatprep.subr.bf16.mxu0 0
      %5771 = vmatpush1.bf16.msra.mxu0 0
      %5772 = vmatprep.subr.bf16.mxu0 0
      %5773 = vmatpush1.bf16.msra.mxu0 0
      %5774 = vmatprep.subr.bf16.mxu0 0
      %5775 = vmatpush1.bf16.msra.mxu0 0
      %5776 = vmatprep.subr.bf16.mxu0 0
      %5777 = vmatpush1.bf16.msra.mxu0 0
      %5778 = vmatprep.subr.bf16.mxu0 0
      %5779 = vmatpush1.bf16.msra.mxu0 0
      %5780 = vmatprep.subr.bf16.mxu0 0
      %5781 = vmatpush1.bf16.msra.mxu0 0
      %5782 = vmatprep.subr.bf16.mxu0 0
      %5783 = vmatpush1.bf16.msra.mxu0 0
      %5784 = vmatprep.subr.bf16.mxu0 0
      %5785 = vmatpush1.bf16.msra.mxu0 0
      %5786 = vmatprep.subr.bf16.mxu0 0
      %5787 = vmatpush1.bf16.msra.mxu0 0
      %5788 = vmatprep.mubr.bf16.mxu0 0
      %5789 = vmatmul.mubr.bf16.gmra.mrb[0].mxu0 %v5730
      %v5790 = vpop.f32.mrb[0].mxu0
      %v5791 = vadd.f32 0.0, %v5790
      %v5792 = vpop.f32.mrb[0].mxu0
      %v5793 = vpop.f32.mrb[0].mxu0
      %v5794 = vadd.f32 0.0, %v5793
      %v5795 = vpop.f32.mrb[0].mxu0
      %5796 = vmatprep.mubr.bf16.mxu0 0
      %5797 = vmatmul.mubr.bf16.gmra.mrb[0].mxu0 %v5733
      %v5798 = vpop.f32.mrb[0].mxu0
      %v5799 = vadd.f32 0.0, %v5798
      %v5800 = vpop.f32.mrb[0].mxu0
      %v5801 = vpop.f32.mrb[0].mxu0
      %v5802 = vadd.f32 0.0, %v5801
      %v5803 = vpop.f32.mrb[0].mxu0
      %5804 = vmatprep.mubr.bf16.mxu0 0
      %5805 = vmatmul.mubr.bf16.gmra.mrb[0].mxu0 %v5736
      %v5806 = vpop.f32.mrb[0].mxu0
      %v5807 = vadd.f32 0.0, %v5806
      %v5808 = vpop.f32.mrb[0].mxu0
      %v5809 = vpop.f32.mrb[0].mxu0
      %v5810 = vadd.f32 0.0, %v5809
      %v5811 = vpop.f32.mrb[0].mxu0
      %5812 = vmatprep.mubr.bf16.mxu0 0
      %5813 = vmatmul.mubr.bf16.gmra.mrb[0].mxu0 %v5739
      %v5814 = vpop.f32.mrb[0].mxu0
      %v5815 = vadd.f32 0.0, %v5814
      %v5816 = vpop.f32.mrb[0].mxu0
      %v5817 = vpop.f32.mrb[0].mxu0
      %v5818 = vadd.f32 0.0, %v5817
      %v5819 = vpop.f32.mrb[0].mxu0
      %5820 = vmatprep.mubr.bf16.mxu0 0
      %5821 = vmatmul.mubr.bf16.gmra.mrb[0].mxu0 %v5742
      %v5822 = vpop.f32.mrb[0].mxu0
      %v5823 = vadd.f32 0.0, %v5822
      %v5824 = vpop.f32.mrb[0].mxu0
      %v5825 = vpop.f32.mrb[0].mxu0
      %v5826 = vadd.f32 0.0, %v5825
      %v5827 = vpop.f32.mrb[0].mxu0
      %5828 = vmatprep.mubr.bf16.mxu0 0
      %5829 = vmatmul.mubr.bf16.gmra.mrb[0].mxu0 %v5745
      %v5830 = vpop.f32.mrb[0].mxu0
      %v5831 = vadd.f32 0.0, %v5830
      %v5832 = vpop.f32.mrb[0].mxu0
      %v5833 = vpop.f32.mrb[0].mxu0
      %v5834 = vadd.f32 0.0, %v5833
      %v5835 = vpop.f32.mrb[0].mxu0
      %5836 = vmatprep.mubr.bf16.mxu0 0
      %5837 = vmatmul.mubr.bf16.gmra.mrb[0].mxu0 %v5748
      %v5838 = vpop.f32.mrb[0].mxu0
      %v5839 = vadd.f32 0.0, %v5838
      %v5840 = vpop.f32.mrb[0].mxu0
      %v5841 = vpop.f32.mrb[0].mxu0
      %v5842 = vadd.f32 0.0, %v5841
      %v5843 = vpop.f32.mrb[0].mxu0
      %5844 = vmatprep.mubr.bf16.mxu0 0
      %5845 = vmatmul.mubr.bf16.gmra.mrb[0].mxu0 %v5751
      %v5846 = vpop.f32.mrb[0].mxu0
      %v5847 = vadd.f32 0.0, %v5846
      %v5848 = vpop.f32.mrb[0].mxu0
      %v5849 = vpop.f32.mrb[0].mxu0
      %v5850 = vadd.f32 0.0, %v5849
      %v5851 = vpop.f32.mrb[0].mxu0
      %5852 = vdwg.mxu0
      %v5853 = vadd.f32 %v5687, %v5791
      %v5854 = vadd.f32 %v5688, %v5794
      %v5855 = vadd.f32 %v5689, %v5799
      %v5856 = vadd.f32 %v5690, %v5802
      %v5857 = vadd.f32 %v5691, %v5807
      %v5858 = vadd.f32 %v5692, %v5810
      %v5859 = vadd.f32 %v5693, %v5815
      %v5860 = vadd.f32 %v5694, %v5818
      %v5861 = vadd.f32 %v5695, %v5823
      %v5862 = vadd.f32 %v5696, %v5826
      %v5863 = vadd.f32 %v5697, %v5831
      %v5864 = vadd.f32 %v5698, %v5834
      %v5865 = vadd.f32 %v5699, %v5839
      %v5866 = vadd.f32 %v5700, %v5842
      %v5867 = vadd.f32 %v5701, %v5847
      %v5868 = vadd.f32 %v5702, %v5850
      %v5869 = vld [vmem:[%s4871 + $0x3] sm:$0xff]
      %v5870 = vld [vmem:[%s4871 + $0x13] sm:$0xff]
      %v5871 = vld [vmem:[%s4871 + $0x23] sm:$0xff]
      %v5872 = vld [vmem:[%s4871 + $0x33] sm:$0xff]
      %v5873 = vld [vmem:[%s4871 + $0x43] sm:$0xff]
      %v5874 = vld [vmem:[%s4871 + $0x53] sm:$0xff]
      %v5875 = vld [vmem:[%s4871 + $0x63] sm:$0xff]
      %v5876 = vld [vmem:[%s4871 + $0x73] sm:$0xff]
      %v5877 = vld [vmem:[%s4871 + $0xb3] sm:$0xff]
      %v5878 = vld [vmem:[%s4871 + $0xc3] sm:$0xff]
      %v5879 = vld [vmem:[%s4871 + $0xd3] sm:$0xff]
      %v5880 = vld [vmem:[%s4871 + $0xe3] sm:$0xff]
      %v5881 = vld [vmem:[%s4871 + $0xf3] sm:$0xff]
      %v5882 = vld [vmem:[%s4871 + $0x103] sm:$0xff]
      %v5883 = vld [vmem:[%s4871 + $0x113] sm:$0xff]
      %v5884 = vld [vmem:[%s4871 + $0x123] sm:$0xff]
      %v5885 = vpack.c.bf16 %v5870, %v5869
      %v5886 = vpack.c.bf16 %v5872, %v5871
      %v5887 = vpack.c.bf16 %v5874, %v5873
      %v5888 = vpack.c.bf16 %v5876, %v5875
      %v5889 = vpack.c.bf16 %v5878, %v5877
      %v5890 = vpack.c.bf16 %v5880, %v5879
      %v5891 = vpack.c.bf16 %v5882, %v5881
      %v5892 = vpack.c.bf16 %v5884, %v5883
      %s5893 = scalar_lea.vmem %s234, 136
      %v5894 = vld [vmem:[%s5893] sm:$0xf]
      %v5896 = vsel %vm299, %v5885, 0
      %v5899 = vsel %vm299, %v5886, 0
      %v5902 = vsel %vm299, %v5887, 0
      %v5905 = vsel %vm299, %v5888, 0
      %v5908 = vsel %vm299, %v5889, 0
      %v5911 = vsel %vm299, %v5890, 0
      %v5914 = vsel %vm299, %v5891, 0
      %v5917 = vsel %vm299, %v5892, 0
      %v5920 = vsel %vm324, %v5894, 0
      %5922 = vmatprep.subr.bf16.mxu0 0
      %5923 = vmatpush1.bf16.msra.mxu0 %v5920
      %5924 = vmatprep.subr.bf16.mxu0 0
      %5925 = vmatpush1.bf16.msra.mxu0 0
      %5926 = vmatprep.subr.bf16.mxu0 0
      %5927 = vmatpush1.bf16.msra.mxu0 0
      %5928 = vmatprep.subr.bf16.mxu0 0
      %5929 = vmatpush1.bf16.msra.mxu0 0
      %5930 = vmatprep.subr.bf16.mxu0 0
      %5931 = vmatpush1.bf16.msra.mxu0 0
      %5932 = vmatprep.subr.bf16.mxu0 0
      %5933 = vmatpush1.bf16.msra.mxu0 0
      %5934 = vmatprep.subr.bf16.mxu0 0
      %5935 = vmatpush1.bf16.msra.mxu0 0
      %5936 = vmatprep.subr.bf16.mxu0 0
      %5937 = vmatpush1.bf16.msra.mxu0 0
      %5938 = vmatprep.subr.bf16.mxu0 0
      %5939 = vmatpush1.bf16.msra.mxu0 0
      %5940 = vmatprep.subr.bf16.mxu0 0
      %5941 = vmatpush1.bf16.msra.mxu0 0
      %5942 = vmatprep.subr.bf16.mxu0 0
      %5943 = vmatpush1.bf16.msra.mxu0 0
      %5944 = vmatprep.subr.bf16.mxu0 0
      %5945 = vmatpush1.bf16.msra.mxu0 0
      %5946 = vmatprep.subr.bf16.mxu0 0
      %5947 = vmatpush1.bf16.msra.mxu0 0
      %5948 = vmatprep.subr.bf16.mxu0 0
      %5949 = vmatpush1.bf16.msra.mxu0 0
      %5950 = vmatprep.subr.bf16.mxu0 0
      %5951 = vmatpush1.bf16.msra.mxu0 0
      %5952 = vmatprep.subr.bf16.mxu0 0
      %5953 = vmatpush1.bf16.msra.mxu0 0
      %5954 = vmatprep.mubr.bf16.mxu0 0
      %5955 = vmatmul.mubr.bf16.gmra.mrb[0].mxu0 %v5896
      %v5956 = vpop.f32.mrb[0].mxu0
      %v5957 = vadd.f32 0.0, %v5956
      %v5958 = vpop.f32.mrb[0].mxu0
      %v5959 = vpop.f32.mrb[0].mxu0
      %v5960 = vadd.f32 0.0, %v5959
      %v5961 = vpop.f32.mrb[0].mxu0
      %5962 = vmatprep.mubr.bf16.mxu0 0
      %5963 = vmatmul.mubr.bf16.gmra.mrb[0].mxu0 %v5899
      %v5964 = vpop.f32.mrb[0].mxu0
      %v5965 = vadd.f32 0.0, %v5964
      %v5966 = vpop.f32.mrb[0].mxu0
      %v5967 = vpop.f32.mrb[0].mxu0
      %v5968 = vadd.f32 0.0, %v5967
      %v5969 = vpop.f32.mrb[0].mxu0
      %5970 = vmatprep.mubr.bf16.mxu0 0
      %5971 = vmatmul.mubr.bf16.gmra.mrb[0].mxu0 %v5902
      %v5972 = vpop.f32.mrb[0].mxu0
      %v5973 = vadd.f32 0.0, %v5972
      %v5974 = vpop.f32.mrb[0].mxu0
      %v5975 = vpop.f32.mrb[0].mxu0
      %v5976 = vadd.f32 0.0, %v5975
      %v5977 = vpop.f32.mrb[0].mxu0
      %5978 = vmatprep.mubr.bf16.mxu0 0
      %5979 = vmatmul.mubr.bf16.gmra.mrb[0].mxu0 %v5905
      %v5980 = vpop.f32.mrb[0].mxu0
      %v5981 = vadd.f32 0.0, %v5980
      %v5982 = vpop.f32.mrb[0].mxu0
      %v5983 = vpop.f32.mrb[0].mxu0
      %v5984 = vadd.f32 0.0, %v5983
      %v5985 = vpop.f32.mrb[0].mxu0
      %5986 = vmatprep.mubr.bf16.mxu0 0
      %5987 = vmatmul.mubr.bf16.gmra.mrb[0].mxu0 %v5908
      %v5988 = vpop.f32.mrb[0].mxu0
      %v5989 = vadd.f32 0.0, %v5988
      %v5990 = vpop.f32.mrb[0].mxu0
      %v5991 = vpop.f32.mrb[0].mxu0
      %v5992 = vadd.f32 0.0, %v5991
      %v5993 = vpop.f32.mrb[0].mxu0
      %5994 = vmatprep.mubr.bf16.mxu0 0
      %5995 = vmatmul.mubr.bf16.gmra.mrb[0].mxu0 %v5911
      %v5996 = vpop.f32.mrb[0].mxu0
      %v5997 = vadd.f32 0.0, %v5996
      %v5998 = vpop.f32.mrb[0].mxu0
      %v5999 = vpop.f32.mrb[0].mxu0
      %v6000 = vadd.f32 0.0, %v5999
      %v6001 = vpop.f32.mrb[0].mxu0
      %6002 = vmatprep.mubr.bf16.mxu0 0
      %6003 = vmatmul.mubr.bf16.gmra.mrb[0].mxu0 %v5914
      %v6004 = vpop.f32.mrb[0].mxu0
      %v6005 = vadd.f32 0.0, %v6004
      %v6006 = vpop.f32.mrb[0].mxu0
      %v6007 = vpop.f32.mrb[0].mxu0
      %v6008 = vadd.f32 0.0, %v6007
      %v6009 = vpop.f32.mrb[0].mxu0
      %6010 = vmatprep.mubr.bf16.mxu0 0
      %6011 = vmatmul.mubr.bf16.gmra.mrb[0].mxu0 %v5917
      %v6012 = vpop.f32.mrb[0].mxu0
      %v6013 = vadd.f32 0.0, %v6012
      %v6014 = vpop.f32.mrb[0].mxu0
      %v6015 = vpop.f32.mrb[0].mxu0
      %v6016 = vadd.f32 0.0, %v6015
      %v6017 = vpop.f32.mrb[0].mxu0
      %6018 = vdwg.mxu0
      %v6019 = vadd.f32 %v5853, %v5957
      %v6020 = vadd.f32 %v5854, %v5960
      %v6021 = vadd.f32 %v5855, %v5965
      %v6022 = vadd.f32 %v5856, %v5968
      %v6023 = vadd.f32 %v5857, %v5973
      %v6024 = vadd.f32 %v5858, %v5976
      %v6025 = vadd.f32 %v5859, %v5981
      %v6026 = vadd.f32 %v5860, %v5984
      %v6027 = vadd.f32 %v5861, %v5989
      %v6028 = vadd.f32 %v5862, %v5992
      %v6029 = vadd.f32 %v5863, %v5997
      %v6030 = vadd.f32 %v5864, %v6000
      %v6031 = vadd.f32 %v5865, %v6005
      %v6032 = vadd.f32 %v5866, %v6008
      %v6033 = vadd.f32 %v5867, %v6013
      %v6034 = vadd.f32 %v5868, %v6016
      %s6035 = scalar_lea.vmem %s229, 736
      %v6036 = vld [vmem:[%s6035] sm:$0xff]
      %v6037 = vld [vmem:[%s6035 + $0x10] sm:$0xff]
      %v6038 = vld [vmem:[%s6035 + $0x20] sm:$0xff]
      %v6039 = vld [vmem:[%s6035 + $0x30] sm:$0xff]
      %v6040 = vld [vmem:[%s6035 + $0x40] sm:$0xff]
      %v6041 = vld [vmem:[%s6035 + $0x50] sm:$0xff]
      %v6042 = vld [vmem:[%s6035 + $0x60] sm:$0xff]
      %v6043 = vld [vmem:[%s6035 + $0x70] sm:$0xff]
      %v6044 = vld [vmem:[%s6035 + $0xb0] sm:$0xff]
      %v6045 = vld [vmem:[%s6035 + $0xc0] sm:$0xff]
      %v6046 = vld [vmem:[%s6035 + $0xd0] sm:$0xff]
      %v6047 = vld [vmem:[%s6035 + $0xe0] sm:$0xff]
      %v6048 = vld [vmem:[%s6035 + $0xf0] sm:$0xff]
      %v6049 = vld [vmem:[%s6035 + $0x100] sm:$0xff]
      %v6050 = vld [vmem:[%s6035 + $0x110] sm:$0xff]
      %v6051 = vld [vmem:[%s6035 + $0x120] sm:$0xff]
      %v6052 = vpack.c.bf16 %v6037, %v6036
      %v6053 = vpack.c.bf16 %v6039, %v6038
      %v6054 = vpack.c.bf16 %v6041, %v6040
      %v6055 = vpack.c.bf16 %v6043, %v6042
      %v6056 = vpack.c.bf16 %v6045, %v6044
      %v6057 = vpack.c.bf16 %v6047, %v6046
      %v6058 = vpack.c.bf16 %v6049, %v6048
      %v6059 = vpack.c.bf16 %v6051, %v6050
      %s6060 = scalar_lea.vmem %s234, 140
      %v6061 = vld [vmem:[%s6060] sm:$0xf]
      %v6063 = vsel %vm299, %v6052, 0
      %v6066 = vsel %vm299, %v6053, 0
      %v6069 = vsel %vm299, %v6054, 0
      %v6072 = vsel %vm299, %v6055, 0
      %v6075 = vsel %vm299, %v6056, 0
      %v6078 = vsel %vm299, %v6057, 0
      %v6081 = vsel %vm299, %v6058, 0
      %v6084 = vsel %vm299, %v6059, 0
      %v6087 = vsel %vm324, %v6061, 0
      %6089 = vmatprep.subr.bf16.mxu0 0
      %6090 = vmatpush1.bf16.msra.mxu0 %v6087
      %6091 = vmatprep.subr.bf16.mxu0 0
      %6092 = vmatpush1.bf16.msra.mxu0 0
      %6093 = vmatprep.subr.bf16.mxu0 0
      %6094 = vmatpush1.bf16.msra.mxu0 0
      %6095 = vmatprep.subr.bf16.mxu0 0
      %6096 = vmatpush1.bf16.msra.mxu0 0
      %6097 = vmatprep.subr.bf16.mxu0 0
      %6098 = vmatpush1.bf16.msra.mxu0 0
      %6099 = vmatprep.subr.bf16.mxu0 0
      %6100 = vmatpush1.bf16.msra.mxu0 0
      %6101 = vmatprep.subr.bf16.mxu0 0
      %6102 = vmatpush1.bf16.msra.mxu0 0
      %6103 = vmatprep.subr.bf16.mxu0 0
      %6104 = vmatpush1.bf16.msra.mxu0 0
      %6105 = vmatprep.subr.bf16.mxu0 0
      %6106 = vmatpush1.bf16.msra.mxu0 0
      %6107 = vmatprep.subr.bf16.mxu0 0
      %6108 = vmatpush1.bf16.msra.mxu0 0
      %6109 = vmatprep.subr.bf16.mxu0 0
      %6110 = vmatpush1.bf16.msra.mxu0 0
      %6111 = vmatprep.subr.bf16.mxu0 0
      %6112 = vmatpush1.bf16.msra.mxu0 0
      %6113 = vmatprep.subr.bf16.mxu0 0
      %6114 = vmatpush1.bf16.msra.mxu0 0
      %6115 = vmatprep.subr.bf16.mxu0 0
      %6116 = vmatpush1.bf16.msra.mxu0 0
      %6117 = vmatprep.subr.bf16.mxu0 0
      %6118 = vmatpush1.bf16.msra.mxu0 0
      %6119 = vmatprep.subr.bf16.mxu0 0
      %6120 = vmatpush1.bf16.msra.mxu0 0
      %6121 = vmatprep.mubr.bf16.mxu0 0
      %6122 = vmatmul.mubr.bf16.gmra.mrb[0].mxu0 %v6063
      %v6123 = vpop.f32.mrb[0].mxu0
      %v6124 = vadd.f32 0.0, %v6123
      %v6125 = vpop.f32.mrb[0].mxu0
      %v6126 = vpop.f32.mrb[0].mxu0
      %v6127 = vadd.f32 0.0, %v6126
      %v6128 = vpop.f32.mrb[0].mxu0
      %6129 = vmatprep.mubr.bf16.mxu0 0
      %6130 = vmatmul.mubr.bf16.gmra.mrb[0].mxu0 %v6066
      %v6131 = vpop.f32.mrb[0].mxu0
      %v6132 = vadd.f32 0.0, %v6131
      %v6133 = vpop.f32.mrb[0].mxu0
      %v6134 = vpop.f32.mrb[0].mxu0
      %v6135 = vadd.f32 0.0, %v6134
      %v6136 = vpop.f32.mrb[0].mxu0
      %6137 = vmatprep.mubr.bf16.mxu0 0
      %6138 = vmatmul.mubr.bf16.gmra.mrb[0].mxu0 %v6069
      %v6139 = vpop.f32.mrb[0].mxu0
      %v6140 = vadd.f32 0.0, %v6139
      %v6141 = vpop.f32.mrb[0].mxu0
      %v6142 = vpop.f32.mrb[0].mxu0
      %v6143 = vadd.f32 0.0, %v6142
      %v6144 = vpop.f32.mrb[0].mxu0
      %6145 = vmatprep.mubr.bf16.mxu0 0
      %6146 = vmatmul.mubr.bf16.gmra.mrb[0].mxu0 %v6072
      %v6147 = vpop.f32.mrb[0].mxu0
      %v6148 = vadd.f32 0.0, %v6147
      %v6149 = vpop.f32.mrb[0].mxu0
      %v6150 = vpop.f32.mrb[0].mxu0
      %v6151 = vadd.f32 0.0, %v6150
      %v6152 = vpop.f32.mrb[0].mxu0
      %6153 = vmatprep.mubr.bf16.mxu0 0
      %6154 = vmatmul.mubr.bf16.gmra.mrb[0].mxu0 %v6075
      %v6155 = vpop.f32.mrb[0].mxu0
      %v6156 = vadd.f32 0.0, %v6155
      %v6157 = vpop.f32.mrb[0].mxu0
      %v6158 = vpop.f32.mrb[0].mxu0
      %v6159 = vadd.f32 0.0, %v6158
      %v6160 = vpop.f32.mrb[0].mxu0
      %6161 = vmatprep.mubr.bf16.mxu0 0
      %6162 = vmatmul.mubr.bf16.gmra.mrb[0].mxu0 %v6078
      %v6163 = vpop.f32.mrb[0].mxu0
      %v6164 = vadd.f32 0.0, %v6163
      %v6165 = vpop.f32.mrb[0].mxu0
      %v6166 = vpop.f32.mrb[0].mxu0
      %v6167 = vadd.f32 0.0, %v6166
      %v6168 = vpop.f32.mrb[0].mxu0
      %6169 = vmatprep.mubr.bf16.mxu0 0
      %6170 = vmatmul.mubr.bf16.gmra.mrb[0].mxu0 %v6081
      %v6171 = vpop.f32.mrb[0].mxu0
      %v6172 = vadd.f32 0.0, %v6171
      %v6173 = vpop.f32.mrb[0].mxu0
      %v6174 = vpop.f32.mrb[0].mxu0
      %v6175 = vadd.f32 0.0, %v6174
      %v6176 = vpop.f32.mrb[0].mxu0
      %6177 = vmatprep.mubr.bf16.mxu0 0
      %6178 = vmatmul.mubr.bf16.gmra.mrb[0].mxu0 %v6084
      %v6179 = vpop.f32.mrb[0].mxu0
      %v6180 = vadd.f32 0.0, %v6179
      %v6181 = vpop.f32.mrb[0].mxu0
      %v6182 = vpop.f32.mrb[0].mxu0
      %v6183 = vadd.f32 0.0, %v6182
      %v6184 = vpop.f32.mrb[0].mxu0
      %6185 = vdwg.mxu0
      %v6186 = vadd.f32 %v6019, %v6124
      %v6187 = vadd.f32 %v6020, %v6127
      %v6188 = vadd.f32 %v6021, %v6132
      %v6189 = vadd.f32 %v6022, %v6135
      %v6190 = vadd.f32 %v6023, %v6140
      %v6191 = vadd.f32 %v6024, %v6143
      %v6192 = vadd.f32 %v6025, %v6148
      %v6193 = vadd.f32 %v6026, %v6151
      %v6194 = vadd.f32 %v6027, %v6156
      %v6195 = vadd.f32 %v6028, %v6159
      %v6196 = vadd.f32 %v6029, %v6164
      %v6197 = vadd.f32 %v6030, %v6167
      %v6198 = vadd.f32 %v6031, %v6172
      %v6199 = vadd.f32 %v6032, %v6175
      %v6200 = vadd.f32 %v6033, %v6180
      %v6201 = vadd.f32 %v6034, %v6183
      %s6202 = scalar_lea.vmem %s229, 1088
      %v6203 = vld [vmem:[%s6202] sm:$0xff]
      %v6204 = vld [vmem:[%s6202 + $0x10] sm:$0xff]
      %v6205 = vld [vmem:[%s6202 + $0x20] sm:$0xff]
      %v6206 = vld [vmem:[%s6202 + $0x30] sm:$0xff]
      %v6207 = vld [vmem:[%s6202 + $0x40] sm:$0xff]
      %v6208 = vld [vmem:[%s6202 + $0x50] sm:$0xff]
      %v6209 = vld [vmem:[%s6202 + $0x60] sm:$0xff]
      %v6210 = vld [vmem:[%s6202 + $0x70] sm:$0xff]
      %v6211 = vld [vmem:[%s6202 + $0xb0] sm:$0xff]
      %v6212 = vld [vmem:[%s6202 + $0xc0] sm:$0xff]
      %v6213 = vld [vmem:[%s6202 + $0xd0] sm:$0xff]
      %v6214 = vld [vmem:[%s6202 + $0xe0] sm:$0xff]
      %v6215 = vld [vmem:[%s6202 + $0xf0] sm:$0xff]
      %v6216 = vld [vmem:[%s6202 + $0x100] sm:$0xff]
      %v6217 = vld [vmem:[%s6202 + $0x110] sm:$0xff]
      %v6218 = vld [vmem:[%s6202 + $0x120] sm:$0xff]
      %v6219 = vpack.c.bf16 %v6204, %v6203
      %v6220 = vpack.c.bf16 %v6206, %v6205
      %v6221 = vpack.c.bf16 %v6208, %v6207
      %v6222 = vpack.c.bf16 %v6210, %v6209
      %v6223 = vpack.c.bf16 %v6212, %v6211
      %v6224 = vpack.c.bf16 %v6214, %v6213
      %v6225 = vpack.c.bf16 %v6216, %v6215
      %v6226 = vpack.c.bf16 %v6218, %v6217
      %s6227 = scalar_lea.vmem %s234, 144
      %v6228 = vld [vmem:[%s6227] sm:$0xf]
      %v6230 = vsel %vm299, %v6219, 0
      %v6233 = vsel %vm299, %v6220, 0
      %v6236 = vsel %vm299, %v6221, 0
      %v6239 = vsel %vm299, %v6222, 0
      %v6242 = vsel %vm299, %v6223, 0
      %v6245 = vsel %vm299, %v6224, 0
      %v6248 = vsel %vm299, %v6225, 0
      %v6251 = vsel %vm299, %v6226, 0
      %v6254 = vsel %vm324, %v6228, 0
      %6256 = vmatprep.subr.bf16.mxu0 0
      %6257 = vmatpush1.bf16.msra.mxu0 %v6254
      %6258 = vmatprep.subr.bf16.mxu0 0
      %6259 = vmatpush1.bf16.msra.mxu0 0
      %6260 = vmatprep.subr.bf16.mxu0 0
      %6261 = vmatpush1.bf16.msra.mxu0 0
      %6262 = vmatprep.subr.bf16.mxu0 0
      %6263 = vmatpush1.bf16.msra.mxu0 0
      %6264 = vmatprep.subr.bf16.mxu0 0
      %6265 = vmatpush1.bf16.msra.mxu0 0
      %6266 = vmatprep.subr.bf16.mxu0 0
      %6267 = vmatpush1.bf16.msra.mxu0 0
      %6268 = vmatprep.subr.bf16.mxu0 0
      %6269 = vmatpush1.bf16.msra.mxu0 0
      %6270 = vmatprep.subr.bf16.mxu0 0
      %6271 = vmatpush1.bf16.msra.mxu0 0
      %6272 = vmatprep.subr.bf16.mxu0 0
      %6273 = vmatpush1.bf16.msra.mxu0 0
      %6274 = vmatprep.subr.bf16.mxu0 0
      %6275 = vmatpush1.bf16.msra.mxu0 0
      %6276 = vmatprep.subr.bf16.mxu0 0
      %6277 = vmatpush1.bf16.msra.mxu0 0
      %6278 = vmatprep.subr.bf16.mxu0 0
      %6279 = vmatpush1.bf16.msra.mxu0 0
      %6280 = vmatprep.subr.bf16.mxu0 0
      %6281 = vmatpush1.bf16.msra.mxu0 0
      %6282 = vmatprep.subr.bf16.mxu0 0
      %6283 = vmatpush1.bf16.msra.mxu0 0
      %6284 = vmatprep.subr.bf16.mxu0 0
      %6285 = vmatpush1.bf16.msra.mxu0 0
      %6286 = vmatprep.subr.bf16.mxu0 0
      %6287 = vmatpush1.bf16.msra.mxu0 0
      %6288 = vmatprep.mubr.bf16.mxu0 0
      %6289 = vmatmul.mubr.bf16.gmra.mrb[0].mxu0 %v6230
      %v6290 = vpop.f32.mrb[0].mxu0
      %v6291 = vadd.f32 0.0, %v6290
      %v6292 = vpop.f32.mrb[0].mxu0
      %v6293 = vpop.f32.mrb[0].mxu0
      %v6294 = vadd.f32 0.0, %v6293
      %v6295 = vpop.f32.mrb[0].mxu0
      %6296 = vmatprep.mubr.bf16.mxu0 0
      %6297 = vmatmul.mubr.bf16.gmra.mrb[0].mxu0 %v6233
      %v6298 = vpop.f32.mrb[0].mxu0
      %v6299 = vadd.f32 0.0, %v6298
      %v6300 = vpop.f32.mrb[0].mxu0
      %v6301 = vpop.f32.mrb[0].mxu0
      %v6302 = vadd.f32 0.0, %v6301
      %v6303 = vpop.f32.mrb[0].mxu0
      %6304 = vmatprep.mubr.bf16.mxu0 0
      %6305 = vmatmul.mubr.bf16.gmra.mrb[0].mxu0 %v6236
      %v6306 = vpop.f32.mrb[0].mxu0
      %v6307 = vadd.f32 0.0, %v6306
      %v6308 = vpop.f32.mrb[0].mxu0
      %v6309 = vpop.f32.mrb[0].mxu0
      %v6310 = vadd.f32 0.0, %v6309
      %v6311 = vpop.f32.mrb[0].mxu0
      %6312 = vmatprep.mubr.bf16.mxu0 0
      %6313 = vmatmul.mubr.bf16.gmra.mrb[0].mxu0 %v6239
      %v6314 = vpop.f32.mrb[0].mxu0
      %v6315 = vadd.f32 0.0, %v6314
      %v6316 = vpop.f32.mrb[0].mxu0
      %v6317 = vpop.f32.mrb[0].mxu0
      %v6318 = vadd.f32 0.0, %v6317
      %v6319 = vpop.f32.mrb[0].mxu0
      %6320 = vmatprep.mubr.bf16.mxu0 0
      %6321 = vmatmul.mubr.bf16.gmra.mrb[0].mxu0 %v6242
      %v6322 = vpop.f32.mrb[0].mxu0
      %v6323 = vadd.f32 0.0, %v6322
      %v6324 = vpop.f32.mrb[0].mxu0
      %v6325 = vpop.f32.mrb[0].mxu0
      %v6326 = vadd.f32 0.0, %v6325
      %v6327 = vpop.f32.mrb[0].mxu0
      %6328 = vmatprep.mubr.bf16.mxu0 0
      %6329 = vmatmul.mubr.bf16.gmra.mrb[0].mxu0 %v6245
      %v6330 = vpop.f32.mrb[0].mxu0
      %v6331 = vadd.f32 0.0, %v6330
      %v6332 = vpop.f32.mrb[0].mxu0
      %v6333 = vpop.f32.mrb[0].mxu0
      %v6334 = vadd.f32 0.0, %v6333
      %v6335 = vpop.f32.mrb[0].mxu0
      %6336 = vmatprep.mubr.bf16.mxu0 0
      %6337 = vmatmul.mubr.bf16.gmra.mrb[0].mxu0 %v6248
      %v6338 = vpop.f32.mrb[0].mxu0
      %v6339 = vadd.f32 0.0, %v6338
      %v6340 = vpop.f32.mrb[0].mxu0
      %v6341 = vpop.f32.mrb[0].mxu0
      %v6342 = vadd.f32 0.0, %v6341
      %v6343 = vpop.f32.mrb[0].mxu0
      %6344 = vmatprep.mubr.bf16.mxu0 0
      %6345 = vmatmul.mubr.bf16.gmra.mrb[0].mxu0 %v6251
      %v6346 = vpop.f32.mrb[0].mxu0
      %v6347 = vadd.f32 0.0, %v6346
      %v6348 = vpop.f32.mrb[0].mxu0
      %v6349 = vpop.f32.mrb[0].mxu0
      %v6350 = vadd.f32 0.0, %v6349
      %v6351 = vpop.f32.mrb[0].mxu0
      %6352 = vdwg.mxu0
      %v6353 = vadd.f32 %v6186, %v6291
      %v6354 = vadd.f32 %v6187, %v6294
      %v6355 = vadd.f32 %v6188, %v6299
      %v6356 = vadd.f32 %v6189, %v6302
      %v6357 = vadd.f32 %v6190, %v6307
      %v6358 = vadd.f32 %v6191, %v6310
      %v6359 = vadd.f32 %v6192, %v6315
      %v6360 = vadd.f32 %v6193, %v6318
      %v6361 = vadd.f32 %v6194, %v6323
      %v6362 = vadd.f32 %v6195, %v6326
      %v6363 = vadd.f32 %v6196, %v6331
      %v6364 = vadd.f32 %v6197, %v6334
      %v6365 = vadd.f32 %v6198, %v6339
      %v6366 = vadd.f32 %v6199, %v6342
      %v6367 = vadd.f32 %v6200, %v6347
      %v6368 = vadd.f32 %v6201, %v6350
      %v6369 = vld [vmem:[%s6035 + $0x1] sm:$0xff]
      %v6370 = vld [vmem:[%s6035 + $0x11] sm:$0xff]
      %v6371 = vld [vmem:[%s6035 + $0x21] sm:$0xff]
      %v6372 = vld [vmem:[%s6035 + $0x31] sm:$0xff]
      %v6373 = vld [vmem:[%s6035 + $0x41] sm:$0xff]
      %v6374 = vld [vmem:[%s6035 + $0x51] sm:$0xff]
      %v6375 = vld [vmem:[%s6035 + $0x61] sm:$0xff]
      %v6376 = vld [vmem:[%s6035 + $0x71] sm:$0xff]
      %v6377 = vld [vmem:[%s6035 + $0xb1] sm:$0xff]
      %v6378 = vld [vmem:[%s6035 + $0xc1] sm:$0xff]
      %v6379 = vld [vmem:[%s6035 + $0xd1] sm:$0xff]
      %v6380 = vld [vmem:[%s6035 + $0xe1] sm:$0xff]
      %v6381 = vld [vmem:[%s6035 + $0xf1] sm:$0xff]
      %v6382 = vld [vmem:[%s6035 + $0x101] sm:$0xff]
      %v6383 = vld [vmem:[%s6035 + $0x111] sm:$0xff]
      %v6384 = vld [vmem:[%s6035 + $0x121] sm:$0xff]
      %v6385 = vpack.c.bf16 %v6370, %v6369
      %v6386 = vpack.c.bf16 %v6372, %v6371
      %v6387 = vpack.c.bf16 %v6374, %v6373
      %v6388 = vpack.c.bf16 %v6376, %v6375
      %v6389 = vpack.c.bf16 %v6378, %v6377
      %v6390 = vpack.c.bf16 %v6380, %v6379
      %v6391 = vpack.c.bf16 %v6382, %v6381
      %v6392 = vpack.c.bf16 %v6384, %v6383
      %s6393 = scalar_lea.vmem %s234, 148
      %v6394 = vld [vmem:[%s6393] sm:$0xf]
      %v6396 = vsel %vm299, %v6385, 0
      %v6399 = vsel %vm299, %v6386, 0
      %v6402 = vsel %vm299, %v6387, 0
      %v6405 = vsel %vm299, %v6388, 0
      %v6408 = vsel %vm299, %v6389, 0
      %v6411 = vsel %vm299, %v6390, 0
      %v6414 = vsel %vm299, %v6391, 0
      %v6417 = vsel %vm299, %v6392, 0
      %v6420 = vsel %vm324, %v6394, 0
      %6422 = vmatprep.subr.bf16.mxu0 0
      %6423 = vmatpush1.bf16.msra.mxu0 %v6420
      %6424 = vmatprep.subr.bf16.mxu0 0
      %6425 = vmatpush1.bf16.msra.mxu0 0
      %6426 = vmatprep.subr.bf16.mxu0 0
      %6427 = vmatpush1.bf16.msra.mxu0 0
      %6428 = vmatprep.subr.bf16.mxu0 0
      %6429 = vmatpush1.bf16.msra.mxu0 0
      %6430 = vmatprep.subr.bf16.mxu0 0
      %6431 = vmatpush1.bf16.msra.mxu0 0
      %6432 = vmatprep.subr.bf16.mxu0 0
      %6433 = vmatpush1.bf16.msra.mxu0 0
      %6434 = vmatprep.subr.bf16.mxu0 0
      %6435 = vmatpush1.bf16.msra.mxu0 0
      %6436 = vmatprep.subr.bf16.mxu0 0
      %6437 = vmatpush1.bf16.msra.mxu0 0
      %6438 = vmatprep.subr.bf16.mxu0 0
      %6439 = vmatpush1.bf16.msra.mxu0 0
      %6440 = vmatprep.subr.bf16.mxu0 0
      %6441 = vmatpush1.bf16.msra.mxu0 0
      %6442 = vmatprep.subr.bf16.mxu0 0
      %6443 = vmatpush1.bf16.msra.mxu0 0
      %6444 = vmatprep.subr.bf16.mxu0 0
      %6445 = vmatpush1.bf16.msra.mxu0 0
      %6446 = vmatprep.subr.bf16.mxu0 0
      %6447 = vmatpush1.bf16.msra.mxu0 0
      %6448 = vmatprep.subr.bf16.mxu0 0
      %6449 = vmatpush1.bf16.msra.mxu0 0
      %6450 = vmatprep.subr.bf16.mxu0 0
      %6451 = vmatpush1.bf16.msra.mxu0 0
      %6452 = vmatprep.subr.bf16.mxu0 0
      %6453 = vmatpush1.bf16.msra.mxu0 0
      %6454 = vmatprep.mubr.bf16.mxu0 0
      %6455 = vmatmul.mubr.bf16.gmra.mrb[0].mxu0 %v6396
      %v6456 = vpop.f32.mrb[0].mxu0
      %v6457 = vadd.f32 0.0, %v6456
      %v6458 = vpop.f32.mrb[0].mxu0
      %v6459 = vpop.f32.mrb[0].mxu0
      %v6460 = vadd.f32 0.0, %v6459
      %v6461 = vpop.f32.mrb[0].mxu0
      %6462 = vmatprep.mubr.bf16.mxu0 0
      %6463 = vmatmul.mubr.bf16.gmra.mrb[0].mxu0 %v6399
      %v6464 = vpop.f32.mrb[0].mxu0
      %v6465 = vadd.f32 0.0, %v6464
      %v6466 = vpop.f32.mrb[0].mxu0
      %v6467 = vpop.f32.mrb[0].mxu0
      %v6468 = vadd.f32 0.0, %v6467
      %v6469 = vpop.f32.mrb[0].mxu0
      %6470 = vmatprep.mubr.bf16.mxu0 0
      %6471 = vmatmul.mubr.bf16.gmra.mrb[0].mxu0 %v6402
      %v6472 = vpop.f32.mrb[0].mxu0
      %v6473 = vadd.f32 0.0, %v6472
      %v6474 = vpop.f32.mrb[0].mxu0
      %v6475 = vpop.f32.mrb[0].mxu0
      %v6476 = vadd.f32 0.0, %v6475
      %v6477 = vpop.f32.mrb[0].mxu0
      %6478 = vmatprep.mubr.bf16.mxu0 0
      %6479 = vmatmul.mubr.bf16.gmra.mrb[0].mxu0 %v6405
      %v6480 = vpop.f32.mrb[0].mxu0
      %v6481 = vadd.f32 0.0, %v6480
      %v6482 = vpop.f32.mrb[0].mxu0
      %v6483 = vpop.f32.mrb[0].mxu0
      %v6484 = vadd.f32 0.0, %v6483
      %v6485 = vpop.f32.mrb[0].mxu0
      %6486 = vmatprep.mubr.bf16.mxu0 0
      %6487 = vmatmul.mubr.bf16.gmra.mrb[0].mxu0 %v6408
      %v6488 = vpop.f32.mrb[0].mxu0
      %v6489 = vadd.f32 0.0, %v6488
      %v6490 = vpop.f32.mrb[0].mxu0
      %v6491 = vpop.f32.mrb[0].mxu0
      %v6492 = vadd.f32 0.0, %v6491
      %v6493 = vpop.f32.mrb[0].mxu0
      %6494 = vmatprep.mubr.bf16.mxu0 0
      %6495 = vmatmul.mubr.bf16.gmra.mrb[0].mxu0 %v6411
      %v6496 = vpop.f32.mrb[0].mxu0
      %v6497 = vadd.f32 0.0, %v6496
      %v6498 = vpop.f32.mrb[0].mxu0
      %v6499 = vpop.f32.mrb[0].mxu0
      %v6500 = vadd.f32 0.0, %v6499
      %v6501 = vpop.f32.mrb[0].mxu0
      %6502 = vmatprep.mubr.bf16.mxu0 0
      %6503 = vmatmul.mubr.bf16.gmra.mrb[0].mxu0 %v6414
      %v6504 = vpop.f32.mrb[0].mxu0
      %v6505 = vadd.f32 0.0, %v6504
      %v6506 = vpop.f32.mrb[0].mxu0
      %v6507 = vpop.f32.mrb[0].mxu0
      %v6508 = vadd.f32 0.0, %v6507
      %v6509 = vpop.f32.mrb[0].mxu0
      %6510 = vmatprep.mubr.bf16.mxu0 0
      %6511 = vmatmul.mubr.bf16.gmra.mrb[0].mxu0 %v6417
      %v6512 = vpop.f32.mrb[0].mxu0
      %v6513 = vadd.f32 0.0, %v6512
      %v6514 = vpop.f32.mrb[0].mxu0
      %v6515 = vpop.f32.mrb[0].mxu0
      %v6516 = vadd.f32 0.0, %v6515
      %v6517 = vpop.f32.mrb[0].mxu0
      %6518 = vdwg.mxu0
      %v6519 = vadd.f32 %v6353, %v6457
      %v6520 = vadd.f32 %v6354, %v6460
      %v6521 = vadd.f32 %v6355, %v6465
      %v6522 = vadd.f32 %v6356, %v6468
      %v6523 = vadd.f32 %v6357, %v6473
      %v6524 = vadd.f32 %v6358, %v6476
      %v6525 = vadd.f32 %v6359, %v6481
      %v6526 = vadd.f32 %v6360, %v6484
      %v6527 = vadd.f32 %v6361, %v6489
      %v6528 = vadd.f32 %v6362, %v6492
      %v6529 = vadd.f32 %v6363, %v6497
      %v6530 = vadd.f32 %v6364, %v6500
      %v6531 = vadd.f32 %v6365, %v6505
      %v6532 = vadd.f32 %v6366, %v6508
      %v6533 = vadd.f32 %v6367, %v6513
      %v6534 = vadd.f32 %v6368, %v6516
      %v6535 = vld [vmem:[%s6202 + $0x1] sm:$0xff]
      %v6536 = vld [vmem:[%s6202 + $0x11] sm:$0xff]
      %v6537 = vld [vmem:[%s6202 + $0x21] sm:$0xff]
      %v6538 = vld [vmem:[%s6202 + $0x31] sm:$0xff]
      %v6539 = vld [vmem:[%s6202 + $0x41] sm:$0xff]
      %v6540 = vld [vmem:[%s6202 + $0x51] sm:$0xff]
      %v6541 = vld [vmem:[%s6202 + $0x61] sm:$0xff]
      %v6542 = vld [vmem:[%s6202 + $0x71] sm:$0xff]
      %v6543 = vld [vmem:[%s6202 + $0xb1] sm:$0xff]
      %v6544 = vld [vmem:[%s6202 + $0xc1] sm:$0xff]
      %v6545 = vld [vmem:[%s6202 + $0xd1] sm:$0xff]
      %v6546 = vld [vmem:[%s6202 + $0xe1] sm:$0xff]
      %v6547 = vld [vmem:[%s6202 + $0xf1] sm:$0xff]
      %v6548 = vld [vmem:[%s6202 + $0x101] sm:$0xff]
      %v6549 = vld [vmem:[%s6202 + $0x111] sm:$0xff]
      %v6550 = vld [vmem:[%s6202 + $0x121] sm:$0xff]
      %v6551 = vpack.c.bf16 %v6536, %v6535
      %v6552 = vpack.c.bf16 %v6538, %v6537
      %v6553 = vpack.c.bf16 %v6540, %v6539
      %v6554 = vpack.c.bf16 %v6542, %v6541
      %v6555 = vpack.c.bf16 %v6544, %v6543
      %v6556 = vpack.c.bf16 %v6546, %v6545
      %v6557 = vpack.c.bf16 %v6548, %v6547
      %v6558 = vpack.c.bf16 %v6550, %v6549
      %s6559 = scalar_lea.vmem %s234, 152
      %v6560 = vld [vmem:[%s6559] sm:$0xf]
      %v6562 = vsel %vm299, %v6551, 0
      %v6565 = vsel %vm299, %v6552, 0
      %v6568 = vsel %vm299, %v6553, 0
      %v6571 = vsel %vm299, %v6554, 0
      %v6574 = vsel %vm299, %v6555, 0
      %v6577 = vsel %vm299, %v6556, 0
      %v6580 = vsel %vm299, %v6557, 0
      %v6583 = vsel %vm299, %v6558, 0
      %v6586 = vsel %vm324, %v6560, 0
      %6588 = vmatprep.subr.bf16.mxu0 0
      %6589 = vmatpush1.bf16.msra.mxu0 %v6586
      %6590 = vmatprep.subr.bf16.mxu0 0
      %6591 = vmatpush1.bf16.msra.mxu0 0
      %6592 = vmatprep.subr.bf16.mxu0 0
      %6593 = vmatpush1.bf16.msra.mxu0 0
      %6594 = vmatprep.subr.bf16.mxu0 0
      %6595 = vmatpush1.bf16.msra.mxu0 0
      %6596 = vmatprep.subr.bf16.mxu0 0
      %6597 = vmatpush1.bf16.msra.mxu0 0
      %6598 = vmatprep.subr.bf16.mxu0 0
      %6599 = vmatpush1.bf16.msra.mxu0 0
      %6600 = vmatprep.subr.bf16.mxu0 0
      %6601 = vmatpush1.bf16.msra.mxu0 0
      %6602 = vmatprep.subr.bf16.mxu0 0
      %6603 = vmatpush1.bf16.msra.mxu0 0
      %6604 = vmatprep.subr.bf16.mxu0 0
      %6605 = vmatpush1.bf16.msra.mxu0 0
      %6606 = vmatprep.subr.bf16.mxu0 0
      %6607 = vmatpush1.bf16.msra.mxu0 0
      %6608 = vmatprep.subr.bf16.mxu0 0
      %6609 = vmatpush1.bf16.msra.mxu0 0
      %6610 = vmatprep.subr.bf16.mxu0 0
      %6611 = vmatpush1.bf16.msra.mxu0 0
      %6612 = vmatprep.subr.bf16.mxu0 0
      %6613 = vmatpush1.bf16.msra.mxu0 0
      %6614 = vmatprep.subr.bf16.mxu0 0
      %6615 = vmatpush1.bf16.msra.mxu0 0
      %6616 = vmatprep.subr.bf16.mxu0 0
      %6617 = vmatpush1.bf16.msra.mxu0 0
      %6618 = vmatprep.subr.bf16.mxu0 0
      %6619 = vmatpush1.bf16.msra.mxu0 0
      %6620 = vmatprep.mubr.bf16.mxu0 0
      %6621 = vmatmul.mubr.bf16.gmra.mrb[0].mxu0 %v6562
      %v6622 = vpop.f32.mrb[0].mxu0
      %v6623 = vadd.f32 0.0, %v6622
      %v6624 = vpop.f32.mrb[0].mxu0
      %v6625 = vpop.f32.mrb[0].mxu0
      %v6626 = vadd.f32 0.0, %v6625
      %v6627 = vpop.f32.mrb[0].mxu0
      %6628 = vmatprep.mubr.bf16.mxu0 0
      %6629 = vmatmul.mubr.bf16.gmra.mrb[0].mxu0 %v6565
      %v6630 = vpop.f32.mrb[0].mxu0
      %v6631 = vadd.f32 0.0, %v6630
      %v6632 = vpop.f32.mrb[0].mxu0
      %v6633 = vpop.f32.mrb[0].mxu0
      %v6634 = vadd.f32 0.0, %v6633
      %v6635 = vpop.f32.mrb[0].mxu0
      %6636 = vmatprep.mubr.bf16.mxu0 0
      %6637 = vmatmul.mubr.bf16.gmra.mrb[0].mxu0 %v6568
      %v6638 = vpop.f32.mrb[0].mxu0
      %v6639 = vadd.f32 0.0, %v6638
      %v6640 = vpop.f32.mrb[0].mxu0
      %v6641 = vpop.f32.mrb[0].mxu0
      %v6642 = vadd.f32 0.0, %v6641
      %v6643 = vpop.f32.mrb[0].mxu0
      %6644 = vmatprep.mubr.bf16.mxu0 0
      %6645 = vmatmul.mubr.bf16.gmra.mrb[0].mxu0 %v6571
      %v6646 = vpop.f32.mrb[0].mxu0
      %v6647 = vadd.f32 0.0, %v6646
      %v6648 = vpop.f32.mrb[0].mxu0
      %v6649 = vpop.f32.mrb[0].mxu0
      %v6650 = vadd.f32 0.0, %v6649
      %v6651 = vpop.f32.mrb[0].mxu0
      %6652 = vmatprep.mubr.bf16.mxu0 0
      %6653 = vmatmul.mubr.bf16.gmra.mrb[0].mxu0 %v6574
      %v6654 = vpop.f32.mrb[0].mxu0
      %v6655 = vadd.f32 0.0, %v6654
      %v6656 = vpop.f32.mrb[0].mxu0
      %v6657 = vpop.f32.mrb[0].mxu0
      %v6658 = vadd.f32 0.0, %v6657
      %v6659 = vpop.f32.mrb[0].mxu0
      %6660 = vmatprep.mubr.bf16.mxu0 0
      %6661 = vmatmul.mubr.bf16.gmra.mrb[0].mxu0 %v6577
      %v6662 = vpop.f32.mrb[0].mxu0
      %v6663 = vadd.f32 0.0, %v6662
      %v6664 = vpop.f32.mrb[0].mxu0
      %v6665 = vpop.f32.mrb[0].mxu0
      %v6666 = vadd.f32 0.0, %v6665
      %v6667 = vpop.f32.mrb[0].mxu0
      %6668 = vmatprep.mubr.bf16.mxu0 0
      %6669 = vmatmul.mubr.bf16.gmra.mrb[0].mxu0 %v6580
      %v6670 = vpop.f32.mrb[0].mxu0
      %v6671 = vadd.f32 0.0, %v6670
      %v6672 = vpop.f32.mrb[0].mxu0
      %v6673 = vpop.f32.mrb[0].mxu0
      %v6674 = vadd.f32 0.0, %v6673
      %v6675 = vpop.f32.mrb[0].mxu0
      %6676 = vmatprep.mubr.bf16.mxu0 0
      %6677 = vmatmul.mubr.bf16.gmra.mrb[0].mxu0 %v6583
      %v6678 = vpop.f32.mrb[0].mxu0
      %v6679 = vadd.f32 0.0, %v6678
      %v6680 = vpop.f32.mrb[0].mxu0
      %v6681 = vpop.f32.mrb[0].mxu0
      %v6682 = vadd.f32 0.0, %v6681
      %v6683 = vpop.f32.mrb[0].mxu0
      %6684 = vdwg.mxu0
      %v6685 = vadd.f32 %v6519, %v6623
      %v6686 = vadd.f32 %v6520, %v6626
      %v6687 = vadd.f32 %v6521, %v6631
      %v6688 = vadd.f32 %v6522, %v6634
      %v6689 = vadd.f32 %v6523, %v6639
      %v6690 = vadd.f32 %v6524, %v6642
      %v6691 = vadd.f32 %v6525, %v6647
      %v6692 = vadd.f32 %v6526, %v6650
      %v6693 = vadd.f32 %v6527, %v6655
      %v6694 = vadd.f32 %v6528, %v6658
      %v6695 = vadd.f32 %v6529, %v6663
      %v6696 = vadd.f32 %v6530, %v6666
      %v6697 = vadd.f32 %v6531, %v6671
      %v6698 = vadd.f32 %v6532, %v6674
      %v6699 = vadd.f32 %v6533, %v6679
      %v6700 = vadd.f32 %v6534, %v6682
      %v6701 = vld [vmem:[%s6035 + $0x2] sm:$0xff]
      %v6702 = vld [vmem:[%s6035 + $0x12] sm:$0xff]
      %v6703 = vld [vmem:[%s6035 + $0x22] sm:$0xff]
      %v6704 = vld [vmem:[%s6035 + $0x32] sm:$0xff]
      %v6705 = vld [vmem:[%s6035 + $0x42] sm:$0xff]
      %v6706 = vld [vmem:[%s6035 + $0x52] sm:$0xff]
      %v6707 = vld [vmem:[%s6035 + $0x62] sm:$0xff]
      %v6708 = vld [vmem:[%s6035 + $0x72] sm:$0xff]
      %v6709 = vld [vmem:[%s6035 + $0xb2] sm:$0xff]
      %v6710 = vld [vmem:[%s6035 + $0xc2] sm:$0xff]
      %v6711 = vld [vmem:[%s6035 + $0xd2] sm:$0xff]
      %v6712 = vld [vmem:[%s6035 + $0xe2] sm:$0xff]
      %v6713 = vld [vmem:[%s6035 + $0xf2] sm:$0xff]
      %v6714 = vld [vmem:[%s6035 + $0x102] sm:$0xff]
      %v6715 = vld [vmem:[%s6035 + $0x112] sm:$0xff]
      %v6716 = vld [vmem:[%s6035 + $0x122] sm:$0xff]
      %v6717 = vpack.c.bf16 %v6702, %v6701
      %v6718 = vpack.c.bf16 %v6704, %v6703
      %v6719 = vpack.c.bf16 %v6706, %v6705
      %v6720 = vpack.c.bf16 %v6708, %v6707
      %v6721 = vpack.c.bf16 %v6710, %v6709
      %v6722 = vpack.c.bf16 %v6712, %v6711
      %v6723 = vpack.c.bf16 %v6714, %v6713
      %v6724 = vpack.c.bf16 %v6716, %v6715
      %s6725 = scalar_lea.vmem %s234, 156
      %v6726 = vld [vmem:[%s6725] sm:$0xf]
      %v6728 = vsel %vm299, %v6717, 0
      %v6731 = vsel %vm299, %v6718, 0
      %v6734 = vsel %vm299, %v6719, 0
      %v6737 = vsel %vm299, %v6720, 0
      %v6740 = vsel %vm299, %v6721, 0
      %v6743 = vsel %vm299, %v6722, 0
      %v6746 = vsel %vm299, %v6723, 0
      %v6749 = vsel %vm299, %v6724, 0
      %v6752 = vsel %vm324, %v6726, 0
      %6754 = vmatprep.subr.bf16.mxu0 0
      %6755 = vmatpush1.bf16.msra.mxu0 %v6752
      %6756 = vmatprep.subr.bf16.mxu0 0
      %6757 = vmatpush1.bf16.msra.mxu0 0
      %6758 = vmatprep.subr.bf16.mxu0 0
      %6759 = vmatpush1.bf16.msra.mxu0 0
      %6760 = vmatprep.subr.bf16.mxu0 0
      %6761 = vmatpush1.bf16.msra.mxu0 0
      %6762 = vmatprep.subr.bf16.mxu0 0
      %6763 = vmatpush1.bf16.msra.mxu0 0
      %6764 = vmatprep.subr.bf16.mxu0 0
      %6765 = vmatpush1.bf16.msra.mxu0 0
      %6766 = vmatprep.subr.bf16.mxu0 0
      %6767 = vmatpush1.bf16.msra.mxu0 0
      %6768 = vmatprep.subr.bf16.mxu0 0
      %6769 = vmatpush1.bf16.msra.mxu0 0
      %6770 = vmatprep.subr.bf16.mxu0 0
      %6771 = vmatpush1.bf16.msra.mxu0 0
      %6772 = vmatprep.subr.bf16.mxu0 0
      %6773 = vmatpush1.bf16.msra.mxu0 0
      %6774 = vmatprep.subr.bf16.mxu0 0
      %6775 = vmatpush1.bf16.msra.mxu0 0
      %6776 = vmatprep.subr.bf16.mxu0 0
      %6777 = vmatpush1.bf16.msra.mxu0 0
      %6778 = vmatprep.subr.bf16.mxu0 0
      %6779 = vmatpush1.bf16.msra.mxu0 0
      %6780 = vmatprep.subr.bf16.mxu0 0
      %6781 = vmatpush1.bf16.msra.mxu0 0
      %6782 = vmatprep.subr.bf16.mxu0 0
      %6783 = vmatpush1.bf16.msra.mxu0 0
      %6784 = vmatprep.subr.bf16.mxu0 0
      %6785 = vmatpush1.bf16.msra.mxu0 0
      %6786 = vmatprep.mubr.bf16.mxu0 0
      %6787 = vmatmul.mubr.bf16.gmra.mrb[0].mxu0 %v6728
      %v6788 = vpop.f32.mrb[0].mxu0
      %v6789 = vadd.f32 0.0, %v6788
      %v6790 = vpop.f32.mrb[0].mxu0
      %v6791 = vpop.f32.mrb[0].mxu0
      %v6792 = vadd.f32 0.0, %v6791
      %v6793 = vpop.f32.mrb[0].mxu0
      %6794 = vmatprep.mubr.bf16.mxu0 0
      %6795 = vmatmul.mubr.bf16.gmra.mrb[0].mxu0 %v6731
      %v6796 = vpop.f32.mrb[0].mxu0
      %v6797 = vadd.f32 0.0, %v6796
      %v6798 = vpop.f32.mrb[0].mxu0
      %v6799 = vpop.f32.mrb[0].mxu0
      %v6800 = vadd.f32 0.0, %v6799
      %v6801 = vpop.f32.mrb[0].mxu0
      %6802 = vmatprep.mubr.bf16.mxu0 0
      %6803 = vmatmul.mubr.bf16.gmra.mrb[0].mxu0 %v6734
      %v6804 = vpop.f32.mrb[0].mxu0
      %v6805 = vadd.f32 0.0, %v6804
      %v6806 = vpop.f32.mrb[0].mxu0
      %v6807 = vpop.f32.mrb[0].mxu0
      %v6808 = vadd.f32 0.0, %v6807
      %v6809 = vpop.f32.mrb[0].mxu0
      %6810 = vmatprep.mubr.bf16.mxu0 0
      %6811 = vmatmul.mubr.bf16.gmra.mrb[0].mxu0 %v6737
      %v6812 = vpop.f32.mrb[0].mxu0
      %v6813 = vadd.f32 0.0, %v6812
      %v6814 = vpop.f32.mrb[0].mxu0
      %v6815 = vpop.f32.mrb[0].mxu0
      %v6816 = vadd.f32 0.0, %v6815
      %v6817 = vpop.f32.mrb[0].mxu0
      %6818 = vmatprep.mubr.bf16.mxu0 0
      %6819 = vmatmul.mubr.bf16.gmra.mrb[0].mxu0 %v6740
      %v6820 = vpop.f32.mrb[0].mxu0
      %v6821 = vadd.f32 0.0, %v6820
      %v6822 = vpop.f32.mrb[0].mxu0
      %v6823 = vpop.f32.mrb[0].mxu0
      %v6824 = vadd.f32 0.0, %v6823
      %v6825 = vpop.f32.mrb[0].mxu0
      %6826 = vmatprep.mubr.bf16.mxu0 0
      %6827 = vmatmul.mubr.bf16.gmra.mrb[0].mxu0 %v6743
      %v6828 = vpop.f32.mrb[0].mxu0
      %v6829 = vadd.f32 0.0, %v6828
      %v6830 = vpop.f32.mrb[0].mxu0
      %v6831 = vpop.f32.mrb[0].mxu0
      %v6832 = vadd.f32 0.0, %v6831
      %v6833 = vpop.f32.mrb[0].mxu0
      %6834 = vmatprep.mubr.bf16.mxu0 0
      %6835 = vmatmul.mubr.bf16.gmra.mrb[0].mxu0 %v6746
      %v6836 = vpop.f32.mrb[0].mxu0
      %v6837 = vadd.f32 0.0, %v6836
      %v6838 = vpop.f32.mrb[0].mxu0
      %v6839 = vpop.f32.mrb[0].mxu0
      %v6840 = vadd.f32 0.0, %v6839
      %v6841 = vpop.f32.mrb[0].mxu0
      %6842 = vmatprep.mubr.bf16.mxu0 0
      %6843 = vmatmul.mubr.bf16.gmra.mrb[0].mxu0 %v6749
      %v6844 = vpop.f32.mrb[0].mxu0
      %v6845 = vadd.f32 0.0, %v6844
      %v6846 = vpop.f32.mrb[0].mxu0
      %v6847 = vpop.f32.mrb[0].mxu0
      %v6848 = vadd.f32 0.0, %v6847
      %v6849 = vpop.f32.mrb[0].mxu0
      %6850 = vdwg.mxu0
      %v6851 = vadd.f32 %v6685, %v6789
      %v6852 = vadd.f32 %v6686, %v6792
      %v6853 = vadd.f32 %v6687, %v6797
      %v6854 = vadd.f32 %v6688, %v6800
      %v6855 = vadd.f32 %v6689, %v6805
      %v6856 = vadd.f32 %v6690, %v6808
      %v6857 = vadd.f32 %v6691, %v6813
      %v6858 = vadd.f32 %v6692, %v6816
      %v6859 = vadd.f32 %v6693, %v6821
      %v6860 = vadd.f32 %v6694, %v6824
      %v6861 = vadd.f32 %v6695, %v6829
      %v6862 = vadd.f32 %v6696, %v6832
      %v6863 = vadd.f32 %v6697, %v6837
      %v6864 = vadd.f32 %v6698, %v6840
      %v6865 = vadd.f32 %v6699, %v6845
      %v6866 = vadd.f32 %v6700, %v6848
      %v6867 = vld [vmem:[%s6202 + $0x2] sm:$0xff]
      %v6868 = vld [vmem:[%s6202 + $0x12] sm:$0xff]
      %v6869 = vld [vmem:[%s6202 + $0x22] sm:$0xff]
      %v6870 = vld [vmem:[%s6202 + $0x32] sm:$0xff]
      %v6871 = vld [vmem:[%s6202 + $0x42] sm:$0xff]
      %v6872 = vld [vmem:[%s6202 + $0x52] sm:$0xff]
      %v6873 = vld [vmem:[%s6202 + $0x62] sm:$0xff]
      %v6874 = vld [vmem:[%s6202 + $0x72] sm:$0xff]
      %v6875 = vld [vmem:[%s6202 + $0xb2] sm:$0xff]
      %v6876 = vld [vmem:[%s6202 + $0xc2] sm:$0xff]
      %v6877 = vld [vmem:[%s6202 + $0xd2] sm:$0xff]
      %v6878 = vld [vmem:[%s6202 + $0xe2] sm:$0xff]
      %v6879 = vld [vmem:[%s6202 + $0xf2] sm:$0xff]
      %v6880 = vld [vmem:[%s6202 + $0x102] sm:$0xff]
      %v6881 = vld [vmem:[%s6202 + $0x112] sm:$0xff]
      %v6882 = vld [vmem:[%s6202 + $0x122] sm:$0xff]
      %v6883 = vpack.c.bf16 %v6868, %v6867
      %v6884 = vpack.c.bf16 %v6870, %v6869
      %v6885 = vpack.c.bf16 %v6872, %v6871
      %v6886 = vpack.c.bf16 %v6874, %v6873
      %v6887 = vpack.c.bf16 %v6876, %v6875
      %v6888 = vpack.c.bf16 %v6878, %v6877
      %v6889 = vpack.c.bf16 %v6880, %v6879
      %v6890 = vpack.c.bf16 %v6882, %v6881
      %s6891 = scalar_lea.vmem %s234, 160
      %v6892 = vld [vmem:[%s6891] sm:$0xf]
      %v6894 = vsel %vm299, %v6883, 0
      %v6897 = vsel %vm299, %v6884, 0
      %v6900 = vsel %vm299, %v6885, 0
      %v6903 = vsel %vm299, %v6886, 0
      %v6906 = vsel %vm299, %v6887, 0
      %v6909 = vsel %vm299, %v6888, 0
      %v6912 = vsel %vm299, %v6889, 0
      %v6915 = vsel %vm299, %v6890, 0
      %v6918 = vsel %vm324, %v6892, 0
      %6920 = vmatprep.subr.bf16.mxu0 0
      %6921 = vmatpush1.bf16.msra.mxu0 %v6918
      %6922 = vmatprep.subr.bf16.mxu0 0
      %6923 = vmatpush1.bf16.msra.mxu0 0
      %6924 = vmatprep.subr.bf16.mxu0 0
      %6925 = vmatpush1.bf16.msra.mxu0 0
      %6926 = vmatprep.subr.bf16.mxu0 0
      %6927 = vmatpush1.bf16.msra.mxu0 0
      %6928 = vmatprep.subr.bf16.mxu0 0
      %6929 = vmatpush1.bf16.msra.mxu0 0
      %6930 = vmatprep.subr.bf16.mxu0 0
      %6931 = vmatpush1.bf16.msra.mxu0 0
      %6932 = vmatprep.subr.bf16.mxu0 0
      %6933 = vmatpush1.bf16.msra.mxu0 0
      %6934 = vmatprep.subr.bf16.mxu0 0
      %6935 = vmatpush1.bf16.msra.mxu0 0
      %6936 = vmatprep.subr.bf16.mxu0 0
      %6937 = vmatpush1.bf16.msra.mxu0 0
      %6938 = vmatprep.subr.bf16.mxu0 0
      %6939 = vmatpush1.bf16.msra.mxu0 0
      %6940 = vmatprep.subr.bf16.mxu0 0
      %6941 = vmatpush1.bf16.msra.mxu0 0
      %6942 = vmatprep.subr.bf16.mxu0 0
      %6943 = vmatpush1.bf16.msra.mxu0 0
      %6944 = vmatprep.subr.bf16.mxu0 0
      %6945 = vmatpush1.bf16.msra.mxu0 0
      %6946 = vmatprep.subr.bf16.mxu0 0
      %6947 = vmatpush1.bf16.msra.mxu0 0
      %6948 = vmatprep.subr.bf16.mxu0 0
      %6949 = vmatpush1.bf16.msra.mxu0 0
      %6950 = vmatprep.subr.bf16.mxu0 0
      %6951 = vmatpush1.bf16.msra.mxu0 0
      %6952 = vmatprep.mubr.bf16.mxu0 0
      %6953 = vmatmul.mubr.bf16.gmra.mrb[0].mxu0 %v6894
      %v6954 = vpop.f32.mrb[0].mxu0
      %v6955 = vadd.f32 0.0, %v6954
      %v6956 = vpop.f32.mrb[0].mxu0
      %v6957 = vpop.f32.mrb[0].mxu0
      %v6958 = vadd.f32 0.0, %v6957
      %v6959 = vpop.f32.mrb[0].mxu0
      %6960 = vmatprep.mubr.bf16.mxu0 0
      %6961 = vmatmul.mubr.bf16.gmra.mrb[0].mxu0 %v6897
      %v6962 = vpop.f32.mrb[0].mxu0
      %v6963 = vadd.f32 0.0, %v6962
      %v6964 = vpop.f32.mrb[0].mxu0
      %v6965 = vpop.f32.mrb[0].mxu0
      %v6966 = vadd.f32 0.0, %v6965
      %v6967 = vpop.f32.mrb[0].mxu0
      %6968 = vmatprep.mubr.bf16.mxu0 0
      %6969 = vmatmul.mubr.bf16.gmra.mrb[0].mxu0 %v6900
      %v6970 = vpop.f32.mrb[0].mxu0
      %v6971 = vadd.f32 0.0, %v6970
      %v6972 = vpop.f32.mrb[0].mxu0
      %v6973 = vpop.f32.mrb[0].mxu0
      %v6974 = vadd.f32 0.0, %v6973
      %v6975 = vpop.f32.mrb[0].mxu0
      %6976 = vmatprep.mubr.bf16.mxu0 0
      %6977 = vmatmul.mubr.bf16.gmra.mrb[0].mxu0 %v6903
      %v6978 = vpop.f32.mrb[0].mxu0
      %v6979 = vadd.f32 0.0, %v6978
      %v6980 = vpop.f32.mrb[0].mxu0
      %v6981 = vpop.f32.mrb[0].mxu0
      %v6982 = vadd.f32 0.0, %v6981
      %v6983 = vpop.f32.mrb[0].mxu0
      %6984 = vmatprep.mubr.bf16.mxu0 0
      %6985 = vmatmul.mubr.bf16.gmra.mrb[0].mxu0 %v6906
      %v6986 = vpop.f32.mrb[0].mxu0
      %v6987 = vadd.f32 0.0, %v6986
      %v6988 = vpop.f32.mrb[0].mxu0
      %v6989 = vpop.f32.mrb[0].mxu0
      %v6990 = vadd.f32 0.0, %v6989
      %v6991 = vpop.f32.mrb[0].mxu0
      %6992 = vmatprep.mubr.bf16.mxu0 0
      %6993 = vmatmul.mubr.bf16.gmra.mrb[0].mxu0 %v6909
      %v6994 = vpop.f32.mrb[0].mxu0
      %v6995 = vadd.f32 0.0, %v6994
      %v6996 = vpop.f32.mrb[0].mxu0
      %v6997 = vpop.f32.mrb[0].mxu0
      %v6998 = vadd.f32 0.0, %v6997
      %v6999 = vpop.f32.mrb[0].mxu0
      %7000 = vmatprep.mubr.bf16.mxu0 0
      %7001 = vmatmul.mubr.bf16.gmra.mrb[0].mxu0 %v6912
      %v7002 = vpop.f32.mrb[0].mxu0
      %v7003 = vadd.f32 0.0, %v7002
      %v7004 = vpop.f32.mrb[0].mxu0
      %v7005 = vpop.f32.mrb[0].mxu0
      %v7006 = vadd.f32 0.0, %v7005
      %v7007 = vpop.f32.mrb[0].mxu0
      %7008 = vmatprep.mubr.bf16.mxu0 0
      %7009 = vmatmul.mubr.bf16.gmra.mrb[0].mxu0 %v6915
      %v7010 = vpop.f32.mrb[0].mxu0
      %v7011 = vadd.f32 0.0, %v7010
      %v7012 = vpop.f32.mrb[0].mxu0
      %v7013 = vpop.f32.mrb[0].mxu0
      %v7014 = vadd.f32 0.0, %v7013
      %v7015 = vpop.f32.mrb[0].mxu0
      %7016 = vdwg.mxu0
      %v7017 = vadd.f32 %v6851, %v6955
      %v7018 = vadd.f32 %v6852, %v6958
      %v7019 = vadd.f32 %v6853, %v6963
      %v7020 = vadd.f32 %v6854, %v6966
      %v7021 = vadd.f32 %v6855, %v6971
      %v7022 = vadd.f32 %v6856, %v6974
      %v7023 = vadd.f32 %v6857, %v6979
      %v7024 = vadd.f32 %v6858, %v6982
      %v7025 = vadd.f32 %v6859, %v6987
      %v7026 = vadd.f32 %v6860, %v6990
      %v7027 = vadd.f32 %v6861, %v6995
      %v7028 = vadd.f32 %v6862, %v6998
      %v7029 = vadd.f32 %v6863, %v7003
      %v7030 = vadd.f32 %v6864, %v7006
      %v7031 = vadd.f32 %v6865, %v7011
      %v7032 = vadd.f32 %v6866, %v7014
      %v7033 = vld [vmem:[%s6035 + $0x3] sm:$0xff]
      %v7034 = vld [vmem:[%s6035 + $0x13] sm:$0xff]
      %v7035 = vld [vmem:[%s6035 + $0x23] sm:$0xff]
      %v7036 = vld [vmem:[%s6035 + $0x33] sm:$0xff]
      %v7037 = vld [vmem:[%s6035 + $0x43] sm:$0xff]
      %v7038 = vld [vmem:[%s6035 + $0x53] sm:$0xff]
      %v7039 = vld [vmem:[%s6035 + $0x63] sm:$0xff]
      %v7040 = vld [vmem:[%s6035 + $0x73] sm:$0xff]
      %v7041 = vld [vmem:[%s6035 + $0xb3] sm:$0xff]
      %v7042 = vld [vmem:[%s6035 + $0xc3] sm:$0xff]
      %v7043 = vld [vmem:[%s6035 + $0xd3] sm:$0xff]
      %v7044 = vld [vmem:[%s6035 + $0xe3] sm:$0xff]
      %v7045 = vld [vmem:[%s6035 + $0xf3] sm:$0xff]
      %v7046 = vld [vmem:[%s6035 + $0x103] sm:$0xff]
      %v7047 = vld [vmem:[%s6035 + $0x113] sm:$0xff]
      %v7048 = vld [vmem:[%s6035 + $0x123] sm:$0xff]
      %v7049 = vpack.c.bf16 %v7034, %v7033
      %v7050 = vpack.c.bf16 %v7036, %v7035
      %v7051 = vpack.c.bf16 %v7038, %v7037
      %v7052 = vpack.c.bf16 %v7040, %v7039
      %v7053 = vpack.c.bf16 %v7042, %v7041
      %v7054 = vpack.c.bf16 %v7044, %v7043
      %v7055 = vpack.c.bf16 %v7046, %v7045
      %v7056 = vpack.c.bf16 %v7048, %v7047
      %s7057 = scalar_lea.vmem %s234, 164
      %v7058 = vld [vmem:[%s7057] sm:$0xf]
      %v7060 = vsel %vm299, %v7049, 0
      %v7063 = vsel %vm299, %v7050, 0
      %v7066 = vsel %vm299, %v7051, 0
      %v7069 = vsel %vm299, %v7052, 0
      %v7072 = vsel %vm299, %v7053, 0
      %v7075 = vsel %vm299, %v7054, 0
      %v7078 = vsel %vm299, %v7055, 0
      %v7081 = vsel %vm299, %v7056, 0
      %v7084 = vsel %vm324, %v7058, 0
      %7086 = vmatprep.subr.bf16.mxu0 0
      %7087 = vmatpush1.bf16.msra.mxu0 %v7084
      %7088 = vmatprep.subr.bf16.mxu0 0
      %7089 = vmatpush1.bf16.msra.mxu0 0
      %7090 = vmatprep.subr.bf16.mxu0 0
      %7091 = vmatpush1.bf16.msra.mxu0 0
      %7092 = vmatprep.subr.bf16.mxu0 0
      %7093 = vmatpush1.bf16.msra.mxu0 0
      %7094 = vmatprep.subr.bf16.mxu0 0
      %7095 = vmatpush1.bf16.msra.mxu0 0
      %7096 = vmatprep.subr.bf16.mxu0 0
      %7097 = vmatpush1.bf16.msra.mxu0 0
      %7098 = vmatprep.subr.bf16.mxu0 0
      %7099 = vmatpush1.bf16.msra.mxu0 0
      %7100 = vmatprep.subr.bf16.mxu0 0
      %7101 = vmatpush1.bf16.msra.mxu0 0
      %7102 = vmatprep.subr.bf16.mxu0 0
      %7103 = vmatpush1.bf16.msra.mxu0 0
      %7104 = vmatprep.subr.bf16.mxu0 0
      %7105 = vmatpush1.bf16.msra.mxu0 0
      %7106 = vmatprep.subr.bf16.mxu0 0
      %7107 = vmatpush1.bf16.msra.mxu0 0
      %7108 = vmatprep.subr.bf16.mxu0 0
      %7109 = vmatpush1.bf16.msra.mxu0 0
      %7110 = vmatprep.subr.bf16.mxu0 0
      %7111 = vmatpush1.bf16.msra.mxu0 0
      %7112 = vmatprep.subr.bf16.mxu0 0
      %7113 = vmatpush1.bf16.msra.mxu0 0
      %7114 = vmatprep.subr.bf16.mxu0 0
      %7115 = vmatpush1.bf16.msra.mxu0 0
      %7116 = vmatprep.subr.bf16.mxu0 0
      %7117 = vmatpush1.bf16.msra.mxu0 0
      %7118 = vmatprep.mubr.bf16.mxu0 0
      %7119 = vmatmul.mubr.bf16.gmra.mrb[0].mxu0 %v7060
      %v7120 = vpop.f32.mrb[0].mxu0
      %v7121 = vadd.f32 0.0, %v7120
      %v7122 = vpop.f32.mrb[0].mxu0
      %v7123 = vpop.f32.mrb[0].mxu0
      %v7124 = vadd.f32 0.0, %v7123
      %v7125 = vpop.f32.mrb[0].mxu0
      %7126 = vmatprep.mubr.bf16.mxu0 0
      %7127 = vmatmul.mubr.bf16.gmra.mrb[0].mxu0 %v7063
      %v7128 = vpop.f32.mrb[0].mxu0
      %v7129 = vadd.f32 0.0, %v7128
      %v7130 = vpop.f32.mrb[0].mxu0
      %v7131 = vpop.f32.mrb[0].mxu0
      %v7132 = vadd.f32 0.0, %v7131
      %v7133 = vpop.f32.mrb[0].mxu0
      %7134 = vmatprep.mubr.bf16.mxu0 0
      %7135 = vmatmul.mubr.bf16.gmra.mrb[0].mxu0 %v7066
      %v7136 = vpop.f32.mrb[0].mxu0
      %v7137 = vadd.f32 0.0, %v7136
      %v7138 = vpop.f32.mrb[0].mxu0
      %v7139 = vpop.f32.mrb[0].mxu0
      %v7140 = vadd.f32 0.0, %v7139
      %v7141 = vpop.f32.mrb[0].mxu0
      %7142 = vmatprep.mubr.bf16.mxu0 0
      %7143 = vmatmul.mubr.bf16.gmra.mrb[0].mxu0 %v7069
      %v7144 = vpop.f32.mrb[0].mxu0
      %v7145 = vadd.f32 0.0, %v7144
      %v7146 = vpop.f32.mrb[0].mxu0
      %v7147 = vpop.f32.mrb[0].mxu0
      %v7148 = vadd.f32 0.0, %v7147
      %v7149 = vpop.f32.mrb[0].mxu0
      %7150 = vmatprep.mubr.bf16.mxu0 0
      %7151 = vmatmul.mubr.bf16.gmra.mrb[0].mxu0 %v7072
      %v7152 = vpop.f32.mrb[0].mxu0
      %v7153 = vadd.f32 0.0, %v7152
      %v7154 = vpop.f32.mrb[0].mxu0
      %v7155 = vpop.f32.mrb[0].mxu0
      %v7156 = vadd.f32 0.0, %v7155
      %v7157 = vpop.f32.mrb[0].mxu0
      %7158 = vmatprep.mubr.bf16.mxu0 0
      %7159 = vmatmul.mubr.bf16.gmra.mrb[0].mxu0 %v7075
      %v7160 = vpop.f32.mrb[0].mxu0
      %v7161 = vadd.f32 0.0, %v7160
      %v7162 = vpop.f32.mrb[0].mxu0
      %v7163 = vpop.f32.mrb[0].mxu0
      %v7164 = vadd.f32 0.0, %v7163
      %v7165 = vpop.f32.mrb[0].mxu0
      %7166 = vmatprep.mubr.bf16.mxu0 0
      %7167 = vmatmul.mubr.bf16.gmra.mrb[0].mxu0 %v7078
      %v7168 = vpop.f32.mrb[0].mxu0
      %v7169 = vadd.f32 0.0, %v7168
      %v7170 = vpop.f32.mrb[0].mxu0
      %v7171 = vpop.f32.mrb[0].mxu0
      %v7172 = vadd.f32 0.0, %v7171
      %v7173 = vpop.f32.mrb[0].mxu0
      %7174 = vmatprep.mubr.bf16.mxu0 0
      %7175 = vmatmul.mubr.bf16.gmra.mrb[0].mxu0 %v7081
      %v7176 = vpop.f32.mrb[0].mxu0
      %v7177 = vadd.f32 0.0, %v7176
      %v7178 = vpop.f32.mrb[0].mxu0
      %v7179 = vpop.f32.mrb[0].mxu0
      %v7180 = vadd.f32 0.0, %v7179
      %v7181 = vpop.f32.mrb[0].mxu0
      %7182 = vdwg.mxu0
      %v7183 = vadd.f32 %v7017, %v7121
      %v7184 = vadd.f32 %v7018, %v7124
      %v7185 = vadd.f32 %v7019, %v7129
      %v7186 = vadd.f32 %v7020, %v7132
      %v7187 = vadd.f32 %v7021, %v7137
      %v7188 = vadd.f32 %v7022, %v7140
      %v7189 = vadd.f32 %v7023, %v7145
      %v7190 = vadd.f32 %v7024, %v7148
      %v7191 = vadd.f32 %v7025, %v7153
      %v7192 = vadd.f32 %v7026, %v7156
      %v7193 = vadd.f32 %v7027, %v7161
      %v7194 = vadd.f32 %v7028, %v7164
      %v7195 = vadd.f32 %v7029, %v7169
      %v7196 = vadd.f32 %v7030, %v7172
      %v7197 = vadd.f32 %v7031, %v7177
      %v7198 = vadd.f32 %v7032, %v7180
      %s7199 = scalar_lea.vmem %s229, 48
      %v7200 = vld [vmem:[%s7199] sm:$0xff]
      %v7201 = vld [vmem:[%s7199 + $0x10] sm:$0xff]
      %v7202 = vld [vmem:[%s7199 + $0x20] sm:$0xff]
      %v7203 = vld [vmem:[%s7199 + $0x30] sm:$0xff]
      %v7204 = vld [vmem:[%s7199 + $0x40] sm:$0xff]
      %v7205 = vld [vmem:[%s7199 + $0x50] sm:$0xff]
      %v7206 = vld [vmem:[%s7199 + $0x60] sm:$0xff]
      %v7207 = vld [vmem:[%s7199 + $0x70] sm:$0xff]
      %v7208 = vld [vmem:[%s7199 + $0xb0] sm:$0xff]
      %v7209 = vld [vmem:[%s7199 + $0xc0] sm:$0xff]
      %v7210 = vld [vmem:[%s7199 + $0xd0] sm:$0xff]
      %v7211 = vld [vmem:[%s7199 + $0xe0] sm:$0xff]
      %v7212 = vld [vmem:[%s7199 + $0xf0] sm:$0xff]
      %v7213 = vld [vmem:[%s7199 + $0x100] sm:$0xff]
      %v7214 = vld [vmem:[%s7199 + $0x110] sm:$0xff]
      %v7215 = vld [vmem:[%s7199 + $0x120] sm:$0xff]
      %v7216 = vpack.c.bf16 %v7201, %v7200
      %v7217 = vpack.c.bf16 %v7203, %v7202
      %v7218 = vpack.c.bf16 %v7205, %v7204
      %v7219 = vpack.c.bf16 %v7207, %v7206
      %v7220 = vpack.c.bf16 %v7209, %v7208
      %v7221 = vpack.c.bf16 %v7211, %v7210
      %v7222 = vpack.c.bf16 %v7213, %v7212
      %v7223 = vpack.c.bf16 %v7215, %v7214
      %s7224 = scalar_lea.vmem %s234, 168
      %v7225 = vld [vmem:[%s7224] sm:$0xf]
      %v7227 = vsel %vm299, %v7216, 0
      %v7230 = vsel %vm299, %v7217, 0
      %v7233 = vsel %vm299, %v7218, 0
      %v7236 = vsel %vm299, %v7219, 0
      %v7239 = vsel %vm299, %v7220, 0
      %v7242 = vsel %vm299, %v7221, 0
      %v7245 = vsel %vm299, %v7222, 0
      %v7248 = vsel %vm299, %v7223, 0
      %v7251 = vsel %vm324, %v7225, 0
      %7253 = vmatprep.subr.bf16.mxu0 0
      %7254 = vmatpush1.bf16.msra.mxu0 %v7251
      %7255 = vmatprep.subr.bf16.mxu0 0
      %7256 = vmatpush1.bf16.msra.mxu0 0
      %7257 = vmatprep.subr.bf16.mxu0 0
      %7258 = vmatpush1.bf16.msra.mxu0 0
      %7259 = vmatprep.subr.bf16.mxu0 0
      %7260 = vmatpush1.bf16.msra.mxu0 0
      %7261 = vmatprep.subr.bf16.mxu0 0
      %7262 = vmatpush1.bf16.msra.mxu0 0
      %7263 = vmatprep.subr.bf16.mxu0 0
      %7264 = vmatpush1.bf16.msra.mxu0 0
      %7265 = vmatprep.subr.bf16.mxu0 0
      %7266 = vmatpush1.bf16.msra.mxu0 0
      %7267 = vmatprep.subr.bf16.mxu0 0
      %7268 = vmatpush1.bf16.msra.mxu0 0
      %7269 = vmatprep.subr.bf16.mxu0 0
      %7270 = vmatpush1.bf16.msra.mxu0 0
      %7271 = vmatprep.subr.bf16.mxu0 0
      %7272 = vmatpush1.bf16.msra.mxu0 0
      %7273 = vmatprep.subr.bf16.mxu0 0
      %7274 = vmatpush1.bf16.msra.mxu0 0
      %7275 = vmatprep.subr.bf16.mxu0 0
      %7276 = vmatpush1.bf16.msra.mxu0 0
      %7277 = vmatprep.subr.bf16.mxu0 0
      %7278 = vmatpush1.bf16.msra.mxu0 0
      %7279 = vmatprep.subr.bf16.mxu0 0
      %7280 = vmatpush1.bf16.msra.mxu0 0
      %7281 = vmatprep.subr.bf16.mxu0 0
      %7282 = vmatpush1.bf16.msra.mxu0 0
      %7283 = vmatprep.subr.bf16.mxu0 0
      %7284 = vmatpush1.bf16.msra.mxu0 0
      %7285 = vmatprep.mubr.bf16.mxu0 0
      %7286 = vmatmul.mubr.bf16.gmra.mrb[0].mxu0 %v7227
      %v7287 = vpop.f32.mrb[0].mxu0
      %v7288 = vadd.f32 0.0, %v7287
      %v7289 = vpop.f32.mrb[0].mxu0
      %v7290 = vpop.f32.mrb[0].mxu0
      %v7291 = vadd.f32 0.0, %v7290
      %v7292 = vpop.f32.mrb[0].mxu0
      %7293 = vmatprep.mubr.bf16.mxu0 0
      %7294 = vmatmul.mubr.bf16.gmra.mrb[0].mxu0 %v7230
      %v7295 = vpop.f32.mrb[0].mxu0
      %v7296 = vadd.f32 0.0, %v7295
      %v7297 = vpop.f32.mrb[0].mxu0
      %v7298 = vpop.f32.mrb[0].mxu0
      %v7299 = vadd.f32 0.0, %v7298
      %v7300 = vpop.f32.mrb[0].mxu0
      %7301 = vmatprep.mubr.bf16.mxu0 0
      %7302 = vmatmul.mubr.bf16.gmra.mrb[0].mxu0 %v7233
      %v7303 = vpop.f32.mrb[0].mxu0
      %v7304 = vadd.f32 0.0, %v7303
      %v7305 = vpop.f32.mrb[0].mxu0
      %v7306 = vpop.f32.mrb[0].mxu0
      %v7307 = vadd.f32 0.0, %v7306
      %v7308 = vpop.f32.mrb[0].mxu0
      %7309 = vmatprep.mubr.bf16.mxu0 0
      %7310 = vmatmul.mubr.bf16.gmra.mrb[0].mxu0 %v7236
      %v7311 = vpop.f32.mrb[0].mxu0
      %v7312 = vadd.f32 0.0, %v7311
      %v7313 = vpop.f32.mrb[0].mxu0
      %v7314 = vpop.f32.mrb[0].mxu0
      %v7315 = vadd.f32 0.0, %v7314
      %v7316 = vpop.f32.mrb[0].mxu0
      %7317 = vmatprep.mubr.bf16.mxu0 0
      %7318 = vmatmul.mubr.bf16.gmra.mrb[0].mxu0 %v7239
      %v7319 = vpop.f32.mrb[0].mxu0
      %v7320 = vadd.f32 0.0, %v7319
      %v7321 = vpop.f32.mrb[0].mxu0
      %v7322 = vpop.f32.mrb[0].mxu0
      %v7323 = vadd.f32 0.0, %v7322
      %v7324 = vpop.f32.mrb[0].mxu0
      %7325 = vmatprep.mubr.bf16.mxu0 0
      %7326 = vmatmul.mubr.bf16.gmra.mrb[0].mxu0 %v7242
      %v7327 = vpop.f32.mrb[0].mxu0
      %v7328 = vadd.f32 0.0, %v7327
      %v7329 = vpop.f32.mrb[0].mxu0
      %v7330 = vpop.f32.mrb[0].mxu0
      %v7331 = vadd.f32 0.0, %v7330
      %v7332 = vpop.f32.mrb[0].mxu0
      %7333 = vmatprep.mubr.bf16.mxu0 0
      %7334 = vmatmul.mubr.bf16.gmra.mrb[0].mxu0 %v7245
      %v7335 = vpop.f32.mrb[0].mxu0
      %v7336 = vadd.f32 0.0, %v7335
      %v7337 = vpop.f32.mrb[0].mxu0
      %v7338 = vpop.f32.mrb[0].mxu0
      %v7339 = vadd.f32 0.0, %v7338
      %v7340 = vpop.f32.mrb[0].mxu0
      %7341 = vmatprep.mubr.bf16.mxu0 0
      %7342 = vmatmul.mubr.bf16.gmra.mrb[0].mxu0 %v7248
      %v7343 = vpop.f32.mrb[0].mxu0
      %v7344 = vadd.f32 0.0, %v7343
      %v7345 = vpop.f32.mrb[0].mxu0
      %v7346 = vpop.f32.mrb[0].mxu0
      %v7347 = vadd.f32 0.0, %v7346
      %v7348 = vpop.f32.mrb[0].mxu0
      %7349 = vdwg.mxu0
      %v7350 = vadd.f32 %v7183, %v7288
      %v7351 = vadd.f32 %v7184, %v7291
      %v7352 = vadd.f32 %v7185, %v7296
      %v7353 = vadd.f32 %v7186, %v7299
      %v7354 = vadd.f32 %v7187, %v7304
      %v7355 = vadd.f32 %v7188, %v7307
      %v7356 = vadd.f32 %v7189, %v7312
      %v7357 = vadd.f32 %v7190, %v7315
      %v7358 = vadd.f32 %v7191, %v7320
      %v7359 = vadd.f32 %v7192, %v7323
      %v7360 = vadd.f32 %v7193, %v7328
      %v7361 = vadd.f32 %v7194, %v7331
      %v7362 = vadd.f32 %v7195, %v7336
      %v7363 = vadd.f32 %v7196, %v7339
      %v7364 = vadd.f32 %v7197, %v7344
      %v7365 = vadd.f32 %v7198, %v7347
      %s7366 = scalar_lea.vmem %s229, 400
      %v7367 = vld [vmem:[%s7366] sm:$0xff]
      %v7368 = vld [vmem:[%s7366 + $0x10] sm:$0xff]
      %v7369 = vld [vmem:[%s7366 + $0x20] sm:$0xff]
      %v7370 = vld [vmem:[%s7366 + $0x30] sm:$0xff]
      %v7371 = vld [vmem:[%s7366 + $0x40] sm:$0xff]
      %v7372 = vld [vmem:[%s7366 + $0x50] sm:$0xff]
      %v7373 = vld [vmem:[%s7366 + $0x60] sm:$0xff]
      %v7374 = vld [vmem:[%s7366 + $0x70] sm:$0xff]
      %v7375 = vld [vmem:[%s7366 + $0xb0] sm:$0xff]
      %v7376 = vld [vmem:[%s7366 + $0xc0] sm:$0xff]
      %v7377 = vld [vmem:[%s7366 + $0xd0] sm:$0xff]
      %v7378 = vld [vmem:[%s7366 + $0xe0] sm:$0xff]
      %v7379 = vld [vmem:[%s7366 + $0xf0] sm:$0xff]
      %v7380 = vld [vmem:[%s7366 + $0x100] sm:$0xff]
      %v7381 = vld [vmem:[%s7366 + $0x110] sm:$0xff]
      %v7382 = vld [vmem:[%s7366 + $0x120] sm:$0xff]
      %v7383 = vpack.c.bf16 %v7368, %v7367
      %v7384 = vpack.c.bf16 %v7370, %v7369
      %v7385 = vpack.c.bf16 %v7372, %v7371
      %v7386 = vpack.c.bf16 %v7374, %v7373
      %v7387 = vpack.c.bf16 %v7376, %v7375
      %v7388 = vpack.c.bf16 %v7378, %v7377
      %v7389 = vpack.c.bf16 %v7380, %v7379
      %v7390 = vpack.c.bf16 %v7382, %v7381
      %s7391 = scalar_lea.vmem %s234, 172
      %v7392 = vld [vmem:[%s7391] sm:$0xf]
      %v7394 = vsel %vm299, %v7383, 0
      %v7397 = vsel %vm299, %v7384, 0
      %v7400 = vsel %vm299, %v7385, 0
      %v7403 = vsel %vm299, %v7386, 0
      %v7406 = vsel %vm299, %v7387, 0
      %v7409 = vsel %vm299, %v7388, 0
      %v7412 = vsel %vm299, %v7389, 0
      %v7415 = vsel %vm299, %v7390, 0
      %v7418 = vsel %vm324, %v7392, 0
      %7420 = vmatprep.subr.bf16.mxu0 0
      %7421 = vmatpush1.bf16.msra.mxu0 %v7418
      %7422 = vmatprep.subr.bf16.mxu0 0
      %7423 = vmatpush1.bf16.msra.mxu0 0
      %7424 = vmatprep.subr.bf16.mxu0 0
      %7425 = vmatpush1.bf16.msra.mxu0 0
      %7426 = vmatprep.subr.bf16.mxu0 0
      %7427 = vmatpush1.bf16.msra.mxu0 0
      %7428 = vmatprep.subr.bf16.mxu0 0
      %7429 = vmatpush1.bf16.msra.mxu0 0
      %7430 = vmatprep.subr.bf16.mxu0 0
      %7431 = vmatpush1.bf16.msra.mxu0 0
      %7432 = vmatprep.subr.bf16.mxu0 0
      %7433 = vmatpush1.bf16.msra.mxu0 0
      %7434 = vmatprep.subr.bf16.mxu0 0
      %7435 = vmatpush1.bf16.msra.mxu0 0
      %7436 = vmatprep.subr.bf16.mxu0 0
      %7437 = vmatpush1.bf16.msra.mxu0 0
      %7438 = vmatprep.subr.bf16.mxu0 0
      %7439 = vmatpush1.bf16.msra.mxu0 0
      %7440 = vmatprep.subr.bf16.mxu0 0
      %7441 = vmatpush1.bf16.msra.mxu0 0
      %7442 = vmatprep.subr.bf16.mxu0 0
      %7443 = vmatpush1.bf16.msra.mxu0 0
      %7444 = vmatprep.subr.bf16.mxu0 0
      %7445 = vmatpush1.bf16.msra.mxu0 0
      %7446 = vmatprep.subr.bf16.mxu0 0
      %7447 = vmatpush1.bf16.msra.mxu0 0
      %7448 = vmatprep.subr.bf16.mxu0 0
      %7449 = vmatpush1.bf16.msra.mxu0 0
      %7450 = vmatprep.subr.bf16.mxu0 0
      %7451 = vmatpush1.bf16.msra.mxu0 0
      %7452 = vmatprep.mubr.bf16.mxu0 0
      %7453 = vmatmul.mubr.bf16.gmra.mrb[0].mxu0 %v7394
      %v7454 = vpop.f32.mrb[0].mxu0
      %v7455 = vadd.f32 0.0, %v7454
      %v7456 = vpop.f32.mrb[0].mxu0
      %v7457 = vpop.f32.mrb[0].mxu0
      %v7458 = vadd.f32 0.0, %v7457
      %v7459 = vpop.f32.mrb[0].mxu0
      %7460 = vmatprep.mubr.bf16.mxu0 0
      %7461 = vmatmul.mubr.bf16.gmra.mrb[0].mxu0 %v7397
      %v7462 = vpop.f32.mrb[0].mxu0
      %v7463 = vadd.f32 0.0, %v7462
      %v7464 = vpop.f32.mrb[0].mxu0
      %v7465 = vpop.f32.mrb[0].mxu0
      %v7466 = vadd.f32 0.0, %v7465
      %v7467 = vpop.f32.mrb[0].mxu0
      %7468 = vmatprep.mubr.bf16.mxu0 0
      %7469 = vmatmul.mubr.bf16.gmra.mrb[0].mxu0 %v7400
      %v7470 = vpop.f32.mrb[0].mxu0
      %v7471 = vadd.f32 0.0, %v7470
      %v7472 = vpop.f32.mrb[0].mxu0
      %v7473 = vpop.f32.mrb[0].mxu0
      %v7474 = vadd.f32 0.0, %v7473
      %v7475 = vpop.f32.mrb[0].mxu0
      %7476 = vmatprep.mubr.bf16.mxu0 0
      %7477 = vmatmul.mubr.bf16.gmra.mrb[0].mxu0 %v7403
      %v7478 = vpop.f32.mrb[0].mxu0
      %v7479 = vadd.f32 0.0, %v7478
      %v7480 = vpop.f32.mrb[0].mxu0
      %v7481 = vpop.f32.mrb[0].mxu0
      %v7482 = vadd.f32 0.0, %v7481
      %v7483 = vpop.f32.mrb[0].mxu0
      %7484 = vmatprep.mubr.bf16.mxu0 0
      %7485 = vmatmul.mubr.bf16.gmra.mrb[0].mxu0 %v7406
      %v7486 = vpop.f32.mrb[0].mxu0
      %v7487 = vadd.f32 0.0, %v7486
      %v7488 = vpop.f32.mrb[0].mxu0
      %v7489 = vpop.f32.mrb[0].mxu0
      %v7490 = vadd.f32 0.0, %v7489
      %v7491 = vpop.f32.mrb[0].mxu0
      %7492 = vmatprep.mubr.bf16.mxu0 0
      %7493 = vmatmul.mubr.bf16.gmra.mrb[0].mxu0 %v7409
      %v7494 = vpop.f32.mrb[0].mxu0
      %v7495 = vadd.f32 0.0, %v7494
      %v7496 = vpop.f32.mrb[0].mxu0
      %v7497 = vpop.f32.mrb[0].mxu0
      %v7498 = vadd.f32 0.0, %v7497
      %v7499 = vpop.f32.mrb[0].mxu0
      %7500 = vmatprep.mubr.bf16.mxu0 0
      %7501 = vmatmul.mubr.bf16.gmra.mrb[0].mxu0 %v7412
      %v7502 = vpop.f32.mrb[0].mxu0
      %v7503 = vadd.f32 0.0, %v7502
      %v7504 = vpop.f32.mrb[0].mxu0
      %v7505 = vpop.f32.mrb[0].mxu0
      %v7506 = vadd.f32 0.0, %v7505
      %v7507 = vpop.f32.mrb[0].mxu0
      %7508 = vmatprep.mubr.bf16.mxu0 0
      %7509 = vmatmul.mubr.bf16.gmra.mrb[0].mxu0 %v7415
      %v7510 = vpop.f32.mrb[0].mxu0
      %v7511 = vadd.f32 0.0, %v7510
      %v7512 = vpop.f32.mrb[0].mxu0
      %v7513 = vpop.f32.mrb[0].mxu0
      %v7514 = vadd.f32 0.0, %v7513
      %v7515 = vpop.f32.mrb[0].mxu0
      %7516 = vdwg.mxu0
      %v7517 = vadd.f32 %v7350, %v7455
      %v7518 = vadd.f32 %v7351, %v7458
      %v7519 = vadd.f32 %v7352, %v7463
      %v7520 = vadd.f32 %v7353, %v7466
      %v7521 = vadd.f32 %v7354, %v7471
      %v7522 = vadd.f32 %v7355, %v7474
      %v7523 = vadd.f32 %v7356, %v7479
      %v7524 = vadd.f32 %v7357, %v7482
      %v7525 = vadd.f32 %v7358, %v7487
      %v7526 = vadd.f32 %v7359, %v7490
      %v7527 = vadd.f32 %v7360, %v7495
      %v7528 = vadd.f32 %v7361, %v7498
      %v7529 = vadd.f32 %v7362, %v7503
      %v7530 = vadd.f32 %v7363, %v7506
      %v7531 = vadd.f32 %v7364, %v7511
      %v7532 = vadd.f32 %v7365, %v7514
      %v7533 = vld [vmem:[%s7199 + $0x1] sm:$0xff]
      %v7534 = vld [vmem:[%s7199 + $0x11] sm:$0xff]
      %v7535 = vld [vmem:[%s7199 + $0x21] sm:$0xff]
      %v7536 = vld [vmem:[%s7199 + $0x31] sm:$0xff]
      %v7537 = vld [vmem:[%s7199 + $0x41] sm:$0xff]
      %v7538 = vld [vmem:[%s7199 + $0x51] sm:$0xff]
      %v7539 = vld [vmem:[%s7199 + $0x61] sm:$0xff]
      %v7540 = vld [vmem:[%s7199 + $0x71] sm:$0xff]
      %v7541 = vld [vmem:[%s7199 + $0xb1] sm:$0xff]
      %v7542 = vld [vmem:[%s7199 + $0xc1] sm:$0xff]
      %v7543 = vld [vmem:[%s7199 + $0xd1] sm:$0xff]
      %v7544 = vld [vmem:[%s7199 + $0xe1] sm:$0xff]
      %v7545 = vld [vmem:[%s7199 + $0xf1] sm:$0xff]
      %v7546 = vld [vmem:[%s7199 + $0x101] sm:$0xff]
      %v7547 = vld [vmem:[%s7199 + $0x111] sm:$0xff]
      %v7548 = vld [vmem:[%s7199 + $0x121] sm:$0xff]
      %v7549 = vpack.c.bf16 %v7534, %v7533
      %v7550 = vpack.c.bf16 %v7536, %v7535
      %v7551 = vpack.c.bf16 %v7538, %v7537
      %v7552 = vpack.c.bf16 %v7540, %v7539
      %v7553 = vpack.c.bf16 %v7542, %v7541
      %v7554 = vpack.c.bf16 %v7544, %v7543
      %v7555 = vpack.c.bf16 %v7546, %v7545
      %v7556 = vpack.c.bf16 %v7548, %v7547
      %s7557 = scalar_lea.vmem %s234, 176
      %v7558 = vld [vmem:[%s7557] sm:$0xf]
      %v7560 = vsel %vm299, %v7549, 0
      %v7563 = vsel %vm299, %v7550, 0
      %v7566 = vsel %vm299, %v7551, 0
      %v7569 = vsel %vm299, %v7552, 0
      %v7572 = vsel %vm299, %v7553, 0
      %v7575 = vsel %vm299, %v7554, 0
      %v7578 = vsel %vm299, %v7555, 0
      %v7581 = vsel %vm299, %v7556, 0
      %v7584 = vsel %vm324, %v7558, 0
      %7586 = vmatprep.subr.bf16.mxu0 0
      %7587 = vmatpush1.bf16.msra.mxu0 %v7584
      %7588 = vmatprep.subr.bf16.mxu0 0
      %7589 = vmatpush1.bf16.msra.mxu0 0
      %7590 = vmatprep.subr.bf16.mxu0 0
      %7591 = vmatpush1.bf16.msra.mxu0 0
      %7592 = vmatprep.subr.bf16.mxu0 0
      %7593 = vmatpush1.bf16.msra.mxu0 0
      %7594 = vmatprep.subr.bf16.mxu0 0
      %7595 = vmatpush1.bf16.msra.mxu0 0
      %7596 = vmatprep.subr.bf16.mxu0 0
      %7597 = vmatpush1.bf16.msra.mxu0 0
      %7598 = vmatprep.subr.bf16.mxu0 0
      %7599 = vmatpush1.bf16.msra.mxu0 0
      %7600 = vmatprep.subr.bf16.mxu0 0
      %7601 = vmatpush1.bf16.msra.mxu0 0
      %7602 = vmatprep.subr.bf16.mxu0 0
      %7603 = vmatpush1.bf16.msra.mxu0 0
      %7604 = vmatprep.subr.bf16.mxu0 0
      %7605 = vmatpush1.bf16.msra.mxu0 0
      %7606 = vmatprep.subr.bf16.mxu0 0
      %7607 = vmatpush1.bf16.msra.mxu0 0
      %7608 = vmatprep.subr.bf16.mxu0 0
      %7609 = vmatpush1.bf16.msra.mxu0 0
      %7610 = vmatprep.subr.bf16.mxu0 0
      %7611 = vmatpush1.bf16.msra.mxu0 0
      %7612 = vmatprep.subr.bf16.mxu0 0
      %7613 = vmatpush1.bf16.msra.mxu0 0
      %7614 = vmatprep.subr.bf16.mxu0 0
      %7615 = vmatpush1.bf16.msra.mxu0 0
      %7616 = vmatprep.subr.bf16.mxu0 0
      %7617 = vmatpush1.bf16.msra.mxu0 0
      %7618 = vmatprep.mubr.bf16.mxu0 0
      %7619 = vmatmul.mubr.bf16.gmra.mrb[0].mxu0 %v7560
      %v7620 = vpop.f32.mrb[0].mxu0
      %v7621 = vadd.f32 0.0, %v7620
      %v7622 = vpop.f32.mrb[0].mxu0
      %v7623 = vpop.f32.mrb[0].mxu0
      %v7624 = vadd.f32 0.0, %v7623
      %v7625 = vpop.f32.mrb[0].mxu0
      %7626 = vmatprep.mubr.bf16.mxu0 0
      %7627 = vmatmul.mubr.bf16.gmra.mrb[0].mxu0 %v7563
      %v7628 = vpop.f32.mrb[0].mxu0
      %v7629 = vadd.f32 0.0, %v7628
      %v7630 = vpop.f32.mrb[0].mxu0
      %v7631 = vpop.f32.mrb[0].mxu0
      %v7632 = vadd.f32 0.0, %v7631
      %v7633 = vpop.f32.mrb[0].mxu0
      %7634 = vmatprep.mubr.bf16.mxu0 0
      %7635 = vmatmul.mubr.bf16.gmra.mrb[0].mxu0 %v7566
      %v7636 = vpop.f32.mrb[0].mxu0
      %v7637 = vadd.f32 0.0, %v7636
      %v7638 = vpop.f32.mrb[0].mxu0
      %v7639 = vpop.f32.mrb[0].mxu0
      %v7640 = vadd.f32 0.0, %v7639
      %v7641 = vpop.f32.mrb[0].mxu0
      %7642 = vmatprep.mubr.bf16.mxu0 0
      %7643 = vmatmul.mubr.bf16.gmra.mrb[0].mxu0 %v7569
      %v7644 = vpop.f32.mrb[0].mxu0
      %v7645 = vadd.f32 0.0, %v7644
      %v7646 = vpop.f32.mrb[0].mxu0
      %v7647 = vpop.f32.mrb[0].mxu0
      %v7648 = vadd.f32 0.0, %v7647
      %v7649 = vpop.f32.mrb[0].mxu0
      %7650 = vmatprep.mubr.bf16.mxu0 0
      %7651 = vmatmul.mubr.bf16.gmra.mrb[0].mxu0 %v7572
      %v7652 = vpop.f32.mrb[0].mxu0
      %v7653 = vadd.f32 0.0, %v7652
      %v7654 = vpop.f32.mrb[0].mxu0
      %v7655 = vpop.f32.mrb[0].mxu0
      %v7656 = vadd.f32 0.0, %v7655
      %v7657 = vpop.f32.mrb[0].mxu0
      %7658 = vmatprep.mubr.bf16.mxu0 0
      %7659 = vmatmul.mubr.bf16.gmra.mrb[0].mxu0 %v7575
      %v7660 = vpop.f32.mrb[0].mxu0
      %v7661 = vadd.f32 0.0, %v7660
      %v7662 = vpop.f32.mrb[0].mxu0
      %v7663 = vpop.f32.mrb[0].mxu0
      %v7664 = vadd.f32 0.0, %v7663
      %v7665 = vpop.f32.mrb[0].mxu0
      %7666 = vmatprep.mubr.bf16.mxu0 0
      %7667 = vmatmul.mubr.bf16.gmra.mrb[0].mxu0 %v7578
      %v7668 = vpop.f32.mrb[0].mxu0
      %v7669 = vadd.f32 0.0, %v7668
      %v7670 = vpop.f32.mrb[0].mxu0
      %v7671 = vpop.f32.mrb[0].mxu0
      %v7672 = vadd.f32 0.0, %v7671
      %v7673 = vpop.f32.mrb[0].mxu0
      %7674 = vmatprep.mubr.bf16.mxu0 0
      %7675 = vmatmul.mubr.bf16.gmra.mrb[0].mxu0 %v7581
      %v7676 = vpop.f32.mrb[0].mxu0
      %v7677 = vadd.f32 0.0, %v7676
      %v7678 = vpop.f32.mrb[0].mxu0
      %v7679 = vpop.f32.mrb[0].mxu0
      %v7680 = vadd.f32 0.0, %v7679
      %v7681 = vpop.f32.mrb[0].mxu0
      %7682 = vdwg.mxu0
      %v7683 = vadd.f32 %v7517, %v7621
      %v7684 = vadd.f32 %v7518, %v7624
      %v7685 = vadd.f32 %v7519, %v7629
      %v7686 = vadd.f32 %v7520, %v7632
      %v7687 = vadd.f32 %v7521, %v7637
      %v7688 = vadd.f32 %v7522, %v7640
      %v7689 = vadd.f32 %v7523, %v7645
      %v7690 = vadd.f32 %v7524, %v7648
      %v7691 = vadd.f32 %v7525, %v7653
      %v7692 = vadd.f32 %v7526, %v7656
      %v7693 = vadd.f32 %v7527, %v7661
      %v7694 = vadd.f32 %v7528, %v7664
      %v7695 = vadd.f32 %v7529, %v7669
      %v7696 = vadd.f32 %v7530, %v7672
      %v7697 = vadd.f32 %v7531, %v7677
      %v7698 = vadd.f32 %v7532, %v7680
      %v7699 = vld [vmem:[%s7366 + $0x1] sm:$0xff]
      %v7700 = vld [vmem:[%s7366 + $0x11] sm:$0xff]
      %v7701 = vld [vmem:[%s7366 + $0x21] sm:$0xff]
      %v7702 = vld [vmem:[%s7366 + $0x31] sm:$0xff]
      %v7703 = vld [vmem:[%s7366 + $0x41] sm:$0xff]
      %v7704 = vld [vmem:[%s7366 + $0x51] sm:$0xff]
      %v7705 = vld [vmem:[%s7366 + $0x61] sm:$0xff]
      %v7706 = vld [vmem:[%s7366 + $0x71] sm:$0xff]
      %v7707 = vld [vmem:[%s7366 + $0xb1] sm:$0xff]
      %v7708 = vld [vmem:[%s7366 + $0xc1] sm:$0xff]
      %v7709 = vld [vmem:[%s7366 + $0xd1] sm:$0xff]
      %v7710 = vld [vmem:[%s7366 + $0xe1] sm:$0xff]
      %v7711 = vld [vmem:[%s7366 + $0xf1] sm:$0xff]
      %v7712 = vld [vmem:[%s7366 + $0x101] sm:$0xff]
      %v7713 = vld [vmem:[%s7366 + $0x111] sm:$0xff]
      %v7714 = vld [vmem:[%s7366 + $0x121] sm:$0xff]
      %v7715 = vpack.c.bf16 %v7700, %v7699
      %v7716 = vpack.c.bf16 %v7702, %v7701
      %v7717 = vpack.c.bf16 %v7704, %v7703
      %v7718 = vpack.c.bf16 %v7706, %v7705
      %v7719 = vpack.c.bf16 %v7708, %v7707
      %v7720 = vpack.c.bf16 %v7710, %v7709
      %v7721 = vpack.c.bf16 %v7712, %v7711
      %v7722 = vpack.c.bf16 %v7714, %v7713
      %s7723 = scalar_lea.vmem %s234, 180
      %v7724 = vld [vmem:[%s7723] sm:$0xf]
      %v7726 = vsel %vm299, %v7715, 0
      %v7729 = vsel %vm299, %v7716, 0
      %v7732 = vsel %vm299, %v7717, 0
      %v7735 = vsel %vm299, %v7718, 0
      %v7738 = vsel %vm299, %v7719, 0
      %v7741 = vsel %vm299, %v7720, 0
      %v7744 = vsel %vm299, %v7721, 0
      %v7747 = vsel %vm299, %v7722, 0
      %v7750 = vsel %vm324, %v7724, 0
      %7752 = vmatprep.subr.bf16.mxu0 0
      %7753 = vmatpush1.bf16.msra.mxu0 %v7750
      %7754 = vmatprep.subr.bf16.mxu0 0
      %7755 = vmatpush1.bf16.msra.mxu0 0
      %7756 = vmatprep.subr.bf16.mxu0 0
      %7757 = vmatpush1.bf16.msra.mxu0 0
      %7758 = vmatprep.subr.bf16.mxu0 0
      %7759 = vmatpush1.bf16.msra.mxu0 0
      %7760 = vmatprep.subr.bf16.mxu0 0
      %7761 = vmatpush1.bf16.msra.mxu0 0
      %7762 = vmatprep.subr.bf16.mxu0 0
      %7763 = vmatpush1.bf16.msra.mxu0 0
      %7764 = vmatprep.subr.bf16.mxu0 0
      %7765 = vmatpush1.bf16.msra.mxu0 0
      %7766 = vmatprep.subr.bf16.mxu0 0
      %7767 = vmatpush1.bf16.msra.mxu0 0
      %7768 = vmatprep.subr.bf16.mxu0 0
      %7769 = vmatpush1.bf16.msra.mxu0 0
      %7770 = vmatprep.subr.bf16.mxu0 0
      %7771 = vmatpush1.bf16.msra.mxu0 0
      %7772 = vmatprep.subr.bf16.mxu0 0
      %7773 = vmatpush1.bf16.msra.mxu0 0
      %7774 = vmatprep.subr.bf16.mxu0 0
      %7775 = vmatpush1.bf16.msra.mxu0 0
      %7776 = vmatprep.subr.bf16.mxu0 0
      %7777 = vmatpush1.bf16.msra.mxu0 0
      %7778 = vmatprep.subr.bf16.mxu0 0
      %7779 = vmatpush1.bf16.msra.mxu0 0
      %7780 = vmatprep.subr.bf16.mxu0 0
      %7781 = vmatpush1.bf16.msra.mxu0 0
      %7782 = vmatprep.subr.bf16.mxu0 0
      %7783 = vmatpush1.bf16.msra.mxu0 0
      %7784 = vmatprep.mubr.bf16.mxu0 0
      %7785 = vmatmul.mubr.bf16.gmra.mrb[0].mxu0 %v7726
      %v7786 = vpop.f32.mrb[0].mxu0
      %v7787 = vadd.f32 0.0, %v7786
      %v7788 = vpop.f32.mrb[0].mxu0
      %v7789 = vpop.f32.mrb[0].mxu0
      %v7790 = vadd.f32 0.0, %v7789
      %v7791 = vpop.f32.mrb[0].mxu0
      %7792 = vmatprep.mubr.bf16.mxu0 0
      %7793 = vmatmul.mubr.bf16.gmra.mrb[0].mxu0 %v7729
      %v7794 = vpop.f32.mrb[0].mxu0
      %v7795 = vadd.f32 0.0, %v7794
      %v7796 = vpop.f32.mrb[0].mxu0
      %v7797 = vpop.f32.mrb[0].mxu0
      %v7798 = vadd.f32 0.0, %v7797
      %v7799 = vpop.f32.mrb[0].mxu0
      %7800 = vmatprep.mubr.bf16.mxu0 0
      %7801 = vmatmul.mubr.bf16.gmra.mrb[0].mxu0 %v7732
      %v7802 = vpop.f32.mrb[0].mxu0
      %v7803 = vadd.f32 0.0, %v7802
      %v7804 = vpop.f32.mrb[0].mxu0
      %v7805 = vpop.f32.mrb[0].mxu0
      %v7806 = vadd.f32 0.0, %v7805
      %v7807 = vpop.f32.mrb[0].mxu0
      %7808 = vmatprep.mubr.bf16.mxu0 0
      %7809 = vmatmul.mubr.bf16.gmra.mrb[0].mxu0 %v7735
      %v7810 = vpop.f32.mrb[0].mxu0
      %v7811 = vadd.f32 0.0, %v7810
      %v7812 = vpop.f32.mrb[0].mxu0
      %v7813 = vpop.f32.mrb[0].mxu0
      %v7814 = vadd.f32 0.0, %v7813
      %v7815 = vpop.f32.mrb[0].mxu0
      %7816 = vmatprep.mubr.bf16.mxu0 0
      %7817 = vmatmul.mubr.bf16.gmra.mrb[0].mxu0 %v7738
      %v7818 = vpop.f32.mrb[0].mxu0
      %v7819 = vadd.f32 0.0, %v7818
      %v7820 = vpop.f32.mrb[0].mxu0
      %v7821 = vpop.f32.mrb[0].mxu0
      %v7822 = vadd.f32 0.0, %v7821
      %v7823 = vpop.f32.mrb[0].mxu0
      %7824 = vmatprep.mubr.bf16.mxu0 0
      %7825 = vmatmul.mubr.bf16.gmra.mrb[0].mxu0 %v7741
      %v7826 = vpop.f32.mrb[0].mxu0
      %v7827 = vadd.f32 0.0, %v7826
      %v7828 = vpop.f32.mrb[0].mxu0
      %v7829 = vpop.f32.mrb[0].mxu0
      %v7830 = vadd.f32 0.0, %v7829
      %v7831 = vpop.f32.mrb[0].mxu0
      %7832 = vmatprep.mubr.bf16.mxu0 0
      %7833 = vmatmul.mubr.bf16.gmra.mrb[0].mxu0 %v7744
      %v7834 = vpop.f32.mrb[0].mxu0
      %v7835 = vadd.f32 0.0, %v7834
      %v7836 = vpop.f32.mrb[0].mxu0
      %v7837 = vpop.f32.mrb[0].mxu0
      %v7838 = vadd.f32 0.0, %v7837
      %v7839 = vpop.f32.mrb[0].mxu0
      %7840 = vmatprep.mubr.bf16.mxu0 0
      %7841 = vmatmul.mubr.bf16.gmra.mrb[0].mxu0 %v7747
      %v7842 = vpop.f32.mrb[0].mxu0
      %v7843 = vadd.f32 0.0, %v7842
      %v7844 = vpop.f32.mrb[0].mxu0
      %v7845 = vpop.f32.mrb[0].mxu0
      %v7846 = vadd.f32 0.0, %v7845
      %v7847 = vpop.f32.mrb[0].mxu0
      %7848 = vdwg.mxu0
      %v7849 = vadd.f32 %v7683, %v7787
      %v7850 = vadd.f32 %v7684, %v7790
      %v7851 = vadd.f32 %v7685, %v7795
      %v7852 = vadd.f32 %v7686, %v7798
      %v7853 = vadd.f32 %v7687, %v7803
      %v7854 = vadd.f32 %v7688, %v7806
      %v7855 = vadd.f32 %v7689, %v7811
      %v7856 = vadd.f32 %v7690, %v7814
      %v7857 = vadd.f32 %v7691, %v7819
      %v7858 = vadd.f32 %v7692, %v7822
      %v7859 = vadd.f32 %v7693, %v7827
      %v7860 = vadd.f32 %v7694, %v7830
      %v7861 = vadd.f32 %v7695, %v7835
      %v7862 = vadd.f32 %v7696, %v7838
      %v7863 = vadd.f32 %v7697, %v7843
      %v7864 = vadd.f32 %v7698, %v7846
      %v7865 = vld [vmem:[%s7199 + $0x2] sm:$0xff]
      %v7866 = vld [vmem:[%s7199 + $0x12] sm:$0xff]
      %v7867 = vld [vmem:[%s7199 + $0x22] sm:$0xff]
      %v7868 = vld [vmem:[%s7199 + $0x32] sm:$0xff]
      %v7869 = vld [vmem:[%s7199 + $0x42] sm:$0xff]
      %v7870 = vld [vmem:[%s7199 + $0x52] sm:$0xff]
      %v7871 = vld [vmem:[%s7199 + $0x62] sm:$0xff]
      %v7872 = vld [vmem:[%s7199 + $0x72] sm:$0xff]
      %v7873 = vld [vmem:[%s7199 + $0xb2] sm:$0xff]
      %v7874 = vld [vmem:[%s7199 + $0xc2] sm:$0xff]
      %v7875 = vld [vmem:[%s7199 + $0xd2] sm:$0xff]
      %v7876 = vld [vmem:[%s7199 + $0xe2] sm:$0xff]
      %v7877 = vld [vmem:[%s7199 + $0xf2] sm:$0xff]
      %v7878 = vld [vmem:[%s7199 + $0x102] sm:$0xff]
      %v7879 = vld [vmem:[%s7199 + $0x112] sm:$0xff]
      %v7880 = vld [vmem:[%s7199 + $0x122] sm:$0xff]
      %v7881 = vpack.c.bf16 %v7866, %v7865
      %v7882 = vpack.c.bf16 %v7868, %v7867
      %v7883 = vpack.c.bf16 %v7870, %v7869
      %v7884 = vpack.c.bf16 %v7872, %v7871
      %v7885 = vpack.c.bf16 %v7874, %v7873
      %v7886 = vpack.c.bf16 %v7876, %v7875
      %v7887 = vpack.c.bf16 %v7878, %v7877
      %v7888 = vpack.c.bf16 %v7880, %v7879
      %s7889 = scalar_lea.vmem %s234, 184
      %v7890 = vld [vmem:[%s7889] sm:$0xf]
      %v7892 = vsel %vm299, %v7881, 0
      %v7895 = vsel %vm299, %v7882, 0
      %v7898 = vsel %vm299, %v7883, 0
      %v7901 = vsel %vm299, %v7884, 0
      %v7904 = vsel %vm299, %v7885, 0
      %v7907 = vsel %vm299, %v7886, 0
      %v7910 = vsel %vm299, %v7887, 0
      %v7913 = vsel %vm299, %v7888, 0
      %v7916 = vsel %vm324, %v7890, 0
      %7918 = vmatprep.subr.bf16.mxu0 0
      %7919 = vmatpush1.bf16.msra.mxu0 %v7916
      %7920 = vmatprep.subr.bf16.mxu0 0
      %7921 = vmatpush1.bf16.msra.mxu0 0
      %7922 = vmatprep.subr.bf16.mxu0 0
      %7923 = vmatpush1.bf16.msra.mxu0 0
      %7924 = vmatprep.subr.bf16.mxu0 0
      %7925 = vmatpush1.bf16.msra.mxu0 0
      %7926 = vmatprep.subr.bf16.mxu0 0
      %7927 = vmatpush1.bf16.msra.mxu0 0
      %7928 = vmatprep.subr.bf16.mxu0 0
      %7929 = vmatpush1.bf16.msra.mxu0 0
      %7930 = vmatprep.subr.bf16.mxu0 0
      %7931 = vmatpush1.bf16.msra.mxu0 0
      %7932 = vmatprep.subr.bf16.mxu0 0
      %7933 = vmatpush1.bf16.msra.mxu0 0
      %7934 = vmatprep.subr.bf16.mxu0 0
      %7935 = vmatpush1.bf16.msra.mxu0 0
      %7936 = vmatprep.subr.bf16.mxu0 0
      %7937 = vmatpush1.bf16.msra.mxu0 0
      %7938 = vmatprep.subr.bf16.mxu0 0
      %7939 = vmatpush1.bf16.msra.mxu0 0
      %7940 = vmatprep.subr.bf16.mxu0 0
      %7941 = vmatpush1.bf16.msra.mxu0 0
      %7942 = vmatprep.subr.bf16.mxu0 0
      %7943 = vmatpush1.bf16.msra.mxu0 0
      %7944 = vmatprep.subr.bf16.mxu0 0
      %7945 = vmatpush1.bf16.msra.mxu0 0
      %7946 = vmatprep.subr.bf16.mxu0 0
      %7947 = vmatpush1.bf16.msra.mxu0 0
      %7948 = vmatprep.subr.bf16.mxu0 0
      %7949 = vmatpush1.bf16.msra.mxu0 0
      %7950 = vmatprep.mubr.bf16.mxu0 0
      %7951 = vmatmul.mubr.bf16.gmra.mrb[0].mxu0 %v7892
      %v7952 = vpop.f32.mrb[0].mxu0
      %v7953 = vadd.f32 0.0, %v7952
      %v7954 = vpop.f32.mrb[0].mxu0
      %v7955 = vpop.f32.mrb[0].mxu0
      %v7956 = vadd.f32 0.0, %v7955
      %v7957 = vpop.f32.mrb[0].mxu0
      %7958 = vmatprep.mubr.bf16.mxu0 0
      %7959 = vmatmul.mubr.bf16.gmra.mrb[0].mxu0 %v7895
      %v7960 = vpop.f32.mrb[0].mxu0
      %v7961 = vadd.f32 0.0, %v7960
      %v7962 = vpop.f32.mrb[0].mxu0
      %v7963 = vpop.f32.mrb[0].mxu0
      %v7964 = vadd.f32 0.0, %v7963
      %v7965 = vpop.f32.mrb[0].mxu0
      %7966 = vmatprep.mubr.bf16.mxu0 0
      %7967 = vmatmul.mubr.bf16.gmra.mrb[0].mxu0 %v7898
      %v7968 = vpop.f32.mrb[0].mxu0
      %v7969 = vadd.f32 0.0, %v7968
      %v7970 = vpop.f32.mrb[0].mxu0
      %v7971 = vpop.f32.mrb[0].mxu0
      %v7972 = vadd.f32 0.0, %v7971
      %v7973 = vpop.f32.mrb[0].mxu0
      %7974 = vmatprep.mubr.bf16.mxu0 0
      %7975 = vmatmul.mubr.bf16.gmra.mrb[0].mxu0 %v7901
      %v7976 = vpop.f32.mrb[0].mxu0
      %v7977 = vadd.f32 0.0, %v7976
      %v7978 = vpop.f32.mrb[0].mxu0
      %v7979 = vpop.f32.mrb[0].mxu0
      %v7980 = vadd.f32 0.0, %v7979
      %v7981 = vpop.f32.mrb[0].mxu0
      %7982 = vmatprep.mubr.bf16.mxu0 0
      %7983 = vmatmul.mubr.bf16.gmra.mrb[0].mxu0 %v7904
      %v7984 = vpop.f32.mrb[0].mxu0
      %v7985 = vadd.f32 0.0, %v7984
      %v7986 = vpop.f32.mrb[0].mxu0
      %v7987 = vpop.f32.mrb[0].mxu0
      %v7988 = vadd.f32 0.0, %v7987
      %v7989 = vpop.f32.mrb[0].mxu0
      %7990 = vmatprep.mubr.bf16.mxu0 0
      %7991 = vmatmul.mubr.bf16.gmra.mrb[0].mxu0 %v7907
      %v7992 = vpop.f32.mrb[0].mxu0
      %v7993 = vadd.f32 0.0, %v7992
      %v7994 = vpop.f32.mrb[0].mxu0
      %v7995 = vpop.f32.mrb[0].mxu0
      %v7996 = vadd.f32 0.0, %v7995
      %v7997 = vpop.f32.mrb[0].mxu0
      %7998 = vmatprep.mubr.bf16.mxu0 0
      %7999 = vmatmul.mubr.bf16.gmra.mrb[0].mxu0 %v7910
      %v8000 = vpop.f32.mrb[0].mxu0
      %v8001 = vadd.f32 0.0, %v8000
      %v8002 = vpop.f32.mrb[0].mxu0
      %v8003 = vpop.f32.mrb[0].mxu0
      %v8004 = vadd.f32 0.0, %v8003
      %v8005 = vpop.f32.mrb[0].mxu0
      %8006 = vmatprep.mubr.bf16.mxu0 0
      %8007 = vmatmul.mubr.bf16.gmra.mrb[0].mxu0 %v7913
      %v8008 = vpop.f32.mrb[0].mxu0
      %v8009 = vadd.f32 0.0, %v8008
      %v8010 = vpop.f32.mrb[0].mxu0
      %v8011 = vpop.f32.mrb[0].mxu0
      %v8012 = vadd.f32 0.0, %v8011
      %v8013 = vpop.f32.mrb[0].mxu0
      %8014 = vdwg.mxu0
      %v8015 = vadd.f32 %v7849, %v7953
      %v8016 = vadd.f32 %v7850, %v7956
      %v8017 = vadd.f32 %v7851, %v7961
      %v8018 = vadd.f32 %v7852, %v7964
      %v8019 = vadd.f32 %v7853, %v7969
      %v8020 = vadd.f32 %v7854, %v7972
      %v8021 = vadd.f32 %v7855, %v7977
      %v8022 = vadd.f32 %v7856, %v7980
      %v8023 = vadd.f32 %v7857, %v7985
      %v8024 = vadd.f32 %v7858, %v7988
      %v8025 = vadd.f32 %v7859, %v7993
      %v8026 = vadd.f32 %v7860, %v7996
      %v8027 = vadd.f32 %v7861, %v8001
      %v8028 = vadd.f32 %v7862, %v8004
      %v8029 = vadd.f32 %v7863, %v8009
      %v8030 = vadd.f32 %v7864, %v8012
      %v8031 = vld [vmem:[%s7366 + $0x2] sm:$0xff]
      %v8032 = vld [vmem:[%s7366 + $0x12] sm:$0xff]
      %v8033 = vld [vmem:[%s7366 + $0x22] sm:$0xff]
      %v8034 = vld [vmem:[%s7366 + $0x32] sm:$0xff]
      %v8035 = vld [vmem:[%s7366 + $0x42] sm:$0xff]
      %v8036 = vld [vmem:[%s7366 + $0x52] sm:$0xff]
      %v8037 = vld [vmem:[%s7366 + $0x62] sm:$0xff]
      %v8038 = vld [vmem:[%s7366 + $0x72] sm:$0xff]
      %v8039 = vld [vmem:[%s7366 + $0xb2] sm:$0xff]
      %v8040 = vld [vmem:[%s7366 + $0xc2] sm:$0xff]
      %v8041 = vld [vmem:[%s7366 + $0xd2] sm:$0xff]
      %v8042 = vld [vmem:[%s7366 + $0xe2] sm:$0xff]
      %v8043 = vld [vmem:[%s7366 + $0xf2] sm:$0xff]
      %v8044 = vld [vmem:[%s7366 + $0x102] sm:$0xff]
      %v8045 = vld [vmem:[%s7366 + $0x112] sm:$0xff]
      %v8046 = vld [vmem:[%s7366 + $0x122] sm:$0xff]
      %v8047 = vpack.c.bf16 %v8032, %v8031
      %v8048 = vpack.c.bf16 %v8034, %v8033
      %v8049 = vpack.c.bf16 %v8036, %v8035
      %v8050 = vpack.c.bf16 %v8038, %v8037
      %v8051 = vpack.c.bf16 %v8040, %v8039
      %v8052 = vpack.c.bf16 %v8042, %v8041
      %v8053 = vpack.c.bf16 %v8044, %v8043
      %v8054 = vpack.c.bf16 %v8046, %v8045
      %s8055 = scalar_lea.vmem %s234, 188
      %v8056 = vld [vmem:[%s8055] sm:$0xf]
      %v8058 = vsel %vm299, %v8047, 0
      %v8061 = vsel %vm299, %v8048, 0
      %v8064 = vsel %vm299, %v8049, 0
      %v8067 = vsel %vm299, %v8050, 0
      %v8070 = vsel %vm299, %v8051, 0
      %v8073 = vsel %vm299, %v8052, 0
      %v8076 = vsel %vm299, %v8053, 0
      %v8079 = vsel %vm299, %v8054, 0
      %v8082 = vsel %vm324, %v8056, 0
      %8084 = vmatprep.subr.bf16.mxu0 0
      %8085 = vmatpush1.bf16.msra.mxu0 %v8082
      %8086 = vmatprep.subr.bf16.mxu0 0
      %8087 = vmatpush1.bf16.msra.mxu0 0
      %8088 = vmatprep.subr.bf16.mxu0 0
      %8089 = vmatpush1.bf16.msra.mxu0 0
      %8090 = vmatprep.subr.bf16.mxu0 0
      %8091 = vmatpush1.bf16.msra.mxu0 0
      %8092 = vmatprep.subr.bf16.mxu0 0
      %8093 = vmatpush1.bf16.msra.mxu0 0
      %8094 = vmatprep.subr.bf16.mxu0 0
      %8095 = vmatpush1.bf16.msra.mxu0 0
      %8096 = vmatprep.subr.bf16.mxu0 0
      %8097 = vmatpush1.bf16.msra.mxu0 0
      %8098 = vmatprep.subr.bf16.mxu0 0
      %8099 = vmatpush1.bf16.msra.mxu0 0
      %8100 = vmatprep.subr.bf16.mxu0 0
      %8101 = vmatpush1.bf16.msra.mxu0 0
      %8102 = vmatprep.subr.bf16.mxu0 0
      %8103 = vmatpush1.bf16.msra.mxu0 0
      %8104 = vmatprep.subr.bf16.mxu0 0
      %8105 = vmatpush1.bf16.msra.mxu0 0
      %8106 = vmatprep.subr.bf16.mxu0 0
      %8107 = vmatpush1.bf16.msra.mxu0 0
      %8108 = vmatprep.subr.bf16.mxu0 0
      %8109 = vmatpush1.bf16.msra.mxu0 0
      %8110 = vmatprep.subr.bf16.mxu0 0
      %8111 = vmatpush1.bf16.msra.mxu0 0
      %8112 = vmatprep.subr.bf16.mxu0 0
      %8113 = vmatpush1.bf16.msra.mxu0 0
      %8114 = vmatprep.subr.bf16.mxu0 0
      %8115 = vmatpush1.bf16.msra.mxu0 0
      %8116 = vmatprep.mubr.bf16.mxu0 0
      %8117 = vmatmul.mubr.bf16.gmra.mrb[0].mxu0 %v8058
      %v8118 = vpop.f32.mrb[0].mxu0
      %v8119 = vadd.f32 0.0, %v8118
      %v8120 = vpop.f32.mrb[0].mxu0
      %v8121 = vpop.f32.mrb[0].mxu0
      %v8122 = vadd.f32 0.0, %v8121
      %v8123 = vpop.f32.mrb[0].mxu0
      %8124 = vmatprep.mubr.bf16.mxu0 0
      %8125 = vmatmul.mubr.bf16.gmra.mrb[0].mxu0 %v8061
      %v8126 = vpop.f32.mrb[0].mxu0
      %v8127 = vadd.f32 0.0, %v8126
      %v8128 = vpop.f32.mrb[0].mxu0
      %v8129 = vpop.f32.mrb[0].mxu0
      %v8130 = vadd.f32 0.0, %v8129
      %v8131 = vpop.f32.mrb[0].mxu0
      %8132 = vmatprep.mubr.bf16.mxu0 0
      %8133 = vmatmul.mubr.bf16.gmra.mrb[0].mxu0 %v8064
      %v8134 = vpop.f32.mrb[0].mxu0
      %v8135 = vadd.f32 0.0, %v8134
      %v8136 = vpop.f32.mrb[0].mxu0
      %v8137 = vpop.f32.mrb[0].mxu0
      %v8138 = vadd.f32 0.0, %v8137
      %v8139 = vpop.f32.mrb[0].mxu0
      %8140 = vmatprep.mubr.bf16.mxu0 0
      %8141 = vmatmul.mubr.bf16.gmra.mrb[0].mxu0 %v8067
      %v8142 = vpop.f32.mrb[0].mxu0
      %v8143 = vadd.f32 0.0, %v8142
      %v8144 = vpop.f32.mrb[0].mxu0
      %v8145 = vpop.f32.mrb[0].mxu0
      %v8146 = vadd.f32 0.0, %v8145
      %v8147 = vpop.f32.mrb[0].mxu0
      %8148 = vmatprep.mubr.bf16.mxu0 0
      %8149 = vmatmul.mubr.bf16.gmra.mrb[0].mxu0 %v8070
      %v8150 = vpop.f32.mrb[0].mxu0
      %v8151 = vadd.f32 0.0, %v8150
      %v8152 = vpop.f32.mrb[0].mxu0
      %v8153 = vpop.f32.mrb[0].mxu0
      %v8154 = vadd.f32 0.0, %v8153
      %v8155 = vpop.f32.mrb[0].mxu0
      %8156 = vmatprep.mubr.bf16.mxu0 0
      %8157 = vmatmul.mubr.bf16.gmra.mrb[0].mxu0 %v8073
      %v8158 = vpop.f32.mrb[0].mxu0
      %v8159 = vadd.f32 0.0, %v8158
      %v8160 = vpop.f32.mrb[0].mxu0
      %v8161 = vpop.f32.mrb[0].mxu0
      %v8162 = vadd.f32 0.0, %v8161
      %v8163 = vpop.f32.mrb[0].mxu0
      %8164 = vmatprep.mubr.bf16.mxu0 0
      %8165 = vmatmul.mubr.bf16.gmra.mrb[0].mxu0 %v8076
      %v8166 = vpop.f32.mrb[0].mxu0
      %v8167 = vadd.f32 0.0, %v8166
      %v8168 = vpop.f32.mrb[0].mxu0
      %v8169 = vpop.f32.mrb[0].mxu0
      %v8170 = vadd.f32 0.0, %v8169
      %v8171 = vpop.f32.mrb[0].mxu0
      %8172 = vmatprep.mubr.bf16.mxu0 0
      %8173 = vmatmul.mubr.bf16.gmra.mrb[0].mxu0 %v8079
      %v8174 = vpop.f32.mrb[0].mxu0
      %v8175 = vadd.f32 0.0, %v8174
      %v8176 = vpop.f32.mrb[0].mxu0
      %v8177 = vpop.f32.mrb[0].mxu0
      %v8178 = vadd.f32 0.0, %v8177
      %v8179 = vpop.f32.mrb[0].mxu0
      %8180 = vdwg.mxu0
      %v8181 = vadd.f32 %v8015, %v8119
      %v8182 = vadd.f32 %v8016, %v8122
      %v8183 = vadd.f32 %v8017, %v8127
      %v8184 = vadd.f32 %v8018, %v8130
      %v8185 = vadd.f32 %v8019, %v8135
      %v8186 = vadd.f32 %v8020, %v8138
      %v8187 = vadd.f32 %v8021, %v8143
      %v8188 = vadd.f32 %v8022, %v8146
      %v8189 = vadd.f32 %v8023, %v8151
      %v8190 = vadd.f32 %v8024, %v8154
      %v8191 = vadd.f32 %v8025, %v8159
      %v8192 = vadd.f32 %v8026, %v8162
      %v8193 = vadd.f32 %v8027, %v8167
      %v8194 = vadd.f32 %v8028, %v8170
      %v8195 = vadd.f32 %v8029, %v8175
      %v8196 = vadd.f32 %v8030, %v8178
      %v8197 = vld [vmem:[%s7199 + $0x3] sm:$0xff]
      %v8198 = vld [vmem:[%s7199 + $0x13] sm:$0xff]
      %v8199 = vld [vmem:[%s7199 + $0x23] sm:$0xff]
      %v8200 = vld [vmem:[%s7199 + $0x33] sm:$0xff]
      %v8201 = vld [vmem:[%s7199 + $0x43] sm:$0xff]
      %v8202 = vld [vmem:[%s7199 + $0x53] sm:$0xff]
      %v8203 = vld [vmem:[%s7199 + $0x63] sm:$0xff]
      %v8204 = vld [vmem:[%s7199 + $0x73] sm:$0xff]
      %v8205 = vld [vmem:[%s7199 + $0xb3] sm:$0xff]
      %v8206 = vld [vmem:[%s7199 + $0xc3] sm:$0xff]
      %v8207 = vld [vmem:[%s7199 + $0xd3] sm:$0xff]
      %v8208 = vld [vmem:[%s7199 + $0xe3] sm:$0xff]
      %v8209 = vld [vmem:[%s7199 + $0xf3] sm:$0xff]
      %v8210 = vld [vmem:[%s7199 + $0x103] sm:$0xff]
      %v8211 = vld [vmem:[%s7199 + $0x113] sm:$0xff]
      %v8212 = vld [vmem:[%s7199 + $0x123] sm:$0xff]
      %v8213 = vpack.c.bf16 %v8198, %v8197
      %v8214 = vpack.c.bf16 %v8200, %v8199
      %v8215 = vpack.c.bf16 %v8202, %v8201
      %v8216 = vpack.c.bf16 %v8204, %v8203
      %v8217 = vpack.c.bf16 %v8206, %v8205
      %v8218 = vpack.c.bf16 %v8208, %v8207
      %v8219 = vpack.c.bf16 %v8210, %v8209
      %v8220 = vpack.c.bf16 %v8212, %v8211
      %s8221 = scalar_lea.vmem %s234, 192
      %v8222 = vld [vmem:[%s8221] sm:$0xf]
      %v8224 = vsel %vm299, %v8213, 0
      %v8227 = vsel %vm299, %v8214, 0
      %v8230 = vsel %vm299, %v8215, 0
      %v8233 = vsel %vm299, %v8216, 0
      %v8236 = vsel %vm299, %v8217, 0
      %v8239 = vsel %vm299, %v8218, 0
      %v8242 = vsel %vm299, %v8219, 0
      %v8245 = vsel %vm299, %v8220, 0
      %v8248 = vsel %vm324, %v8222, 0
      %8250 = vmatprep.subr.bf16.mxu0 0
      %8251 = vmatpush1.bf16.msra.mxu0 %v8248
      %8252 = vmatprep.subr.bf16.mxu0 0
      %8253 = vmatpush1.bf16.msra.mxu0 0
      %8254 = vmatprep.subr.bf16.mxu0 0
      %8255 = vmatpush1.bf16.msra.mxu0 0
      %8256 = vmatprep.subr.bf16.mxu0 0
      %8257 = vmatpush1.bf16.msra.mxu0 0
      %8258 = vmatprep.subr.bf16.mxu0 0
      %8259 = vmatpush1.bf16.msra.mxu0 0
      %8260 = vmatprep.subr.bf16.mxu0 0
      %8261 = vmatpush1.bf16.msra.mxu0 0
      %8262 = vmatprep.subr.bf16.mxu0 0
      %8263 = vmatpush1.bf16.msra.mxu0 0
      %8264 = vmatprep.subr.bf16.mxu0 0
      %8265 = vmatpush1.bf16.msra.mxu0 0
      %8266 = vmatprep.subr.bf16.mxu0 0
      %8267 = vmatpush1.bf16.msra.mxu0 0
      %8268 = vmatprep.subr.bf16.mxu0 0
      %8269 = vmatpush1.bf16.msra.mxu0 0
      %8270 = vmatprep.subr.bf16.mxu0 0
      %8271 = vmatpush1.bf16.msra.mxu0 0
      %8272 = vmatprep.subr.bf16.mxu0 0
      %8273 = vmatpush1.bf16.msra.mxu0 0
      %8274 = vmatprep.subr.bf16.mxu0 0
      %8275 = vmatpush1.bf16.msra.mxu0 0
      %8276 = vmatprep.subr.bf16.mxu0 0
      %8277 = vmatpush1.bf16.msra.mxu0 0
      %8278 = vmatprep.subr.bf16.mxu0 0
      %8279 = vmatpush1.bf16.msra.mxu0 0
      %8280 = vmatprep.subr.bf16.mxu0 0
      %8281 = vmatpush1.bf16.msra.mxu0 0
      %8282 = vmatprep.mubr.bf16.mxu0 0
      %8283 = vmatmul.mubr.bf16.gmra.mrb[0].mxu0 %v8224
      %v8284 = vpop.f32.mrb[0].mxu0
      %v8285 = vadd.f32 0.0, %v8284
      %v8286 = vpop.f32.mrb[0].mxu0
      %v8287 = vpop.f32.mrb[0].mxu0
      %v8288 = vadd.f32 0.0, %v8287
      %v8289 = vpop.f32.mrb[0].mxu0
      %8290 = vmatprep.mubr.bf16.mxu0 0
      %8291 = vmatmul.mubr.bf16.gmra.mrb[0].mxu0 %v8227
      %v8292 = vpop.f32.mrb[0].mxu0
      %v8293 = vadd.f32 0.0, %v8292
      %v8294 = vpop.f32.mrb[0].mxu0
      %v8295 = vpop.f32.mrb[0].mxu0
      %v8296 = vadd.f32 0.0, %v8295
      %v8297 = vpop.f32.mrb[0].mxu0
      %8298 = vmatprep.mubr.bf16.mxu0 0
      %8299 = vmatmul.mubr.bf16.gmra.mrb[0].mxu0 %v8230
      %v8300 = vpop.f32.mrb[0].mxu0
      %v8301 = vadd.f32 0.0, %v8300
      %v8302 = vpop.f32.mrb[0].mxu0
      %v8303 = vpop.f32.mrb[0].mxu0
      %v8304 = vadd.f32 0.0, %v8303
      %v8305 = vpop.f32.mrb[0].mxu0
      %8306 = vmatprep.mubr.bf16.mxu0 0
      %8307 = vmatmul.mubr.bf16.gmra.mrb[0].mxu0 %v8233
      %v8308 = vpop.f32.mrb[0].mxu0
      %v8309 = vadd.f32 0.0, %v8308
      %v8310 = vpop.f32.mrb[0].mxu0
      %v8311 = vpop.f32.mrb[0].mxu0
      %v8312 = vadd.f32 0.0, %v8311
      %v8313 = vpop.f32.mrb[0].mxu0
      %8314 = vmatprep.mubr.bf16.mxu0 0
      %8315 = vmatmul.mubr.bf16.gmra.mrb[0].mxu0 %v8236
      %v8316 = vpop.f32.mrb[0].mxu0
      %v8317 = vadd.f32 0.0, %v8316
      %v8318 = vpop.f32.mrb[0].mxu0
      %v8319 = vpop.f32.mrb[0].mxu0
      %v8320 = vadd.f32 0.0, %v8319
      %v8321 = vpop.f32.mrb[0].mxu0
      %8322 = vmatprep.mubr.bf16.mxu0 0
      %8323 = vmatmul.mubr.bf16.gmra.mrb[0].mxu0 %v8239
      %v8324 = vpop.f32.mrb[0].mxu0
      %v8325 = vadd.f32 0.0, %v8324
      %v8326 = vpop.f32.mrb[0].mxu0
      %v8327 = vpop.f32.mrb[0].mxu0
      %v8328 = vadd.f32 0.0, %v8327
      %v8329 = vpop.f32.mrb[0].mxu0
      %8330 = vmatprep.mubr.bf16.mxu0 0
      %8331 = vmatmul.mubr.bf16.gmra.mrb[0].mxu0 %v8242
      %v8332 = vpop.f32.mrb[0].mxu0
      %v8333 = vadd.f32 0.0, %v8332
      %v8334 = vpop.f32.mrb[0].mxu0
      %v8335 = vpop.f32.mrb[0].mxu0
      %v8336 = vadd.f32 0.0, %v8335
      %v8337 = vpop.f32.mrb[0].mxu0
      %8338 = vmatprep.mubr.bf16.mxu0 0
      %8339 = vmatmul.mubr.bf16.gmra.mrb[0].mxu0 %v8245
      %v8340 = vpop.f32.mrb[0].mxu0
      %v8341 = vadd.f32 0.0, %v8340
      %v8342 = vpop.f32.mrb[0].mxu0
      %v8343 = vpop.f32.mrb[0].mxu0
      %v8344 = vadd.f32 0.0, %v8343
      %v8345 = vpop.f32.mrb[0].mxu0
      %8346 = vdwg.mxu0
      %v8347 = vadd.f32 %v8181, %v8285
      %v8348 = vadd.f32 %v8182, %v8288
      %v8349 = vadd.f32 %v8183, %v8293
      %v8350 = vadd.f32 %v8184, %v8296
      %v8351 = vadd.f32 %v8185, %v8301
      %v8352 = vadd.f32 %v8186, %v8304
      %v8353 = vadd.f32 %v8187, %v8309
      %v8354 = vadd.f32 %v8188, %v8312
      %v8355 = vadd.f32 %v8189, %v8317
      %v8356 = vadd.f32 %v8190, %v8320
      %v8357 = vadd.f32 %v8191, %v8325
      %v8358 = vadd.f32 %v8192, %v8328
      %v8359 = vadd.f32 %v8193, %v8333
      %v8360 = vadd.f32 %v8194, %v8336
      %v8361 = vadd.f32 %v8195, %v8341
      %v8362 = vadd.f32 %v8196, %v8344
      %vm8363 = vcmask 523264
      %v8364 = vsel %vm8363, %v8347, 0.0
      %v8365 = vsel %vm8363, %v8348, 0.0
      %v8366 = vadd.f32 %v8364, %v8365
      %v8367 = vsel %vm8363, %v8349, 0.0
      %v8368 = vadd.f32 %v8366, %v8367
      %v8369 = vsel %vm8363, %v8350, 0.0
      %v8370 = vadd.f32 %v8368, %v8369
      %v8371 = vsel %vm8363, %v8351, 0.0
      %v8372 = vadd.f32 %v8370, %v8371
      %v8373 = vsel %vm8363, %v8352, 0.0
      %v8374 = vadd.f32 %v8372, %v8373
      %v8375 = vsel %vm8363, %v8353, 0.0
      %v8376 = vadd.f32 %v8374, %v8375
      %v8377 = vsel %vm8363, %v8354, 0.0
      %v8378 = vadd.f32 %v8376, %v8377
      %v8379 = vsel %vm8363, %v8355, 0.0
      %v8380 = vadd.f32 %v8378, %v8379
      %v8381 = vsel %vm8363, %v8356, 0.0
      %v8382 = vadd.f32 %v8380, %v8381
      %v8383 = vsel %vm8363, %v8357, 0.0
      %v8384 = vadd.f32 %v8382, %v8383
      %v8385 = vsel %vm8363, %v8358, 0.0
      %v8386 = vadd.f32 %v8384, %v8385
      %v8387 = vsel %vm8363, %v8359, 0.0
      %v8388 = vadd.f32 %v8386, %v8387
      %v8389 = vsel %vm8363, %v8360, 0.0
      %v8390 = vadd.f32 %v8388, %v8389
      %v8391 = vsel %vm8363, %v8361, 0.0
      %v8392 = vadd.f32 %v8390, %v8391
      %v8393 = vsel %vm8363, %v8362, 0.0
      %v8394 = vadd.f32 %v8392, %v8393
      %v8395 = vrot.slane %v8394, 4
      %v8396 = vadd.f32 %v8394, %v8395
      %v8397 = vrot.slane %v8396, 2
      %v8398 = vadd.f32 %v8396, %v8397
      %v8399 = vrot.slane %v8398, 1
      %v8400 = vadd.f32 %v8398, %v8399
      %v8401 = vrcp.pop 128.0
      %v8402 = vmul.f32 %v8400, %v8401
      %v8403 = vmul.f32 %v8347, %v8347
      %v8404 = vmul.f32 %v8348, %v8348
      %v8405 = vmul.f32 %v8349, %v8349
      %v8406 = vmul.f32 %v8350, %v8350
      %v8407 = vmul.f32 %v8351, %v8351
      %v8408 = vmul.f32 %v8352, %v8352
      %v8409 = vmul.f32 %v8353, %v8353
      %v8410 = vmul.f32 %v8354, %v8354
      %v8411 = vmul.f32 %v8355, %v8355
      %v8412 = vmul.f32 %v8356, %v8356
      %v8413 = vmul.f32 %v8357, %v8357
      %v8414 = vmul.f32 %v8358, %v8358
      %v8415 = vmul.f32 %v8359, %v8359
      %v8416 = vmul.f32 %v8360, %v8360
      %v8417 = vmul.f32 %v8361, %v8361
      %v8418 = vmul.f32 %v8362, %v8362
      %v8419 = vsel %vm8363, %v8403, 0.0
      %v8420 = vsel %vm8363, %v8404, 0.0
      %v8421 = vadd.f32 %v8419, %v8420
      %v8422 = vsel %vm8363, %v8405, 0.0
      %v8423 = vadd.f32 %v8421, %v8422
      %v8424 = vsel %vm8363, %v8406, 0.0
      %v8425 = vadd.f32 %v8423, %v8424
      %v8426 = vsel %vm8363, %v8407, 0.0
      %v8427 = vadd.f32 %v8425, %v8426
      %v8428 = vsel %vm8363, %v8408, 0.0
      %v8429 = vadd.f32 %v8427, %v8428
      %v8430 = vsel %vm8363, %v8409, 0.0
      %v8431 = vadd.f32 %v8429, %v8430
      %v8432 = vsel %vm8363, %v8410, 0.0
      %v8433 = vadd.f32 %v8431, %v8432
      %v8434 = vsel %vm8363, %v8411, 0.0
      %v8435 = vadd.f32 %v8433, %v8434
      %v8436 = vsel %vm8363, %v8412, 0.0
      %v8437 = vadd.f32 %v8435, %v8436
      %v8438 = vsel %vm8363, %v8413, 0.0
      %v8439 = vadd.f32 %v8437, %v8438
      %v8440 = vsel %vm8363, %v8414, 0.0
      %v8441 = vadd.f32 %v8439, %v8440
      %v8442 = vsel %vm8363, %v8415, 0.0
      %v8443 = vadd.f32 %v8441, %v8442
      %v8444 = vsel %vm8363, %v8416, 0.0
      %v8445 = vadd.f32 %v8443, %v8444
      %v8446 = vsel %vm8363, %v8417, 0.0
      %v8447 = vadd.f32 %v8445, %v8446
      %v8448 = vsel %vm8363, %v8418, 0.0
      %v8449 = vadd.f32 %v8447, %v8448
      %v8450 = vrot.slane %v8449, 4
      %v8451 = vadd.f32 %v8449, %v8450
      %v8452 = vrot.slane %v8451, 2
      %v8453 = vadd.f32 %v8451, %v8452
      %v8454 = vrot.slane %v8453, 1
      %v8455 = vadd.f32 %v8453, %v8454
      %v8456 = vmul.f32 %v8455, %v8401
      %v8457 = vmul.f32 %v8402, %v8402
      %v8458 = vsub.f32 %v8456, %v8457
      %v8459 = vld [vmem:[%s237] sm:$0x1]
      %v8460 = vadd.f32 %v8458, 1e-05
      %v8461 = vrsqrt.pop %v8460
      %v8462 = vmul.f32 %v8459, %v8461
      %v8463 = vld [vmem:[%s240] sm:$0x1]
      %v8464 = vmul.f32 %v8402, %v8462
      %v8465 = vsub.f32 %v8463, %v8464
      %v8467 = vlaneseq
      %v8468 = vshrl.u32 %v8467, 7
      %v8469 = vsub.s32 0, %v8468
      %v8470 = vrot.slane %v8462, %v8469
      %v8472 = vmul.f32 %v8347, %v8470
      %v8473 = vmul.f32 %v8348, %v8470
      %v8474 = vmul.f32 %v8349, %v8470
      %v8475 = vmul.f32 %v8350, %v8470
      %v8476 = vmul.f32 %v8351, %v8470
      %v8477 = vmul.f32 %v8352, %v8470
      %v8478 = vmul.f32 %v8353, %v8470
      %v8479 = vmul.f32 %v8354, %v8470
      %v8480 = vmul.f32 %v8355, %v8470
      %v8481 = vmul.f32 %v8356, %v8470
      %v8482 = vmul.f32 %v8357, %v8470
      %v8483 = vmul.f32 %v8358, %v8470
      %v8484 = vmul.f32 %v8359, %v8470
      %v8485 = vmul.f32 %v8360, %v8470
      %v8486 = vmul.f32 %v8361, %v8470
      %v8487 = vmul.f32 %v8362, %v8470
      %v8489 = vlaneseq
      %v8490 = vshrl.u32 %v8489, 7
      %v8491 = vsub.s32 0, %v8490
      %v8492 = vrot.slane %v8465, %v8491
      %v8494 = vadd.f32 %v8472, %v8492
      %v8495 = vadd.f32 %v8473, %v8492
      %v8496 = vadd.f32 %v8474, %v8492
      %v8497 = vadd.f32 %v8475, %v8492
      %v8498 = vadd.f32 %v8476, %v8492
      %v8499 = vadd.f32 %v8477, %v8492
      %v8500 = vadd.f32 %v8478, %v8492
      %v8501 = vadd.f32 %v8479, %v8492
      %v8502 = vadd.f32 %v8480, %v8492
      %v8503 = vadd.f32 %v8481, %v8492
      %v8504 = vadd.f32 %v8482, %v8492
      %v8505 = vadd.f32 %v8483, %v8492
      %v8506 = vadd.f32 %v8484, %v8492
      %v8507 = vadd.f32 %v8485, %v8492
      %v8508 = vadd.f32 %v8486, %v8492
      %v8509 = vadd.f32 %v8487, %v8492
      %v8510 = vmax.f32 %v8494, 0.0
      %v8511 = vmax.f32 %v8495, 0.0
      %v8512 = vmax.f32 %v8496, 0.0
      %v8513 = vmax.f32 %v8497, 0.0
      %v8514 = vmax.f32 %v8498, 0.0
      %v8515 = vmax.f32 %v8499, 0.0
      %v8516 = vmax.f32 %v8500, 0.0
      %v8517 = vmax.f32 %v8501, 0.0
      %v8518 = vmax.f32 %v8502, 0.0
      %v8519 = vmax.f32 %v8503, 0.0
      %v8520 = vmax.f32 %v8504, 0.0
      %v8521 = vmax.f32 %v8505, 0.0
      %v8522 = vmax.f32 %v8506, 0.0
      %v8523 = vmax.f32 %v8507, 0.0
      %v8524 = vmax.f32 %v8508, 0.0
      %v8525 = vmax.f32 %v8509, 0.0
      %v8526 = vsel %vm8363, %v8510, -inf
      %v8527 = vsel %vm8363, %v8511, -inf
      %v8528 = vmax.f32 %v8526, %v8527
      %v8529 = vsel %vm8363, %v8518, -inf
      %v8530 = vsel %vm8363, %v8519, -inf
      %v8531 = vmax.f32 %v8529, %v8530
      %v8532 = vsel %vm8363, %v8512, -inf
      %v8533 = vsel %vm8363, %v8513, -inf
      %v8534 = vmax.f32 %v8527, %v8533
      %v8535 = vmax.f32 %v8534, %v8532
      %v8536 = vsel %vm8363, %v8520, -inf
      %v8537 = vsel %vm8363, %v8521, -inf
      %v8538 = vmax.f32 %v8530, %v8537
      %v8539 = vmax.f32 %v8538, %v8536
      %v8540 = vsel %vm8363, %v8514, -inf
      %v8541 = vsel %vm8363, %v8515, -inf
      %v8542 = vmax.f32 %v8533, %v8541
      %v8543 = vmax.f32 %v8542, %v8540
      %v8544 = vsel %vm8363, %v8522, -inf
      %v8545 = vsel %vm8363, %v8523, -inf
      %v8546 = vmax.f32 %v8537, %v8545
      %v8547 = vmax.f32 %v8546, %v8544
      %v8548 = vsel %vm8363, %v8516, -inf
      %v8549 = vsel %vm8363, %v8517, -inf
      %v8550 = vmax.f32 %v8541, %v8549
      %v8551 = vmax.f32 %v8550, %v8548
      %v8552 = vsel %vm8363, %v8524, -inf
      %v8553 = vsel %vm8363, %v8525, -inf
      %v8554 = vmax.f32 %v8545, %v8553
      %v8555 = vmax.f32 %v8554, %v8552
      %vm8556 = vcmask 517120
      %v8557 = vsel %vm8556, %v8528, -inf
      %v8558 = vrot.slane %v8557, 4
      %v8559 = vmax.f32 %v8557, %v8558
      %v8560 = vrot.slane %v8559, 2
      %v8561 = vmax.f32 %v8559, %v8560
      %v8562 = vrot.slane %v8561, 1
      %v8563 = vmax.f32 %v8561, %v8562
      %v8564 = vsel %vm8556, %v8535, -inf
      %v8565 = vrot.slane %v8564, 4
      %v8566 = vmax.f32 %v8564, %v8565
      %v8567 = vrot.slane %v8566, 2
      %v8568 = vmax.f32 %v8566, %v8567
      %v8569 = vrot.slane %v8568, 1
      %v8570 = vmax.f32 %v8568, %v8569
      %v8571 = vsel %vm8556, %v8543, -inf
      %v8572 = vrot.slane %v8571, 4
      %v8573 = vmax.f32 %v8571, %v8572
      %v8574 = vrot.slane %v8573, 2
      %v8575 = vmax.f32 %v8573, %v8574
      %v8576 = vrot.slane %v8575, 1
      %v8577 = vmax.f32 %v8575, %v8576
      %v8578 = vsel %vm8556, %v8551, -inf
      %v8579 = vrot.slane %v8578, 4
      %v8580 = vmax.f32 %v8578, %v8579
      %v8581 = vrot.slane %v8580, 2
      %v8582 = vmax.f32 %v8580, %v8581
      %v8583 = vrot.slane %v8582, 1
      %v8584 = vmax.f32 %v8582, %v8583
      %v8585 = vsel %vm8556, %v8531, -inf
      %v8586 = vrot.slane %v8585, 4
      %v8587 = vmax.f32 %v8585, %v8586
      %v8588 = vrot.slane %v8587, 2
      %v8589 = vmax.f32 %v8587, %v8588
      %v8590 = vrot.slane %v8589, 1
      %v8591 = vmax.f32 %v8589, %v8590
      %v8592 = vsel %vm8556, %v8539, -inf
      %v8593 = vrot.slane %v8592, 4
      %v8594 = vmax.f32 %v8592, %v8593
      %v8595 = vrot.slane %v8594, 2
      %v8596 = vmax.f32 %v8594, %v8595
      %v8597 = vrot.slane %v8596, 1
      %v8598 = vmax.f32 %v8596, %v8597
      %v8599 = vsel %vm8556, %v8547, -inf
      %v8600 = vrot.slane %v8599, 4
      %v8601 = vmax.f32 %v8599, %v8600
      %v8602 = vrot.slane %v8601, 2
      %v8603 = vmax.f32 %v8601, %v8602
      %v8604 = vrot.slane %v8603, 1
      %v8605 = vmax.f32 %v8603, %v8604
      %v8606 = vsel %vm8556, %v8555, -inf
      %v8607 = vrot.slane %v8606, 4
      %v8608 = vmax.f32 %v8606, %v8607
      %v8609 = vrot.slane %v8608, 2
      %v8610 = vmax.f32 %v8608, %v8609
      %v8611 = vrot.slane %v8610, 1
      %v8612 = vmax.f32 %v8610, %v8611
      %vm8613 = vcmask 519169
      %v8614 = vsel %vm8613, %v8528, -inf
      %v8615 = vrot.slane %v8614, 4
      %v8616 = vmax.f32 %v8614, %v8615
      %v8617 = vrot.slane %v8616, 2
      %v8618 = vmax.f32 %v8616, %v8617
      %v8619 = vrot.slane %v8618, 1
      %v8620 = vmax.f32 %v8618, %v8619
      %v8621 = vsel %vm8613, %v8535, -inf
      %v8622 = vrot.slane %v8621, 4
      %v8623 = vmax.f32 %v8621, %v8622
      %v8624 = vrot.slane %v8623, 2
      %v8625 = vmax.f32 %v8623, %v8624
      %v8626 = vrot.slane %v8625, 1
      %v8627 = vmax.f32 %v8625, %v8626
      %v8628 = vsel %vm8613, %v8543, -inf
      %v8629 = vrot.slane %v8628, 4
      %v8630 = vmax.f32 %v8628, %v8629
      %v8631 = vrot.slane %v8630, 2
      %v8632 = vmax.f32 %v8630, %v8631
      %v8633 = vrot.slane %v8632, 1
      %v8634 = vmax.f32 %v8632, %v8633
      %v8635 = vsel %vm8613, %v8551, -inf
      %v8636 = vrot.slane %v8635, 4
      %v8637 = vmax.f32 %v8635, %v8636
      %v8638 = vrot.slane %v8637, 2
      %v8639 = vmax.f32 %v8637, %v8638
      %v8640 = vrot.slane %v8639, 1
      %v8641 = vmax.f32 %v8639, %v8640
      %v8642 = vsel %vm8613, %v8531, -inf
      %v8643 = vrot.slane %v8642, 4
      %v8644 = vmax.f32 %v8642, %v8643
      %v8645 = vrot.slane %v8644, 2
      %v8646 = vmax.f32 %v8644, %v8645
      %v8647 = vrot.slane %v8646, 1
      %v8648 = vmax.f32 %v8646, %v8647
      %v8649 = vsel %vm8613, %v8539, -inf
      %v8650 = vrot.slane %v8649, 4
      %v8651 = vmax.f32 %v8649, %v8650
      %v8652 = vrot.slane %v8651, 2
      %v8653 = vmax.f32 %v8651, %v8652
      %v8654 = vrot.slane %v8653, 1
      %v8655 = vmax.f32 %v8653, %v8654
      %v8656 = vsel %vm8613, %v8547, -inf
      %v8657 = vrot.slane %v8656, 4
      %v8658 = vmax.f32 %v8656, %v8657
      %v8659 = vrot.slane %v8658, 2
      %v8660 = vmax.f32 %v8658, %v8659
      %v8661 = vrot.slane %v8660, 1
      %v8662 = vmax.f32 %v8660, %v8661
      %v8663 = vsel %vm8613, %v8555, -inf
      %v8664 = vrot.slane %v8663, 4
      %v8665 = vmax.f32 %v8663, %v8664
      %v8666 = vrot.slane %v8665, 2
      %v8667 = vmax.f32 %v8665, %v8666
      %v8668 = vrot.slane %v8667, 1
      %v8669 = vmax.f32 %v8667, %v8668
      %vm8670 = vcmask 521219
      %v8671 = vsel %vm8670, %v8528, -inf
      %v8672 = vrot.slane %v8671, 4
      %v8673 = vmax.f32 %v8671, %v8672
      %v8674 = vrot.slane %v8673, 2
      %v8675 = vmax.f32 %v8673, %v8674
      %v8676 = vrot.slane %v8675, 1
      %v8677 = vmax.f32 %v8675, %v8676
      %v8678 = vsel %vm8670, %v8535, -inf
      %v8679 = vrot.slane %v8678, 4
      %v8680 = vmax.f32 %v8678, %v8679
      %v8681 = vrot.slane %v8680, 2
      %v8682 = vmax.f32 %v8680, %v8681
      %v8683 = vrot.slane %v8682, 1
      %v8684 = vmax.f32 %v8682, %v8683
      %v8685 = vsel %vm8670, %v8543, -inf
      %v8686 = vrot.slane %v8685, 4
      %v8687 = vmax.f32 %v8685, %v8686
      %v8688 = vrot.slane %v8687, 2
      %v8689 = vmax.f32 %v8687, %v8688
      %v8690 = vrot.slane %v8689, 1
      %v8691 = vmax.f32 %v8689, %v8690
      %v8692 = vsel %vm8670, %v8551, -inf
      %v8693 = vrot.slane %v8692, 4
      %v8694 = vmax.f32 %v8692, %v8693
      %v8695 = vrot.slane %v8694, 2
      %v8696 = vmax.f32 %v8694, %v8695
      %v8697 = vrot.slane %v8696, 1
      %v8698 = vmax.f32 %v8696, %v8697
      %v8699 = vsel %vm8670, %v8531, -inf
      %v8700 = vrot.slane %v8699, 4
      %v8701 = vmax.f32 %v8699, %v8700
      %v8702 = vrot.slane %v8701, 2
      %v8703 = vmax.f32 %v8701, %v8702
      %v8704 = vrot.slane %v8703, 1
      %v8705 = vmax.f32 %v8703, %v8704
      %v8706 = vsel %vm8670, %v8539, -inf
      %v8707 = vrot.slane %v8706, 4
      %v8708 = vmax.f32 %v8706, %v8707
      %v8709 = vrot.slane %v8708, 2
      %v8710 = vmax.f32 %v8708, %v8709
      %v8711 = vrot.slane %v8710, 1
      %v8712 = vmax.f32 %v8710, %v8711
      %v8713 = vsel %vm8670, %v8547, -inf
      %v8714 = vrot.slane %v8713, 4
      %v8715 = vmax.f32 %v8713, %v8714
      %v8716 = vrot.slane %v8715, 2
      %v8717 = vmax.f32 %v8715, %v8716
      %v8718 = vrot.slane %v8717, 1
      %v8719 = vmax.f32 %v8717, %v8718
      %v8720 = vsel %vm8670, %v8555, -inf
      %v8721 = vrot.slane %v8720, 4
      %v8722 = vmax.f32 %v8720, %v8721
      %v8723 = vrot.slane %v8722, 2
      %v8724 = vmax.f32 %v8722, %v8723
      %v8725 = vrot.slane %v8724, 1
      %v8726 = vmax.f32 %v8724, %v8725
      %vm8727 = vcmask 523269
      %v8728 = vsel %vm8727, %v8528, -inf
      %v8729 = vrot.slane %v8728, 4
      %v8730 = vmax.f32 %v8728, %v8729
      %v8731 = vrot.slane %v8730, 2
      %v8732 = vmax.f32 %v8730, %v8731
      %v8733 = vrot.slane %v8732, 1
      %v8734 = vmax.f32 %v8732, %v8733
      %v8735 = vsel %vm8727, %v8535, -inf
      %v8736 = vrot.slane %v8735, 4
      %v8737 = vmax.f32 %v8735, %v8736
      %v8738 = vrot.slane %v8737, 2
      %v8739 = vmax.f32 %v8737, %v8738
      %v8740 = vrot.slane %v8739, 1
      %v8741 = vmax.f32 %v8739, %v8740
      %v8742 = vsel %vm8727, %v8543, -inf
      %v8743 = vrot.slane %v8742, 4
      %v8744 = vmax.f32 %v8742, %v8743
      %v8745 = vrot.slane %v8744, 2
      %v8746 = vmax.f32 %v8744, %v8745
      %v8747 = vrot.slane %v8746, 1
      %v8748 = vmax.f32 %v8746, %v8747
      %v8749 = vsel %vm8727, %v8551, -inf
      %v8750 = vrot.slane %v8749, 4
      %v8751 = vmax.f32 %v8749, %v8750
      %v8752 = vrot.slane %v8751, 2
      %v8753 = vmax.f32 %v8751, %v8752
      %v8754 = vrot.slane %v8753, 1
      %v8755 = vmax.f32 %v8753, %v8754
      %v8756 = vsel %vm8727, %v8531, -inf
      %v8757 = vrot.slane %v8756, 4
      %v8758 = vmax.f32 %v8756, %v8757
      %v8759 = vrot.slane %v8758, 2
      %v8760 = vmax.f32 %v8758, %v8759
      %v8761 = vrot.slane %v8760, 1
      %v8762 = vmax.f32 %v8760, %v8761
      %v8763 = vsel %vm8727, %v8539, -inf
      %v8764 = vrot.slane %v8763, 4
      %v8765 = vmax.f32 %v8763, %v8764
      %v8766 = vrot.slane %v8765, 2
      %v8767 = vmax.f32 %v8765, %v8766
      %v8768 = vrot.slane %v8767, 1
      %v8769 = vmax.f32 %v8767, %v8768
      %v8770 = vsel %vm8727, %v8547, -inf
      %v8771 = vrot.slane %v8770, 4
      %v8772 = vmax.f32 %v8770, %v8771
      %v8773 = vrot.slane %v8772, 2
      %v8774 = vmax.f32 %v8772, %v8773
      %v8775 = vrot.slane %v8774, 1
      %v8776 = vmax.f32 %v8774, %v8775
      %v8777 = vsel %vm8727, %v8555, -inf
      %v8778 = vrot.slane %v8777, 4
      %v8779 = vmax.f32 %v8777, %v8778
      %v8780 = vrot.slane %v8779, 2
      %v8781 = vmax.f32 %v8779, %v8780
      %v8782 = vrot.slane %v8781, 1
      %v8783 = vmax.f32 %v8781, %v8782
      %vm8784 = vcmask 1040384
      %v8785 = vsel %vm8784, %v8563, %v8620
      %v8786 = vsel %vm8784, %v8570, %v8627
      %v8787 = vsel %vm8784, %v8577, %v8634
      %v8788 = vsel %vm8784, %v8584, %v8641
      %v8789 = vsel %vm8784, %v8591, %v8648
      %v8790 = vsel %vm8784, %v8598, %v8655
      %v8791 = vsel %vm8784, %v8605, %v8662
      %v8792 = vsel %vm8784, %v8612, %v8669
      %vm8793 = vcmask 1041408
      %v8794 = vsel %vm8793, %v8785, %v8677
      %v8795 = vsel %vm8793, %v8786, %v8684
      %v8796 = vsel %vm8793, %v8787, %v8691
      %v8797 = vsel %vm8793, %v8788, %v8698
      %v8798 = vsel %vm8793, %v8789, %v8705
      %v8799 = vsel %vm8793, %v8790, %v8712
      %v8800 = vsel %vm8793, %v8791, %v8719
      %v8801 = vsel %vm8793, %v8792, %v8726
      %vm8802 = vcmask 1042432
      %v8803 = vsel %vm8802, %v8794, %v8734
      %v8804 = vsel %vm8802, %v8795, %v8741
      %v8805 = vsel %vm8802, %v8796, %v8748
      %v8806 = vsel %vm8802, %v8797, %v8755
      %v8807 = vsel %vm8802, %v8798, %v8762
      %v8808 = vsel %vm8802, %v8799, %v8769
      %v8809 = vsel %vm8802, %v8800, %v8776
      %v8810 = vsel %vm8802, %v8801, %v8783
      %v8819 = vcombine.low %v8803, %v8804
      %v8820 = vcombine.low %v8805, %v8806
      %v8821 = vcombine.low %v8807, %v8808
      %v8822 = vcombine.low %v8809, %v8810
      %8827 = vst.msk [vmem:[%s245] sm:$0xff] %vm8363, %v8819
      %8828 = vst.msk [vmem:[%s245 + $0x8] sm:$0xff] %vm8363, %v8820
      %8829 = vst.msk [vmem:[%s245 + $0x10] sm:$0xff] %vm8363, %v8821
      %8830 = vst.msk [vmem:[%s245 + $0x18] sm:$0xff] %vm8363, %v8822
      %p8831 = scmp.lt.s32.totalorder %s15, 1
      %s8832 = scalar_select %p8831, %s15, 1
      %s8833 = smul.addr %s8832, 4
      %s8834 = smul.addr %s8833, 8
      %s8835 = scalar_lea.vmem %s4, %s8834
      // Predicated region
      $region37: #{serial_conv_block.1} parent=35 // pred_check
        %p8836 = pneg %p137
      $region38: #{serial_conv_block.1} parent=35 // pred_check_branch
        %8838 = sbr.rel (%p8836) target = $region40
      $region39: #{serial_conv_block.1} parent=35 // pred_region
        _
      $region40: #{serial_conv_block.1} parent=35 // pred_fallthru
        _
    $region36: #{serial_conv_block.1} parent=5 // pred_fallthru
      _
    %p8839 = scmp.le.s32.totalorder 2, %s10
    // Predicated region
    $region41: #{serial_conv_block.1} parent=5 // pred_check
      %p8840 = pneg %p8839
    $region42: #{serial_conv_block.1} parent=5 // pred_check_branch
      %8842 = sbr.rel (%p8840) target = $region44
    $region43: #{serial_conv_block.1} parent=5 // pred_region
      %s8843 = ssub.s32 %s10, 2
      // Predicated region
      $region45: #{serial_conv_block.1} parent=43 // pred_check
        %p8844 = pneg %p143
      $region46: #{serial_conv_block.1} parent=43 // pred_check_branch
        %8846 = sbr.rel (%p8844) target = $region48
      $region47: #{serial_conv_block.1} parent=43 // pred_region
        %p8847 = scmp.lt.s32.totalorder %s16, 1
        %s8848 = scalar_select %p8847, %s16, 1
        %s8849 = smul.addr %s8848, 4
        %s8850 = smul.addr %s8849, 8
        %s8851 = scalar_lea.vmem %s4, %s8850
      $region48: #{serial_conv_block.1} parent=43 // pred_fallthru
        _
    $region44: #{serial_conv_block.1} parent=5 // pred_fallthru
      _
  $region6: #{serial_conv_block.1} parent=0 // loop_footer
    %s14 = sadd.s32 1, %s10
  $region7: #{serial_conv_block.1} parent=0 // loop_footer_branch
    %9 = sbr.rel target = $region3
  $region8: #{serial_conv_block.1} parent=0 // loop_exit
    _

</llo_original>
